<compile_context>
chip_gen: v7x
topology: tpu7x:2x2x1
jax: 0.10.0
libtpu: 0.0.40
codegen_flags: <defaults>
</compile_context>

<pallas_src>
import numpy as np
import jax
import jax.numpy as jnp
from jax.experimental import pallas as pl
from jax.experimental.pallas import tpu as pltpu

LANES = 128


def _round_up(v, m):
    return ((v + m - 1) // m) * m


def _pick_images_per_step(n, ho, wo, target_rows=128):
    """Largest divisor of n such that nb*ho*wo <= target_rows (>=1)."""
    nb = 1
    for cand in range(1, n + 1):
        if n % cand == 0 and cand * ho * wo <= target_rows:
            nb = cand
    return nb


# ------------------------- fused BasicBlock kernel -------------------------- #

def _make_block_kernel(nb, H, W, Cin, Cout, stride, equal_in_out):
    """Fused WRN BasicBlock kernel for `nb` images per grid step (NHWC, padded ch)."""
    Ho, Wo = H // stride, W // stride
    M = nb * Ho * Wo

    def kernel(*refs):
        if equal_in_out:
            (x_ref, s1_ref, o1_ref, w1_ref, s2_ref, o2_ref, w2_ref,
             out_ref, apad_ref, bpad_ref) = refs
            wsc_ref = None
        else:
            (x_ref, s1_ref, o1_ref, w1_ref, s2_ref, o2_ref, w2_ref, wsc_ref,
             out_ref, apad_ref, bpad_ref) = refs

        # ---- bn1 + relu (f32 VPU) --------------------------------------------
        x2d = x_ref[...].reshape(nb * H * W, Cin).astype(jnp.float32)
        a2d = jnp.maximum(x2d * s1_ref[...] + o1_ref[...], 0.0)
        a = a2d.reshape(nb, H, W, Cin)

        # ---- halo buffer: zero border strips only, write interior directly ----
        apad_ref[:, 0:1, :, :] = jnp.zeros((nb, 1, W + 2, Cin), jnp.float32)
        apad_ref[:, H + 1:H + 2, :, :] = jnp.zeros((nb, 1, W + 2, Cin), jnp.float32)
        apad_ref[:, :, 0:1, :] = jnp.zeros((nb, H + 2, 1, Cin), jnp.float32)
        apad_ref[:, :, W + 1:W + 2, :] = jnp.zeros((nb, H + 2, 1, Cin), jnp.float32)
        apad_ref[:, 1:H + 1, 1:W + 1, :] = a

        # ---- conv1: 3x3, stride s, pad 1  ->  im2col + ONE MXU matmul ---------
        cols = []
        a_sub = None
        if stride == 1:
            for kh in range(3):
                for kw in range(3):
                    cols.append(apad_ref[:, kh:kh + Ho, kw:kw + Wo, :]
                                .reshape(M, Cin))
        else:
            # space-to-depth: 4 strided phase reads, then every tap is contiguous.
            Hp, Wp = (H + 2) // stride, (W + 2) // stride
            phase = [[apad_ref[:, pl.ds(ph, Hp, stride), pl.ds(pw, Wp, stride), :]
                      for pw in range(stride)] for ph in range(stride)]
            for kh in range(3):
                for kw in range(3):
                    p = phase[kh % stride][kw % stride]
                    cols.append(p[:, kh // stride:kh // stride + Ho,
                                  kw // stride:kw // stride + Wo, :].reshape(M, Cin))
            # shortcut input a[:, ::s, ::s, :] == odd/odd phase interior
            a_sub = phase[1][1][:, :Ho, :Wo, :].reshape(M, Cin).astype(jnp.bfloat16)

        patches1 = jnp.concatenate(cols, axis=-1).astype(jnp.bfloat16)   # (M, 9*Cin)
        h = jnp.dot(patches1, w1_ref[...], preferred_element_type=jnp.float32)

        # ---- bn2 + relu (f32 VPU), second halo --------------------------------
        b2d = jnp.maximum(h * s2_ref[...] + o2_ref[...], 0.0)
        b = b2d.reshape(nb, Ho, Wo, Cout)
        bpad_ref[:, 0:1, :, :] = jnp.zeros((nb, 1, Wo + 2, Cout), jnp.float32)
        bpad_ref[:, Ho + 1:Ho + 2, :, :] = jnp.zeros((nb, 1, Wo + 2, Cout), jnp.float32)
        bpad_ref[:, :, 0:1, :] = jnp.zeros((nb, Ho + 2, 1, Cout), jnp.float32)
        bpad_ref[:, :, Wo + 1:Wo + 2, :] = jnp.zeros((nb, Ho + 2, 1, Cout), jnp.float32)
        bpad_ref[:, 1:Ho + 1, 1:Wo + 1, :] = b

        # ---- residual / 1x1 shortcut ------------------------------------------
        if equal_in_out:
            res = x2d                                    # Cin == Cout, stride == 1
        else:
            if stride == 1:
                a_sub = a2d.astype(jnp.bfloat16)
            res = jnp.dot(a_sub, wsc_ref[...], preferred_element_type=jnp.float32)

        # ---- conv2: 3x3, stride 1, pad 1 -> im2col + ONE matmul + fused add ---
        cols2 = []
        for kh in range(3):
            for kw in range(3):
                cols2.append(bpad_ref[:, kh:kh + Ho, kw:kw + Wo, :].reshape(M, Cout))
        patches2 = jnp.concatenate(cols2, axis=-1).astype(jnp.bfloat16)  # (M, 9*Cout)
        out = res + jnp.dot(patches2, w2_ref[...], preferred_element_type=jnp.float32)

        out_ref[...] = out.reshape(nb, Ho, Wo, Cout).astype(out_ref.dtype)

    return kernel


def basic_block(x_nhwc, p, stride, equal_in_out, nb):
    """One fused WRN BasicBlock on lane-padded NHWC data (NHWC in, NHWC out)."""
    N, H, W, Cin = x_nhwc.shape
    Cout = p["w1"].shape[-1]
    assert N % nb == 0 and H % stride == 0 and W % stride == 0
    assert stride in (1, 2)
    assert not (equal_in_out and stride != 1)
    Ho, Wo = H // stride, W // stride

    kernel = _make_block_kernel(nb, H, W, Cin, Cout, stride, equal_in_out)

    inputs = [x_nhwc, p["s1"], p["o1"], p["w1"], p["s2"], p["o2"], p["w2"]]
    in_specs = [
        pl.BlockSpec((nb, H, W, Cin), lambda n: (n, 0, 0, 0)),     # nb images / step
        pl.BlockSpec((1, Cin), lambda n: (0, 0)),
        pl.BlockSpec((1, Cin), lambda n: (0, 0)),
        pl.BlockSpec((9 * Cin, Cout), lambda n: (0, 0)),           # im2col weights
        pl.BlockSpec((1, Cout), lambda n: (0, 0)),
        pl.BlockSpec((1, Cout), lambda n: (0, 0)),
        pl.BlockSpec((9 * Cout, Cout), lambda n: (0, 0)),
    ]
    if not equal_in_out:
        inputs.append(p["wsc"])
        in_specs.append(pl.BlockSpec((Cin, Cout), lambda n: (0, 0)))

    flops = 2 * N * Ho * Wo * (9 * Cin * Cout + 9 * Cout * Cout
                               + (0 if equal_in_out else Cin * Cout))
    bytes_accessed = (4 * int(x_nhwc.size) + 4 * N * Ho * Wo * Cout
                      + sum(int(np.prod(a.shape)) * a.dtype.itemsize
                            for a in inputs[1:]))

    return pl.pallas_call(
        kernel,
        out_shape=jax.ShapeDtypeStruct((N, Ho, Wo, Cout), x_nhwc.dtype),
        grid_spec=pltpu.PrefetchScalarGridSpec(
            num_scalar_prefetch=0,
            grid=(N // nb,),
            in_specs=in_specs,
            out_specs=pl.BlockSpec((nb, Ho, Wo, Cout), lambda n: (n, 0, 0, 0)),
            scratch_shapes=[
                pltpu.VMEM((nb, H + 2, W + 2, Cin), jnp.float32),    # relu(bn1(x)) halo
                pltpu.VMEM((nb, Ho + 2, Wo + 2, Cout), jnp.float32), # relu(bn2(h)) halo
            ]),
        compiler_params=pltpu.CompilerParams(
            dimension_semantics=("parallel",),
            vmem_limit_bytes=32 * 1024 * 1024),
        cost_estimate=pl.CostEstimate(flops=int(flops), transcendentals=0,
                                      bytes_accessed=int(bytes_accessed)),
    )(*inputs)


# --------------------- wrapper: channel padding + stacking -------------------- #

def _prepare_block_params(p, cin, cout, cin_p, cout_p):
    """Zero-pad channels to lane multiples, fold BN, reshape weights for im2col, bf16."""
    def pad_vec(v, n):
        return jnp.pad(v, (0, n - v.shape[0]))
    w1 = jnp.pad(p["w1"], ((0, 0), (0, 0), (0, cin_p - cin), (0, cout_p - cout)))
    w2 = jnp.pad(p["w2"], ((0, 0), (0, 0), (0, cout_p - cout), (0, cout_p - cout)))
    out = dict(
        s1=pad_vec(p["s1"], cin_p).reshape(1, cin_p),
        o1=pad_vec(p["o1"], cin_p).reshape(1, cin_p),
        s2=pad_vec(p["s2"], cout_p).reshape(1, cout_p),
        o2=pad_vec(p["o2"], cout_p).reshape(1, cout_p),
        w1=w1.reshape(9 * cin_p, cout_p).astype(jnp.bfloat16),   # (kh,kw,ci) x co
        w2=w2.reshape(9 * cout_p, cout_p).astype(jnp.bfloat16),
    )
    if "wsc" in p:
        out["wsc"] = jnp.pad(p["wsc"], ((0, cin_p - cin),
                                        (0, cout_p - cout))).astype(jnp.bfloat16)
    return out


def block_stack_forward(x_nchw, block_params, strides, equals):
    N, Cin, H, W = x_nchw.shape
    x = jnp.transpose(x_nchw, (0, 2, 3, 1))                 # NCHW -> NHWC
    cin_p = _round_up(Cin, LANES)
    x = jnp.pad(x, ((0, 0), (0, 0), (0, 0), (0, cin_p - Cin)))   # lane-dense channels
    cur_c, cur_cp = Cin, cin_p
    for p, s, eq in zip(block_params, strides, equals):
        cout = p["w1"].shape[-1]
        cout_p = _round_up(cout, LANES)
        kp = _prepare_block_params(p, cur_c, cout, cur_cp, cout_p)
        Hc, Wc = x.shape[1], x.shape[2]
        nb = _pick_images_per_step(N, Hc // s, Wc // s)
        x = basic_block(x, kp, s, eq, nb)
        cur_c, cur_cp = cout, cout_p
    x = x[..., :cur_c]                                       # drop channel padding
    return jnp.transpose(x, (0, 3, 1, 2))                    # NHWC -> NCHW


# --------------------------- pure-JAX reference ------------------------------ #
# Reference also uses bf16 matmul operands (f32 accumulation) so the validation
# against the bf16-MXU kernel stays tight.

def _ref_conv3x3(x, w, stride):
    return jax.lax.conv_general_dilated(
        x.astype(jnp.bfloat16), w.astype(jnp.bfloat16), (stride, stride),
        ((1, 1), (1, 1)), dimension_numbers=("NHWC", "HWIO", "NHWC"),
        preferred_element_type=jnp.float32)


def _ref_block(x, p, stride, equal_in_out):
    a = jnp.maximum(x * p["s1"] + p["o1"], 0.0)
    h = _ref_conv3x3(a, p["w1"], stride)
    b = jnp.maximum(h * p["s2"] + p["o2"], 0.0)
    out = _ref_conv3x3(b, p["w2"], 1)
    if equal_in_out:
        res = x
    else:
        a_ds = a[:, ::stride, ::stride, :]
        n, ho, wo, cin = a_ds.shape
        res = jnp.dot(a_ds.reshape(n * ho * wo, cin).astype(jnp.bfloat16),
                      p["wsc"].astype(jnp.bfloat16),
                      preferred_element_type=jnp.float32).reshape(n, ho, wo, -1)
    return out + res


def ref_stack_forward(x_nchw, block_params, strides, equals):
    x = jnp.transpose(x_nchw, (0, 2, 3, 1))
    for p, s, eq in zip(block_params, strides, equals):
        x = _ref_block(x, p, s, eq)
    return jnp.transpose(x, (0, 3, 1, 2))


# ------------------------------- param init ---------------------------------- #

def init_block_params(key, cin, cout):
    ks = jax.random.split(key, 11)
    eps = 1e-5
    g1 = 1.0 + 0.1 * jax.random.normal(ks[0], (cin,), jnp.float32)
    b1 = 0.1 * jax.random.normal(ks[1], (cin,), jnp.float32)
    m1 = 0.1 * jax.random.normal(ks[2], (cin,), jnp.float32)
    v1 = jnp.abs(1.0 + 0.1 * jax.random.normal(ks[3], (cin,), jnp.float32))
    g2 = 1.0 + 0.1 * jax.random.normal(ks[4], (cout,), jnp.float32)
    b2 = 0.1 * jax.random.normal(ks[5], (cout,), jnp.float32)
    m2 = 0.1 * jax.random.normal(ks[6], (cout,), jnp.float32)
    v2 = jnp.abs(1.0 + 0.1 * jax.random.normal(ks[7], (cout,), jnp.float32))
    s1 = g1 / jnp.sqrt(v1 + eps)
    s2 = g2 / jnp.sqrt(v2 + eps)
    p = dict(
        s1=s1, o1=b1 - m1 * s1,
        s2=s2, o2=b2 - m2 * s2,
        w1=0.1 * jax.random.normal(ks[8], (3, 3, cin, cout), jnp.float32),   # HWIO
        w2=0.1 * jax.random.normal(ks[9], (3, 3, cout, cout), jnp.float32),  # HWIO
    )
    if cin != cout:
        p["wsc"] = 0.1 * jax.random.normal(ks[10], (cin, cout), jnp.float32)  # 1x1 (I,O)
    return p


def init_stack(key, in_channels, out_channels, stride, num_block):
    keys = jax.random.split(key, num_block)
    params, strides, equals = [], [], []
    for idx in range(num_block):
        cin = in_channels if idx == 0 else out_channels
        s = stride if idx == 0 else 1
        params.append(init_block_params(keys[idx], cin, out_channels))
        strides.append(s)
        equals.append(cin == out_channels)
    return params, strides, equals


# ---------------------------------- main -------------------------------------- #

if __name__ == "__main__":
    key = jax.random.PRNGKey(0)
    kx, kp = jax.random.split(key)

    # BlockStack(WRN BasicBlock, in_channels=8, out_channels=16,
    #            stride=2, dropout=0.0, numBlock=2)
    N, Cin, H, W = 8, 8, 16, 16
    Cout, stride, num_block = 16, 2, 2

    x_nchw = jax.random.normal(kx, (N, Cin, H, W), jnp.float32)
    params, strides, equals = init_stack(kp, Cin, Cout, stride, num_block)

    fwd = jax.jit(lambda x, p: block_stack_forward(x, p, strides, equals))
    out = jax.block_until_ready(fwd(x_nchw, params))

    ref = jax.block_until_ready(ref_stack_forward(x_nchw, params, strides, equals))

    assert out.shape == (N, Cout, H // stride, W // stride), out.shape
    np.testing.assert_allclose(np.asarray(out), np.asarray(ref), rtol=2e-2, atol=2e-2)
    print("KERNEL_OK")
</pallas_src>

<mosaic_0001>
module attributes {stable_mosaic.version = 11 : i64} {
  func.func @kernel(%arg0: i32, %arg1: memref<2x16x16x128xf32, #tpu.memory_space<vmem>>, %arg2: memref<1x128xf32, #tpu.memory_space<vmem>>, %arg3: memref<1x128xf32, #tpu.memory_space<vmem>>, %arg4: memref<1152x128xbf16, #tpu.memory_space<vmem>>, %arg5: memref<1x128xf32, #tpu.memory_space<vmem>>, %arg6: memref<1x128xf32, #tpu.memory_space<vmem>>, %arg7: memref<1152x128xbf16, #tpu.memory_space<vmem>>, %arg8: memref<128x128xbf16, #tpu.memory_space<vmem>>, %arg9: memref<2x8x8x128xf32, #tpu.memory_space<vmem>>, %arg10: memref<2x18x18x128xf32, #tpu.memory_space<vmem>>, %arg11: memref<2x10x10x128xf32, #tpu.memory_space<vmem>>) attributes {dimension_semantics = [#tpu.dimension_semantics<parallel>], iteration_bounds = array<i64: 4>, scalar_prefetch = 0 : i64, scratch_operands = 2 : i64, tpu.core_type = #tpu.core_type<tc>, window_params = [{transform_indices = @transform_0, window_bounds = array<i64: 2, 16, 16, 128>}, {pipeline_mode = #tpu.pipeline_mode<synchronous>, transform_indices = @transform_1, window_bounds = array<i64: 1, 128>}, {pipeline_mode = #tpu.pipeline_mode<synchronous>, transform_indices = @transform_2, window_bounds = array<i64: 1, 128>}, {pipeline_mode = #tpu.pipeline_mode<synchronous>, transform_indices = @transform_3, window_bounds = array<i64: 1152, 128>}, {pipeline_mode = #tpu.pipeline_mode<synchronous>, transform_indices = @transform_4, window_bounds = array<i64: 1, 128>}, {pipeline_mode = #tpu.pipeline_mode<synchronous>, transform_indices = @transform_5, window_bounds = array<i64: 1, 128>}, {pipeline_mode = #tpu.pipeline_mode<synchronous>, transform_indices = @transform_6, window_bounds = array<i64: 1152, 128>}, {pipeline_mode = #tpu.pipeline_mode<synchronous>, transform_indices = @transform_7, window_bounds = array<i64: 128, 128>}, {transform_indices = @transform_8, window_bounds = array<i64: 2, 8, 8, 128>}]} {
    %c0 = arith.constant 0 : index
    %c0_0 = arith.constant 0 : index
    %c0_1 = arith.constant 0 : index
    %c0_2 = arith.constant 0 : index
    %0 = vector.load %arg1[%c0, %c0_0, %c0_1, %c0_2] : memref<2x16x16x128xf32, #tpu.memory_space<vmem>>, vector<2x16x16x128xf32>
    %1 = vector.shape_cast %0 : vector<2x16x16x128xf32> to vector<512x128xf32>
    %c0_3 = arith.constant 0 : index
    %c0_4 = arith.constant 0 : index
    %2 = vector.load %arg2[%c0_3, %c0_4] : memref<1x128xf32, #tpu.memory_space<vmem>>, vector<1x128xf32>
    %3 = vector.broadcast %2 : vector<1x128xf32> to vector<512x128xf32>
    %4 = arith.mulf %1, %3 : vector<512x128xf32>
    %c0_5 = arith.constant 0 : index
    %c0_6 = arith.constant 0 : index
    %5 = vector.load %arg3[%c0_5, %c0_6] : memref<1x128xf32, #tpu.memory_space<vmem>>, vector<1x128xf32>
    %6 = vector.broadcast %5 : vector<1x128xf32> to vector<512x128xf32>
    %7 = arith.addf %4, %6 : vector<512x128xf32>
    %cst = arith.constant 0.000000e+00 : f32
    %8 = vector.broadcast %cst : f32 to vector<512x128xf32>
    %9 = arith.maximumf %7, %8 : vector<512x128xf32>
    %10 = vector.shape_cast %9 : vector<512x128xf32> to vector<2x16x16x128xf32>
    %cst_7 = arith.constant 0.000000e+00 : f32
    %11 = vector.broadcast %cst_7 : f32 to vector<2x1x18x128xf32>
    %c0_8 = arith.constant 0 : index
    %c0_9 = arith.constant 0 : index
    %c0_10 = arith.constant 0 : index
    %c0_11 = arith.constant 0 : index
    %12 = vector.load %arg10[%c0_8, %c0_9, %c0_10, %c0_11] : memref<2x18x18x128xf32, #tpu.memory_space<vmem>>, vector<2x1x18x128xf32>
    tpu.vector_store %arg10[%c0_8, %c0_9, %c0_10, %c0_11], %11 {strides = array<i32>} : memref<2x18x18x128xf32, #tpu.memory_space<vmem>>, vector<2x1x18x128xf32>,
    %cst_12 = arith.constant 0.000000e+00 : f32
    %13 = vector.broadcast %cst_12 : f32 to vector<2x1x18x128xf32>
    %c0_13 = arith.constant 0 : index
    %c17 = arith.constant 17 : index
    %c0_14 = arith.constant 0 : index
    %c0_15 = arith.constant 0 : index
    %14 = vector.load %arg10[%c0_13, %c17, %c0_14, %c0_15] : memref<2x18x18x128xf32, #tpu.memory_space<vmem>>, vector<2x1x18x128xf32>
    tpu.vector_store %arg10[%c0_13, %c17, %c0_14, %c0_15], %13 {strides = array<i32>} : memref<2x18x18x128xf32, #tpu.memory_space<vmem>>, vector<2x1x18x128xf32>,
    %cst_16 = arith.constant 0.000000e+00 : f32
    %15 = vector.broadcast %cst_16 : f32 to vector<2x18x1x128xf32>
    %c0_17 = arith.constant 0 : index
    %c0_18 = arith.constant 0 : index
    %c0_19 = arith.constant 0 : index
    %c0_20 = arith.constant 0 : index
    %16 = vector.load %arg10[%c0_17, %c0_18, %c0_19, %c0_20] : memref<2x18x18x128xf32, #tpu.memory_space<vmem>>, vector<2x18x1x128xf32>
    tpu.vector_store %arg10[%c0_17, %c0_18, %c0_19, %c0_20], %15 {strides = array<i32>} : memref<2x18x18x128xf32, #tpu.memory_space<vmem>>, vector<2x18x1x128xf32>,
    %cst_21 = arith.constant 0.000000e+00 : f32
    %17 = vector.broadcast %cst_21 : f32 to vector<2x18x1x128xf32>
    %c0_22 = arith.constant 0 : index
    %c0_23 = arith.constant 0 : index
    %c17_24 = arith.constant 17 : index
    %c0_25 = arith.constant 0 : index
    %18 = vector.load %arg10[%c0_22, %c0_23, %c17_24, %c0_25] : memref<2x18x18x128xf32, #tpu.memory_space<vmem>>, vector<2x18x1x128xf32>
    tpu.vector_store %arg10[%c0_22, %c0_23, %c17_24, %c0_25], %17 {strides = array<i32>} : memref<2x18x18x128xf32, #tpu.memory_space<vmem>>, vector<2x18x1x128xf32>,
    %c0_26 = arith.constant 0 : index
    %c1 = arith.constant 1 : index
    %c1_27 = arith.constant 1 : index
    %c0_28 = arith.constant 0 : index
    %19 = vector.load %arg10[%c0_26, %c1, %c1_27, %c0_28] : memref<2x18x18x128xf32, #tpu.memory_space<vmem>>, vector<2x16x16x128xf32>
    tpu.vector_store %arg10[%c0_26, %c1, %c1_27, %c0_28], %10 {strides = array<i32>} : memref<2x18x18x128xf32, #tpu.memory_space<vmem>>, vector<2x16x16x128xf32>,
    %c0_29 = arith.constant 0 : index
    %c0_30 = arith.constant 0 : index
    %c0_31 = arith.constant 0 : index
    %c0_32 = arith.constant 0 : index
    %20 = tpu.strided_load %arg10[%c0_29, %c0_30, %c0_31, %c0_32] {strides = array<i32: 1, 2, 2, 1>} : memref<2x18x18x128xf32, #tpu.memory_space<vmem>>, vector<2x9x9x128xf32>
    %c0_33 = arith.constant 0 : index
    %c0_34 = arith.constant 0 : index
    %c1_35 = arith.constant 1 : index
    %c0_36 = arith.constant 0 : index
    %21 = tpu.strided_load %arg10[%c0_33, %c0_34, %c1_35, %c0_36] {strides = array<i32: 1, 2, 2, 1>} : memref<2x18x18x128xf32, #tpu.memory_space<vmem>>, vector<2x9x9x128xf32>
    %c0_37 = arith.constant 0 : index
    %c1_38 = arith.constant 1 : index
    %c0_39 = arith.constant 0 : index
    %c0_40 = arith.constant 0 : index
    %22 = tpu.strided_load %arg10[%c0_37, %c1_38, %c0_39, %c0_40] {strides = array<i32: 1, 2, 2, 1>} : memref<2x18x18x128xf32, #tpu.memory_space<vmem>>, vector<2x9x9x128xf32>
    %c0_41 = arith.constant 0 : index
    %c1_42 = arith.constant 1 : index
    %c1_43 = arith.constant 1 : index
    %c0_44 = arith.constant 0 : index
    %23 = tpu.strided_load %arg10[%c0_41, %c1_42, %c1_43, %c0_44] {strides = array<i32: 1, 2, 2, 1>} : memref<2x18x18x128xf32, #tpu.memory_space<vmem>>, vector<2x9x9x128xf32>
    %24 = vector.extract_strided_slice %20 {offsets = [0, 0, 0, 0], sizes = [2, 8, 8, 128], strides = [1, 1, 1, 1]} : vector<2x9x9x128xf32> to vector<2x8x8x128xf32>
    %25 = vector.shape_cast %24 : vector<2x8x8x128xf32> to vector<128x128xf32>
    %26 = vector.extract_strided_slice %21 {offsets = [0, 0, 0, 0], sizes = [2, 8, 8, 128], strides = [1, 1, 1, 1]} : vector<2x9x9x128xf32> to vector<2x8x8x128xf32>
    %27 = vector.shape_cast %26 : vector<2x8x8x128xf32> to vector<128x128xf32>
    %28 = vector.extract_strided_slice %20 {offsets = [0, 0, 1, 0], sizes = [2, 8, 8, 128], strides = [1, 1, 1, 1]} : vector<2x9x9x128xf32> to vector<2x8x8x128xf32>
    %29 = vector.shape_cast %28 : vector<2x8x8x128xf32> to vector<128x128xf32>
    %30 = vector.extract_strided_slice %22 {offsets = [0, 0, 0, 0], sizes = [2, 8, 8, 128], strides = [1, 1, 1, 1]} : vector<2x9x9x128xf32> to vector<2x8x8x128xf32>
    %31 = vector.shape_cast %30 : vector<2x8x8x128xf32> to vector<128x128xf32>
    %32 = vector.extract_strided_slice %23 {offsets = [0, 0, 0, 0], sizes = [2, 8, 8, 128], strides = [1, 1, 1, 1]} : vector<2x9x9x128xf32> to vector<2x8x8x128xf32>
    %33 = vector.shape_cast %32 : vector<2x8x8x128xf32> to vector<128x128xf32>
    %34 = vector.extract_strided_slice %22 {offsets = [0, 0, 1, 0], sizes = [2, 8, 8, 128], strides = [1, 1, 1, 1]} : vector<2x9x9x128xf32> to vector<2x8x8x128xf32>
    %35 = vector.shape_cast %34 : vector<2x8x8x128xf32> to vector<128x128xf32>
    %36 = vector.extract_strided_slice %20 {offsets = [0, 1, 0, 0], sizes = [2, 8, 8, 128], strides = [1, 1, 1, 1]} : vector<2x9x9x128xf32> to vector<2x8x8x128xf32>
    %37 = vector.shape_cast %36 : vector<2x8x8x128xf32> to vector<128x128xf32>
    %38 = vector.extract_strided_slice %21 {offsets = [0, 1, 0, 0], sizes = [2, 8, 8, 128], strides = [1, 1, 1, 1]} : vector<2x9x9x128xf32> to vector<2x8x8x128xf32>
    %39 = vector.shape_cast %38 : vector<2x8x8x128xf32> to vector<128x128xf32>
    %40 = vector.extract_strided_slice %20 {offsets = [0, 1, 1, 0], sizes = [2, 8, 8, 128], strides = [1, 1, 1, 1]} : vector<2x9x9x128xf32> to vector<2x8x8x128xf32>
    %41 = vector.shape_cast %40 : vector<2x8x8x128xf32> to vector<128x128xf32>
    %42 = vector.extract_strided_slice %23 {offsets = [0, 0, 0, 0], sizes = [2, 8, 8, 128], strides = [1, 1, 1, 1]} : vector<2x9x9x128xf32> to vector<2x8x8x128xf32>
    %43 = vector.shape_cast %42 : vector<2x8x8x128xf32> to vector<128x128xf32>
    %44 = arith.truncf %43 : vector<128x128xf32> to vector<128x128xbf16>
    %45 = tpu.concatenate %25, %27, %29, %31, %33, %35, %37, %39, %41 in 1 : vector<128x128xf32>, vector<128x128xf32>, vector<128x128xf32>, vector<128x128xf32>, vector<128x128xf32>, vector<128x128xf32>, vector<128x128xf32>, vector<128x128xf32>, vector<128x128xf32> -> vector<128x1152xf32>
    %46 = arith.truncf %45 : vector<128x1152xf32> to vector<128x1152xbf16>
    %c0_45 = arith.constant 0 : index
    %c0_46 = arith.constant 0 : index
    %47 = vector.load %arg4[%c0_45, %c0_46] : memref<1152x128xbf16, #tpu.memory_space<vmem>>, vector<1152x128xbf16>
    %cst_47 = arith.constant dense<0.000000e+00> : vector<128x128xf32>
    %48 = tpu.matmul %46, %47, %cst_47 {dimension_numbers = #tpu.dot_dimension_numbers<[1], [0], [0], [1], [0, 0, 1, 1], [], []>} : vector<128x1152xbf16>, vector<1152x128xbf16>, vector<128x128xf32> -> vector<128x128xf32>
    %c0_48 = arith.constant 0 : index
    %c0_49 = arith.constant 0 : index
    %49 = vector.load %arg5[%c0_48, %c0_49] : memref<1x128xf32, #tpu.memory_space<vmem>>, vector<1x128xf32>
    %50 = vector.broadcast %49 : vector<1x128xf32> to vector<128x128xf32>
    %51 = arith.mulf %48, %50 : vector<128x128xf32>
    %c0_50 = arith.constant 0 : index
    %c0_51 = arith.constant 0 : index
    %52 = vector.load %arg6[%c0_50, %c0_51] : memref<1x128xf32, #tpu.memory_space<vmem>>, vector<1x128xf32>
    %53 = vector.broadcast %52 : vector<1x128xf32> to vector<128x128xf32>
    %54 = arith.addf %51, %53 : vector<128x128xf32>
    %cst_52 = arith.constant 0.000000e+00 : f32
    %55 = vector.broadcast %cst_52 : f32 to vector<128x128xf32>
    %56 = arith.maximumf %54, %55 : vector<128x128xf32>
    %57 = vector.shape_cast %56 : vector<128x128xf32> to vector<2x8x8x128xf32>
    %cst_53 = arith.constant 0.000000e+00 : f32
    %58 = vector.broadcast %cst_53 : f32 to vector<2x1x10x128xf32>
    %c0_54 = arith.constant 0 : index
    %c0_55 = arith.constant 0 : index
    %c0_56 = arith.constant 0 : index
    %c0_57 = arith.constant 0 : index
    %59 = vector.load %arg11[%c0_54, %c0_55, %c0_56, %c0_57] : memref<2x10x10x128xf32, #tpu.memory_space<vmem>>, vector<2x1x10x128xf32>
    tpu.vector_store %arg11[%c0_54, %c0_55, %c0_56, %c0_57], %58 {strides = array<i32>} : memref<2x10x10x128xf32, #tpu.memory_space<vmem>>, vector<2x1x10x128xf32>,
    %cst_58 = arith.constant 0.000000e+00 : f32
    %60 = vector.broadcast %cst_58 : f32 to vector<2x1x10x128xf32>
    %c0_59 = arith.constant 0 : index
    %c9 = arith.constant 9 : index
    %c0_60 = arith.constant 0 : index
    %c0_61 = arith.constant 0 : index
    %61 = vector.load %arg11[%c0_59, %c9, %c0_60, %c0_61] : memref<2x10x10x128xf32, #tpu.memory_space<vmem>>, vector<2x1x10x128xf32>
    tpu.vector_store %arg11[%c0_59, %c9, %c0_60, %c0_61], %60 {strides = array<i32>} : memref<2x10x10x128xf32, #tpu.memory_space<vmem>>, vector<2x1x10x128xf32>,
    %cst_62 = arith.constant 0.000000e+00 : f32
    %62 = vector.broadcast %cst_62 : f32 to vector<2x10x1x128xf32>
    %c0_63 = arith.constant 0 : index
    %c0_64 = arith.constant 0 : index
    %c0_65 = arith.constant 0 : index
    %c0_66 = arith.constant 0 : index
    %63 = vector.load %arg11[%c0_63, %c0_64, %c0_65, %c0_66] : memref<2x10x10x128xf32, #tpu.memory_space<vmem>>, vector<2x10x1x128xf32>
    tpu.vector_store %arg11[%c0_63, %c0_64, %c0_65, %c0_66], %62 {strides = array<i32>} : memref<2x10x10x128xf32, #tpu.memory_space<vmem>>, vector<2x10x1x128xf32>,
    %cst_67 = arith.constant 0.000000e+00 : f32
    %64 = vector.broadcast %cst_67 : f32 to vector<2x10x1x128xf32>
    %c0_68 = arith.constant 0 : index
    %c0_69 = arith.constant 0 : index
    %c9_70 = arith.constant 9 : index
    %c0_71 = arith.constant 0 : index
    %65 = vector.load %arg11[%c0_68, %c0_69, %c9_70, %c0_71] : memref<2x10x10x128xf32, #tpu.memory_space<vmem>>, vector<2x10x1x128xf32>
    tpu.vector_store %arg11[%c0_68, %c0_69, %c9_70, %c0_71], %64 {strides = array<i32>} : memref<2x10x10x128xf32, #tpu.memory_space<vmem>>, vector<2x10x1x128xf32>,
    %c0_72 = arith.constant 0 : index
    %c1_73 = arith.constant 1 : index
    %c1_74 = arith.constant 1 : index
    %c0_75 = arith.constant 0 : index
    %66 = vector.load %arg11[%c0_72, %c1_73, %c1_74, %c0_75] : memref<2x10x10x128xf32, #tpu.memory_space<vmem>>, vector<2x8x8x128xf32>
    tpu.vector_store %arg11[%c0_72, %c1_73, %c1_74, %c0_75], %57 {strides = array<i32>} : memref<2x10x10x128xf32, #tpu.memory_space<vmem>>, vector<2x8x8x128xf32>,
    %c0_76 = arith.constant 0 : index
    %c0_77 = arith.constant 0 : index
    %67 = vector.load %arg8[%c0_76, %c0_77] : memref<128x128xbf16, #tpu.memory_space<vmem>>, vector<128x128xbf16>
    %cst_78 = arith.constant dense<0.000000e+00> : vector<128x128xf32>
    %68 = tpu.matmul %44, %67, %cst_78 {dimension_numbers = #tpu.dot_dimension_numbers<[1], [0], [0], [1], [0, 0, 1, 1], [], []>} : vector<128x128xbf16>, vector<128x128xbf16>, vector<128x128xf32> -> vector<128x128xf32>
    %c0_79 = arith.constant 0 : index
    %c0_80 = arith.constant 0 : index
    %c0_81 = arith.constant 0 : index
    %c0_82 = arith.constant 0 : index
    %69 = vector.load %arg11[%c0_79, %c0_80, %c0_81, %c0_82] : memref<2x10x10x128xf32, #tpu.memory_space<vmem>>, vector<2x8x8x128xf32>
    %70 = vector.shape_cast %69 : vector<2x8x8x128xf32> to vector<128x128xf32>
    %c0_83 = arith.constant 0 : index
    %c0_84 = arith.constant 0 : index
    %c1_85 = arith.constant 1 : index
    %c0_86 = arith.constant 0 : index
    %71 = vector.load %arg11[%c0_83, %c0_84, %c1_85, %c0_86] : memref<2x10x10x128xf32, #tpu.memory_space<vmem>>, vector<2x8x8x128xf32>
    %72 = vector.shape_cast %71 : vector<2x8x8x128xf32> to vector<128x128xf32>
    %c0_87 = arith.constant 0 : index
    %c0_88 = arith.constant 0 : index
    %c2 = arith.constant 2 : index
    %c0_89 = arith.constant 0 : index
    %73 = vector.load %arg11[%c0_87, %c0_88, %c2, %c0_89] : memref<2x10x10x128xf32, #tpu.memory_space<vmem>>, vector<2x8x8x128xf32>
    %74 = vector.shape_cast %73 : vector<2x8x8x128xf32> to vector<128x128xf32>
    %c0_90 = arith.constant 0 : index
    %c1_91 = arith.constant 1 : index
    %c0_92 = arith.constant 0 : index
    %c0_93 = arith.constant 0 : index
    %75 = vector.load %arg11[%c0_90, %c1_91, %c0_92, %c0_93] : memref<2x10x10x128xf32, #tpu.memory_space<vmem>>, vector<2x8x8x128xf32>
    %76 = vector.shape_cast %75 : vector<2x8x8x128xf32> to vector<128x128xf32>
    %c0_94 = arith.constant 0 : index
    %c1_95 = arith.constant 1 : index
    %c1_96 = arith.constant 1 : index
    %c0_97 = arith.constant 0 : index
    %77 = vector.load %arg11[%c0_94, %c1_95, %c1_96, %c0_97] : memref<2x10x10x128xf32, #tpu.memory_space<vmem>>, vector<2x8x8x128xf32>
    %78 = vector.shape_cast %77 : vector<2x8x8x128xf32> to vector<128x128xf32>
    %c0_98 = arith.constant 0 : index
    %c1_99 = arith.constant 1 : index
    %c2_100 = arith.constant 2 : index
    %c0_101 = arith.constant 0 : index
    %79 = vector.load %arg11[%c0_98, %c1_99, %c2_100, %c0_101] : memref<2x10x10x128xf32, #tpu.memory_space<vmem>>, vector<2x8x8x128xf32>
    %80 = vector.shape_cast %79 : vector<2x8x8x128xf32> to vector<128x128xf32>
    %c0_102 = arith.constant 0 : index
    %c2_103 = arith.constant 2 : index
    %c0_104 = arith.constant 0 : index
    %c0_105 = arith.constant 0 : index
    %81 = vector.load %arg11[%c0_102, %c2_103, %c0_104, %c0_105] : memref<2x10x10x128xf32, #tpu.memory_space<vmem>>, vector<2x8x8x128xf32>
    %82 = vector.shape_cast %81 : vector<2x8x8x128xf32> to vector<128x128xf32>
    %c0_106 = arith.constant 0 : index
    %c2_107 = arith.constant 2 : index
    %c1_108 = arith.constant 1 : index
    %c0_109 = arith.constant 0 : index
    %83 = vector.load %arg11[%c0_106, %c2_107, %c1_108, %c0_109] : memref<2x10x10x128xf32, #tpu.memory_space<vmem>>, vector<2x8x8x128xf32>
    %84 = vector.shape_cast %83 : vector<2x8x8x128xf32> to vector<128x128xf32>
    %c0_110 = arith.constant 0 : index
    %c2_111 = arith.constant 2 : index
    %c2_112 = arith.constant 2 : index
    %c0_113 = arith.constant 0 : index
    %85 = vector.load %arg11[%c0_110, %c2_111, %c2_112, %c0_113] : memref<2x10x10x128xf32, #tpu.memory_space<vmem>>, vector<2x8x8x128xf32>
    %86 = vector.shape_cast %85 : vector<2x8x8x128xf32> to vector<128x128xf32>
    %87 = tpu.concatenate %70, %72, %74, %76, %78, %80, %82, %84, %86 in 1 : vector<128x128xf32>, vector<128x128xf32>, vector<128x128xf32>, vector<128x128xf32>, vector<128x128xf32>, vector<128x128xf32>, vector<128x128xf32>, vector<128x128xf32>, vector<128x128xf32> -> vector<128x1152xf32>
    %88 = arith.truncf %87 : vector<128x1152xf32> to vector<128x1152xbf16>
    %c0_114 = arith.constant 0 : index
    %c0_115 = arith.constant 0 : index
    %89 = vector.load %arg7[%c0_114, %c0_115] : memref<1152x128xbf16, #tpu.memory_space<vmem>>, vector<1152x128xbf16>
    %cst_116 = arith.constant dense<0.000000e+00> : vector<128x128xf32>
    %90 = tpu.matmul %88, %89, %cst_116 {dimension_numbers = #tpu.dot_dimension_numbers<[1], [0], [0], [1], [0, 0, 1, 1], [], []>} : vector<128x1152xbf16>, vector<1152x128xbf16>, vector<128x128xf32> -> vector<128x128xf32>
    %91 = arith.addf %68, %90 : vector<128x128xf32>
    %92 = vector.shape_cast %91 : vector<128x128xf32> to vector<2x8x8x128xf32>
    %c0_117 = arith.constant 0 : index
    %c0_118 = arith.constant 0 : index
    %c0_119 = arith.constant 0 : index
    %c0_120 = arith.constant 0 : index
    %93 = vector.load %arg9[%c0_117, %c0_118, %c0_119, %c0_120] : memref<2x8x8x128xf32, #tpu.memory_space<vmem>>, vector<2x8x8x128xf32>
    tpu.vector_store %arg9[%c0_117, %c0_118, %c0_119, %c0_120], %92 {strides = array<i32>} : memref<2x8x8x128xf32, #tpu.memory_space<vmem>>, vector<2x8x8x128xf32>,
    return
  }
  func.func @transform_0(%arg0: i32) -> (i32, i32, i32, i32) {
    %c0_i32 = arith.constant 0 : i32
    %c0_i32_0 = arith.constant 0 : i32
    %c0_i32_1 = arith.constant 0 : i32
    %c0_i32_2 = arith.constant 0 : i32
    return %arg0, %c0_i32, %c0_i32_0, %c0_i32_1 : i32, i32, i32, i32
  }
  func.func @transform_1(%arg0: i32) -> (i32, i32) {
    %c0_i32 = arith.constant 0 : i32
    %c0_i32_0 = arith.constant 0 : i32
    %c0_i32_1 = arith.constant 0 : i32
    return %c0_i32, %c0_i32_0 : i32, i32
  }
  func.func @transform_2(%arg0: i32) -> (i32, i32) {
    %c0_i32 = arith.constant 0 : i32
    %c0_i32_0 = arith.constant 0 : i32
    %c0_i32_1 = arith.constant 0 : i32
    return %c0_i32, %c0_i32_0 : i32, i32
  }
  func.func @transform_3(%arg0: i32) -> (i32, i32) {
    %c0_i32 = arith.constant 0 : i32
    %c0_i32_0 = arith.constant 0 : i32
    %c0_i32_1 = arith.constant 0 : i32
    return %c0_i32, %c0_i32_0 : i32, i32
  }
  func.func @transform_4(%arg0: i32) -> (i32, i32) {
    %c0_i32 = arith.constant 0 : i32
    %c0_i32_0 = arith.constant 0 : i32
    %c0_i32_1 = arith.constant 0 : i32
    return %c0_i32, %c0_i32_0 : i32, i32
  }
  func.func @transform_5(%arg0: i32) -> (i32, i32) {
    %c0_i32 = arith.constant 0 : i32
    %c0_i32_0 = arith.constant 0 : i32
    %c0_i32_1 = arith.constant 0 : i32
    return %c0_i32, %c0_i32_0 : i32, i32
  }
  func.func @transform_6(%arg0: i32) -> (i32, i32) {
    %c0_i32 = arith.constant 0 : i32
    %c0_i32_0 = arith.constant 0 : i32
    %c0_i32_1 = arith.constant 0 : i32
    return %c0_i32, %c0_i32_0 : i32, i32
  }
  func.func @transform_7(%arg0: i32) -> (i32, i32) {
    %c0_i32 = arith.constant 0 : i32
    %c0_i32_0 = arith.constant 0 : i32
    %c0_i32_1 = arith.constant 0 : i32
    return %c0_i32, %c0_i32_0 : i32, i32
  }
  func.func @transform_8(%arg0: i32) -> (i32, i32, i32, i32) {
    %c0_i32 = arith.constant 0 : i32
    %c0_i32_0 = arith.constant 0 : i32
    %c0_i32_1 = arith.constant 0 : i32
    %c0_i32_2 = arith.constant 0 : i32
    return %arg0, %c0_i32, %c0_i32_0, %c0_i32_1 : i32, i32, i32, i32
  }
}

module attributes {stable_mosaic.version = 11 : i64} {
  func.func @kernel(%arg0: i32, %arg1: memref<2x8x8x128xf32, #tpu.memory_space<vmem>>, %arg2: memref<1x128xf32, #tpu.memory_space<vmem>>, %arg3: memref<1x128xf32, #tpu.memory_space<vmem>>, %arg4: memref<1152x128xbf16, #tpu.memory_space<vmem>>, %arg5: memref<1x128xf32, #tpu.memory_space<vmem>>, %arg6: memref<1x128xf32, #tpu.memory_space<vmem>>, %arg7: memref<1152x128xbf16, #tpu.memory_space<vmem>>, %arg8: memref<2x8x8x128xf32, #tpu.memory_space<vmem>>, %arg9: memref<2x10x10x128xf32, #tpu.memory_space<vmem>>, %arg10: memref<2x10x10x128xf32, #tpu.memory_space<vmem>>) attributes {dimension_semantics = [#tpu.dimension_semantics<parallel>], iteration_bounds = array<i64: 4>, scalar_prefetch = 0 : i64, scratch_operands = 2 : i64, tpu.core_type = #tpu.core_type<tc>, window_params = [{transform_indices = @transform_0, window_bounds = array<i64: 2, 8, 8, 128>}, {pipeline_mode = #tpu.pipeline_mode<synchronous>, transform_indices = @transform_1, window_bounds = array<i64: 1, 128>}, {pipeline_mode = #tpu.pipeline_mode<synchronous>, transform_indices = @transform_2, window_bounds = array<i64: 1, 128>}, {pipeline_mode = #tpu.pipeline_mode<synchronous>, transform_indices = @transform_3, window_bounds = array<i64: 1152, 128>}, {pipeline_mode = #tpu.pipeline_mode<synchronous>, transform_indices = @transform_4, window_bounds = array<i64: 1, 128>}, {pipeline_mode = #tpu.pipeline_mode<synchronous>, transform_indices = @transform_5, window_bounds = array<i64: 1, 128>}, {pipeline_mode = #tpu.pipeline_mode<synchronous>, transform_indices = @transform_6, window_bounds = array<i64: 1152, 128>}, {transform_indices = @transform_7, window_bounds = array<i64: 2, 8, 8, 128>}]} {
    %c0 = arith.constant 0 : index
    %c0_0 = arith.constant 0 : index
    %c0_1 = arith.constant 0 : index
    %c0_2 = arith.constant 0 : index
    %0 = vector.load %arg1[%c0, %c0_0, %c0_1, %c0_2] : memref<2x8x8x128xf32, #tpu.memory_space<vmem>>, vector<2x8x8x128xf32>
    %1 = vector.shape_cast %0 : vector<2x8x8x128xf32> to vector<128x128xf32>
    %c0_3 = arith.constant 0 : index
    %c0_4 = arith.constant 0 : index
    %2 = vector.load %arg2[%c0_3, %c0_4] : memref<1x128xf32, #tpu.memory_space<vmem>>, vector<1x128xf32>
    %3 = vector.broadcast %2 : vector<1x128xf32> to vector<128x128xf32>
    %4 = arith.mulf %1, %3 : vector<128x128xf32>
    %c0_5 = arith.constant 0 : index
    %c0_6 = arith.constant 0 : index
    %5 = vector.load %arg3[%c0_5, %c0_6] : memref<1x128xf32, #tpu.memory_space<vmem>>, vector<1x128xf32>
    %6 = vector.broadcast %5 : vector<1x128xf32> to vector<128x128xf32>
    %7 = arith.addf %4, %6 : vector<128x128xf32>
    %cst = arith.constant 0.000000e+00 : f32
    %8 = vector.broadcast %cst : f32 to vector<128x128xf32>
    %9 = arith.maximumf %7, %8 : vector<128x128xf32>
    %10 = vector.shape_cast %9 : vector<128x128xf32> to vector<2x8x8x128xf32>
    %cst_7 = arith.constant 0.000000e+00 : f32
    %11 = vector.broadcast %cst_7 : f32 to vector<2x1x10x128xf32>
    %c0_8 = arith.constant 0 : index
    %c0_9 = arith.constant 0 : index
    %c0_10 = arith.constant 0 : index
    %c0_11 = arith.constant 0 : index
    %12 = vector.load %arg9[%c0_8, %c0_9, %c0_10, %c0_11] : memref<2x10x10x128xf32, #tpu.memory_space<vmem>>, vector<2x1x10x128xf32>
    tpu.vector_store %arg9[%c0_8, %c0_9, %c0_10, %c0_11], %11 {strides = array<i32>} : memref<2x10x10x128xf32, #tpu.memory_space<vmem>>, vector<2x1x10x128xf32>,
    %cst_12 = arith.constant 0.000000e+00 : f32
    %13 = vector.broadcast %cst_12 : f32 to vector<2x1x10x128xf32>
    %c0_13 = arith.constant 0 : index
    %c9 = arith.constant 9 : index
    %c0_14 = arith.constant 0 : index
    %c0_15 = arith.constant 0 : index
    %14 = vector.load %arg9[%c0_13, %c9, %c0_14, %c0_15] : memref<2x10x10x128xf32, #tpu.memory_space<vmem>>, vector<2x1x10x128xf32>
    tpu.vector_store %arg9[%c0_13, %c9, %c0_14, %c0_15], %13 {strides = array<i32>} : memref<2x10x10x128xf32, #tpu.memory_space<vmem>>, vector<2x1x10x128xf32>,
    %cst_16 = arith.constant 0.000000e+00 : f32
    %15 = vector.broadcast %cst_16 : f32 to vector<2x10x1x128xf32>
    %c0_17 = arith.constant 0 : index
    %c0_18 = arith.constant 0 : index
    %c0_19 = arith.constant 0 : index
    %c0_20 = arith.constant 0 : index
    %16 = vector.load %arg9[%c0_17, %c0_18, %c0_19, %c0_20] : memref<2x10x10x128xf32, #tpu.memory_space<vmem>>, vector<2x10x1x128xf32>
    tpu.vector_store %arg9[%c0_17, %c0_18, %c0_19, %c0_20], %15 {strides = array<i32>} : memref<2x10x10x128xf32, #tpu.memory_space<vmem>>, vector<2x10x1x128xf32>,
    %cst_21 = arith.constant 0.000000e+00 : f32
    %17 = vector.broadcast %cst_21 : f32 to vector<2x10x1x128xf32>
    %c0_22 = arith.constant 0 : index
    %c0_23 = arith.constant 0 : index
    %c9_24 = arith.constant 9 : index
    %c0_25 = arith.constant 0 : index
    %18 = vector.load %arg9[%c0_22, %c0_23, %c9_24, %c0_25] : memref<2x10x10x128xf32, #tpu.memory_space<vmem>>, vector<2x10x1x128xf32>
    tpu.vector_store %arg9[%c0_22, %c0_23, %c9_24, %c0_25], %17 {strides = array<i32>} : memref<2x10x10x128xf32, #tpu.memory_space<vmem>>, vector<2x10x1x128xf32>,
    %c0_26 = arith.constant 0 : index
    %c1 = arith.constant 1 : index
    %c1_27 = arith.constant 1 : index
    %c0_28 = arith.constant 0 : index
    %19 = vector.load %arg9[%c0_26, %c1, %c1_27, %c0_28] : memref<2x10x10x128xf32, #tpu.memory_space<vmem>>, vector<2x8x8x128xf32>
    tpu.vector_store %arg9[%c0_26, %c1, %c1_27, %c0_28], %10 {strides = array<i32>} : memref<2x10x10x128xf32, #tpu.memory_space<vmem>>, vector<2x8x8x128xf32>,
    %c0_29 = arith.constant 0 : index
    %c0_30 = arith.constant 0 : index
    %c0_31 = arith.constant 0 : index
    %c0_32 = arith.constant 0 : index
    %20 = vector.load %arg9[%c0_29, %c0_30, %c0_31, %c0_32] : memref<2x10x10x128xf32, #tpu.memory_space<vmem>>, vector<2x8x8x128xf32>
    %21 = vector.shape_cast %20 : vector<2x8x8x128xf32> to vector<128x128xf32>
    %c0_33 = arith.constant 0 : index
    %c0_34 = arith.constant 0 : index
    %c1_35 = arith.constant 1 : index
    %c0_36 = arith.constant 0 : index
    %22 = vector.load %arg9[%c0_33, %c0_34, %c1_35, %c0_36] : memref<2x10x10x128xf32, #tpu.memory_space<vmem>>, vector<2x8x8x128xf32>
    %23 = vector.shape_cast %22 : vector<2x8x8x128xf32> to vector<128x128xf32>
    %c0_37 = arith.constant 0 : index
    %c0_38 = arith.constant 0 : index
    %c2 = arith.constant 2 : index
    %c0_39 = arith.constant 0 : index
    %24 = vector.load %arg9[%c0_37, %c0_38, %c2, %c0_39] : memref<2x10x10x128xf32, #tpu.memory_space<vmem>>, vector<2x8x8x128xf32>
    %25 = vector.shape_cast %24 : vector<2x8x8x128xf32> to vector<128x128xf32>
    %c0_40 = arith.constant 0 : index
    %c1_41 = arith.constant 1 : index
    %c0_42 = arith.constant 0 : index
    %c0_43 = arith.constant 0 : index
    %26 = vector.load %arg9[%c0_40, %c1_41, %c0_42, %c0_43] : memref<2x10x10x128xf32, #tpu.memory_space<vmem>>, vector<2x8x8x128xf32>
    %27 = vector.shape_cast %26 : vector<2x8x8x128xf32> to vector<128x128xf32>
    %c0_44 = arith.constant 0 : index
    %c1_45 = arith.constant 1 : index
    %c1_46 = arith.constant 1 : index
    %c0_47 = arith.constant 0 : index
    %28 = vector.load %arg9[%c0_44, %c1_45, %c1_46, %c0_47] : memref<2x10x10x128xf32, #tpu.memory_space<vmem>>, vector<2x8x8x128xf32>
    %29 = vector.shape_cast %28 : vector<2x8x8x128xf32> to vector<128x128xf32>
    %c0_48 = arith.constant 0 : index
    %c1_49 = arith.constant 1 : index
    %c2_50 = arith.constant 2 : index
    %c0_51 = arith.constant 0 : index
    %30 = vector.load %arg9[%c0_48, %c1_49, %c2_50, %c0_51] : memref<2x10x10x128xf32, #tpu.memory_space<vmem>>, vector<2x8x8x128xf32>
    %31 = vector.shape_cast %30 : vector<2x8x8x128xf32> to vector<128x128xf32>
    %c0_52 = arith.constant 0 : index
    %c2_53 = arith.constant 2 : index
    %c0_54 = arith.constant 0 : index
    %c0_55 = arith.constant 0 : index
    %32 = vector.load %arg9[%c0_52, %c2_53, %c0_54, %c0_55] : memref<2x10x10x128xf32, #tpu.memory_space<vmem>>, vector<2x8x8x128xf32>
    %33 = vector.shape_cast %32 : vector<2x8x8x128xf32> to vector<128x128xf32>
    %c0_56 = arith.constant 0 : index
    %c2_57 = arith.constant 2 : index
    %c1_58 = arith.constant 1 : index
    %c0_59 = arith.constant 0 : index
    %34 = vector.load %arg9[%c0_56, %c2_57, %c1_58, %c0_59] : memref<2x10x10x128xf32, #tpu.memory_space<vmem>>, vector<2x8x8x128xf32>
    %35 = vector.shape_cast %34 : vector<2x8x8x128xf32> to vector<128x128xf32>
    %c0_60 = arith.constant 0 : index
    %c2_61 = arith.constant 2 : index
    %c2_62 = arith.constant 2 : index
    %c0_63 = arith.constant 0 : index
    %36 = vector.load %arg9[%c0_60, %c2_61, %c2_62, %c0_63] : memref<2x10x10x128xf32, #tpu.memory_space<vmem>>, vector<2x8x8x128xf32>
    %37 = vector.shape_cast %36 : vector<2x8x8x128xf32> to vector<128x128xf32>
    %38 = tpu.concatenate %21, %23, %25, %27, %29, %31, %33, %35, %37 in 1 : vector<128x128xf32>, vector<128x128xf32>, vector<128x128xf32>, vector<128x128xf32>, vector<128x128xf32>, vector<128x128xf32>, vector<128x128xf32>, vector<128x128xf32>, vector<128x128xf32> -> vector<128x1152xf32>
    %39 = arith.truncf %38 : vector<128x1152xf32> to vector<128x1152xbf16>
    %c0_64 = arith.constant 0 : index
    %c0_65 = arith.constant 0 : index
    %40 = vector.load %arg4[%c0_64, %c0_65] : memref<1152x128xbf16, #tpu.memory_space<vmem>>, vector<1152x128xbf16>
    %cst_66 = arith.constant dense<0.000000e+00> : vector<128x128xf32>
    %41 = tpu.matmul %39, %40, %cst_66 {dimension_numbers = #tpu.dot_dimension_numbers<[1], [0], [0], [1], [0, 0, 1, 1], [], []>} : vector<128x1152xbf16>, vector<1152x128xbf16>, vector<128x128xf32> -> vector<128x128xf32>
    %c0_67 = arith.constant 0 : index
    %c0_68 = arith.constant 0 : index
    %42 = vector.load %arg5[%c0_67, %c0_68] : memref<1x128xf32, #tpu.memory_space<vmem>>, vector<1x128xf32>
    %43 = vector.broadcast %42 : vector<1x128xf32> to vector<128x128xf32>
    %44 = arith.mulf %41, %43 : vector<128x128xf32>
    %c0_69 = arith.constant 0 : index
    %c0_70 = arith.constant 0 : index
    %45 = vector.load %arg6[%c0_69, %c0_70] : memref<1x128xf32, #tpu.memory_space<vmem>>, vector<1x128xf32>
    %46 = vector.broadcast %45 : vector<1x128xf32> to vector<128x128xf32>
    %47 = arith.addf %44, %46 : vector<128x128xf32>
    %cst_71 = arith.constant 0.000000e+00 : f32
    %48 = vector.broadcast %cst_71 : f32 to vector<128x128xf32>
    %49 = arith.maximumf %47, %48 : vector<128x128xf32>
    %50 = vector.shape_cast %49 : vector<128x128xf32> to vector<2x8x8x128xf32>
    %cst_72 = arith.constant 0.000000e+00 : f32
    %51 = vector.broadcast %cst_72 : f32 to vector<2x1x10x128xf32>
    %c0_73 = arith.constant 0 : index
    %c0_74 = arith.constant 0 : index
    %c0_75 = arith.constant 0 : index
    %c0_76 = arith.constant 0 : index
    %52 = vector.load %arg10[%c0_73, %c0_74, %c0_75, %c0_76] : memref<2x10x10x128xf32, #tpu.memory_space<vmem>>, vector<2x1x10x128xf32>
    tpu.vector_store %arg10[%c0_73, %c0_74, %c0_75, %c0_76], %51 {strides = array<i32>} : memref<2x10x10x128xf32, #tpu.memory_space<vmem>>, vector<2x1x10x128xf32>,
    %cst_77 = arith.constant 0.000000e+00 : f32
    %53 = vector.broadcast %cst_77 : f32 to vector<2x1x10x128xf32>
    %c0_78 = arith.constant 0 : index
    %c9_79 = arith.constant 9 : index
    %c0_80 = arith.constant 0 : index
    %c0_81 = arith.constant 0 : index
    %54 = vector.load %arg10[%c0_78, %c9_79, %c0_80, %c0_81] : memref<2x10x10x128xf32, #tpu.memory_space<vmem>>, vector<2x1x10x128xf32>
    tpu.vector_store %arg10[%c0_78, %c9_79, %c0_80, %c0_81], %53 {strides = array<i32>} : memref<2x10x10x128xf32, #tpu.memory_space<vmem>>, vector<2x1x10x128xf32>,
    %cst_82 = arith.constant 0.000000e+00 : f32
    %55 = vector.broadcast %cst_82 : f32 to vector<2x10x1x128xf32>
    %c0_83 = arith.constant 0 : index
    %c0_84 = arith.constant 0 : index
    %c0_85 = arith.constant 0 : index
    %c0_86 = arith.constant 0 : index
    %56 = vector.load %arg10[%c0_83, %c0_84, %c0_85, %c0_86] : memref<2x10x10x128xf32, #tpu.memory_space<vmem>>, vector<2x10x1x128xf32>
    tpu.vector_store %arg10[%c0_83, %c0_84, %c0_85, %c0_86], %55 {strides = array<i32>} : memref<2x10x10x128xf32, #tpu.memory_space<vmem>>, vector<2x10x1x128xf32>,
    %cst_87 = arith.constant 0.000000e+00 : f32
    %57 = vector.broadcast %cst_87 : f32 to vector<2x10x1x128xf32>
    %c0_88 = arith.constant 0 : index
    %c0_89 = arith.constant 0 : index
    %c9_90 = arith.constant 9 : index
    %c0_91 = arith.constant 0 : index
    %58 = vector.load %arg10[%c0_88, %c0_89, %c9_90, %c0_91] : memref<2x10x10x128xf32, #tpu.memory_space<vmem>>, vector<2x10x1x128xf32>
    tpu.vector_store %arg10[%c0_88, %c0_89, %c9_90, %c0_91], %57 {strides = array<i32>} : memref<2x10x10x128xf32, #tpu.memory_space<vmem>>, vector<2x10x1x128xf32>,
    %c0_92 = arith.constant 0 : index
    %c1_93 = arith.constant 1 : index
    %c1_94 = arith.constant 1 : index
    %c0_95 = arith.constant 0 : index
    %59 = vector.load %arg10[%c0_92, %c1_93, %c1_94, %c0_95] : memref<2x10x10x128xf32, #tpu.memory_space<vmem>>, vector<2x8x8x128xf32>
    tpu.vector_store %arg10[%c0_92, %c1_93, %c1_94, %c0_95], %50 {strides = array<i32>} : memref<2x10x10x128xf32, #tpu.memory_space<vmem>>, vector<2x8x8x128xf32>,
    %c0_96 = arith.constant 0 : index
    %c0_97 = arith.constant 0 : index
    %c0_98 = arith.constant 0 : index
    %c0_99 = arith.constant 0 : index
    %60 = vector.load %arg10[%c0_96, %c0_97, %c0_98, %c0_99] : memref<2x10x10x128xf32, #tpu.memory_space<vmem>>, vector<2x8x8x128xf32>
    %61 = vector.shape_cast %60 : vector<2x8x8x128xf32> to vector<128x128xf32>
    %c0_100 = arith.constant 0 : index
    %c0_101 = arith.constant 0 : index
    %c1_102 = arith.constant 1 : index
    %c0_103 = arith.constant 0 : index
    %62 = vector.load %arg10[%c0_100, %c0_101, %c1_102, %c0_103] : memref<2x10x10x128xf32, #tpu.memory_space<vmem>>, vector<2x8x8x128xf32>
    %63 = vector.shape_cast %62 : vector<2x8x8x128xf32> to vector<128x128xf32>
    %c0_104 = arith.constant 0 : index
    %c0_105 = arith.constant 0 : index
    %c2_106 = arith.constant 2 : index
    %c0_107 = arith.constant 0 : index
    %64 = vector.load %arg10[%c0_104, %c0_105, %c2_106, %c0_107] : memref<2x10x10x128xf32, #tpu.memory_space<vmem>>, vector<2x8x8x128xf32>
    %65 = vector.shape_cast %64 : vector<2x8x8x128xf32> to vector<128x128xf32>
    %c0_108 = arith.constant 0 : index
    %c1_109 = arith.constant 1 : index
    %c0_110 = arith.constant 0 : index
    %c0_111 = arith.constant 0 : index
    %66 = vector.load %arg10[%c0_108, %c1_109, %c0_110, %c0_111] : memref<2x10x10x128xf32, #tpu.memory_space<vmem>>, vector<2x8x8x128xf32>
    %67 = vector.shape_cast %66 : vector<2x8x8x128xf32> to vector<128x128xf32>
    %c0_112 = arith.constant 0 : index
    %c1_113 = arith.constant 1 : index
    %c1_114 = arith.constant 1 : index
    %c0_115 = arith.constant 0 : index
    %68 = vector.load %arg10[%c0_112, %c1_113, %c1_114, %c0_115] : memref<2x10x10x128xf32, #tpu.memory_space<vmem>>, vector<2x8x8x128xf32>
    %69 = vector.shape_cast %68 : vector<2x8x8x128xf32> to vector<128x128xf32>
    %c0_116 = arith.constant 0 : index
    %c1_117 = arith.constant 1 : index
    %c2_118 = arith.constant 2 : index
    %c0_119 = arith.constant 0 : index
    %70 = vector.load %arg10[%c0_116, %c1_117, %c2_118, %c0_119] : memref<2x10x10x128xf32, #tpu.memory_space<vmem>>, vector<2x8x8x128xf32>
    %71 = vector.shape_cast %70 : vector<2x8x8x128xf32> to vector<128x128xf32>
    %c0_120 = arith.constant 0 : index
    %c2_121 = arith.constant 2 : index
    %c0_122 = arith.constant 0 : index
    %c0_123 = arith.constant 0 : index
    %72 = vector.load %arg10[%c0_120, %c2_121, %c0_122, %c0_123] : memref<2x10x10x128xf32, #tpu.memory_space<vmem>>, vector<2x8x8x128xf32>
    %73 = vector.shape_cast %72 : vector<2x8x8x128xf32> to vector<128x128xf32>
    %c0_124 = arith.constant 0 : index
    %c2_125 = arith.constant 2 : index
    %c1_126 = arith.constant 1 : index
    %c0_127 = arith.constant 0 : index
    %74 = vector.load %arg10[%c0_124, %c2_125, %c1_126, %c0_127] : memref<2x10x10x128xf32, #tpu.memory_space<vmem>>, vector<2x8x8x128xf32>
    %75 = vector.shape_cast %74 : vector<2x8x8x128xf32> to vector<128x128xf32>
    %c0_128 = arith.constant 0 : index
    %c2_129 = arith.constant 2 : index
    %c2_130 = arith.constant 2 : index
    %c0_131 = arith.constant 0 : index
    %76 = vector.load %arg10[%c0_128, %c2_129, %c2_130, %c0_131] : memref<2x10x10x128xf32, #tpu.memory_space<vmem>>, vector<2x8x8x128xf32>
    %77 = vector.shape_cast %76 : vector<2x8x8x128xf32> to vector<128x128xf32>
    %78 = tpu.concatenate %61, %63, %65, %67, %69, %71, %73, %75, %77 in 1 : vector<128x128xf32>, vector<128x128xf32>, vector<128x128xf32>, vector<128x128xf32>, vector<128x128xf32>, vector<128x128xf32>, vector<128x128xf32>, vector<128x128xf32>, vector<128x128xf32> -> vector<128x1152xf32>
    %79 = arith.truncf %78 : vector<128x1152xf32> to vector<128x1152xbf16>
    %c0_132 = arith.constant 0 : index
    %c0_133 = arith.constant 0 : index
    %80 = vector.load %arg7[%c0_132, %c0_133] : memref<1152x128xbf16, #tpu.memory_space<vmem>>, vector<1152x128xbf16>
    %cst_134 = arith.constant dense<0.000000e+00> : vector<128x128xf32>
    %81 = tpu.matmul %79, %80, %cst_134 {dimension_numbers = #tpu.dot_dimension_numbers<[1], [0], [0], [1], [0, 0, 1, 1], [], []>} : vector<128x1152xbf16>, vector<1152x128xbf16>, vector<128x128xf32> -> vector<128x128xf32>
    %82 = arith.addf %1, %81 : vector<128x128xf32>
    %83 = vector.shape_cast %82 : vector<128x128xf32> to vector<2x8x8x128xf32>
    %c0_135 = arith.constant 0 : index
    %c0_136 = arith.constant 0 : index
    %c0_137 = arith.constant 0 : index
    %c0_138 = arith.constant 0 : index
    %84 = vector.load %arg8[%c0_135, %c0_136, %c0_137, %c0_138] : memref<2x8x8x128xf32, #tpu.memory_space<vmem>>, vector<2x8x8x128xf32>
    tpu.vector_store %arg8[%c0_135, %c0_136, %c0_137, %c0_138], %83 {strides = array<i32>} : memref<2x8x8x128xf32, #tpu.memory_space<vmem>>, vector<2x8x8x128xf32>,
    return
  }
  func.func @transform_0(%arg0: i32) -> (i32, i32, i32, i32) {
    %c0_i32 = arith.constant 0 : i32
    %c0_i32_0 = arith.constant 0 : i32
    %c0_i32_1 = arith.constant 0 : i32
    %c0_i32_2 = arith.constant 0 : i32
    return %arg0, %c0_i32, %c0_i32_0, %c0_i32_1 : i32, i32, i32, i32
  }
  func.func @transform_1(%arg0: i32) -> (i32, i32) {
    %c0_i32 = arith.constant 0 : i32
    %c0_i32_0 = arith.constant 0 : i32
    %c0_i32_1 = arith.constant 0 : i32
    return %c0_i32, %c0_i32_0 : i32, i32
  }
  func.func @transform_2(%arg0: i32) -> (i32, i32) {
    %c0_i32 = arith.constant 0 : i32
    %c0_i32_0 = arith.constant 0 : i32
    %c0_i32_1 = arith.constant 0 : i32
    return %c0_i32, %c0_i32_0 : i32, i32
  }
  func.func @transform_3(%arg0: i32) -> (i32, i32) {
    %c0_i32 = arith.constant 0 : i32
    %c0_i32_0 = arith.constant 0 : i32
    %c0_i32_1 = arith.constant 0 : i32
    return %c0_i32, %c0_i32_0 : i32, i32
  }
  func.func @transform_4(%arg0: i32) -> (i32, i32) {
    %c0_i32 = arith.constant 0 : i32
    %c0_i32_0 = arith.constant 0 : i32
    %c0_i32_1 = arith.constant 0 : i32
    return %c0_i32, %c0_i32_0 : i32, i32
  }
  func.func @transform_5(%arg0: i32) -> (i32, i32) {
    %c0_i32 = arith.constant 0 : i32
    %c0_i32_0 = arith.constant 0 : i32
    %c0_i32_1 = arith.constant 0 : i32
    return %c0_i32, %c0_i32_0 : i32, i32
  }
  func.func @transform_6(%arg0: i32) -> (i32, i32) {
    %c0_i32 = arith.constant 0 : i32
    %c0_i32_0 = arith.constant 0 : i32
    %c0_i32_1 = arith.constant 0 : i32
    return %c0_i32, %c0_i32_0 : i32, i32
  }
  func.func @transform_7(%arg0: i32) -> (i32, i32, i32, i32) {
    %c0_i32 = arith.constant 0 : i32
    %c0_i32_0 = arith.constant 0 : i32
    %c0_i32_1 = arith.constant 0 : i32
    %c0_i32_2 = arith.constant 0 : i32
    return %arg0, %c0_i32, %c0_i32_0, %c0_i32_1 : i32, i32, i32, i32
  }
}

</mosaic_0001>

<llo_original>
// kernel: _lambda_.3
$region0: #{_lambda_.3}
  #allocation0 [shape = 'u32[]', space=smem, size = 0x4, offset = 0x4, fixed_abs, tag = 'smem constant byte address 0x4 - core index']
  #allocation1 [shape = 'u32[144,128]{1,0:T(1,128)}', space=vmem, size = 0x12000, scoped, tag = 'internal scratch']
  #allocation2 [shape = 'f32[2,10,10,128]{3,2,1,0:T(8,128)}', space=vmem, size = 0x28000, scoped, tag = 'scratch operand']
  #allocation3 [shape = 'f32[2,10,10,128]{3,2,1,0:T(8,128)}', space=vmem, size = 0x28000, scoped, tag = 'scratch operand']
  %s0 = inlined_call_operand.vmem [shape: f32[8,8,8,128], index: 0, kind: input, shape index: {}]
  %s1 = inlined_call_operand.vmem [shape: f32[1,128], index: 1, kind: input, shape index: {}]
  %s2 = inlined_call_operand.vmem [shape: f32[1,128], index: 2, kind: input, shape index: {}]
  %s3 = inlined_call_operand.vmem [shape: bf16[1152,128], index: 3, kind: input, shape index: {}]
  %s4 = inlined_call_operand.vmem [shape: f32[1,128], index: 4, kind: input, shape index: {}]
  %s5 = inlined_call_operand.vmem [shape: f32[1,128], index: 5, kind: input, shape index: {}]
  %s6 = inlined_call_operand.vmem [shape: bf16[1152,128], index: 6, kind: input, shape index: {}]
  %s7 = inlined_call_operand.vmem [shape: f32[8,8,8,128], index: 7, kind: output, shape index: {}]
  %s8 = sld [smem:[#allocation0]]
  $region61: #{_lambda_.3} parent=0
    _
  %s10 = ssub.s32 1, %s8
  %s11 = scalar_select 0, %s10, %s8
  loop: start=0, step=1, limit=6
  $region2: #{_lambda_.3} parent=0 // loop_pre_header
    _
  $region3: #{_lambda_.3} parent=0 // loop_header
    %s13 = sphi 0, %s17
    %p14 = scmp.ge.s32.totalorder %s13, 6
    %s23 = sphi 0, %s25
    %s26 = sphi 0, %s23
    %s27 = sphi 0, %s26
    %s43 = sphi 0, %s27
    %s47 = sphi 0, %s47
    %s49 = sphi 0, %s47
    %s50 = sphi 0, %s49
    %s64 = sphi 0, %s50
    %s68 = sphi 0, %s68
    %s70 = sphi 0, %s68
    %s71 = sphi 0, %s70
    %s85 = sphi 0, %s71
    %s89 = sphi 0, %s89
    %s91 = sphi 0, %s89
    %s92 = sphi 0, %s91
    %s106 = sphi 0, %s92
    %s110 = sphi 0, %s110
    %s112 = sphi 0, %s110
    %s113 = sphi 0, %s112
    %s127 = sphi 0, %s113
    %s131 = sphi 0, %s131
    %s133 = sphi 0, %s131
    %s134 = sphi 0, %s133
    %s148 = sphi 0, %s134
    %s152 = sphi 0, %s152
    %s154 = sphi 0, %s152
    %s155 = sphi 0, %s154
    %s169 = sphi 0, %s155
    %s175 = sphi 0, %s177
    %s178 = sphi 0, %s175
    %s179 = sphi 0, %s178
    %s195 = sphi 0, %s179
  $region4: #{_lambda_.3} parent=0 // loop_header_branch
    %16 = sbr.rel (%p14) target = $region8
  $region5: #{_lambda_.3} parent=0 // loop_body
    %s18 = ssub.s32 %s13, 1
    %s19 = ssub.s32 %s13, 2
    %s20 = sadd.s32 %s13, 1
    %s21 = ssub.s32 %s13, %s20
    %p22 = scmp.eq.s32.totalorder %s21, 0
    %s24 = sadd.s32 %s23, 1
    %s25 = scalar_select %p22, %s23, %s24
    %p28 = pneg %p22
    %p29 = scmp.eq.s32.totalorder %s13, 3
    %p30 = por %p28, %p29
    %p31 = scmp.ne.s32.totalorder %s23, %s26
    %p32 = scmp.eq.s32.totalorder %s13, 0
    %p33 = por %p31, %p32
    %p34 = scmp.ne.s32.totalorder %s23, %s26
    %p35 = scmp.eq.s32.totalorder %s18, 3
    %p36 = por %p34, %p35
    %p37 = scmp.ne.s32.totalorder %s26, %s27
    %p38 = scmp.eq.s32.totalorder %s18, 0
    %p39 = por %p37, %p38
    %p40 = scmp.ne.s32.totalorder %s26, %s27
    %p41 = scmp.eq.s32.totalorder %s19, 3
    %p42 = por %p40, %p41
    %p44 = scmp.ne.s32.totalorder %s27, %s43
    %p45 = scmp.eq.s32.totalorder %s19, 0
    %p46 = por %p44, %p45
    %s48 = sadd.s32 %s47, 1
    %p51 = scmp.eq.s32.totalorder %s13, 3
    %p52 = scmp.ne.s32.totalorder %s47, %s49
    %p53 = scmp.eq.s32.totalorder %s13, 0
    %p54 = por %p52, %p53
    %p55 = scmp.ne.s32.totalorder %s47, %s49
    %p56 = scmp.eq.s32.totalorder %s18, 3
    %p57 = por %p55, %p56
    %p58 = scmp.ne.s32.totalorder %s49, %s50
    %p59 = scmp.eq.s32.totalorder %s18, 0
    %p60 = por %p58, %p59
    %p61 = scmp.ne.s32.totalorder %s49, %s50
    %p62 = scmp.eq.s32.totalorder %s19, 3
    %p63 = por %p61, %p62
    %p65 = scmp.ne.s32.totalorder %s50, %s64
    %p66 = scmp.eq.s32.totalorder %s19, 0
    %p67 = por %p65, %p66
    %s69 = sadd.s32 %s68, 1
    %p72 = scmp.eq.s32.totalorder %s13, 3
    %p73 = scmp.ne.s32.totalorder %s68, %s70
    %p74 = scmp.eq.s32.totalorder %s13, 0
    %p75 = por %p73, %p74
    %p76 = scmp.ne.s32.totalorder %s68, %s70
    %p77 = scmp.eq.s32.totalorder %s18, 3
    %p78 = por %p76, %p77
    %p79 = scmp.ne.s32.totalorder %s70, %s71
    %p80 = scmp.eq.s32.totalorder %s18, 0
    %p81 = por %p79, %p80
    %p82 = scmp.ne.s32.totalorder %s70, %s71
    %p83 = scmp.eq.s32.totalorder %s19, 3
    %p84 = por %p82, %p83
    %p86 = scmp.ne.s32.totalorder %s71, %s85
    %p87 = scmp.eq.s32.totalorder %s19, 0
    %p88 = por %p86, %p87
    %s90 = sadd.s32 %s89, 1
    %p93 = scmp.eq.s32.totalorder %s13, 3
    %p94 = scmp.ne.s32.totalorder %s89, %s91
    %p95 = scmp.eq.s32.totalorder %s13, 0
    %p96 = por %p94, %p95
    %p97 = scmp.ne.s32.totalorder %s89, %s91
    %p98 = scmp.eq.s32.totalorder %s18, 3
    %p99 = por %p97, %p98
    %p100 = scmp.ne.s32.totalorder %s91, %s92
    %p101 = scmp.eq.s32.totalorder %s18, 0
    %p102 = por %p100, %p101
    %p103 = scmp.ne.s32.totalorder %s91, %s92
    %p104 = scmp.eq.s32.totalorder %s19, 3
    %p105 = por %p103, %p104
    %p107 = scmp.ne.s32.totalorder %s92, %s106
    %p108 = scmp.eq.s32.totalorder %s19, 0
    %p109 = por %p107, %p108
    %s111 = sadd.s32 %s110, 1
    %p114 = scmp.eq.s32.totalorder %s13, 3
    %p115 = scmp.ne.s32.totalorder %s110, %s112
    %p116 = scmp.eq.s32.totalorder %s13, 0
    %p117 = por %p115, %p116
    %p118 = scmp.ne.s32.totalorder %s110, %s112
    %p119 = scmp.eq.s32.totalorder %s18, 3
    %p120 = por %p118, %p119
    %p121 = scmp.ne.s32.totalorder %s112, %s113
    %p122 = scmp.eq.s32.totalorder %s18, 0
    %p123 = por %p121, %p122
    %p124 = scmp.ne.s32.totalorder %s112, %s113
    %p125 = scmp.eq.s32.totalorder %s19, 3
    %p126 = por %p124, %p125
    %p128 = scmp.ne.s32.totalorder %s113, %s127
    %p129 = scmp.eq.s32.totalorder %s19, 0
    %p130 = por %p128, %p129
    %s132 = sadd.s32 %s131, 1
    %p135 = scmp.eq.s32.totalorder %s13, 3
    %p136 = scmp.ne.s32.totalorder %s131, %s133
    %p137 = scmp.eq.s32.totalorder %s13, 0
    %p138 = por %p136, %p137
    %p139 = scmp.ne.s32.totalorder %s131, %s133
    %p140 = scmp.eq.s32.totalorder %s18, 3
    %p141 = por %p139, %p140
    %p142 = scmp.ne.s32.totalorder %s133, %s134
    %p143 = scmp.eq.s32.totalorder %s18, 0
    %p144 = por %p142, %p143
    %p145 = scmp.ne.s32.totalorder %s133, %s134
    %p146 = scmp.eq.s32.totalorder %s19, 3
    %p147 = por %p145, %p146
    %p149 = scmp.ne.s32.totalorder %s134, %s148
    %p150 = scmp.eq.s32.totalorder %s19, 0
    %p151 = por %p149, %p150
    %s153 = sadd.s32 %s152, 1
    %p156 = scmp.eq.s32.totalorder %s13, 3
    %p157 = scmp.ne.s32.totalorder %s152, %s154
    %p158 = scmp.eq.s32.totalorder %s13, 0
    %p159 = por %p157, %p158
    %p160 = scmp.ne.s32.totalorder %s152, %s154
    %p161 = scmp.eq.s32.totalorder %s18, 3
    %p162 = por %p160, %p161
    %p163 = scmp.ne.s32.totalorder %s154, %s155
    %p164 = scmp.eq.s32.totalorder %s18, 0
    %p165 = por %p163, %p164
    %p166 = scmp.ne.s32.totalorder %s154, %s155
    %p167 = scmp.eq.s32.totalorder %s19, 3
    %p168 = por %p166, %p167
    %p170 = scmp.ne.s32.totalorder %s155, %s169
    %p171 = scmp.eq.s32.totalorder %s19, 0
    %p172 = por %p170, %p171
    %s173 = ssub.s32 %s13, %s20
    %p174 = scmp.eq.s32.totalorder %s173, 0
    %s176 = sadd.s32 %s175, 1
    %s177 = scalar_select %p174, %s175, %s176
    %p180 = pneg %p174
    %p181 = scmp.eq.s32.totalorder %s13, 3
    %p182 = por %p180, %p181
    %p183 = scmp.ne.s32.totalorder %s175, %s178
    %p184 = scmp.eq.s32.totalorder %s13, 0
    %p185 = por %p183, %p184
    %p186 = scmp.ne.s32.totalorder %s175, %s178
    %p187 = scmp.eq.s32.totalorder %s18, 3
    %p188 = por %p186, %p187
    %p189 = scmp.ne.s32.totalorder %s178, %s179
    %p190 = scmp.eq.s32.totalorder %s18, 0
    %p191 = por %p189, %p190
    %p192 = scmp.ne.s32.totalorder %s178, %s179
    %p193 = scmp.eq.s32.totalorder %s19, 3
    %p194 = por %p192, %p193
    %p196 = scmp.ne.s32.totalorder %s179, %s195
    %p197 = scmp.eq.s32.totalorder %s19, 0
    %p198 = por %p196, %p197
    %p199 = scmp.le.s32.totalorder 1, %s13
    %p200 = scmp.lt.s32.totalorder %s13, 5
    %p201 = pnand %p199, %p200
    %p202 = pneg %p201
    // Predicated region
    $region9: #{_lambda_.3} parent=5 // pred_check
      _
    $region10: #{_lambda_.3} parent=5 // pred_check_branch
      %204 = sbr.rel (%p201) target = $region12
    $region11: #{_lambda_.3} parent=5 // pred_region
      %s205 = ssub.s32 %s13, 1
      // Predicated region
      $region13: #{_lambda_.3} parent=11 // pred_check
        %p206 = pneg %p60
      $region14: #{_lambda_.3} parent=11 // pred_check_branch
        %208 = sbr.rel (%p206) target = $region16
      $region15: #{_lambda_.3} parent=11 // pred_region
        _
      $region16: #{_lambda_.3} parent=11 // pred_fallthru
        _
      // Predicated region
      $region17: #{_lambda_.3} parent=11 // pred_check
        %p209 = pneg %p81
      $region18: #{_lambda_.3} parent=11 // pred_check_branch
        %211 = sbr.rel (%p209) target = $region20
      $region19: #{_lambda_.3} parent=11 // pred_region
        _
      $region20: #{_lambda_.3} parent=11 // pred_fallthru
        _
      // Predicated region
      $region21: #{_lambda_.3} parent=11 // pred_check
        %p212 = pneg %p102
      $region22: #{_lambda_.3} parent=11 // pred_check_branch
        %214 = sbr.rel (%p212) target = $region24
      $region23: #{_lambda_.3} parent=11 // pred_region
        _
      $region24: #{_lambda_.3} parent=11 // pred_fallthru
        _
      // Predicated region
      $region25: #{_lambda_.3} parent=11 // pred_check
        %p215 = pneg %p123
      $region26: #{_lambda_.3} parent=11 // pred_check_branch
        %217 = sbr.rel (%p215) target = $region28
      $region27: #{_lambda_.3} parent=11 // pred_region
        _
      $region28: #{_lambda_.3} parent=11 // pred_fallthru
        _
      // Predicated region
      $region29: #{_lambda_.3} parent=11 // pred_check
        %p218 = pneg %p144
      $region30: #{_lambda_.3} parent=11 // pred_check_branch
        %220 = sbr.rel (%p218) target = $region32
      $region31: #{_lambda_.3} parent=11 // pred_region
        _
      $region32: #{_lambda_.3} parent=11 // pred_fallthru
        _
      // Predicated region
      $region33: #{_lambda_.3} parent=11 // pred_check
        %p221 = pneg %p165
      $region34: #{_lambda_.3} parent=11 // pred_check_branch
        %223 = sbr.rel (%p221) target = $region36
      $region35: #{_lambda_.3} parent=11 // pred_region
        _
      $region36: #{_lambda_.3} parent=11 // pred_fallthru
        _
    $region12: #{_lambda_.3} parent=5 // pred_fallthru
      _
    %p224 = scmp.lt.s32.totalorder %s13, 4
    // Predicated region
    $region37: #{_lambda_.3} parent=5 // pred_check
      %p225 = pneg %p224
    $region38: #{_lambda_.3} parent=5 // pred_check_branch
      %227 = sbr.rel (%p225) target = $region40
    $region39: #{_lambda_.3} parent=5 // pred_region
      // Predicated region
      $region41: #{_lambda_.3} parent=39 // pred_check
        %p228 = pneg %p33
      $region42: #{_lambda_.3} parent=39 // pred_check_branch
        %230 = sbr.rel (%p228) target = $region44
      $region43: #{_lambda_.3} parent=39 // pred_region
        %s231 = smul.u32 2, %s13
        %p232 = scmp.lt.s32.totalorder %s231, 7
        %s233 = scalar_select %p232, %s231, 7
        %s234 = smul.addr %s233, 8
        %s235 = smul.addr %s234, 8
        %s236 = scalar_lea.vmem %s0, %s235
        %s237 = smul.u32 2, %s13
      $region44: #{_lambda_.3} parent=39 // pred_fallthru
        _
    $region40: #{_lambda_.3} parent=5 // pred_fallthru
      _
    %p238 = scmp.le.s32.totalorder 1, %s13
    %p239 = scmp.lt.s32.totalorder %s13, 5
    %p240 = pnand %p238, %p239
    %p241 = pneg %p240
    // Predicated region
    $region45: #{_lambda_.3} parent=5 // pred_check
      _
    $region46: #{_lambda_.3} parent=5 // pred_check_branch
      %243 = sbr.rel (%p240) target = $region48
    $region47: #{_lambda_.3} parent=5 // pred_region
      %s244 = ssub.s32 %s13, 1
      %s245 = smul.u32 2, %s18
      %p246 = scmp.lt.s32.totalorder %s245, 7
      %s247 = scalar_select %p246, %s245, 7
      %s248 = smul.addr %s247, 8
      %s249 = smul.addr %s248, 8
      %s250 = scalar_lea.vmem %s0, %s249
      %p251 = pneg %p39
      %p252 = pneg %p36
      %p253 = pneg %p60
      %p254 = pneg %p57
      %p255 = pneg %p81
      %p256 = pneg %p78
      %p257 = pneg %p102
      %p258 = pneg %p99
      %p259 = pneg %p123
      %p260 = pneg %p120
      %p261 = pneg %p144
      %p262 = pneg %p141
      %p263 = pneg %p165
      %p264 = pneg %p162
      %p265 = pneg %p191
      %p266 = pneg %p188
      %s267 = smul.u32 2, %s18
      %p268 = scmp.lt.s32.totalorder %s267, 7
      %s269 = scalar_select %p268, %s267, 7
      %s270 = smul.addr %s269, 8
      %s271 = smul.addr %s270, 8
      %s272 = scalar_lea.vmem %s7, %s271
      %s273 = smul.u32 2, %s18
      %p274 = scmp.lt.s32.totalorder %s273, 7
      %s275 = scalar_select %p274, %s273, 7
      %s276 = smul.addr %s275, 8
      %s277 = smul.addr %s276, 8
      %s278 = scalar_lea.vmem %s0, %s277
      %s279 = smul.u32 2, %s18
      %s280 = smul.u32 2, %s18
      %p281 = scmp.lt.s32.totalorder %s280, 7
      %s282 = scalar_select %p281, %s280, 7
      %s283 = smul.addr %s282, 8
      %s284 = smul.addr %s283, 8
      %s285 = scalar_lea.vmem %s7, %s284
      %s286 = smul.u32 2, %s18
      %v288 = vld [vmem:[%s278] sm:$0xff]
      %v289 = vld [vmem:[%s278 + $0x8] sm:$0xff]
      %v290 = vld [vmem:[%s278 + $0x10] sm:$0xff]
      %v291 = vld [vmem:[%s278 + $0x18] sm:$0xff]
      %v292 = vld [vmem:[%s278 + $0x20] sm:$0xff]
      %v293 = vld [vmem:[%s278 + $0x28] sm:$0xff]
      %v294 = vld [vmem:[%s278 + $0x30] sm:$0xff]
      %v295 = vld [vmem:[%s278 + $0x38] sm:$0xff]
      %v296 = vld [vmem:[%s278 + $0x40] sm:$0xff]
      %v297 = vld [vmem:[%s278 + $0x48] sm:$0xff]
      %v298 = vld [vmem:[%s278 + $0x50] sm:$0xff]
      %v299 = vld [vmem:[%s278 + $0x58] sm:$0xff]
      %v300 = vld [vmem:[%s278 + $0x60] sm:$0xff]
      %v301 = vld [vmem:[%s278 + $0x68] sm:$0xff]
      %v302 = vld [vmem:[%s278 + $0x70] sm:$0xff]
      %v303 = vld [vmem:[%s278 + $0x78] sm:$0xff]
      %v304 = vld [vmem:[%s1] sm:$0x1]
      %v306 = vlaneseq
      %v307 = vshrl.u32 %v306, 7
      %v308 = vsub.s32 0, %v307
      %v309 = vrot.slane %v304, %v308
      %v311 = vmul.f32 %v288, %v309
      %v312 = vmul.f32 %v289, %v309
      %v313 = vmul.f32 %v290, %v309
      %v314 = vmul.f32 %v291, %v309
      %v315 = vmul.f32 %v292, %v309
      %v316 = vmul.f32 %v293, %v309
      %v317 = vmul.f32 %v294, %v309
      %v318 = vmul.f32 %v295, %v309
      %v319 = vmul.f32 %v296, %v309
      %v320 = vmul.f32 %v297, %v309
      %v321 = vmul.f32 %v298, %v309
      %v322 = vmul.f32 %v299, %v309
      %v323 = vmul.f32 %v300, %v309
      %v324 = vmul.f32 %v301, %v309
      %v325 = vmul.f32 %v302, %v309
      %v326 = vmul.f32 %v303, %v309
      %v327 = vld [vmem:[%s2] sm:$0x1]
      %v329 = vlaneseq
      %v330 = vshrl.u32 %v329, 7
      %v331 = vsub.s32 0, %v330
      %v332 = vrot.slane %v327, %v331
      %v334 = vadd.f32 %v311, %v332
      %v335 = vadd.f32 %v312, %v332
      %v336 = vadd.f32 %v313, %v332
      %v337 = vadd.f32 %v314, %v332
      %v338 = vadd.f32 %v315, %v332
      %v339 = vadd.f32 %v316, %v332
      %v340 = vadd.f32 %v317, %v332
      %v341 = vadd.f32 %v318, %v332
      %v342 = vadd.f32 %v319, %v332
      %v343 = vadd.f32 %v320, %v332
      %v344 = vadd.f32 %v321, %v332
      %v345 = vadd.f32 %v322, %v332
      %v346 = vadd.f32 %v323, %v332
      %v347 = vadd.f32 %v324, %v332
      %v348 = vadd.f32 %v325, %v332
      %v349 = vadd.f32 %v326, %v332
      %v350 = vmax.f32 %v334, 0.0
      %v351 = vmax.f32 %v335, 0.0
      %v352 = vmax.f32 %v336, 0.0
      %v353 = vmax.f32 %v337, 0.0
      %v354 = vmax.f32 %v338, 0.0
      %v355 = vmax.f32 %v339, 0.0
      %v356 = vmax.f32 %v340, 0.0
      %v357 = vmax.f32 %v341, 0.0
      %v358 = vmax.f32 %v342, 0.0
      %v359 = vmax.f32 %v343, 0.0
      %v360 = vmax.f32 %v344, 0.0
      %v361 = vmax.f32 %v345, 0.0
      %v362 = vmax.f32 %v346, 0.0
      %v363 = vmax.f32 %v347, 0.0
      %v364 = vmax.f32 %v348, 0.0
      %v365 = vmax.f32 %v349, 0.0
      %366 = vst [vmem:[#allocation2] sm:$0xff] 0.0
      %367 = vst [vmem:[#allocation2 + $0x8] sm:$0x3] 0.0
      %368 = vst [vmem:[#allocation2 + $0xa0] sm:$0xff] 0.0
      %369 = vst [vmem:[#allocation2 + $0xa8] sm:$0x3] 0.0
      %s370 = scalar_lea.vmem [#allocation2], 144
      %371 = vst [vmem:[%s370] sm:$0xff] 0.0
      %372 = vst [vmem:[%s370 + $0x8] sm:$0x3] 0.0
      %373 = vst [vmem:[%s370 + $0xa0] sm:$0xff] 0.0
      %374 = vst [vmem:[%s370 + $0xa8] sm:$0x3] 0.0
      %375 = vst [vmem:[#allocation2] sm:$0x1] 0.0
      %376 = vst [vmem:[#allocation2 + $0x10] sm:$0x1] 0.0
      %377 = vst [vmem:[#allocation2 + $0x20] sm:$0x1] 0.0
      %378 = vst [vmem:[#allocation2 + $0x30] sm:$0x1] 0.0
      %379 = vst [vmem:[#allocation2 + $0x40] sm:$0x1] 0.0
      %380 = vst [vmem:[#allocation2 + $0x50] sm:$0x1] 0.0
      %381 = vst [vmem:[#allocation2 + $0x60] sm:$0x1] 0.0
      %382 = vst [vmem:[#allocation2 + $0x70] sm:$0x1] 0.0
      %383 = vst [vmem:[#allocation2 + $0x80] sm:$0x1] 0.0
      %384 = vst [vmem:[#allocation2 + $0x90] sm:$0x1] 0.0
      %385 = vst [vmem:[#allocation2 + $0xa0] sm:$0x1] 0.0
      %386 = vst [vmem:[#allocation2 + $0xb0] sm:$0x1] 0.0
      %387 = vst [vmem:[#allocation2 + $0xc0] sm:$0x1] 0.0
      %388 = vst [vmem:[#allocation2 + $0xd0] sm:$0x1] 0.0
      %389 = vst [vmem:[#allocation2 + $0xe0] sm:$0x1] 0.0
      %390 = vst [vmem:[#allocation2 + $0xf0] sm:$0x1] 0.0
      %391 = vst [vmem:[#allocation2 + $0x100] sm:$0x1] 0.0
      %392 = vst [vmem:[#allocation2 + $0x110] sm:$0x1] 0.0
      %393 = vst [vmem:[#allocation2 + $0x120] sm:$0x1] 0.0
      %394 = vst [vmem:[#allocation2 + $0x130] sm:$0x1] 0.0
      %395 = vst [vmem:[#allocation2 + $0x9] sm:$0x1] 0.0
      %396 = vst [vmem:[#allocation2 + $0x19] sm:$0x1] 0.0
      %397 = vst [vmem:[#allocation2 + $0x29] sm:$0x1] 0.0
      %398 = vst [vmem:[#allocation2 + $0x39] sm:$0x1] 0.0
      %399 = vst [vmem:[#allocation2 + $0x49] sm:$0x1] 0.0
      %400 = vst [vmem:[#allocation2 + $0x59] sm:$0x1] 0.0
      %401 = vst [vmem:[#allocation2 + $0x69] sm:$0x1] 0.0
      %402 = vst [vmem:[#allocation2 + $0x79] sm:$0x1] 0.0
      %403 = vst [vmem:[#allocation2 + $0x89] sm:$0x1] 0.0
      %404 = vst [vmem:[#allocation2 + $0x99] sm:$0x1] 0.0
      %405 = vst [vmem:[#allocation2 + $0xa9] sm:$0x1] 0.0
      %406 = vst [vmem:[#allocation2 + $0xb9] sm:$0x1] 0.0
      %407 = vst [vmem:[#allocation2 + $0xc9] sm:$0x1] 0.0
      %408 = vst [vmem:[#allocation2 + $0xd9] sm:$0x1] 0.0
      %409 = vst [vmem:[#allocation2 + $0xe9] sm:$0x1] 0.0
      %410 = vst [vmem:[#allocation2 + $0xf9] sm:$0x1] 0.0
      %411 = vst [vmem:[#allocation2 + $0x109] sm:$0x1] 0.0
      %412 = vst [vmem:[#allocation2 + $0x119] sm:$0x1] 0.0
      %413 = vst [vmem:[#allocation2 + $0x129] sm:$0x1] 0.0
      %414 = vst [vmem:[#allocation2 + $0x139] sm:$0x1] 0.0
      %s415 = scalar_lea.vmem [#allocation2], 16
      %416 = vst [vmem:[%s415 + $0x1] sm:$0xff] %v350
      %417 = vst [vmem:[%s415 + $0x11] sm:$0xff] %v351
      %418 = vst [vmem:[%s415 + $0x21] sm:$0xff] %v352
      %419 = vst [vmem:[%s415 + $0x31] sm:$0xff] %v353
      %420 = vst [vmem:[%s415 + $0x41] sm:$0xff] %v354
      %421 = vst [vmem:[%s415 + $0x51] sm:$0xff] %v355
      %422 = vst [vmem:[%s415 + $0x61] sm:$0xff] %v356
      %423 = vst [vmem:[%s415 + $0x71] sm:$0xff] %v357
      %424 = vst [vmem:[%s415 + $0xa1] sm:$0xff] %v358
      %425 = vst [vmem:[%s415 + $0xb1] sm:$0xff] %v359
      %426 = vst [vmem:[%s415 + $0xc1] sm:$0xff] %v360
      %427 = vst [vmem:[%s415 + $0xd1] sm:$0xff] %v361
      %428 = vst [vmem:[%s415 + $0xe1] sm:$0xff] %v362
      %429 = vst [vmem:[%s415 + $0xf1] sm:$0xff] %v363
      %430 = vst [vmem:[%s415 + $0x101] sm:$0xff] %v364
      %431 = vst [vmem:[%s415 + $0x111] sm:$0xff] %v365
      %v432 = vld [vmem:[#allocation2] sm:$0xff]
      %v433 = vld [vmem:[#allocation2 + $0x10] sm:$0xff]
      %v434 = vld [vmem:[#allocation2 + $0x20] sm:$0xff]
      %v435 = vld [vmem:[#allocation2 + $0x30] sm:$0xff]
      %v436 = vld [vmem:[#allocation2 + $0x40] sm:$0xff]
      %v437 = vld [vmem:[#allocation2 + $0x50] sm:$0xff]
      %v438 = vld [vmem:[#allocation2 + $0x60] sm:$0xff]
      %v439 = vld [vmem:[#allocation2 + $0x70] sm:$0xff]
      %v440 = vld [vmem:[#allocation2 + $0xa0] sm:$0xff]
      %v441 = vld [vmem:[#allocation2 + $0xb0] sm:$0xff]
      %v442 = vld [vmem:[#allocation2 + $0xc0] sm:$0xff]
      %v443 = vld [vmem:[#allocation2 + $0xd0] sm:$0xff]
      %v444 = vld [vmem:[#allocation2 + $0xe0] sm:$0xff]
      %v445 = vld [vmem:[#allocation2 + $0xf0] sm:$0xff]
      %v446 = vld [vmem:[#allocation2 + $0x100] sm:$0xff]
      %v447 = vld [vmem:[#allocation2 + $0x110] sm:$0xff]
      %v448 = vld [vmem:[#allocation2 + $0x1] sm:$0xff]
      %v449 = vld [vmem:[#allocation2 + $0x11] sm:$0xff]
      %v450 = vld [vmem:[#allocation2 + $0x21] sm:$0xff]
      %v451 = vld [vmem:[#allocation2 + $0x31] sm:$0xff]
      %v452 = vld [vmem:[#allocation2 + $0x41] sm:$0xff]
      %v453 = vld [vmem:[#allocation2 + $0x51] sm:$0xff]
      %v454 = vld [vmem:[#allocation2 + $0x61] sm:$0xff]
      %v455 = vld [vmem:[#allocation2 + $0x71] sm:$0xff]
      %v456 = vld [vmem:[#allocation2 + $0xa1] sm:$0xff]
      %v457 = vld [vmem:[#allocation2 + $0xb1] sm:$0xff]
      %v458 = vld [vmem:[#allocation2 + $0xc1] sm:$0xff]
      %v459 = vld [vmem:[#allocation2 + $0xd1] sm:$0xff]
      %v460 = vld [vmem:[#allocation2 + $0xe1] sm:$0xff]
      %v461 = vld [vmem:[#allocation2 + $0xf1] sm:$0xff]
      %v462 = vld [vmem:[#allocation2 + $0x101] sm:$0xff]
      %v463 = vld [vmem:[#allocation2 + $0x111] sm:$0xff]
      %v464 = vld [vmem:[#allocation2 + $0x2] sm:$0xff]
      %v465 = vld [vmem:[#allocation2 + $0x12] sm:$0xff]
      %v466 = vld [vmem:[#allocation2 + $0x22] sm:$0xff]
      %v467 = vld [vmem:[#allocation2 + $0x32] sm:$0xff]
      %v468 = vld [vmem:[#allocation2 + $0x42] sm:$0xff]
      %v469 = vld [vmem:[#allocation2 + $0x52] sm:$0xff]
      %v470 = vld [vmem:[#allocation2 + $0x62] sm:$0xff]
      %v471 = vld [vmem:[#allocation2 + $0x72] sm:$0xff]
      %v472 = vld [vmem:[#allocation2 + $0xa2] sm:$0xff]
      %v473 = vld [vmem:[#allocation2 + $0xb2] sm:$0xff]
      %v474 = vld [vmem:[#allocation2 + $0xc2] sm:$0xff]
      %v475 = vld [vmem:[#allocation2 + $0xd2] sm:$0xff]
      %v476 = vld [vmem:[#allocation2 + $0xe2] sm:$0xff]
      %v477 = vld [vmem:[#allocation2 + $0xf2] sm:$0xff]
      %v478 = vld [vmem:[#allocation2 + $0x102] sm:$0xff]
      %v479 = vld [vmem:[#allocation2 + $0x112] sm:$0xff]
      %v480 = vld [vmem:[%s415] sm:$0xff]
      %v481 = vld [vmem:[%s415 + $0x10] sm:$0xff]
      %v482 = vld [vmem:[%s415 + $0x20] sm:$0xff]
      %v483 = vld [vmem:[%s415 + $0x30] sm:$0xff]
      %v484 = vld [vmem:[%s415 + $0x40] sm:$0xff]
      %v485 = vld [vmem:[%s415 + $0x50] sm:$0xff]
      %v486 = vld [vmem:[%s415 + $0x60] sm:$0xff]
      %v487 = vld [vmem:[%s415 + $0x70] sm:$0xff]
      %v488 = vld [vmem:[%s415 + $0xa0] sm:$0xff]
      %v489 = vld [vmem:[%s415 + $0xb0] sm:$0xff]
      %v490 = vld [vmem:[%s415 + $0xc0] sm:$0xff]
      %v491 = vld [vmem:[%s415 + $0xd0] sm:$0xff]
      %v492 = vld [vmem:[%s415 + $0xe0] sm:$0xff]
      %v493 = vld [vmem:[%s415 + $0xf0] sm:$0xff]
      %v494 = vld [vmem:[%s415 + $0x100] sm:$0xff]
      %v495 = vld [vmem:[%s415 + $0x110] sm:$0xff]
      %v496 = vld [vmem:[%s415 + $0x1] sm:$0xff]
      %v497 = vld [vmem:[%s415 + $0x11] sm:$0xff]
      %v498 = vld [vmem:[%s415 + $0x21] sm:$0xff]
      %v499 = vld [vmem:[%s415 + $0x31] sm:$0xff]
      %v500 = vld [vmem:[%s415 + $0x41] sm:$0xff]
      %v501 = vld [vmem:[%s415 + $0x51] sm:$0xff]
      %v502 = vld [vmem:[%s415 + $0x61] sm:$0xff]
      %v503 = vld [vmem:[%s415 + $0x71] sm:$0xff]
      %v504 = vld [vmem:[%s415 + $0xa1] sm:$0xff]
      %v505 = vld [vmem:[%s415 + $0xb1] sm:$0xff]
      %v506 = vld [vmem:[%s415 + $0xc1] sm:$0xff]
      %v507 = vld [vmem:[%s415 + $0xd1] sm:$0xff]
      %v508 = vld [vmem:[%s415 + $0xe1] sm:$0xff]
      %v509 = vld [vmem:[%s415 + $0xf1] sm:$0xff]
      %v510 = vld [vmem:[%s415 + $0x101] sm:$0xff]
      %v511 = vld [vmem:[%s415 + $0x111] sm:$0xff]
      %v512 = vld [vmem:[%s415 + $0x2] sm:$0xff]
      %v513 = vld [vmem:[%s415 + $0x12] sm:$0xff]
      %v514 = vld [vmem:[%s415 + $0x22] sm:$0xff]
      %v515 = vld [vmem:[%s415 + $0x32] sm:$0xff]
      %v516 = vld [vmem:[%s415 + $0x42] sm:$0xff]
      %v517 = vld [vmem:[%s415 + $0x52] sm:$0xff]
      %v518 = vld [vmem:[%s415 + $0x62] sm:$0xff]
      %v519 = vld [vmem:[%s415 + $0x72] sm:$0xff]
      %v520 = vld [vmem:[%s415 + $0xa2] sm:$0xff]
      %v521 = vld [vmem:[%s415 + $0xb2] sm:$0xff]
      %v522 = vld [vmem:[%s415 + $0xc2] sm:$0xff]
      %v523 = vld [vmem:[%s415 + $0xd2] sm:$0xff]
      %v524 = vld [vmem:[%s415 + $0xe2] sm:$0xff]
      %v525 = vld [vmem:[%s415 + $0xf2] sm:$0xff]
      %v526 = vld [vmem:[%s415 + $0x102] sm:$0xff]
      %v527 = vld [vmem:[%s415 + $0x112] sm:$0xff]
      %s528 = scalar_lea.vmem [#allocation2], 32
      %v529 = vld [vmem:[%s528] sm:$0xff]
      %v530 = vld [vmem:[%s528 + $0x10] sm:$0xff]
      %v531 = vld [vmem:[%s528 + $0x20] sm:$0xff]
      %v532 = vld [vmem:[%s528 + $0x30] sm:$0xff]
      %v533 = vld [vmem:[%s528 + $0x40] sm:$0xff]
      %v534 = vld [vmem:[%s528 + $0x50] sm:$0xff]
      %v535 = vld [vmem:[%s528 + $0x60] sm:$0xff]
      %v536 = vld [vmem:[%s528 + $0x70] sm:$0xff]
      %v537 = vld [vmem:[%s528 + $0xa0] sm:$0xff]
      %v538 = vld [vmem:[%s528 + $0xb0] sm:$0xff]
      %v539 = vld [vmem:[%s528 + $0xc0] sm:$0xff]
      %v540 = vld [vmem:[%s528 + $0xd0] sm:$0xff]
      %v541 = vld [vmem:[%s528 + $0xe0] sm:$0xff]
      %v542 = vld [vmem:[%s528 + $0xf0] sm:$0xff]
      %v543 = vld [vmem:[%s528 + $0x100] sm:$0xff]
      %v544 = vld [vmem:[%s528 + $0x110] sm:$0xff]
      %v545 = vld [vmem:[%s528 + $0x1] sm:$0xff]
      %v546 = vld [vmem:[%s528 + $0x11] sm:$0xff]
      %v547 = vld [vmem:[%s528 + $0x21] sm:$0xff]
      %v548 = vld [vmem:[%s528 + $0x31] sm:$0xff]
      %v549 = vld [vmem:[%s528 + $0x41] sm:$0xff]
      %v550 = vld [vmem:[%s528 + $0x51] sm:$0xff]
      %v551 = vld [vmem:[%s528 + $0x61] sm:$0xff]
      %v552 = vld [vmem:[%s528 + $0x71] sm:$0xff]
      %v553 = vld [vmem:[%s528 + $0xa1] sm:$0xff]
      %v554 = vld [vmem:[%s528 + $0xb1] sm:$0xff]
      %v555 = vld [vmem:[%s528 + $0xc1] sm:$0xff]
      %v556 = vld [vmem:[%s528 + $0xd1] sm:$0xff]
      %v557 = vld [vmem:[%s528 + $0xe1] sm:$0xff]
      %v558 = vld [vmem:[%s528 + $0xf1] sm:$0xff]
      %v559 = vld [vmem:[%s528 + $0x101] sm:$0xff]
      %v560 = vld [vmem:[%s528 + $0x111] sm:$0xff]
      %v561 = vld [vmem:[%s528 + $0x2] sm:$0xff]
      %v562 = vld [vmem:[%s528 + $0x12] sm:$0xff]
      %v563 = vld [vmem:[%s528 + $0x22] sm:$0xff]
      %v564 = vld [vmem:[%s528 + $0x32] sm:$0xff]
      %v565 = vld [vmem:[%s528 + $0x42] sm:$0xff]
      %v566 = vld [vmem:[%s528 + $0x52] sm:$0xff]
      %v567 = vld [vmem:[%s528 + $0x62] sm:$0xff]
      %v568 = vld [vmem:[%s528 + $0x72] sm:$0xff]
      %v569 = vld [vmem:[%s528 + $0xa2] sm:$0xff]
      %v570 = vld [vmem:[%s528 + $0xb2] sm:$0xff]
      %v571 = vld [vmem:[%s528 + $0xc2] sm:$0xff]
      %v572 = vld [vmem:[%s528 + $0xd2] sm:$0xff]
      %v573 = vld [vmem:[%s528 + $0xe2] sm:$0xff]
      %v574 = vld [vmem:[%s528 + $0xf2] sm:$0xff]
      %v575 = vld [vmem:[%s528 + $0x102] sm:$0xff]
      %v576 = vld [vmem:[%s528 + $0x112] sm:$0xff]
      %v577 = vpack.c.bf16 %v433, %v432
      %v578 = vpack.c.bf16 %v449, %v448
      %v579 = vpack.c.bf16 %v465, %v464
      %v580 = vpack.c.bf16 %v481, %v480
      %v581 = vpack.c.bf16 %v497, %v496
      %v582 = vpack.c.bf16 %v513, %v512
      %v583 = vpack.c.bf16 %v530, %v529
      %v584 = vpack.c.bf16 %v546, %v545
      %v585 = vpack.c.bf16 %v562, %v561
      %v586 = vpack.c.bf16 %v435, %v434
      %v587 = vpack.c.bf16 %v451, %v450
      %v588 = vpack.c.bf16 %v467, %v466
      %v589 = vpack.c.bf16 %v483, %v482
      %v590 = vpack.c.bf16 %v499, %v498
      %v591 = vpack.c.bf16 %v515, %v514
      %v592 = vpack.c.bf16 %v532, %v531
      %v593 = vpack.c.bf16 %v548, %v547
      %v594 = vpack.c.bf16 %v564, %v563
      %v595 = vpack.c.bf16 %v437, %v436
      %v596 = vpack.c.bf16 %v453, %v452
      %v597 = vpack.c.bf16 %v469, %v468
      %v598 = vpack.c.bf16 %v485, %v484
      %v599 = vpack.c.bf16 %v501, %v500
      %v600 = vpack.c.bf16 %v517, %v516
      %v601 = vpack.c.bf16 %v534, %v533
      %v602 = vpack.c.bf16 %v550, %v549
      %v603 = vpack.c.bf16 %v566, %v565
      %v604 = vpack.c.bf16 %v439, %v438
      %v605 = vpack.c.bf16 %v455, %v454
      %v606 = vpack.c.bf16 %v471, %v470
      %v607 = vpack.c.bf16 %v487, %v486
      %v608 = vpack.c.bf16 %v503, %v502
      %v609 = vpack.c.bf16 %v519, %v518
      %v610 = vpack.c.bf16 %v536, %v535
      %v611 = vpack.c.bf16 %v552, %v551
      %v612 = vpack.c.bf16 %v568, %v567
      %v613 = vpack.c.bf16 %v441, %v440
      %v614 = vpack.c.bf16 %v457, %v456
      %v615 = vpack.c.bf16 %v473, %v472
      %v616 = vpack.c.bf16 %v489, %v488
      %v617 = vpack.c.bf16 %v505, %v504
      %v618 = vpack.c.bf16 %v521, %v520
      %v619 = vpack.c.bf16 %v538, %v537
      %v620 = vpack.c.bf16 %v554, %v553
      %v621 = vpack.c.bf16 %v570, %v569
      %v622 = vpack.c.bf16 %v443, %v442
      %v623 = vpack.c.bf16 %v459, %v458
      %v624 = vpack.c.bf16 %v475, %v474
      %v625 = vpack.c.bf16 %v491, %v490
      %v626 = vpack.c.bf16 %v507, %v506
      %v627 = vpack.c.bf16 %v523, %v522
      %v628 = vpack.c.bf16 %v540, %v539
      %v629 = vpack.c.bf16 %v556, %v555
      %v630 = vpack.c.bf16 %v572, %v571
      %v631 = vpack.c.bf16 %v445, %v444
      %v632 = vpack.c.bf16 %v461, %v460
      %v633 = vpack.c.bf16 %v477, %v476
      %v634 = vpack.c.bf16 %v493, %v492
      %v635 = vpack.c.bf16 %v509, %v508
      %v636 = vpack.c.bf16 %v525, %v524
      %v637 = vpack.c.bf16 %v542, %v541
      %v638 = vpack.c.bf16 %v558, %v557
      %v639 = vpack.c.bf16 %v574, %v573
      %v640 = vpack.c.bf16 %v447, %v446
      %v641 = vpack.c.bf16 %v463, %v462
      %v642 = vpack.c.bf16 %v479, %v478
      %v643 = vpack.c.bf16 %v495, %v494
      %v644 = vpack.c.bf16 %v511, %v510
      %v645 = vpack.c.bf16 %v527, %v526
      %v646 = vpack.c.bf16 %v544, %v543
      %v647 = vpack.c.bf16 %v560, %v559
      %v648 = vpack.c.bf16 %v576, %v575
      %v649 = vld [vmem:[%s3] sm:$0xf]
      %v650 = vld [vmem:[%s3 + $0x4] sm:$0xf]
      %v651 = vld [vmem:[%s3 + $0x8] sm:$0xf]
      %v652 = vld [vmem:[%s3 + $0xc] sm:$0xf]
      %v653 = vld [vmem:[%s3 + $0x10] sm:$0xf]
      %v654 = vld [vmem:[%s3 + $0x14] sm:$0xf]
      %v655 = vld [vmem:[%s3 + $0x18] sm:$0xf]
      %v656 = vld [vmem:[%s3 + $0x1c] sm:$0xf]
      %v657 = vld [vmem:[%s3 + $0x20] sm:$0xf]
      %v658 = vld [vmem:[%s3 + $0x24] sm:$0xf]
      %v659 = vld [vmem:[%s3 + $0x28] sm:$0xf]
      %v660 = vld [vmem:[%s3 + $0x2c] sm:$0xf]
      %v661 = vld [vmem:[%s3 + $0x30] sm:$0xf]
      %v662 = vld [vmem:[%s3 + $0x34] sm:$0xf]
      %v663 = vld [vmem:[%s3 + $0x38] sm:$0xf]
      %v664 = vld [vmem:[%s3 + $0x3c] sm:$0xf]
      %v665 = vld [vmem:[%s3 + $0x40] sm:$0xf]
      %v666 = vld [vmem:[%s3 + $0x44] sm:$0xf]
      %v667 = vld [vmem:[%s3 + $0x48] sm:$0xf]
      %v668 = vld [vmem:[%s3 + $0x4c] sm:$0xf]
      %v669 = vld [vmem:[%s3 + $0x50] sm:$0xf]
      %v670 = vld [vmem:[%s3 + $0x54] sm:$0xf]
      %v671 = vld [vmem:[%s3 + $0x58] sm:$0xf]
      %v672 = vld [vmem:[%s3 + $0x5c] sm:$0xf]
      %v673 = vld [vmem:[%s3 + $0x60] sm:$0xf]
      %v674 = vld [vmem:[%s3 + $0x64] sm:$0xf]
      %v675 = vld [vmem:[%s3 + $0x68] sm:$0xf]
      %v676 = vld [vmem:[%s3 + $0x6c] sm:$0xf]
      %v677 = vld [vmem:[%s3 + $0x70] sm:$0xf]
      %v678 = vld [vmem:[%s3 + $0x74] sm:$0xf]
      %v679 = vld [vmem:[%s3 + $0x78] sm:$0xf]
      %v680 = vld [vmem:[%s3 + $0x7c] sm:$0xf]
      %v681 = vld [vmem:[%s3 + $0x80] sm:$0xf]
      %v682 = vld [vmem:[%s3 + $0x84] sm:$0xf]
      %v683 = vld [vmem:[%s3 + $0x88] sm:$0xf]
      %v684 = vld [vmem:[%s3 + $0x8c] sm:$0xf]
      %v685 = vld [vmem:[%s3 + $0x90] sm:$0xf]
      %v686 = vld [vmem:[%s3 + $0x94] sm:$0xf]
      %v687 = vld [vmem:[%s3 + $0x98] sm:$0xf]
      %v688 = vld [vmem:[%s3 + $0x9c] sm:$0xf]
      %v689 = vld [vmem:[%s3 + $0xa0] sm:$0xf]
      %v690 = vld [vmem:[%s3 + $0xa4] sm:$0xf]
      %v691 = vld [vmem:[%s3 + $0xa8] sm:$0xf]
      %v692 = vld [vmem:[%s3 + $0xac] sm:$0xf]
      %v693 = vld [vmem:[%s3 + $0xb0] sm:$0xf]
      %v694 = vld [vmem:[%s3 + $0xb4] sm:$0xf]
      %v695 = vld [vmem:[%s3 + $0xb8] sm:$0xf]
      %v696 = vld [vmem:[%s3 + $0xbc] sm:$0xf]
      %v697 = vld [vmem:[%s3 + $0xc0] sm:$0xf]
      %v698 = vld [vmem:[%s3 + $0xc4] sm:$0xf]
      %v699 = vld [vmem:[%s3 + $0xc8] sm:$0xf]
      %v700 = vld [vmem:[%s3 + $0xcc] sm:$0xf]
      %v701 = vld [vmem:[%s3 + $0xd0] sm:$0xf]
      %v702 = vld [vmem:[%s3 + $0xd4] sm:$0xf]
      %v703 = vld [vmem:[%s3 + $0xd8] sm:$0xf]
      %v704 = vld [vmem:[%s3 + $0xdc] sm:$0xf]
      %v705 = vld [vmem:[%s3 + $0xe0] sm:$0xf]
      %v706 = vld [vmem:[%s3 + $0xe4] sm:$0xf]
      %v707 = vld [vmem:[%s3 + $0xe8] sm:$0xf]
      %v708 = vld [vmem:[%s3 + $0xec] sm:$0xf]
      %v709 = vld [vmem:[%s3 + $0xf0] sm:$0xf]
      %v710 = vld [vmem:[%s3 + $0xf4] sm:$0xf]
      %v711 = vld [vmem:[%s3 + $0xf8] sm:$0xf]
      %v712 = vld [vmem:[%s3 + $0xfc] sm:$0xf]
      %v713 = vld [vmem:[%s3 + $0x100] sm:$0xf]
      %v714 = vld [vmem:[%s3 + $0x104] sm:$0xf]
      %v715 = vld [vmem:[%s3 + $0x108] sm:$0xf]
      %v716 = vld [vmem:[%s3 + $0x10c] sm:$0xf]
      %v717 = vld [vmem:[%s3 + $0x110] sm:$0xf]
      %v718 = vld [vmem:[%s3 + $0x114] sm:$0xf]
      %v719 = vld [vmem:[%s3 + $0x118] sm:$0xf]
      %v720 = vld [vmem:[%s3 + $0x11c] sm:$0xf]
      %v721 = vld [vmem:[%s3 + $0x120] sm:$0xf]
      %v722 = vld [vmem:[%s3 + $0x124] sm:$0xf]
      %v723 = vld [vmem:[%s3 + $0x128] sm:$0xf]
      %v724 = vld [vmem:[%s3 + $0x12c] sm:$0xf]
      %v725 = vld [vmem:[%s3 + $0x130] sm:$0xf]
      %v726 = vld [vmem:[%s3 + $0x134] sm:$0xf]
      %v727 = vld [vmem:[%s3 + $0x138] sm:$0xf]
      %v728 = vld [vmem:[%s3 + $0x13c] sm:$0xf]
      %v729 = vld [vmem:[%s3 + $0x140] sm:$0xf]
      %v730 = vld [vmem:[%s3 + $0x144] sm:$0xf]
      %v731 = vld [vmem:[%s3 + $0x148] sm:$0xf]
      %v732 = vld [vmem:[%s3 + $0x14c] sm:$0xf]
      %v733 = vld [vmem:[%s3 + $0x150] sm:$0xf]
      %v734 = vld [vmem:[%s3 + $0x154] sm:$0xf]
      %v735 = vld [vmem:[%s3 + $0x158] sm:$0xf]
      %v736 = vld [vmem:[%s3 + $0x15c] sm:$0xf]
      %v737 = vld [vmem:[%s3 + $0x160] sm:$0xf]
      %v738 = vld [vmem:[%s3 + $0x164] sm:$0xf]
      %v739 = vld [vmem:[%s3 + $0x168] sm:$0xf]
      %v740 = vld [vmem:[%s3 + $0x16c] sm:$0xf]
      %v741 = vld [vmem:[%s3 + $0x170] sm:$0xf]
      %v742 = vld [vmem:[%s3 + $0x174] sm:$0xf]
      %v743 = vld [vmem:[%s3 + $0x178] sm:$0xf]
      %v744 = vld [vmem:[%s3 + $0x17c] sm:$0xf]
      %v745 = vld [vmem:[%s3 + $0x180] sm:$0xf]
      %v746 = vld [vmem:[%s3 + $0x184] sm:$0xf]
      %v747 = vld [vmem:[%s3 + $0x188] sm:$0xf]
      %v748 = vld [vmem:[%s3 + $0x18c] sm:$0xf]
      %v749 = vld [vmem:[%s3 + $0x190] sm:$0xf]
      %v750 = vld [vmem:[%s3 + $0x194] sm:$0xf]
      %v751 = vld [vmem:[%s3 + $0x198] sm:$0xf]
      %v752 = vld [vmem:[%s3 + $0x19c] sm:$0xf]
      %v753 = vld [vmem:[%s3 + $0x1a0] sm:$0xf]
      %v754 = vld [vmem:[%s3 + $0x1a4] sm:$0xf]
      %v755 = vld [vmem:[%s3 + $0x1a8] sm:$0xf]
      %v756 = vld [vmem:[%s3 + $0x1ac] sm:$0xf]
      %v757 = vld [vmem:[%s3 + $0x1b0] sm:$0xf]
      %v758 = vld [vmem:[%s3 + $0x1b4] sm:$0xf]
      %v759 = vld [vmem:[%s3 + $0x1b8] sm:$0xf]
      %v760 = vld [vmem:[%s3 + $0x1bc] sm:$0xf]
      %v761 = vld [vmem:[%s3 + $0x1c0] sm:$0xf]
      %v762 = vld [vmem:[%s3 + $0x1c4] sm:$0xf]
      %v763 = vld [vmem:[%s3 + $0x1c8] sm:$0xf]
      %v764 = vld [vmem:[%s3 + $0x1cc] sm:$0xf]
      %v765 = vld [vmem:[%s3 + $0x1d0] sm:$0xf]
      %v766 = vld [vmem:[%s3 + $0x1d4] sm:$0xf]
      %v767 = vld [vmem:[%s3 + $0x1d8] sm:$0xf]
      %v768 = vld [vmem:[%s3 + $0x1dc] sm:$0xf]
      %v769 = vld [vmem:[%s3 + $0x1e0] sm:$0xf]
      %v770 = vld [vmem:[%s3 + $0x1e4] sm:$0xf]
      %v771 = vld [vmem:[%s3 + $0x1e8] sm:$0xf]
      %v772 = vld [vmem:[%s3 + $0x1ec] sm:$0xf]
      %v773 = vld [vmem:[%s3 + $0x1f0] sm:$0xf]
      %v774 = vld [vmem:[%s3 + $0x1f4] sm:$0xf]
      %v775 = vld [vmem:[%s3 + $0x1f8] sm:$0xf]
      %v776 = vld [vmem:[%s3 + $0x1fc] sm:$0xf]
      %v777 = vld [vmem:[%s3 + $0x200] sm:$0xf]
      %v778 = vld [vmem:[%s3 + $0x204] sm:$0xf]
      %v779 = vld [vmem:[%s3 + $0x208] sm:$0xf]
      %v780 = vld [vmem:[%s3 + $0x20c] sm:$0xf]
      %v781 = vld [vmem:[%s3 + $0x210] sm:$0xf]
      %v782 = vld [vmem:[%s3 + $0x214] sm:$0xf]
      %v783 = vld [vmem:[%s3 + $0x218] sm:$0xf]
      %v784 = vld [vmem:[%s3 + $0x21c] sm:$0xf]
      %v785 = vld [vmem:[%s3 + $0x220] sm:$0xf]
      %v786 = vld [vmem:[%s3 + $0x224] sm:$0xf]
      %v787 = vld [vmem:[%s3 + $0x228] sm:$0xf]
      %v788 = vld [vmem:[%s3 + $0x22c] sm:$0xf]
      %v789 = vld [vmem:[%s3 + $0x230] sm:$0xf]
      %v790 = vld [vmem:[%s3 + $0x234] sm:$0xf]
      %v791 = vld [vmem:[%s3 + $0x238] sm:$0xf]
      %v792 = vld [vmem:[%s3 + $0x23c] sm:$0xf]
      %v937 = vunpack.c.l.b16 %v649
      %v938 = vunpack.c.l.b16 %v650
      %v939 = vunpack.c.l.b16 %v651
      %v940 = vunpack.c.l.b16 %v652
      %v941 = vunpack.c.l.b16 %v653
      %v942 = vunpack.c.l.b16 %v654
      %v943 = vunpack.c.l.b16 %v655
      %v944 = vunpack.c.l.b16 %v656
      %v945 = vunpack.c.l.b16 %v657
      %v946 = vunpack.c.l.b16 %v658
      %v947 = vunpack.c.l.b16 %v659
      %v948 = vunpack.c.l.b16 %v660
      %v949 = vunpack.c.l.b16 %v661
      %v950 = vunpack.c.l.b16 %v662
      %v951 = vunpack.c.l.b16 %v663
      %v952 = vunpack.c.l.b16 %v664
      %v953 = vunpack.c.l.b16 %v665
      %v954 = vunpack.c.l.b16 %v666
      %v955 = vunpack.c.l.b16 %v667
      %v956 = vunpack.c.l.b16 %v668
      %v957 = vunpack.c.l.b16 %v669
      %v958 = vunpack.c.l.b16 %v670
      %v959 = vunpack.c.l.b16 %v671
      %v960 = vunpack.c.l.b16 %v672
      %v961 = vunpack.c.l.b16 %v673
      %v962 = vunpack.c.l.b16 %v674
      %v963 = vunpack.c.l.b16 %v675
      %v964 = vunpack.c.l.b16 %v676
      %v965 = vunpack.c.l.b16 %v677
      %v966 = vunpack.c.l.b16 %v678
      %v967 = vunpack.c.l.b16 %v679
      %v968 = vunpack.c.l.b16 %v680
      %v969 = vunpack.c.l.b16 %v681
      %v970 = vunpack.c.l.b16 %v682
      %v971 = vunpack.c.l.b16 %v683
      %v972 = vunpack.c.l.b16 %v684
      %v973 = vunpack.c.l.b16 %v685
      %v974 = vunpack.c.l.b16 %v686
      %v975 = vunpack.c.l.b16 %v687
      %v976 = vunpack.c.l.b16 %v688
      %v977 = vunpack.c.l.b16 %v689
      %v978 = vunpack.c.l.b16 %v690
      %v979 = vunpack.c.l.b16 %v691
      %v980 = vunpack.c.l.b16 %v692
      %v981 = vunpack.c.l.b16 %v693
      %v982 = vunpack.c.l.b16 %v694
      %v983 = vunpack.c.l.b16 %v695
      %v984 = vunpack.c.l.b16 %v696
      %v985 = vunpack.c.l.b16 %v697
      %v986 = vunpack.c.l.b16 %v698
      %v987 = vunpack.c.l.b16 %v699
      %v988 = vunpack.c.l.b16 %v700
      %v989 = vunpack.c.l.b16 %v701
      %v990 = vunpack.c.l.b16 %v702
      %v991 = vunpack.c.l.b16 %v703
      %v992 = vunpack.c.l.b16 %v704
      %v993 = vunpack.c.l.b16 %v705
      %v994 = vunpack.c.l.b16 %v706
      %v995 = vunpack.c.l.b16 %v707
      %v996 = vunpack.c.l.b16 %v708
      %v997 = vunpack.c.l.b16 %v709
      %v998 = vunpack.c.l.b16 %v710
      %v999 = vunpack.c.l.b16 %v711
      %v1000 = vunpack.c.l.b16 %v712
      %v1001 = vunpack.c.l.b16 %v713
      %v1002 = vunpack.c.l.b16 %v714
      %v1003 = vunpack.c.l.b16 %v715
      %v1004 = vunpack.c.l.b16 %v716
      %v1005 = vunpack.c.l.b16 %v717
      %v1006 = vunpack.c.l.b16 %v718
      %v1007 = vunpack.c.l.b16 %v719
      %v1008 = vunpack.c.l.b16 %v720
      %v1009 = vunpack.c.l.b16 %v721
      %v1010 = vunpack.c.l.b16 %v722
      %v1011 = vunpack.c.l.b16 %v723
      %v1012 = vunpack.c.l.b16 %v724
      %v1013 = vunpack.c.l.b16 %v725
      %v1014 = vunpack.c.l.b16 %v726
      %v1015 = vunpack.c.l.b16 %v727
      %v1016 = vunpack.c.l.b16 %v728
      %v1017 = vunpack.c.l.b16 %v729
      %v1018 = vunpack.c.l.b16 %v730
      %v1019 = vunpack.c.l.b16 %v731
      %v1020 = vunpack.c.l.b16 %v732
      %v1021 = vunpack.c.l.b16 %v733
      %v1022 = vunpack.c.l.b16 %v734
      %v1023 = vunpack.c.l.b16 %v735
      %v1024 = vunpack.c.l.b16 %v736
      %v1025 = vunpack.c.l.b16 %v737
      %v1026 = vunpack.c.l.b16 %v738
      %v1027 = vunpack.c.l.b16 %v739
      %v1028 = vunpack.c.l.b16 %v740
      %v1029 = vunpack.c.l.b16 %v741
      %v1030 = vunpack.c.l.b16 %v742
      %v1031 = vunpack.c.l.b16 %v743
      %v1032 = vunpack.c.l.b16 %v744
      %v1033 = vunpack.c.l.b16 %v745
      %v1034 = vunpack.c.l.b16 %v746
      %v1035 = vunpack.c.l.b16 %v747
      %v1036 = vunpack.c.l.b16 %v748
      %v1037 = vunpack.c.l.b16 %v749
      %v1038 = vunpack.c.l.b16 %v750
      %v1039 = vunpack.c.l.b16 %v751
      %v1040 = vunpack.c.l.b16 %v752
      %v1041 = vunpack.c.l.b16 %v753
      %v1042 = vunpack.c.l.b16 %v754
      %v1043 = vunpack.c.l.b16 %v755
      %v1044 = vunpack.c.l.b16 %v756
      %v1045 = vunpack.c.l.b16 %v757
      %v1046 = vunpack.c.l.b16 %v758
      %v1047 = vunpack.c.l.b16 %v759
      %v1048 = vunpack.c.l.b16 %v760
      %v1049 = vunpack.c.l.b16 %v761
      %v1050 = vunpack.c.l.b16 %v762
      %v1051 = vunpack.c.l.b16 %v763
      %v1052 = vunpack.c.l.b16 %v764
      %v1053 = vunpack.c.l.b16 %v765
      %v1054 = vunpack.c.l.b16 %v766
      %v1055 = vunpack.c.l.b16 %v767
      %v1056 = vunpack.c.l.b16 %v768
      %v1057 = vunpack.c.l.b16 %v769
      %v1058 = vunpack.c.l.b16 %v770
      %v1059 = vunpack.c.l.b16 %v771
      %v1060 = vunpack.c.l.b16 %v772
      %v1061 = vunpack.c.l.b16 %v773
      %v1062 = vunpack.c.l.b16 %v774
      %v1063 = vunpack.c.l.b16 %v775
      %v1064 = vunpack.c.l.b16 %v776
      %v1065 = vunpack.c.l.b16 %v777
      %v1066 = vunpack.c.l.b16 %v778
      %v1067 = vunpack.c.l.b16 %v779
      %v1068 = vunpack.c.l.b16 %v780
      %v1069 = vunpack.c.l.b16 %v781
      %v1070 = vunpack.c.l.b16 %v782
      %v1071 = vunpack.c.l.b16 %v783
      %v1072 = vunpack.c.l.b16 %v784
      %v1073 = vunpack.c.l.b16 %v785
      %v1074 = vunpack.c.l.b16 %v786
      %v1075 = vunpack.c.l.b16 %v787
      %v1076 = vunpack.c.l.b16 %v788
      %v1077 = vunpack.c.l.b16 %v789
      %v1078 = vunpack.c.l.b16 %v790
      %v1079 = vunpack.c.l.b16 %v791
      %v1080 = vunpack.c.l.b16 %v792
      %v1081 = vpack.c.b16 %v938, %v937
      %v1082 = vpack.c.b16 %v940, %v939
      %v1083 = vpack.c.b16 %v942, %v941
      %v1084 = vpack.c.b16 %v944, %v943
      %v1085 = vpack.c.b16 %v946, %v945
      %v1086 = vpack.c.b16 %v948, %v947
      %v1087 = vpack.c.b16 %v950, %v949
      %v1088 = vpack.c.b16 %v952, %v951
      %v1089 = vpack.c.b16 %v954, %v953
      %v1090 = vpack.c.b16 %v956, %v955
      %v1091 = vpack.c.b16 %v958, %v957
      %v1092 = vpack.c.b16 %v960, %v959
      %v1093 = vpack.c.b16 %v962, %v961
      %v1094 = vpack.c.b16 %v964, %v963
      %v1095 = vpack.c.b16 %v966, %v965
      %v1096 = vpack.c.b16 %v968, %v967
      %v1097 = vpack.c.b16 %v970, %v969
      %v1098 = vpack.c.b16 %v972, %v971
      %v1099 = vpack.c.b16 %v974, %v973
      %v1100 = vpack.c.b16 %v976, %v975
      %v1101 = vpack.c.b16 %v978, %v977
      %v1102 = vpack.c.b16 %v980, %v979
      %v1103 = vpack.c.b16 %v982, %v981
      %v1104 = vpack.c.b16 %v984, %v983
      %v1105 = vpack.c.b16 %v986, %v985
      %v1106 = vpack.c.b16 %v988, %v987
      %v1107 = vpack.c.b16 %v990, %v989
      %v1108 = vpack.c.b16 %v992, %v991
      %v1109 = vpack.c.b16 %v994, %v993
      %v1110 = vpack.c.b16 %v996, %v995
      %v1111 = vpack.c.b16 %v998, %v997
      %v1112 = vpack.c.b16 %v1000, %v999
      %v1113 = vpack.c.b16 %v1002, %v1001
      %v1114 = vpack.c.b16 %v1004, %v1003
      %v1115 = vpack.c.b16 %v1006, %v1005
      %v1116 = vpack.c.b16 %v1008, %v1007
      %v1117 = vpack.c.b16 %v1010, %v1009
      %v1118 = vpack.c.b16 %v1012, %v1011
      %v1119 = vpack.c.b16 %v1014, %v1013
      %v1120 = vpack.c.b16 %v1016, %v1015
      %v1121 = vpack.c.b16 %v1018, %v1017
      %v1122 = vpack.c.b16 %v1020, %v1019
      %v1123 = vpack.c.b16 %v1022, %v1021
      %v1124 = vpack.c.b16 %v1024, %v1023
      %v1125 = vpack.c.b16 %v1026, %v1025
      %v1126 = vpack.c.b16 %v1028, %v1027
      %v1127 = vpack.c.b16 %v1030, %v1029
      %v1128 = vpack.c.b16 %v1032, %v1031
      %v1129 = vpack.c.b16 %v1034, %v1033
      %v1130 = vpack.c.b16 %v1036, %v1035
      %v1131 = vpack.c.b16 %v1038, %v1037
      %v1132 = vpack.c.b16 %v1040, %v1039
      %v1133 = vpack.c.b16 %v1042, %v1041
      %v1134 = vpack.c.b16 %v1044, %v1043
      %v1135 = vpack.c.b16 %v1046, %v1045
      %v1136 = vpack.c.b16 %v1048, %v1047
      %v1137 = vpack.c.b16 %v1050, %v1049
      %v1138 = vpack.c.b16 %v1052, %v1051
      %v1139 = vpack.c.b16 %v1054, %v1053
      %v1140 = vpack.c.b16 %v1056, %v1055
      %v1141 = vpack.c.b16 %v1058, %v1057
      %v1142 = vpack.c.b16 %v1060, %v1059
      %v1143 = vpack.c.b16 %v1062, %v1061
      %v1144 = vpack.c.b16 %v1064, %v1063
      %v1145 = vpack.c.b16 %v1066, %v1065
      %v1146 = vpack.c.b16 %v1068, %v1067
      %v1147 = vpack.c.b16 %v1070, %v1069
      %v1148 = vpack.c.b16 %v1072, %v1071
      %v1149 = vpack.c.b16 %v1074, %v1073
      %v1150 = vpack.c.b16 %v1076, %v1075
      %v1151 = vpack.c.b16 %v1078, %v1077
      %v1152 = vpack.c.b16 %v1080, %v1079
      %1225 = vmatprep.subr.bf16.mxu0 0
      %1226 = vmatpush1.bf16.msra.mxu0 %v1081
      %1227 = vmatprep.subr.bf16.mxu0 0
      %1228 = vmatpush1.bf16.msra.mxu0 %v1082
      %1229 = vmatprep.subr.bf16.mxu0 0
      %1230 = vmatpush1.bf16.msra.mxu0 %v1083
      %1231 = vmatprep.subr.bf16.mxu0 0
      %1232 = vmatpush1.bf16.msra.mxu0 %v1084
      %1233 = vmatprep.subr.bf16.mxu0 0
      %1234 = vmatpush1.bf16.msra.mxu0 %v1085
      %1235 = vmatprep.subr.bf16.mxu0 0
      %1236 = vmatpush1.bf16.msra.mxu0 %v1086
      %1237 = vmatprep.subr.bf16.mxu0 0
      %1238 = vmatpush1.bf16.msra.mxu0 %v1087
      %1239 = vmatprep.subr.bf16.mxu0 0
      %1240 = vmatpush1.bf16.msra.mxu0 %v1088
      %1241 = vmatprep.subr.bf16.mxu0 0
      %1242 = vmatpush1.bf16.msra.mxu0 %v1089
      %1243 = vmatprep.subr.bf16.mxu0 0
      %1244 = vmatpush1.bf16.msra.mxu0 %v1090
      %1245 = vmatprep.subr.bf16.mxu0 0
      %1246 = vmatpush1.bf16.msra.mxu0 %v1091
      %1247 = vmatprep.subr.bf16.mxu0 0
      %1248 = vmatpush1.bf16.msra.mxu0 %v1092
      %1249 = vmatprep.subr.bf16.mxu0 0
      %1250 = vmatpush1.bf16.msra.mxu0 %v1093
      %1251 = vmatprep.subr.bf16.mxu0 0
      %1252 = vmatpush1.bf16.msra.mxu0 %v1094
      %1253 = vmatprep.subr.bf16.mxu0 0
      %1254 = vmatpush1.bf16.msra.mxu0 %v1095
      %1255 = vmatprep.subr.bf16.mxu0 0
      %1256 = vmatpush1.bf16.msra.mxu0 %v1096
      %1257 = vmatprep.mubr.bf16.mxu0 %v578
      %1258 = vmatmul.mubr.bf16.gmra.mrb[0].mxu0 %v577
      %v1259 = vpop.f32.mrb[0].mxu0
      %v1260 = vadd.f32 0.0, %v1259
      %v1261 = vpop.f32.mrb[0].mxu0
      %v1262 = vpop.f32.mrb[0].mxu0
      %v1263 = vadd.f32 0.0, %v1262
      %v1264 = vpop.f32.mrb[0].mxu0
      %1265 = vmatprep.mubr.bf16.mxu0 %v587
      %1266 = vmatmul.mubr.bf16.gmra.mrb[0].mxu0 %v586
      %v1267 = vpop.f32.mrb[0].mxu0
      %v1268 = vadd.f32 0.0, %v1267
      %v1269 = vpop.f32.mrb[0].mxu0
      %v1270 = vpop.f32.mrb[0].mxu0
      %v1271 = vadd.f32 0.0, %v1270
      %v1272 = vpop.f32.mrb[0].mxu0
      %1273 = vmatprep.mubr.bf16.mxu0 %v596
      %1274 = vmatmul.mubr.bf16.gmra.mrb[0].mxu0 %v595
      %v1275 = vpop.f32.mrb[0].mxu0
      %v1276 = vadd.f32 0.0, %v1275
      %v1277 = vpop.f32.mrb[0].mxu0
      %v1278 = vpop.f32.mrb[0].mxu0
      %v1279 = vadd.f32 0.0, %v1278
      %v1280 = vpop.f32.mrb[0].mxu0
      %1281 = vmatprep.mubr.bf16.mxu0 %v605
      %1282 = vmatmul.mubr.bf16.gmra.mrb[0].mxu0 %v604
      %v1283 = vpop.f32.mrb[0].mxu0
      %v1284 = vadd.f32 0.0, %v1283
      %v1285 = vpop.f32.mrb[0].mxu0
      %v1286 = vpop.f32.mrb[0].mxu0
      %v1287 = vadd.f32 0.0, %v1286
      %v1288 = vpop.f32.mrb[0].mxu0
      %1289 = vmatprep.mubr.bf16.mxu0 %v614
      %1290 = vmatmul.mubr.bf16.gmra.mrb[0].mxu0 %v613
      %v1291 = vpop.f32.mrb[0].mxu0
      %v1292 = vadd.f32 0.0, %v1291
      %v1293 = vpop.f32.mrb[0].mxu0
      %v1294 = vpop.f32.mrb[0].mxu0
      %v1295 = vadd.f32 0.0, %v1294
      %v1296 = vpop.f32.mrb[0].mxu0
      %1297 = vmatprep.mubr.bf16.mxu0 %v623
      %1298 = vmatmul.mubr.bf16.gmra.mrb[0].mxu0 %v622
      %v1299 = vpop.f32.mrb[0].mxu0
      %v1300 = vadd.f32 0.0, %v1299
      %v1301 = vpop.f32.mrb[0].mxu0
      %v1302 = vpop.f32.mrb[0].mxu0
      %v1303 = vadd.f32 0.0, %v1302
      %v1304 = vpop.f32.mrb[0].mxu0
      %1305 = vmatprep.mubr.bf16.mxu0 %v632
      %1306 = vmatmul.mubr.bf16.gmra.mrb[0].mxu0 %v631
      %v1307 = vpop.f32.mrb[0].mxu0
      %v1308 = vadd.f32 0.0, %v1307
      %v1309 = vpop.f32.mrb[0].mxu0
      %v1310 = vpop.f32.mrb[0].mxu0
      %v1311 = vadd.f32 0.0, %v1310
      %v1312 = vpop.f32.mrb[0].mxu0
      %1313 = vmatprep.mubr.bf16.mxu0 %v641
      %1314 = vmatmul.mubr.bf16.gmra.mrb[0].mxu0 %v640
      %v1315 = vpop.f32.mrb[0].mxu0
      %v1316 = vadd.f32 0.0, %v1315
      %v1317 = vpop.f32.mrb[0].mxu0
      %v1318 = vpop.f32.mrb[0].mxu0
      %v1319 = vadd.f32 0.0, %v1318
      %v1320 = vpop.f32.mrb[0].mxu0
      %1321 = vdwg.mxu0
      %1322 = vmatprep.subr.bf16.mxu0 0
      %1323 = vmatpush1.bf16.msra.mxu0 %v1097
      %1324 = vmatprep.subr.bf16.mxu0 0
      %1325 = vmatpush1.bf16.msra.mxu0 %v1098
      %1326 = vmatprep.subr.bf16.mxu0 0
      %1327 = vmatpush1.bf16.msra.mxu0 %v1099
      %1328 = vmatprep.subr.bf16.mxu0 0
      %1329 = vmatpush1.bf16.msra.mxu0 %v1100
      %1330 = vmatprep.subr.bf16.mxu0 0
      %1331 = vmatpush1.bf16.msra.mxu0 %v1101
      %1332 = vmatprep.subr.bf16.mxu0 0
      %1333 = vmatpush1.bf16.msra.mxu0 %v1102
      %1334 = vmatprep.subr.bf16.mxu0 0
      %1335 = vmatpush1.bf16.msra.mxu0 %v1103
      %1336 = vmatprep.subr.bf16.mxu0 0
      %1337 = vmatpush1.bf16.msra.mxu0 %v1104
      %1338 = vmatprep.subr.bf16.mxu0 0
      %1339 = vmatpush1.bf16.msra.mxu0 %v1105
      %1340 = vmatprep.subr.bf16.mxu0 0
      %1341 = vmatpush1.bf16.msra.mxu0 %v1106
      %1342 = vmatprep.subr.bf16.mxu0 0
      %1343 = vmatpush1.bf16.msra.mxu0 %v1107
      %1344 = vmatprep.subr.bf16.mxu0 0
      %1345 = vmatpush1.bf16.msra.mxu0 %v1108
      %1346 = vmatprep.subr.bf16.mxu0 0
      %1347 = vmatpush1.bf16.msra.mxu0 %v1109
      %1348 = vmatprep.subr.bf16.mxu0 0
      %1349 = vmatpush1.bf16.msra.mxu0 %v1110
      %1350 = vmatprep.subr.bf16.mxu0 0
      %1351 = vmatpush1.bf16.msra.mxu0 %v1111
      %1352 = vmatprep.subr.bf16.mxu0 0
      %1353 = vmatpush1.bf16.msra.mxu0 %v1112
      %1354 = vmatprep.mubr.bf16.mxu0 %v580
      %1355 = vmatmul.mubr.bf16.gmra.mrb[0].mxu0 %v579
      %v1356 = vpop.f32.mrb[0].mxu0
      %v1357 = vadd.f32 %v1260, %v1356
      %v1358 = vpop.f32.mrb[0].mxu0
      %v1359 = vpop.f32.mrb[0].mxu0
      %v1360 = vadd.f32 %v1263, %v1359
      %v1361 = vpop.f32.mrb[0].mxu0
      %1362 = vmatprep.mubr.bf16.mxu0 %v589
      %1363 = vmatmul.mubr.bf16.gmra.mrb[0].mxu0 %v588
      %v1364 = vpop.f32.mrb[0].mxu0
      %v1365 = vadd.f32 %v1268, %v1364
      %v1366 = vpop.f32.mrb[0].mxu0
      %v1367 = vpop.f32.mrb[0].mxu0
      %v1368 = vadd.f32 %v1271, %v1367
      %v1369 = vpop.f32.mrb[0].mxu0
      %1370 = vmatprep.mubr.bf16.mxu0 %v598
      %1371 = vmatmul.mubr.bf16.gmra.mrb[0].mxu0 %v597
      %v1372 = vpop.f32.mrb[0].mxu0
      %v1373 = vadd.f32 %v1276, %v1372
      %v1374 = vpop.f32.mrb[0].mxu0
      %v1375 = vpop.f32.mrb[0].mxu0
      %v1376 = vadd.f32 %v1279, %v1375
      %v1377 = vpop.f32.mrb[0].mxu0
      %1378 = vmatprep.mubr.bf16.mxu0 %v607
      %1379 = vmatmul.mubr.bf16.gmra.mrb[0].mxu0 %v606
      %v1380 = vpop.f32.mrb[0].mxu0
      %v1381 = vadd.f32 %v1284, %v1380
      %v1382 = vpop.f32.mrb[0].mxu0
      %v1383 = vpop.f32.mrb[0].mxu0
      %v1384 = vadd.f32 %v1287, %v1383
      %v1385 = vpop.f32.mrb[0].mxu0
      %1386 = vmatprep.mubr.bf16.mxu0 %v616
      %1387 = vmatmul.mubr.bf16.gmra.mrb[0].mxu0 %v615
      %v1388 = vpop.f32.mrb[0].mxu0
      %v1389 = vadd.f32 %v1292, %v1388
      %v1390 = vpop.f32.mrb[0].mxu0
      %v1391 = vpop.f32.mrb[0].mxu0
      %v1392 = vadd.f32 %v1295, %v1391
      %v1393 = vpop.f32.mrb[0].mxu0
      %1394 = vmatprep.mubr.bf16.mxu0 %v625
      %1395 = vmatmul.mubr.bf16.gmra.mrb[0].mxu0 %v624
      %v1396 = vpop.f32.mrb[0].mxu0
      %v1397 = vadd.f32 %v1300, %v1396
      %v1398 = vpop.f32.mrb[0].mxu0
      %v1399 = vpop.f32.mrb[0].mxu0
      %v1400 = vadd.f32 %v1303, %v1399
      %v1401 = vpop.f32.mrb[0].mxu0
      %1402 = vmatprep.mubr.bf16.mxu0 %v634
      %1403 = vmatmul.mubr.bf16.gmra.mrb[0].mxu0 %v633
      %v1404 = vpop.f32.mrb[0].mxu0
      %v1405 = vadd.f32 %v1308, %v1404
      %v1406 = vpop.f32.mrb[0].mxu0
      %v1407 = vpop.f32.mrb[0].mxu0
      %v1408 = vadd.f32 %v1311, %v1407
      %v1409 = vpop.f32.mrb[0].mxu0
      %1410 = vmatprep.mubr.bf16.mxu0 %v643
      %1411 = vmatmul.mubr.bf16.gmra.mrb[0].mxu0 %v642
      %v1412 = vpop.f32.mrb[0].mxu0
      %v1413 = vadd.f32 %v1316, %v1412
      %v1414 = vpop.f32.mrb[0].mxu0
      %v1415 = vpop.f32.mrb[0].mxu0
      %v1416 = vadd.f32 %v1319, %v1415
      %v1417 = vpop.f32.mrb[0].mxu0
      %1418 = vdwg.mxu0
      %1419 = vmatprep.subr.bf16.mxu0 0
      %1420 = vmatpush1.bf16.msra.mxu0 %v1113
      %1421 = vmatprep.subr.bf16.mxu0 0
      %1422 = vmatpush1.bf16.msra.mxu0 %v1114
      %1423 = vmatprep.subr.bf16.mxu0 0
      %1424 = vmatpush1.bf16.msra.mxu0 %v1115
      %1425 = vmatprep.subr.bf16.mxu0 0
      %1426 = vmatpush1.bf16.msra.mxu0 %v1116
      %1427 = vmatprep.subr.bf16.mxu0 0
      %1428 = vmatpush1.bf16.msra.mxu0 %v1117
      %1429 = vmatprep.subr.bf16.mxu0 0
      %1430 = vmatpush1.bf16.msra.mxu0 %v1118
      %1431 = vmatprep.subr.bf16.mxu0 0
      %1432 = vmatpush1.bf16.msra.mxu0 %v1119
      %1433 = vmatprep.subr.bf16.mxu0 0
      %1434 = vmatpush1.bf16.msra.mxu0 %v1120
      %1435 = vmatprep.subr.bf16.mxu0 0
      %1436 = vmatpush1.bf16.msra.mxu0 %v1121
      %1437 = vmatprep.subr.bf16.mxu0 0
      %1438 = vmatpush1.bf16.msra.mxu0 %v1122
      %1439 = vmatprep.subr.bf16.mxu0 0
      %1440 = vmatpush1.bf16.msra.mxu0 %v1123
      %1441 = vmatprep.subr.bf16.mxu0 0
      %1442 = vmatpush1.bf16.msra.mxu0 %v1124
      %1443 = vmatprep.subr.bf16.mxu0 0
      %1444 = vmatpush1.bf16.msra.mxu0 %v1125
      %1445 = vmatprep.subr.bf16.mxu0 0
      %1446 = vmatpush1.bf16.msra.mxu0 %v1126
      %1447 = vmatprep.subr.bf16.mxu0 0
      %1448 = vmatpush1.bf16.msra.mxu0 %v1127
      %1449 = vmatprep.subr.bf16.mxu0 0
      %1450 = vmatpush1.bf16.msra.mxu0 %v1128
      %1451 = vmatprep.mubr.bf16.mxu0 %v582
      %1452 = vmatmul.mubr.bf16.gmra.mrb[0].mxu0 %v581
      %v1453 = vpop.f32.mrb[0].mxu0
      %v1454 = vadd.f32 %v1357, %v1453
      %v1455 = vpop.f32.mrb[0].mxu0
      %v1456 = vpop.f32.mrb[0].mxu0
      %v1457 = vadd.f32 %v1360, %v1456
      %v1458 = vpop.f32.mrb[0].mxu0
      %1459 = vmatprep.mubr.bf16.mxu0 %v591
      %1460 = vmatmul.mubr.bf16.gmra.mrb[0].mxu0 %v590
      %v1461 = vpop.f32.mrb[0].mxu0
      %v1462 = vadd.f32 %v1365, %v1461
      %v1463 = vpop.f32.mrb[0].mxu0
      %v1464 = vpop.f32.mrb[0].mxu0
      %v1465 = vadd.f32 %v1368, %v1464
      %v1466 = vpop.f32.mrb[0].mxu0
      %1467 = vmatprep.mubr.bf16.mxu0 %v600
      %1468 = vmatmul.mubr.bf16.gmra.mrb[0].mxu0 %v599
      %v1469 = vpop.f32.mrb[0].mxu0
      %v1470 = vadd.f32 %v1373, %v1469
      %v1471 = vpop.f32.mrb[0].mxu0
      %v1472 = vpop.f32.mrb[0].mxu0
      %v1473 = vadd.f32 %v1376, %v1472
      %v1474 = vpop.f32.mrb[0].mxu0
      %1475 = vmatprep.mubr.bf16.mxu0 %v609
      %1476 = vmatmul.mubr.bf16.gmra.mrb[0].mxu0 %v608
      %v1477 = vpop.f32.mrb[0].mxu0
      %v1478 = vadd.f32 %v1381, %v1477
      %v1479 = vpop.f32.mrb[0].mxu0
      %v1480 = vpop.f32.mrb[0].mxu0
      %v1481 = vadd.f32 %v1384, %v1480
      %v1482 = vpop.f32.mrb[0].mxu0
      %1483 = vmatprep.mubr.bf16.mxu0 %v618
      %1484 = vmatmul.mubr.bf16.gmra.mrb[0].mxu0 %v617
      %v1485 = vpop.f32.mrb[0].mxu0
      %v1486 = vadd.f32 %v1389, %v1485
      %v1487 = vpop.f32.mrb[0].mxu0
      %v1488 = vpop.f32.mrb[0].mxu0
      %v1489 = vadd.f32 %v1392, %v1488
      %v1490 = vpop.f32.mrb[0].mxu0
      %1491 = vmatprep.mubr.bf16.mxu0 %v627
      %1492 = vmatmul.mubr.bf16.gmra.mrb[0].mxu0 %v626
      %v1493 = vpop.f32.mrb[0].mxu0
      %v1494 = vadd.f32 %v1397, %v1493
      %v1495 = vpop.f32.mrb[0].mxu0
      %v1496 = vpop.f32.mrb[0].mxu0
      %v1497 = vadd.f32 %v1400, %v1496
      %v1498 = vpop.f32.mrb[0].mxu0
      %1499 = vmatprep.mubr.bf16.mxu0 %v636
      %1500 = vmatmul.mubr.bf16.gmra.mrb[0].mxu0 %v635
      %v1501 = vpop.f32.mrb[0].mxu0
      %v1502 = vadd.f32 %v1405, %v1501
      %v1503 = vpop.f32.mrb[0].mxu0
      %v1504 = vpop.f32.mrb[0].mxu0
      %v1505 = vadd.f32 %v1408, %v1504
      %v1506 = vpop.f32.mrb[0].mxu0
      %1507 = vmatprep.mubr.bf16.mxu0 %v645
      %1508 = vmatmul.mubr.bf16.gmra.mrb[0].mxu0 %v644
      %v1509 = vpop.f32.mrb[0].mxu0
      %v1510 = vadd.f32 %v1413, %v1509
      %v1511 = vpop.f32.mrb[0].mxu0
      %v1512 = vpop.f32.mrb[0].mxu0
      %v1513 = vadd.f32 %v1416, %v1512
      %v1514 = vpop.f32.mrb[0].mxu0
      %1515 = vdwg.mxu0
      %1516 = vmatprep.subr.bf16.mxu0 0
      %1517 = vmatpush1.bf16.msra.mxu0 %v1129
      %1518 = vmatprep.subr.bf16.mxu0 0
      %1519 = vmatpush1.bf16.msra.mxu0 %v1130
      %1520 = vmatprep.subr.bf16.mxu0 0
      %1521 = vmatpush1.bf16.msra.mxu0 %v1131
      %1522 = vmatprep.subr.bf16.mxu0 0
      %1523 = vmatpush1.bf16.msra.mxu0 %v1132
      %1524 = vmatprep.subr.bf16.mxu0 0
      %1525 = vmatpush1.bf16.msra.mxu0 %v1133
      %1526 = vmatprep.subr.bf16.mxu0 0
      %1527 = vmatpush1.bf16.msra.mxu0 %v1134
      %1528 = vmatprep.subr.bf16.mxu0 0
      %1529 = vmatpush1.bf16.msra.mxu0 %v1135
      %1530 = vmatprep.subr.bf16.mxu0 0
      %1531 = vmatpush1.bf16.msra.mxu0 %v1136
      %1532 = vmatprep.subr.bf16.mxu0 0
      %1533 = vmatpush1.bf16.msra.mxu0 %v1137
      %1534 = vmatprep.subr.bf16.mxu0 0
      %1535 = vmatpush1.bf16.msra.mxu0 %v1138
      %1536 = vmatprep.subr.bf16.mxu0 0
      %1537 = vmatpush1.bf16.msra.mxu0 %v1139
      %1538 = vmatprep.subr.bf16.mxu0 0
      %1539 = vmatpush1.bf16.msra.mxu0 %v1140
      %1540 = vmatprep.subr.bf16.mxu0 0
      %1541 = vmatpush1.bf16.msra.mxu0 %v1141
      %1542 = vmatprep.subr.bf16.mxu0 0
      %1543 = vmatpush1.bf16.msra.mxu0 %v1142
      %1544 = vmatprep.subr.bf16.mxu0 0
      %1545 = vmatpush1.bf16.msra.mxu0 %v1143
      %1546 = vmatprep.subr.bf16.mxu0 0
      %1547 = vmatpush1.bf16.msra.mxu0 %v1144
      %1548 = vmatprep.mubr.bf16.mxu0 %v584
      %1549 = vmatmul.mubr.bf16.gmra.mrb[0].mxu0 %v583
      %v1550 = vpop.f32.mrb[0].mxu0
      %v1551 = vadd.f32 %v1454, %v1550
      %v1552 = vpop.f32.mrb[0].mxu0
      %v1553 = vpop.f32.mrb[0].mxu0
      %v1554 = vadd.f32 %v1457, %v1553
      %v1555 = vpop.f32.mrb[0].mxu0
      %1556 = vmatprep.mubr.bf16.mxu0 %v593
      %1557 = vmatmul.mubr.bf16.gmra.mrb[0].mxu0 %v592
      %v1558 = vpop.f32.mrb[0].mxu0
      %v1559 = vadd.f32 %v1462, %v1558
      %v1560 = vpop.f32.mrb[0].mxu0
      %v1561 = vpop.f32.mrb[0].mxu0
      %v1562 = vadd.f32 %v1465, %v1561
      %v1563 = vpop.f32.mrb[0].mxu0
      %1564 = vmatprep.mubr.bf16.mxu0 %v602
      %1565 = vmatmul.mubr.bf16.gmra.mrb[0].mxu0 %v601
      %v1566 = vpop.f32.mrb[0].mxu0
      %v1567 = vadd.f32 %v1470, %v1566
      %v1568 = vpop.f32.mrb[0].mxu0
      %v1569 = vpop.f32.mrb[0].mxu0
      %v1570 = vadd.f32 %v1473, %v1569
      %v1571 = vpop.f32.mrb[0].mxu0
      %1572 = vmatprep.mubr.bf16.mxu0 %v611
      %1573 = vmatmul.mubr.bf16.gmra.mrb[0].mxu0 %v610
      %v1574 = vpop.f32.mrb[0].mxu0
      %v1575 = vadd.f32 %v1478, %v1574
      %v1576 = vpop.f32.mrb[0].mxu0
      %v1577 = vpop.f32.mrb[0].mxu0
      %v1578 = vadd.f32 %v1481, %v1577
      %v1579 = vpop.f32.mrb[0].mxu0
      %1580 = vmatprep.mubr.bf16.mxu0 %v620
      %1581 = vmatmul.mubr.bf16.gmra.mrb[0].mxu0 %v619
      %v1582 = vpop.f32.mrb[0].mxu0
      %v1583 = vadd.f32 %v1486, %v1582
      %v1584 = vpop.f32.mrb[0].mxu0
      %v1585 = vpop.f32.mrb[0].mxu0
      %v1586 = vadd.f32 %v1489, %v1585
      %v1587 = vpop.f32.mrb[0].mxu0
      %1588 = vmatprep.mubr.bf16.mxu0 %v629
      %1589 = vmatmul.mubr.bf16.gmra.mrb[0].mxu0 %v628
      %v1590 = vpop.f32.mrb[0].mxu0
      %v1591 = vadd.f32 %v1494, %v1590
      %v1592 = vpop.f32.mrb[0].mxu0
      %v1593 = vpop.f32.mrb[0].mxu0
      %v1594 = vadd.f32 %v1497, %v1593
      %v1595 = vpop.f32.mrb[0].mxu0
      %1596 = vmatprep.mubr.bf16.mxu0 %v638
      %1597 = vmatmul.mubr.bf16.gmra.mrb[0].mxu0 %v637
      %v1598 = vpop.f32.mrb[0].mxu0
      %v1599 = vadd.f32 %v1502, %v1598
      %v1600 = vpop.f32.mrb[0].mxu0
      %v1601 = vpop.f32.mrb[0].mxu0
      %v1602 = vadd.f32 %v1505, %v1601
      %v1603 = vpop.f32.mrb[0].mxu0
      %1604 = vmatprep.mubr.bf16.mxu0 %v647
      %1605 = vmatmul.mubr.bf16.gmra.mrb[0].mxu0 %v646
      %v1606 = vpop.f32.mrb[0].mxu0
      %v1607 = vadd.f32 %v1510, %v1606
      %v1608 = vpop.f32.mrb[0].mxu0
      %v1609 = vpop.f32.mrb[0].mxu0
      %v1610 = vadd.f32 %v1513, %v1609
      %v1611 = vpop.f32.mrb[0].mxu0
      %1612 = vdwg.mxu0
      %1613 = vmatprep.subr.bf16.mxu0 0
      %1614 = vmatpush1.bf16.msra.mxu0 %v1145
      %1615 = vmatprep.subr.bf16.mxu0 0
      %1616 = vmatpush1.bf16.msra.mxu0 %v1146
      %1617 = vmatprep.subr.bf16.mxu0 0
      %1618 = vmatpush1.bf16.msra.mxu0 %v1147
      %1619 = vmatprep.subr.bf16.mxu0 0
      %1620 = vmatpush1.bf16.msra.mxu0 %v1148
      %1621 = vmatprep.subr.bf16.mxu0 0
      %1622 = vmatpush1.bf16.msra.mxu0 %v1149
      %1623 = vmatprep.subr.bf16.mxu0 0
      %1624 = vmatpush1.bf16.msra.mxu0 %v1150
      %1625 = vmatprep.subr.bf16.mxu0 0
      %1626 = vmatpush1.bf16.msra.mxu0 %v1151
      %1627 = vmatprep.subr.bf16.mxu0 0
      %1628 = vmatpush1.bf16.msra.mxu0 %v1152
      %1629 = vmatprep.subr.bf16.mxu0 0
      %1630 = vmatpush1.bf16.msra.mxu0 0
      %1631 = vmatprep.subr.bf16.mxu0 0
      %1632 = vmatpush1.bf16.msra.mxu0 0
      %1633 = vmatprep.subr.bf16.mxu0 0
      %1634 = vmatpush1.bf16.msra.mxu0 0
      %1635 = vmatprep.subr.bf16.mxu0 0
      %1636 = vmatpush1.bf16.msra.mxu0 0
      %1637 = vmatprep.subr.bf16.mxu0 0
      %1638 = vmatpush1.bf16.msra.mxu0 0
      %1639 = vmatprep.subr.bf16.mxu0 0
      %1640 = vmatpush1.bf16.msra.mxu0 0
      %1641 = vmatprep.subr.bf16.mxu0 0
      %1642 = vmatpush1.bf16.msra.mxu0 0
      %1643 = vmatprep.subr.bf16.mxu0 0
      %1644 = vmatpush1.bf16.msra.mxu0 0
      %1645 = vmatprep.mubr.bf16.mxu0 0
      %1646 = vmatmul.mubr.bf16.gmra.mrb[0].mxu0 %v585
      %v1647 = vpop.f32.mrb[0].mxu0
      %v1648 = vadd.f32 %v1551, %v1647
      %v1649 = vpop.f32.mrb[0].mxu0
      %v1650 = vpop.f32.mrb[0].mxu0
      %v1651 = vadd.f32 %v1554, %v1650
      %v1652 = vpop.f32.mrb[0].mxu0
      %1653 = vmatprep.mubr.bf16.mxu0 0
      %1654 = vmatmul.mubr.bf16.gmra.mrb[0].mxu0 %v594
      %v1655 = vpop.f32.mrb[0].mxu0
      %v1656 = vadd.f32 %v1559, %v1655
      %v1657 = vpop.f32.mrb[0].mxu0
      %v1658 = vpop.f32.mrb[0].mxu0
      %v1659 = vadd.f32 %v1562, %v1658
      %v1660 = vpop.f32.mrb[0].mxu0
      %1661 = vmatprep.mubr.bf16.mxu0 0
      %1662 = vmatmul.mubr.bf16.gmra.mrb[0].mxu0 %v603
      %v1663 = vpop.f32.mrb[0].mxu0
      %v1664 = vadd.f32 %v1567, %v1663
      %v1665 = vpop.f32.mrb[0].mxu0
      %v1666 = vpop.f32.mrb[0].mxu0
      %v1667 = vadd.f32 %v1570, %v1666
      %v1668 = vpop.f32.mrb[0].mxu0
      %1669 = vmatprep.mubr.bf16.mxu0 0
      %1670 = vmatmul.mubr.bf16.gmra.mrb[0].mxu0 %v612
      %v1671 = vpop.f32.mrb[0].mxu0
      %v1672 = vadd.f32 %v1575, %v1671
      %v1673 = vpop.f32.mrb[0].mxu0
      %v1674 = vpop.f32.mrb[0].mxu0
      %v1675 = vadd.f32 %v1578, %v1674
      %v1676 = vpop.f32.mrb[0].mxu0
      %1677 = vmatprep.mubr.bf16.mxu0 0
      %1678 = vmatmul.mubr.bf16.gmra.mrb[0].mxu0 %v621
      %v1679 = vpop.f32.mrb[0].mxu0
      %v1680 = vadd.f32 %v1583, %v1679
      %v1681 = vpop.f32.mrb[0].mxu0
      %v1682 = vpop.f32.mrb[0].mxu0
      %v1683 = vadd.f32 %v1586, %v1682
      %v1684 = vpop.f32.mrb[0].mxu0
      %1685 = vmatprep.mubr.bf16.mxu0 0
      %1686 = vmatmul.mubr.bf16.gmra.mrb[0].mxu0 %v630
      %v1687 = vpop.f32.mrb[0].mxu0
      %v1688 = vadd.f32 %v1591, %v1687
      %v1689 = vpop.f32.mrb[0].mxu0
      %v1690 = vpop.f32.mrb[0].mxu0
      %v1691 = vadd.f32 %v1594, %v1690
      %v1692 = vpop.f32.mrb[0].mxu0
      %1693 = vmatprep.mubr.bf16.mxu0 0
      %1694 = vmatmul.mubr.bf16.gmra.mrb[0].mxu0 %v639
      %v1695 = vpop.f32.mrb[0].mxu0
      %v1696 = vadd.f32 %v1599, %v1695
      %v1697 = vpop.f32.mrb[0].mxu0
      %v1698 = vpop.f32.mrb[0].mxu0
      %v1699 = vadd.f32 %v1602, %v1698
      %v1700 = vpop.f32.mrb[0].mxu0
      %1701 = vmatprep.mubr.bf16.mxu0 0
      %1702 = vmatmul.mubr.bf16.gmra.mrb[0].mxu0 %v648
      %v1703 = vpop.f32.mrb[0].mxu0
      %v1704 = vadd.f32 %v1607, %v1703
      %v1705 = vpop.f32.mrb[0].mxu0
      %v1706 = vpop.f32.mrb[0].mxu0
      %v1707 = vadd.f32 %v1610, %v1706
      %v1708 = vpop.f32.mrb[0].mxu0
      %1709 = vdwg.mxu0
      %v1710 = vld [vmem:[%s4] sm:$0x1]
      %v1712 = vlaneseq
      %v1713 = vshrl.u32 %v1712, 7
      %v1714 = vsub.s32 0, %v1713
      %v1715 = vrot.slane %v1710, %v1714
      %v1717 = vmul.f32 %v1648, %v1715
      %v1718 = vmul.f32 %v1651, %v1715
      %v1719 = vmul.f32 %v1656, %v1715
      %v1720 = vmul.f32 %v1659, %v1715
      %v1721 = vmul.f32 %v1664, %v1715
      %v1722 = vmul.f32 %v1667, %v1715
      %v1723 = vmul.f32 %v1672, %v1715
      %v1724 = vmul.f32 %v1675, %v1715
      %v1725 = vmul.f32 %v1680, %v1715
      %v1726 = vmul.f32 %v1683, %v1715
      %v1727 = vmul.f32 %v1688, %v1715
      %v1728 = vmul.f32 %v1691, %v1715
      %v1729 = vmul.f32 %v1696, %v1715
      %v1730 = vmul.f32 %v1699, %v1715
      %v1731 = vmul.f32 %v1704, %v1715
      %v1732 = vmul.f32 %v1707, %v1715
      %v1733 = vld [vmem:[%s5] sm:$0x1]
      %v1735 = vlaneseq
      %v1736 = vshrl.u32 %v1735, 7
      %v1737 = vsub.s32 0, %v1736
      %v1738 = vrot.slane %v1733, %v1737
      %v1740 = vadd.f32 %v1717, %v1738
      %v1741 = vadd.f32 %v1718, %v1738
      %v1742 = vadd.f32 %v1719, %v1738
      %v1743 = vadd.f32 %v1720, %v1738
      %v1744 = vadd.f32 %v1721, %v1738
      %v1745 = vadd.f32 %v1722, %v1738
      %v1746 = vadd.f32 %v1723, %v1738
      %v1747 = vadd.f32 %v1724, %v1738
      %v1748 = vadd.f32 %v1725, %v1738
      %v1749 = vadd.f32 %v1726, %v1738
      %v1750 = vadd.f32 %v1727, %v1738
      %v1751 = vadd.f32 %v1728, %v1738
      %v1752 = vadd.f32 %v1729, %v1738
      %v1753 = vadd.f32 %v1730, %v1738
      %v1754 = vadd.f32 %v1731, %v1738
      %v1755 = vadd.f32 %v1732, %v1738
      %v1756 = vmax.f32 %v1740, 0.0
      %v1757 = vmax.f32 %v1741, 0.0
      %v1758 = vmax.f32 %v1742, 0.0
      %v1759 = vmax.f32 %v1743, 0.0
      %v1760 = vmax.f32 %v1744, 0.0
      %v1761 = vmax.f32 %v1745, 0.0
      %v1762 = vmax.f32 %v1746, 0.0
      %v1763 = vmax.f32 %v1747, 0.0
      %v1764 = vmax.f32 %v1748, 0.0
      %v1765 = vmax.f32 %v1749, 0.0
      %v1766 = vmax.f32 %v1750, 0.0
      %v1767 = vmax.f32 %v1751, 0.0
      %v1768 = vmax.f32 %v1752, 0.0
      %v1769 = vmax.f32 %v1753, 0.0
      %v1770 = vmax.f32 %v1754, 0.0
      %v1771 = vmax.f32 %v1755, 0.0
      %1772 = vst [vmem:[#allocation3] sm:$0xff] 0.0
      %1773 = vst [vmem:[#allocation3 + $0x8] sm:$0x3] 0.0
      %1774 = vst [vmem:[#allocation3 + $0xa0] sm:$0xff] 0.0
      %1775 = vst [vmem:[#allocation3 + $0xa8] sm:$0x3] 0.0
      %s1776 = scalar_lea.vmem [#allocation3], 144
      %1777 = vst [vmem:[%s1776] sm:$0xff] 0.0
      %1778 = vst [vmem:[%s1776 + $0x8] sm:$0x3] 0.0
      %1779 = vst [vmem:[%s1776 + $0xa0] sm:$0xff] 0.0
      %1780 = vst [vmem:[%s1776 + $0xa8] sm:$0x3] 0.0
      %1781 = vst [vmem:[#allocation3] sm:$0x1] 0.0
      %1782 = vst [vmem:[#allocation3 + $0x10] sm:$0x1] 0.0
      %1783 = vst [vmem:[#allocation3 + $0x20] sm:$0x1] 0.0
      %1784 = vst [vmem:[#allocation3 + $0x30] sm:$0x1] 0.0
      %1785 = vst [vmem:[#allocation3 + $0x40] sm:$0x1] 0.0
      %1786 = vst [vmem:[#allocation3 + $0x50] sm:$0x1] 0.0
      %1787 = vst [vmem:[#allocation3 + $0x60] sm:$0x1] 0.0
      %1788 = vst [vmem:[#allocation3 + $0x70] sm:$0x1] 0.0
      %1789 = vst [vmem:[#allocation3 + $0x80] sm:$0x1] 0.0
      %1790 = vst [vmem:[#allocation3 + $0x90] sm:$0x1] 0.0
      %1791 = vst [vmem:[#allocation3 + $0xa0] sm:$0x1] 0.0
      %1792 = vst [vmem:[#allocation3 + $0xb0] sm:$0x1] 0.0
      %1793 = vst [vmem:[#allocation3 + $0xc0] sm:$0x1] 0.0
      %1794 = vst [vmem:[#allocation3 + $0xd0] sm:$0x1] 0.0
      %1795 = vst [vmem:[#allocation3 + $0xe0] sm:$0x1] 0.0
      %1796 = vst [vmem:[#allocation3 + $0xf0] sm:$0x1] 0.0
      %1797 = vst [vmem:[#allocation3 + $0x100] sm:$0x1] 0.0
      %1798 = vst [vmem:[#allocation3 + $0x110] sm:$0x1] 0.0
      %1799 = vst [vmem:[#allocation3 + $0x120] sm:$0x1] 0.0
      %1800 = vst [vmem:[#allocation3 + $0x130] sm:$0x1] 0.0
      %1801 = vst [vmem:[#allocation3 + $0x9] sm:$0x1] 0.0
      %1802 = vst [vmem:[#allocation3 + $0x19] sm:$0x1] 0.0
      %1803 = vst [vmem:[#allocation3 + $0x29] sm:$0x1] 0.0
      %1804 = vst [vmem:[#allocation3 + $0x39] sm:$0x1] 0.0
      %1805 = vst [vmem:[#allocation3 + $0x49] sm:$0x1] 0.0
      %1806 = vst [vmem:[#allocation3 + $0x59] sm:$0x1] 0.0
      %1807 = vst [vmem:[#allocation3 + $0x69] sm:$0x1] 0.0
      %1808 = vst [vmem:[#allocation3 + $0x79] sm:$0x1] 0.0
      %1809 = vst [vmem:[#allocation3 + $0x89] sm:$0x1] 0.0
      %1810 = vst [vmem:[#allocation3 + $0x99] sm:$0x1] 0.0
      %1811 = vst [vmem:[#allocation3 + $0xa9] sm:$0x1] 0.0
      %1812 = vst [vmem:[#allocation3 + $0xb9] sm:$0x1] 0.0
      %1813 = vst [vmem:[#allocation3 + $0xc9] sm:$0x1] 0.0
      %1814 = vst [vmem:[#allocation3 + $0xd9] sm:$0x1] 0.0
      %1815 = vst [vmem:[#allocation3 + $0xe9] sm:$0x1] 0.0
      %1816 = vst [vmem:[#allocation3 + $0xf9] sm:$0x1] 0.0
      %1817 = vst [vmem:[#allocation3 + $0x109] sm:$0x1] 0.0
      %1818 = vst [vmem:[#allocation3 + $0x119] sm:$0x1] 0.0
      %1819 = vst [vmem:[#allocation3 + $0x129] sm:$0x1] 0.0
      %1820 = vst [vmem:[#allocation3 + $0x139] sm:$0x1] 0.0
      %s1821 = scalar_lea.vmem [#allocation3], 16
      %1822 = vst [vmem:[%s1821 + $0x1] sm:$0xff] %v1756
      %1823 = vst [vmem:[%s1821 + $0x11] sm:$0xff] %v1757
      %1824 = vst [vmem:[%s1821 + $0x21] sm:$0xff] %v1758
      %1825 = vst [vmem:[%s1821 + $0x31] sm:$0xff] %v1759
      %1826 = vst [vmem:[%s1821 + $0x41] sm:$0xff] %v1760
      %1827 = vst [vmem:[%s1821 + $0x51] sm:$0xff] %v1761
      %1828 = vst [vmem:[%s1821 + $0x61] sm:$0xff] %v1762
      %1829 = vst [vmem:[%s1821 + $0x71] sm:$0xff] %v1763
      %1830 = vst [vmem:[%s1821 + $0xa1] sm:$0xff] %v1764
      %1831 = vst [vmem:[%s1821 + $0xb1] sm:$0xff] %v1765
      %1832 = vst [vmem:[%s1821 + $0xc1] sm:$0xff] %v1766
      %1833 = vst [vmem:[%s1821 + $0xd1] sm:$0xff] %v1767
      %1834 = vst [vmem:[%s1821 + $0xe1] sm:$0xff] %v1768
      %1835 = vst [vmem:[%s1821 + $0xf1] sm:$0xff] %v1769
      %1836 = vst [vmem:[%s1821 + $0x101] sm:$0xff] %v1770
      %1837 = vst [vmem:[%s1821 + $0x111] sm:$0xff] %v1771
      %v1838 = vld [vmem:[#allocation3] sm:$0xff]
      %v1839 = vld [vmem:[#allocation3 + $0x10] sm:$0xff]
      %v1840 = vld [vmem:[#allocation3 + $0x20] sm:$0xff]
      %v1841 = vld [vmem:[#allocation3 + $0x30] sm:$0xff]
      %v1842 = vld [vmem:[#allocation3 + $0x40] sm:$0xff]
      %v1843 = vld [vmem:[#allocation3 + $0x50] sm:$0xff]
      %v1844 = vld [vmem:[#allocation3 + $0x60] sm:$0xff]
      %v1845 = vld [vmem:[#allocation3 + $0x70] sm:$0xff]
      %v1846 = vld [vmem:[#allocation3 + $0xa0] sm:$0xff]
      %v1847 = vld [vmem:[#allocation3 + $0xb0] sm:$0xff]
      %v1848 = vld [vmem:[#allocation3 + $0xc0] sm:$0xff]
      %v1849 = vld [vmem:[#allocation3 + $0xd0] sm:$0xff]
      %v1850 = vld [vmem:[#allocation3 + $0xe0] sm:$0xff]
      %v1851 = vld [vmem:[#allocation3 + $0xf0] sm:$0xff]
      %v1852 = vld [vmem:[#allocation3 + $0x100] sm:$0xff]
      %v1853 = vld [vmem:[#allocation3 + $0x110] sm:$0xff]
      %v1854 = vld [vmem:[#allocation3 + $0x1] sm:$0xff]
      %v1855 = vld [vmem:[#allocation3 + $0x11] sm:$0xff]
      %v1856 = vld [vmem:[#allocation3 + $0x21] sm:$0xff]
      %v1857 = vld [vmem:[#allocation3 + $0x31] sm:$0xff]
      %v1858 = vld [vmem:[#allocation3 + $0x41] sm:$0xff]
      %v1859 = vld [vmem:[#allocation3 + $0x51] sm:$0xff]
      %v1860 = vld [vmem:[#allocation3 + $0x61] sm:$0xff]
      %v1861 = vld [vmem:[#allocation3 + $0x71] sm:$0xff]
      %v1862 = vld [vmem:[#allocation3 + $0xa1] sm:$0xff]
      %v1863 = vld [vmem:[#allocation3 + $0xb1] sm:$0xff]
      %v1864 = vld [vmem:[#allocation3 + $0xc1] sm:$0xff]
      %v1865 = vld [vmem:[#allocation3 + $0xd1] sm:$0xff]
      %v1866 = vld [vmem:[#allocation3 + $0xe1] sm:$0xff]
      %v1867 = vld [vmem:[#allocation3 + $0xf1] sm:$0xff]
      %v1868 = vld [vmem:[#allocation3 + $0x101] sm:$0xff]
      %v1869 = vld [vmem:[#allocation3 + $0x111] sm:$0xff]
      %v1870 = vld [vmem:[#allocation3 + $0x2] sm:$0xff]
      %v1871 = vld [vmem:[#allocation3 + $0x12] sm:$0xff]
      %v1872 = vld [vmem:[#allocation3 + $0x22] sm:$0xff]
      %v1873 = vld [vmem:[#allocation3 + $0x32] sm:$0xff]
      %v1874 = vld [vmem:[#allocation3 + $0x42] sm:$0xff]
      %v1875 = vld [vmem:[#allocation3 + $0x52] sm:$0xff]
      %v1876 = vld [vmem:[#allocation3 + $0x62] sm:$0xff]
      %v1877 = vld [vmem:[#allocation3 + $0x72] sm:$0xff]
      %v1878 = vld [vmem:[#allocation3 + $0xa2] sm:$0xff]
      %v1879 = vld [vmem:[#allocation3 + $0xb2] sm:$0xff]
      %v1880 = vld [vmem:[#allocation3 + $0xc2] sm:$0xff]
      %v1881 = vld [vmem:[#allocation3 + $0xd2] sm:$0xff]
      %v1882 = vld [vmem:[#allocation3 + $0xe2] sm:$0xff]
      %v1883 = vld [vmem:[#allocation3 + $0xf2] sm:$0xff]
      %v1884 = vld [vmem:[#allocation3 + $0x102] sm:$0xff]
      %v1885 = vld [vmem:[#allocation3 + $0x112] sm:$0xff]
      %v1886 = vld [vmem:[%s1821] sm:$0xff]
      %v1887 = vld [vmem:[%s1821 + $0x10] sm:$0xff]
      %v1888 = vld [vmem:[%s1821 + $0x20] sm:$0xff]
      %v1889 = vld [vmem:[%s1821 + $0x30] sm:$0xff]
      %v1890 = vld [vmem:[%s1821 + $0x40] sm:$0xff]
      %v1891 = vld [vmem:[%s1821 + $0x50] sm:$0xff]
      %v1892 = vld [vmem:[%s1821 + $0x60] sm:$0xff]
      %v1893 = vld [vmem:[%s1821 + $0x70] sm:$0xff]
      %v1894 = vld [vmem:[%s1821 + $0xa0] sm:$0xff]
      %v1895 = vld [vmem:[%s1821 + $0xb0] sm:$0xff]
      %v1896 = vld [vmem:[%s1821 + $0xc0] sm:$0xff]
      %v1897 = vld [vmem:[%s1821 + $0xd0] sm:$0xff]
      %v1898 = vld [vmem:[%s1821 + $0xe0] sm:$0xff]
      %v1899 = vld [vmem:[%s1821 + $0xf0] sm:$0xff]
      %v1900 = vld [vmem:[%s1821 + $0x100] sm:$0xff]
      %v1901 = vld [vmem:[%s1821 + $0x110] sm:$0xff]
      %v1902 = vld [vmem:[%s1821 + $0x1] sm:$0xff]
      %v1903 = vld [vmem:[%s1821 + $0x11] sm:$0xff]
      %v1904 = vld [vmem:[%s1821 + $0x21] sm:$0xff]
      %v1905 = vld [vmem:[%s1821 + $0x31] sm:$0xff]
      %v1906 = vld [vmem:[%s1821 + $0x41] sm:$0xff]
      %v1907 = vld [vmem:[%s1821 + $0x51] sm:$0xff]
      %v1908 = vld [vmem:[%s1821 + $0x61] sm:$0xff]
      %v1909 = vld [vmem:[%s1821 + $0x71] sm:$0xff]
      %v1910 = vld [vmem:[%s1821 + $0xa1] sm:$0xff]
      %v1911 = vld [vmem:[%s1821 + $0xb1] sm:$0xff]
      %v1912 = vld [vmem:[%s1821 + $0xc1] sm:$0xff]
      %v1913 = vld [vmem:[%s1821 + $0xd1] sm:$0xff]
      %v1914 = vld [vmem:[%s1821 + $0xe1] sm:$0xff]
      %v1915 = vld [vmem:[%s1821 + $0xf1] sm:$0xff]
      %v1916 = vld [vmem:[%s1821 + $0x101] sm:$0xff]
      %v1917 = vld [vmem:[%s1821 + $0x111] sm:$0xff]
      %v1918 = vld [vmem:[%s1821 + $0x2] sm:$0xff]
      %v1919 = vld [vmem:[%s1821 + $0x12] sm:$0xff]
      %v1920 = vld [vmem:[%s1821 + $0x22] sm:$0xff]
      %v1921 = vld [vmem:[%s1821 + $0x32] sm:$0xff]
      %v1922 = vld [vmem:[%s1821 + $0x42] sm:$0xff]
      %v1923 = vld [vmem:[%s1821 + $0x52] sm:$0xff]
      %v1924 = vld [vmem:[%s1821 + $0x62] sm:$0xff]
      %v1925 = vld [vmem:[%s1821 + $0x72] sm:$0xff]
      %v1926 = vld [vmem:[%s1821 + $0xa2] sm:$0xff]
      %v1927 = vld [vmem:[%s1821 + $0xb2] sm:$0xff]
      %v1928 = vld [vmem:[%s1821 + $0xc2] sm:$0xff]
      %v1929 = vld [vmem:[%s1821 + $0xd2] sm:$0xff]
      %v1930 = vld [vmem:[%s1821 + $0xe2] sm:$0xff]
      %v1931 = vld [vmem:[%s1821 + $0xf2] sm:$0xff]
      %v1932 = vld [vmem:[%s1821 + $0x102] sm:$0xff]
      %v1933 = vld [vmem:[%s1821 + $0x112] sm:$0xff]
      %s1934 = scalar_lea.vmem [#allocation3], 32
      %v1935 = vld [vmem:[%s1934] sm:$0xff]
      %v1936 = vld [vmem:[%s1934 + $0x10] sm:$0xff]
      %v1937 = vld [vmem:[%s1934 + $0x20] sm:$0xff]
      %v1938 = vld [vmem:[%s1934 + $0x30] sm:$0xff]
      %v1939 = vld [vmem:[%s1934 + $0x40] sm:$0xff]
      %v1940 = vld [vmem:[%s1934 + $0x50] sm:$0xff]
      %v1941 = vld [vmem:[%s1934 + $0x60] sm:$0xff]
      %v1942 = vld [vmem:[%s1934 + $0x70] sm:$0xff]
      %v1943 = vld [vmem:[%s1934 + $0xa0] sm:$0xff]
      %v1944 = vld [vmem:[%s1934 + $0xb0] sm:$0xff]
      %v1945 = vld [vmem:[%s1934 + $0xc0] sm:$0xff]
      %v1946 = vld [vmem:[%s1934 + $0xd0] sm:$0xff]
      %v1947 = vld [vmem:[%s1934 + $0xe0] sm:$0xff]
      %v1948 = vld [vmem:[%s1934 + $0xf0] sm:$0xff]
      %v1949 = vld [vmem:[%s1934 + $0x100] sm:$0xff]
      %v1950 = vld [vmem:[%s1934 + $0x110] sm:$0xff]
      %v1951 = vld [vmem:[%s1934 + $0x1] sm:$0xff]
      %v1952 = vld [vmem:[%s1934 + $0x11] sm:$0xff]
      %v1953 = vld [vmem:[%s1934 + $0x21] sm:$0xff]
      %v1954 = vld [vmem:[%s1934 + $0x31] sm:$0xff]
      %v1955 = vld [vmem:[%s1934 + $0x41] sm:$0xff]
      %v1956 = vld [vmem:[%s1934 + $0x51] sm:$0xff]
      %v1957 = vld [vmem:[%s1934 + $0x61] sm:$0xff]
      %v1958 = vld [vmem:[%s1934 + $0x71] sm:$0xff]
      %v1959 = vld [vmem:[%s1934 + $0xa1] sm:$0xff]
      %v1960 = vld [vmem:[%s1934 + $0xb1] sm:$0xff]
      %v1961 = vld [vmem:[%s1934 + $0xc1] sm:$0xff]
      %v1962 = vld [vmem:[%s1934 + $0xd1] sm:$0xff]
      %v1963 = vld [vmem:[%s1934 + $0xe1] sm:$0xff]
      %v1964 = vld [vmem:[%s1934 + $0xf1] sm:$0xff]
      %v1965 = vld [vmem:[%s1934 + $0x101] sm:$0xff]
      %v1966 = vld [vmem:[%s1934 + $0x111] sm:$0xff]
      %v1967 = vld [vmem:[%s1934 + $0x2] sm:$0xff]
      %v1968 = vld [vmem:[%s1934 + $0x12] sm:$0xff]
      %v1969 = vld [vmem:[%s1934 + $0x22] sm:$0xff]
      %v1970 = vld [vmem:[%s1934 + $0x32] sm:$0xff]
      %v1971 = vld [vmem:[%s1934 + $0x42] sm:$0xff]
      %v1972 = vld [vmem:[%s1934 + $0x52] sm:$0xff]
      %v1973 = vld [vmem:[%s1934 + $0x62] sm:$0xff]
      %v1974 = vld [vmem:[%s1934 + $0x72] sm:$0xff]
      %v1975 = vld [vmem:[%s1934 + $0xa2] sm:$0xff]
      %v1976 = vld [vmem:[%s1934 + $0xb2] sm:$0xff]
      %v1977 = vld [vmem:[%s1934 + $0xc2] sm:$0xff]
      %v1978 = vld [vmem:[%s1934 + $0xd2] sm:$0xff]
      %v1979 = vld [vmem:[%s1934 + $0xe2] sm:$0xff]
      %v1980 = vld [vmem:[%s1934 + $0xf2] sm:$0xff]
      %v1981 = vld [vmem:[%s1934 + $0x102] sm:$0xff]
      %v1982 = vld [vmem:[%s1934 + $0x112] sm:$0xff]
      %v1983 = vpack.c.bf16 %v1839, %v1838
      %v1984 = vpack.c.bf16 %v1855, %v1854
      %v1985 = vpack.c.bf16 %v1871, %v1870
      %v1986 = vpack.c.bf16 %v1887, %v1886
      %v1987 = vpack.c.bf16 %v1903, %v1902
      %v1988 = vpack.c.bf16 %v1919, %v1918
      %v1989 = vpack.c.bf16 %v1936, %v1935
      %v1990 = vpack.c.bf16 %v1952, %v1951
      %v1991 = vpack.c.bf16 %v1968, %v1967
      %v1992 = vpack.c.bf16 %v1841, %v1840
      %v1993 = vpack.c.bf16 %v1857, %v1856
      %v1994 = vpack.c.bf16 %v1873, %v1872
      %v1995 = vpack.c.bf16 %v1889, %v1888
      %v1996 = vpack.c.bf16 %v1905, %v1904
      %v1997 = vpack.c.bf16 %v1921, %v1920
      %v1998 = vpack.c.bf16 %v1938, %v1937
      %v1999 = vpack.c.bf16 %v1954, %v1953
      %v2000 = vpack.c.bf16 %v1970, %v1969
      %v2001 = vpack.c.bf16 %v1843, %v1842
      %v2002 = vpack.c.bf16 %v1859, %v1858
      %v2003 = vpack.c.bf16 %v1875, %v1874
      %v2004 = vpack.c.bf16 %v1891, %v1890
      %v2005 = vpack.c.bf16 %v1907, %v1906
      %v2006 = vpack.c.bf16 %v1923, %v1922
      %v2007 = vpack.c.bf16 %v1940, %v1939
      %v2008 = vpack.c.bf16 %v1956, %v1955
      %v2009 = vpack.c.bf16 %v1972, %v1971
      %v2010 = vpack.c.bf16 %v1845, %v1844
      %v2011 = vpack.c.bf16 %v1861, %v1860
      %v2012 = vpack.c.bf16 %v1877, %v1876
      %v2013 = vpack.c.bf16 %v1893, %v1892
      %v2014 = vpack.c.bf16 %v1909, %v1908
      %v2015 = vpack.c.bf16 %v1925, %v1924
      %v2016 = vpack.c.bf16 %v1942, %v1941
      %v2017 = vpack.c.bf16 %v1958, %v1957
      %v2018 = vpack.c.bf16 %v1974, %v1973
      %v2019 = vpack.c.bf16 %v1847, %v1846
      %v2020 = vpack.c.bf16 %v1863, %v1862
      %v2021 = vpack.c.bf16 %v1879, %v1878
      %v2022 = vpack.c.bf16 %v1895, %v1894
      %v2023 = vpack.c.bf16 %v1911, %v1910
      %v2024 = vpack.c.bf16 %v1927, %v1926
      %v2025 = vpack.c.bf16 %v1944, %v1943
      %v2026 = vpack.c.bf16 %v1960, %v1959
      %v2027 = vpack.c.bf16 %v1976, %v1975
      %v2028 = vpack.c.bf16 %v1849, %v1848
      %v2029 = vpack.c.bf16 %v1865, %v1864
      %v2030 = vpack.c.bf16 %v1881, %v1880
      %v2031 = vpack.c.bf16 %v1897, %v1896
      %v2032 = vpack.c.bf16 %v1913, %v1912
      %v2033 = vpack.c.bf16 %v1929, %v1928
      %v2034 = vpack.c.bf16 %v1946, %v1945
      %v2035 = vpack.c.bf16 %v1962, %v1961
      %v2036 = vpack.c.bf16 %v1978, %v1977
      %v2037 = vpack.c.bf16 %v1851, %v1850
      %v2038 = vpack.c.bf16 %v1867, %v1866
      %v2039 = vpack.c.bf16 %v1883, %v1882
      %v2040 = vpack.c.bf16 %v1899, %v1898
      %v2041 = vpack.c.bf16 %v1915, %v1914
      %v2042 = vpack.c.bf16 %v1931, %v1930
      %v2043 = vpack.c.bf16 %v1948, %v1947
      %v2044 = vpack.c.bf16 %v1964, %v1963
      %v2045 = vpack.c.bf16 %v1980, %v1979
      %v2046 = vpack.c.bf16 %v1853, %v1852
      %v2047 = vpack.c.bf16 %v1869, %v1868
      %v2048 = vpack.c.bf16 %v1885, %v1884
      %v2049 = vpack.c.bf16 %v1901, %v1900
      %v2050 = vpack.c.bf16 %v1917, %v1916
      %v2051 = vpack.c.bf16 %v1933, %v1932
      %v2052 = vpack.c.bf16 %v1950, %v1949
      %v2053 = vpack.c.bf16 %v1966, %v1965
      %v2054 = vpack.c.bf16 %v1982, %v1981
      %v2055 = vld [vmem:[%s6] sm:$0xf]
      %v2056 = vld [vmem:[%s6 + $0x4] sm:$0xf]
      %v2057 = vld [vmem:[%s6 + $0x8] sm:$0xf]
      %v2058 = vld [vmem:[%s6 + $0xc] sm:$0xf]
      %v2059 = vld [vmem:[%s6 + $0x10] sm:$0xf]
      %v2060 = vld [vmem:[%s6 + $0x14] sm:$0xf]
      %v2061 = vld [vmem:[%s6 + $0x18] sm:$0xf]
      %v2062 = vld [vmem:[%s6 + $0x1c] sm:$0xf]
      %v2063 = vld [vmem:[%s6 + $0x20] sm:$0xf]
      %v2064 = vld [vmem:[%s6 + $0x24] sm:$0xf]
      %v2065 = vld [vmem:[%s6 + $0x28] sm:$0xf]
      %v2066 = vld [vmem:[%s6 + $0x2c] sm:$0xf]
      %v2067 = vld [vmem:[%s6 + $0x30] sm:$0xf]
      %v2068 = vld [vmem:[%s6 + $0x34] sm:$0xf]
      %v2069 = vld [vmem:[%s6 + $0x38] sm:$0xf]
      %v2070 = vld [vmem:[%s6 + $0x3c] sm:$0xf]
      %v2071 = vld [vmem:[%s6 + $0x40] sm:$0xf]
      %v2072 = vld [vmem:[%s6 + $0x44] sm:$0xf]
      %v2073 = vld [vmem:[%s6 + $0x48] sm:$0xf]
      %v2074 = vld [vmem:[%s6 + $0x4c] sm:$0xf]
      %v2075 = vld [vmem:[%s6 + $0x50] sm:$0xf]
      %v2076 = vld [vmem:[%s6 + $0x54] sm:$0xf]
      %v2077 = vld [vmem:[%s6 + $0x58] sm:$0xf]
      %v2078 = vld [vmem:[%s6 + $0x5c] sm:$0xf]
      %v2079 = vld [vmem:[%s6 + $0x60] sm:$0xf]
      %v2080 = vld [vmem:[%s6 + $0x64] sm:$0xf]
      %v2081 = vld [vmem:[%s6 + $0x68] sm:$0xf]
      %v2082 = vld [vmem:[%s6 + $0x6c] sm:$0xf]
      %v2083 = vld [vmem:[%s6 + $0x70] sm:$0xf]
      %v2084 = vld [vmem:[%s6 + $0x74] sm:$0xf]
      %v2085 = vld [vmem:[%s6 + $0x78] sm:$0xf]
      %v2086 = vld [vmem:[%s6 + $0x7c] sm:$0xf]
      %v2087 = vld [vmem:[%s6 + $0x80] sm:$0xf]
      %v2088 = vld [vmem:[%s6 + $0x84] sm:$0xf]
      %v2089 = vld [vmem:[%s6 + $0x88] sm:$0xf]
      %v2090 = vld [vmem:[%s6 + $0x8c] sm:$0xf]
      %v2091 = vld [vmem:[%s6 + $0x90] sm:$0xf]
      %v2092 = vld [vmem:[%s6 + $0x94] sm:$0xf]
      %v2093 = vld [vmem:[%s6 + $0x98] sm:$0xf]
      %v2094 = vld [vmem:[%s6 + $0x9c] sm:$0xf]
      %v2095 = vld [vmem:[%s6 + $0xa0] sm:$0xf]
      %v2096 = vld [vmem:[%s6 + $0xa4] sm:$0xf]
      %v2097 = vld [vmem:[%s6 + $0xa8] sm:$0xf]
      %v2098 = vld [vmem:[%s6 + $0xac] sm:$0xf]
      %v2099 = vld [vmem:[%s6 + $0xb0] sm:$0xf]
      %v2100 = vld [vmem:[%s6 + $0xb4] sm:$0xf]
      %v2101 = vld [vmem:[%s6 + $0xb8] sm:$0xf]
      %v2102 = vld [vmem:[%s6 + $0xbc] sm:$0xf]
      %v2103 = vld [vmem:[%s6 + $0xc0] sm:$0xf]
      %v2104 = vld [vmem:[%s6 + $0xc4] sm:$0xf]
      %v2105 = vld [vmem:[%s6 + $0xc8] sm:$0xf]
      %v2106 = vld [vmem:[%s6 + $0xcc] sm:$0xf]
      %v2107 = vld [vmem:[%s6 + $0xd0] sm:$0xf]
      %v2108 = vld [vmem:[%s6 + $0xd4] sm:$0xf]
      %v2109 = vld [vmem:[%s6 + $0xd8] sm:$0xf]
      %v2110 = vld [vmem:[%s6 + $0xdc] sm:$0xf]
      %v2111 = vld [vmem:[%s6 + $0xe0] sm:$0xf]
      %v2112 = vld [vmem:[%s6 + $0xe4] sm:$0xf]
      %v2113 = vld [vmem:[%s6 + $0xe8] sm:$0xf]
      %v2114 = vld [vmem:[%s6 + $0xec] sm:$0xf]
      %v2115 = vld [vmem:[%s6 + $0xf0] sm:$0xf]
      %v2116 = vld [vmem:[%s6 + $0xf4] sm:$0xf]
      %v2117 = vld [vmem:[%s6 + $0xf8] sm:$0xf]
      %v2118 = vld [vmem:[%s6 + $0xfc] sm:$0xf]
      %v2119 = vld [vmem:[%s6 + $0x100] sm:$0xf]
      %v2120 = vld [vmem:[%s6 + $0x104] sm:$0xf]
      %v2121 = vld [vmem:[%s6 + $0x108] sm:$0xf]
      %v2122 = vld [vmem:[%s6 + $0x10c] sm:$0xf]
      %v2123 = vld [vmem:[%s6 + $0x110] sm:$0xf]
      %v2124 = vld [vmem:[%s6 + $0x114] sm:$0xf]
      %v2125 = vld [vmem:[%s6 + $0x118] sm:$0xf]
      %v2126 = vld [vmem:[%s6 + $0x11c] sm:$0xf]
      %v2127 = vld [vmem:[%s6 + $0x120] sm:$0xf]
      %v2128 = vld [vmem:[%s6 + $0x124] sm:$0xf]
      %v2129 = vld [vmem:[%s6 + $0x128] sm:$0xf]
      %v2130 = vld [vmem:[%s6 + $0x12c] sm:$0xf]
      %v2131 = vld [vmem:[%s6 + $0x130] sm:$0xf]
      %v2132 = vld [vmem:[%s6 + $0x134] sm:$0xf]
      %v2133 = vld [vmem:[%s6 + $0x138] sm:$0xf]
      %v2134 = vld [vmem:[%s6 + $0x13c] sm:$0xf]
      %v2135 = vld [vmem:[%s6 + $0x140] sm:$0xf]
      %v2136 = vld [vmem:[%s6 + $0x144] sm:$0xf]
      %v2137 = vld [vmem:[%s6 + $0x148] sm:$0xf]
      %v2138 = vld [vmem:[%s6 + $0x14c] sm:$0xf]
      %v2139 = vld [vmem:[%s6 + $0x150] sm:$0xf]
      %v2140 = vld [vmem:[%s6 + $0x154] sm:$0xf]
      %v2141 = vld [vmem:[%s6 + $0x158] sm:$0xf]
      %v2142 = vld [vmem:[%s6 + $0x15c] sm:$0xf]
      %v2143 = vld [vmem:[%s6 + $0x160] sm:$0xf]
      %v2144 = vld [vmem:[%s6 + $0x164] sm:$0xf]
      %v2145 = vld [vmem:[%s6 + $0x168] sm:$0xf]
      %v2146 = vld [vmem:[%s6 + $0x16c] sm:$0xf]
      %v2147 = vld [vmem:[%s6 + $0x170] sm:$0xf]
      %v2148 = vld [vmem:[%s6 + $0x174] sm:$0xf]
      %v2149 = vld [vmem:[%s6 + $0x178] sm:$0xf]
      %v2150 = vld [vmem:[%s6 + $0x17c] sm:$0xf]
      %v2151 = vld [vmem:[%s6 + $0x180] sm:$0xf]
      %v2152 = vld [vmem:[%s6 + $0x184] sm:$0xf]
      %v2153 = vld [vmem:[%s6 + $0x188] sm:$0xf]
      %v2154 = vld [vmem:[%s6 + $0x18c] sm:$0xf]
      %v2155 = vld [vmem:[%s6 + $0x190] sm:$0xf]
      %v2156 = vld [vmem:[%s6 + $0x194] sm:$0xf]
      %v2157 = vld [vmem:[%s6 + $0x198] sm:$0xf]
      %v2158 = vld [vmem:[%s6 + $0x19c] sm:$0xf]
      %v2159 = vld [vmem:[%s6 + $0x1a0] sm:$0xf]
      %v2160 = vld [vmem:[%s6 + $0x1a4] sm:$0xf]
      %v2161 = vld [vmem:[%s6 + $0x1a8] sm:$0xf]
      %v2162 = vld [vmem:[%s6 + $0x1ac] sm:$0xf]
      %v2163 = vld [vmem:[%s6 + $0x1b0] sm:$0xf]
      %v2164 = vld [vmem:[%s6 + $0x1b4] sm:$0xf]
      %v2165 = vld [vmem:[%s6 + $0x1b8] sm:$0xf]
      %v2166 = vld [vmem:[%s6 + $0x1bc] sm:$0xf]
      %v2167 = vld [vmem:[%s6 + $0x1c0] sm:$0xf]
      %v2168 = vld [vmem:[%s6 + $0x1c4] sm:$0xf]
      %v2169 = vld [vmem:[%s6 + $0x1c8] sm:$0xf]
      %v2170 = vld [vmem:[%s6 + $0x1cc] sm:$0xf]
      %v2171 = vld [vmem:[%s6 + $0x1d0] sm:$0xf]
      %v2172 = vld [vmem:[%s6 + $0x1d4] sm:$0xf]
      %v2173 = vld [vmem:[%s6 + $0x1d8] sm:$0xf]
      %v2174 = vld [vmem:[%s6 + $0x1dc] sm:$0xf]
      %v2175 = vld [vmem:[%s6 + $0x1e0] sm:$0xf]
      %v2176 = vld [vmem:[%s6 + $0x1e4] sm:$0xf]
      %v2177 = vld [vmem:[%s6 + $0x1e8] sm:$0xf]
      %v2178 = vld [vmem:[%s6 + $0x1ec] sm:$0xf]
      %v2179 = vld [vmem:[%s6 + $0x1f0] sm:$0xf]
      %v2180 = vld [vmem:[%s6 + $0x1f4] sm:$0xf]
      %v2181 = vld [vmem:[%s6 + $0x1f8] sm:$0xf]
      %v2182 = vld [vmem:[%s6 + $0x1fc] sm:$0xf]
      %v2183 = vld [vmem:[%s6 + $0x200] sm:$0xf]
      %v2184 = vld [vmem:[%s6 + $0x204] sm:$0xf]
      %v2185 = vld [vmem:[%s6 + $0x208] sm:$0xf]
      %v2186 = vld [vmem:[%s6 + $0x20c] sm:$0xf]
      %v2187 = vld [vmem:[%s6 + $0x210] sm:$0xf]
      %v2188 = vld [vmem:[%s6 + $0x214] sm:$0xf]
      %v2189 = vld [vmem:[%s6 + $0x218] sm:$0xf]
      %v2190 = vld [vmem:[%s6 + $0x21c] sm:$0xf]
      %v2191 = vld [vmem:[%s6 + $0x220] sm:$0xf]
      %v2192 = vld [vmem:[%s6 + $0x224] sm:$0xf]
      %v2193 = vld [vmem:[%s6 + $0x228] sm:$0xf]
      %v2194 = vld [vmem:[%s6 + $0x22c] sm:$0xf]
      %v2195 = vld [vmem:[%s6 + $0x230] sm:$0xf]
      %v2196 = vld [vmem:[%s6 + $0x234] sm:$0xf]
      %v2197 = vld [vmem:[%s6 + $0x238] sm:$0xf]
      %v2198 = vld [vmem:[%s6 + $0x23c] sm:$0xf]
      %v2343 = vunpack.c.l.b16 %v2055
      %v2344 = vunpack.c.l.b16 %v2056
      %v2345 = vunpack.c.l.b16 %v2057
      %v2346 = vunpack.c.l.b16 %v2058
      %v2347 = vunpack.c.l.b16 %v2059
      %v2348 = vunpack.c.l.b16 %v2060
      %v2349 = vunpack.c.l.b16 %v2061
      %v2350 = vunpack.c.l.b16 %v2062
      %v2351 = vunpack.c.l.b16 %v2063
      %v2352 = vunpack.c.l.b16 %v2064
      %v2353 = vunpack.c.l.b16 %v2065
      %v2354 = vunpack.c.l.b16 %v2066
      %v2355 = vunpack.c.l.b16 %v2067
      %v2356 = vunpack.c.l.b16 %v2068
      %v2357 = vunpack.c.l.b16 %v2069
      %v2358 = vunpack.c.l.b16 %v2070
      %v2359 = vunpack.c.l.b16 %v2071
      %v2360 = vunpack.c.l.b16 %v2072
      %v2361 = vunpack.c.l.b16 %v2073
      %v2362 = vunpack.c.l.b16 %v2074
      %v2363 = vunpack.c.l.b16 %v2075
      %v2364 = vunpack.c.l.b16 %v2076
      %v2365 = vunpack.c.l.b16 %v2077
      %v2366 = vunpack.c.l.b16 %v2078
      %v2367 = vunpack.c.l.b16 %v2079
      %v2368 = vunpack.c.l.b16 %v2080
      %v2369 = vunpack.c.l.b16 %v2081
      %v2370 = vunpack.c.l.b16 %v2082
      %v2371 = vunpack.c.l.b16 %v2083
      %v2372 = vunpack.c.l.b16 %v2084
      %v2373 = vunpack.c.l.b16 %v2085
      %v2374 = vunpack.c.l.b16 %v2086
      %v2375 = vunpack.c.l.b16 %v2087
      %v2376 = vunpack.c.l.b16 %v2088
      %v2377 = vunpack.c.l.b16 %v2089
      %v2378 = vunpack.c.l.b16 %v2090
      %v2379 = vunpack.c.l.b16 %v2091
      %v2380 = vunpack.c.l.b16 %v2092
      %v2381 = vunpack.c.l.b16 %v2093
      %v2382 = vunpack.c.l.b16 %v2094
      %v2383 = vunpack.c.l.b16 %v2095
      %v2384 = vunpack.c.l.b16 %v2096
      %v2385 = vunpack.c.l.b16 %v2097
      %v2386 = vunpack.c.l.b16 %v2098
      %v2387 = vunpack.c.l.b16 %v2099
      %v2388 = vunpack.c.l.b16 %v2100
      %v2389 = vunpack.c.l.b16 %v2101
      %v2390 = vunpack.c.l.b16 %v2102
      %v2391 = vunpack.c.l.b16 %v2103
      %v2392 = vunpack.c.l.b16 %v2104
      %v2393 = vunpack.c.l.b16 %v2105
      %v2394 = vunpack.c.l.b16 %v2106
      %v2395 = vunpack.c.l.b16 %v2107
      %v2396 = vunpack.c.l.b16 %v2108
      %v2397 = vunpack.c.l.b16 %v2109
      %v2398 = vunpack.c.l.b16 %v2110
      %v2399 = vunpack.c.l.b16 %v2111
      %v2400 = vunpack.c.l.b16 %v2112
      %v2401 = vunpack.c.l.b16 %v2113
      %v2402 = vunpack.c.l.b16 %v2114
      %v2403 = vunpack.c.l.b16 %v2115
      %v2404 = vunpack.c.l.b16 %v2116
      %v2405 = vunpack.c.l.b16 %v2117
      %v2406 = vunpack.c.l.b16 %v2118
      %v2407 = vunpack.c.l.b16 %v2119
      %v2408 = vunpack.c.l.b16 %v2120
      %v2409 = vunpack.c.l.b16 %v2121
      %v2410 = vunpack.c.l.b16 %v2122
      %v2411 = vunpack.c.l.b16 %v2123
      %v2412 = vunpack.c.l.b16 %v2124
      %v2413 = vunpack.c.l.b16 %v2125
      %v2414 = vunpack.c.l.b16 %v2126
      %v2415 = vunpack.c.l.b16 %v2127
      %v2416 = vunpack.c.l.b16 %v2128
      %v2417 = vunpack.c.l.b16 %v2129
      %v2418 = vunpack.c.l.b16 %v2130
      %v2419 = vunpack.c.l.b16 %v2131
      %v2420 = vunpack.c.l.b16 %v2132
      %v2421 = vunpack.c.l.b16 %v2133
      %v2422 = vunpack.c.l.b16 %v2134
      %v2423 = vunpack.c.l.b16 %v2135
      %v2424 = vunpack.c.l.b16 %v2136
      %v2425 = vunpack.c.l.b16 %v2137
      %v2426 = vunpack.c.l.b16 %v2138
      %v2427 = vunpack.c.l.b16 %v2139
      %v2428 = vunpack.c.l.b16 %v2140
      %v2429 = vunpack.c.l.b16 %v2141
      %v2430 = vunpack.c.l.b16 %v2142
      %v2431 = vunpack.c.l.b16 %v2143
      %v2432 = vunpack.c.l.b16 %v2144
      %v2433 = vunpack.c.l.b16 %v2145
      %v2434 = vunpack.c.l.b16 %v2146
      %v2435 = vunpack.c.l.b16 %v2147
      %v2436 = vunpack.c.l.b16 %v2148
      %v2437 = vunpack.c.l.b16 %v2149
      %v2438 = vunpack.c.l.b16 %v2150
      %v2439 = vunpack.c.l.b16 %v2151
      %v2440 = vunpack.c.l.b16 %v2152
      %v2441 = vunpack.c.l.b16 %v2153
      %v2442 = vunpack.c.l.b16 %v2154
      %v2443 = vunpack.c.l.b16 %v2155
      %v2444 = vunpack.c.l.b16 %v2156
      %v2445 = vunpack.c.l.b16 %v2157
      %v2446 = vunpack.c.l.b16 %v2158
      %v2447 = vunpack.c.l.b16 %v2159
      %v2448 = vunpack.c.l.b16 %v2160
      %v2449 = vunpack.c.l.b16 %v2161
      %v2450 = vunpack.c.l.b16 %v2162
      %v2451 = vunpack.c.l.b16 %v2163
      %v2452 = vunpack.c.l.b16 %v2164
      %v2453 = vunpack.c.l.b16 %v2165
      %v2454 = vunpack.c.l.b16 %v2166
      %v2455 = vunpack.c.l.b16 %v2167
      %v2456 = vunpack.c.l.b16 %v2168
      %v2457 = vunpack.c.l.b16 %v2169
      %v2458 = vunpack.c.l.b16 %v2170
      %v2459 = vunpack.c.l.b16 %v2171
      %v2460 = vunpack.c.l.b16 %v2172
      %v2461 = vunpack.c.l.b16 %v2173
      %v2462 = vunpack.c.l.b16 %v2174
      %v2463 = vunpack.c.l.b16 %v2175
      %v2464 = vunpack.c.l.b16 %v2176
      %v2465 = vunpack.c.l.b16 %v2177
      %v2466 = vunpack.c.l.b16 %v2178
      %v2467 = vunpack.c.l.b16 %v2179
      %v2468 = vunpack.c.l.b16 %v2180
      %v2469 = vunpack.c.l.b16 %v2181
      %v2470 = vunpack.c.l.b16 %v2182
      %v2471 = vunpack.c.l.b16 %v2183
      %v2472 = vunpack.c.l.b16 %v2184
      %v2473 = vunpack.c.l.b16 %v2185
      %v2474 = vunpack.c.l.b16 %v2186
      %v2475 = vunpack.c.l.b16 %v2187
      %v2476 = vunpack.c.l.b16 %v2188
      %v2477 = vunpack.c.l.b16 %v2189
      %v2478 = vunpack.c.l.b16 %v2190
      %v2479 = vunpack.c.l.b16 %v2191
      %v2480 = vunpack.c.l.b16 %v2192
      %v2481 = vunpack.c.l.b16 %v2193
      %v2482 = vunpack.c.l.b16 %v2194
      %v2483 = vunpack.c.l.b16 %v2195
      %v2484 = vunpack.c.l.b16 %v2196
      %v2485 = vunpack.c.l.b16 %v2197
      %v2486 = vunpack.c.l.b16 %v2198
      %v2487 = vpack.c.b16 %v2344, %v2343
      %v2488 = vpack.c.b16 %v2346, %v2345
      %v2489 = vpack.c.b16 %v2348, %v2347
      %v2490 = vpack.c.b16 %v2350, %v2349
      %v2491 = vpack.c.b16 %v2352, %v2351
      %v2492 = vpack.c.b16 %v2354, %v2353
      %v2493 = vpack.c.b16 %v2356, %v2355
      %v2494 = vpack.c.b16 %v2358, %v2357
      %v2495 = vpack.c.b16 %v2360, %v2359
      %v2496 = vpack.c.b16 %v2362, %v2361
      %v2497 = vpack.c.b16 %v2364, %v2363
      %v2498 = vpack.c.b16 %v2366, %v2365
      %v2499 = vpack.c.b16 %v2368, %v2367
      %v2500 = vpack.c.b16 %v2370, %v2369
      %v2501 = vpack.c.b16 %v2372, %v2371
      %v2502 = vpack.c.b16 %v2374, %v2373
      %v2503 = vpack.c.b16 %v2376, %v2375
      %v2504 = vpack.c.b16 %v2378, %v2377
      %v2505 = vpack.c.b16 %v2380, %v2379
      %v2506 = vpack.c.b16 %v2382, %v2381
      %v2507 = vpack.c.b16 %v2384, %v2383
      %v2508 = vpack.c.b16 %v2386, %v2385
      %v2509 = vpack.c.b16 %v2388, %v2387
      %v2510 = vpack.c.b16 %v2390, %v2389
      %v2511 = vpack.c.b16 %v2392, %v2391
      %v2512 = vpack.c.b16 %v2394, %v2393
      %v2513 = vpack.c.b16 %v2396, %v2395
      %v2514 = vpack.c.b16 %v2398, %v2397
      %v2515 = vpack.c.b16 %v2400, %v2399
      %v2516 = vpack.c.b16 %v2402, %v2401
      %v2517 = vpack.c.b16 %v2404, %v2403
      %v2518 = vpack.c.b16 %v2406, %v2405
      %v2519 = vpack.c.b16 %v2408, %v2407
      %v2520 = vpack.c.b16 %v2410, %v2409
      %v2521 = vpack.c.b16 %v2412, %v2411
      %v2522 = vpack.c.b16 %v2414, %v2413
      %v2523 = vpack.c.b16 %v2416, %v2415
      %v2524 = vpack.c.b16 %v2418, %v2417
      %v2525 = vpack.c.b16 %v2420, %v2419
      %v2526 = vpack.c.b16 %v2422, %v2421
      %v2527 = vpack.c.b16 %v2424, %v2423
      %v2528 = vpack.c.b16 %v2426, %v2425
      %v2529 = vpack.c.b16 %v2428, %v2427
      %v2530 = vpack.c.b16 %v2430, %v2429
      %v2531 = vpack.c.b16 %v2432, %v2431
      %v2532 = vpack.c.b16 %v2434, %v2433
      %v2533 = vpack.c.b16 %v2436, %v2435
      %v2534 = vpack.c.b16 %v2438, %v2437
      %v2535 = vpack.c.b16 %v2440, %v2439
      %v2536 = vpack.c.b16 %v2442, %v2441
      %v2537 = vpack.c.b16 %v2444, %v2443
      %v2538 = vpack.c.b16 %v2446, %v2445
      %v2539 = vpack.c.b16 %v2448, %v2447
      %v2540 = vpack.c.b16 %v2450, %v2449
      %v2541 = vpack.c.b16 %v2452, %v2451
      %v2542 = vpack.c.b16 %v2454, %v2453
      %v2543 = vpack.c.b16 %v2456, %v2455
      %v2544 = vpack.c.b16 %v2458, %v2457
      %v2545 = vpack.c.b16 %v2460, %v2459
      %v2546 = vpack.c.b16 %v2462, %v2461
      %v2547 = vpack.c.b16 %v2464, %v2463
      %v2548 = vpack.c.b16 %v2466, %v2465
      %v2549 = vpack.c.b16 %v2468, %v2467
      %v2550 = vpack.c.b16 %v2470, %v2469
      %v2551 = vpack.c.b16 %v2472, %v2471
      %v2552 = vpack.c.b16 %v2474, %v2473
      %v2553 = vpack.c.b16 %v2476, %v2475
      %v2554 = vpack.c.b16 %v2478, %v2477
      %v2555 = vpack.c.b16 %v2480, %v2479
      %v2556 = vpack.c.b16 %v2482, %v2481
      %v2557 = vpack.c.b16 %v2484, %v2483
      %v2558 = vpack.c.b16 %v2486, %v2485
      %2631 = vmatprep.subr.bf16.mxu0 0
      %2632 = vmatpush1.bf16.msra.mxu0 %v2487
      %2633 = vmatprep.subr.bf16.mxu0 0
      %2634 = vmatpush1.bf16.msra.mxu0 %v2488
      %2635 = vmatprep.subr.bf16.mxu0 0
      %2636 = vmatpush1.bf16.msra.mxu0 %v2489
      %2637 = vmatprep.subr.bf16.mxu0 0
      %2638 = vmatpush1.bf16.msra.mxu0 %v2490
      %2639 = vmatprep.subr.bf16.mxu0 0
      %2640 = vmatpush1.bf16.msra.mxu0 %v2491
      %2641 = vmatprep.subr.bf16.mxu0 0
      %2642 = vmatpush1.bf16.msra.mxu0 %v2492
      %2643 = vmatprep.subr.bf16.mxu0 0
      %2644 = vmatpush1.bf16.msra.mxu0 %v2493
      %2645 = vmatprep.subr.bf16.mxu0 0
      %2646 = vmatpush1.bf16.msra.mxu0 %v2494
      %2647 = vmatprep.subr.bf16.mxu0 0
      %2648 = vmatpush1.bf16.msra.mxu0 %v2495
      %2649 = vmatprep.subr.bf16.mxu0 0
      %2650 = vmatpush1.bf16.msra.mxu0 %v2496
      %2651 = vmatprep.subr.bf16.mxu0 0
      %2652 = vmatpush1.bf16.msra.mxu0 %v2497
      %2653 = vmatprep.subr.bf16.mxu0 0
      %2654 = vmatpush1.bf16.msra.mxu0 %v2498
      %2655 = vmatprep.subr.bf16.mxu0 0
      %2656 = vmatpush1.bf16.msra.mxu0 %v2499
      %2657 = vmatprep.subr.bf16.mxu0 0
      %2658 = vmatpush1.bf16.msra.mxu0 %v2500
      %2659 = vmatprep.subr.bf16.mxu0 0
      %2660 = vmatpush1.bf16.msra.mxu0 %v2501
      %2661 = vmatprep.subr.bf16.mxu0 0
      %2662 = vmatpush1.bf16.msra.mxu0 %v2502
      %2663 = vmatprep.mubr.bf16.mxu0 %v1984
      %2664 = vmatmul.mubr.bf16.gmra.mrb[0].mxu0 %v1983
      %v2665 = vpop.f32.mrb[0].mxu0
      %v2666 = vadd.f32 0.0, %v2665
      %v2667 = vpop.f32.mrb[0].mxu0
      %v2668 = vpop.f32.mrb[0].mxu0
      %v2669 = vadd.f32 0.0, %v2668
      %v2670 = vpop.f32.mrb[0].mxu0
      %2671 = vmatprep.mubr.bf16.mxu0 %v1993
      %2672 = vmatmul.mubr.bf16.gmra.mrb[0].mxu0 %v1992
      %v2673 = vpop.f32.mrb[0].mxu0
      %v2674 = vadd.f32 0.0, %v2673
      %v2675 = vpop.f32.mrb[0].mxu0
      %v2676 = vpop.f32.mrb[0].mxu0
      %v2677 = vadd.f32 0.0, %v2676
      %v2678 = vpop.f32.mrb[0].mxu0
      %2679 = vmatprep.mubr.bf16.mxu0 %v2002
      %2680 = vmatmul.mubr.bf16.gmra.mrb[0].mxu0 %v2001
      %v2681 = vpop.f32.mrb[0].mxu0
      %v2682 = vadd.f32 0.0, %v2681
      %v2683 = vpop.f32.mrb[0].mxu0
      %v2684 = vpop.f32.mrb[0].mxu0
      %v2685 = vadd.f32 0.0, %v2684
      %v2686 = vpop.f32.mrb[0].mxu0
      %2687 = vmatprep.mubr.bf16.mxu0 %v2011
      %2688 = vmatmul.mubr.bf16.gmra.mrb[0].mxu0 %v2010
      %v2689 = vpop.f32.mrb[0].mxu0
      %v2690 = vadd.f32 0.0, %v2689
      %v2691 = vpop.f32.mrb[0].mxu0
      %v2692 = vpop.f32.mrb[0].mxu0
      %v2693 = vadd.f32 0.0, %v2692
      %v2694 = vpop.f32.mrb[0].mxu0
      %2695 = vmatprep.mubr.bf16.mxu0 %v2020
      %2696 = vmatmul.mubr.bf16.gmra.mrb[0].mxu0 %v2019
      %v2697 = vpop.f32.mrb[0].mxu0
      %v2698 = vadd.f32 0.0, %v2697
      %v2699 = vpop.f32.mrb[0].mxu0
      %v2700 = vpop.f32.mrb[0].mxu0
      %v2701 = vadd.f32 0.0, %v2700
      %v2702 = vpop.f32.mrb[0].mxu0
      %2703 = vmatprep.mubr.bf16.mxu0 %v2029
      %2704 = vmatmul.mubr.bf16.gmra.mrb[0].mxu0 %v2028
      %v2705 = vpop.f32.mrb[0].mxu0
      %v2706 = vadd.f32 0.0, %v2705
      %v2707 = vpop.f32.mrb[0].mxu0
      %v2708 = vpop.f32.mrb[0].mxu0
      %v2709 = vadd.f32 0.0, %v2708
      %v2710 = vpop.f32.mrb[0].mxu0
      %2711 = vmatprep.mubr.bf16.mxu0 %v2038
      %2712 = vmatmul.mubr.bf16.gmra.mrb[0].mxu0 %v2037
      %v2713 = vpop.f32.mrb[0].mxu0
      %v2714 = vadd.f32 0.0, %v2713
      %v2715 = vpop.f32.mrb[0].mxu0
      %v2716 = vpop.f32.mrb[0].mxu0
      %v2717 = vadd.f32 0.0, %v2716
      %v2718 = vpop.f32.mrb[0].mxu0
      %2719 = vmatprep.mubr.bf16.mxu0 %v2047
      %2720 = vmatmul.mubr.bf16.gmra.mrb[0].mxu0 %v2046
      %v2721 = vpop.f32.mrb[0].mxu0
      %v2722 = vadd.f32 0.0, %v2721
      %v2723 = vpop.f32.mrb[0].mxu0
      %v2724 = vpop.f32.mrb[0].mxu0
      %v2725 = vadd.f32 0.0, %v2724
      %v2726 = vpop.f32.mrb[0].mxu0
      %2727 = vdwg.mxu0
      %2728 = vmatprep.subr.bf16.mxu0 0
      %2729 = vmatpush1.bf16.msra.mxu0 %v2503
      %2730 = vmatprep.subr.bf16.mxu0 0
      %2731 = vmatpush1.bf16.msra.mxu0 %v2504
      %2732 = vmatprep.subr.bf16.mxu0 0
      %2733 = vmatpush1.bf16.msra.mxu0 %v2505
      %2734 = vmatprep.subr.bf16.mxu0 0
      %2735 = vmatpush1.bf16.msra.mxu0 %v2506
      %2736 = vmatprep.subr.bf16.mxu0 0
      %2737 = vmatpush1.bf16.msra.mxu0 %v2507
      %2738 = vmatprep.subr.bf16.mxu0 0
      %2739 = vmatpush1.bf16.msra.mxu0 %v2508
      %2740 = vmatprep.subr.bf16.mxu0 0
      %2741 = vmatpush1.bf16.msra.mxu0 %v2509
      %2742 = vmatprep.subr.bf16.mxu0 0
      %2743 = vmatpush1.bf16.msra.mxu0 %v2510
      %2744 = vmatprep.subr.bf16.mxu0 0
      %2745 = vmatpush1.bf16.msra.mxu0 %v2511
      %2746 = vmatprep.subr.bf16.mxu0 0
      %2747 = vmatpush1.bf16.msra.mxu0 %v2512
      %2748 = vmatprep.subr.bf16.mxu0 0
      %2749 = vmatpush1.bf16.msra.mxu0 %v2513
      %2750 = vmatprep.subr.bf16.mxu0 0
      %2751 = vmatpush1.bf16.msra.mxu0 %v2514
      %2752 = vmatprep.subr.bf16.mxu0 0
      %2753 = vmatpush1.bf16.msra.mxu0 %v2515
      %2754 = vmatprep.subr.bf16.mxu0 0
      %2755 = vmatpush1.bf16.msra.mxu0 %v2516
      %2756 = vmatprep.subr.bf16.mxu0 0
      %2757 = vmatpush1.bf16.msra.mxu0 %v2517
      %2758 = vmatprep.subr.bf16.mxu0 0
      %2759 = vmatpush1.bf16.msra.mxu0 %v2518
      %2760 = vmatprep.mubr.bf16.mxu0 %v1986
      %2761 = vmatmul.mubr.bf16.gmra.mrb[0].mxu0 %v1985
      %v2762 = vpop.f32.mrb[0].mxu0
      %v2763 = vadd.f32 %v2666, %v2762
      %v2764 = vpop.f32.mrb[0].mxu0
      %v2765 = vpop.f32.mrb[0].mxu0
      %v2766 = vadd.f32 %v2669, %v2765
      %v2767 = vpop.f32.mrb[0].mxu0
      %2768 = vmatprep.mubr.bf16.mxu0 %v1995
      %2769 = vmatmul.mubr.bf16.gmra.mrb[0].mxu0 %v1994
      %v2770 = vpop.f32.mrb[0].mxu0
      %v2771 = vadd.f32 %v2674, %v2770
      %v2772 = vpop.f32.mrb[0].mxu0
      %v2773 = vpop.f32.mrb[0].mxu0
      %v2774 = vadd.f32 %v2677, %v2773
      %v2775 = vpop.f32.mrb[0].mxu0
      %2776 = vmatprep.mubr.bf16.mxu0 %v2004
      %2777 = vmatmul.mubr.bf16.gmra.mrb[0].mxu0 %v2003
      %v2778 = vpop.f32.mrb[0].mxu0
      %v2779 = vadd.f32 %v2682, %v2778
      %v2780 = vpop.f32.mrb[0].mxu0
      %v2781 = vpop.f32.mrb[0].mxu0
      %v2782 = vadd.f32 %v2685, %v2781
      %v2783 = vpop.f32.mrb[0].mxu0
      %2784 = vmatprep.mubr.bf16.mxu0 %v2013
      %2785 = vmatmul.mubr.bf16.gmra.mrb[0].mxu0 %v2012
      %v2786 = vpop.f32.mrb[0].mxu0
      %v2787 = vadd.f32 %v2690, %v2786
      %v2788 = vpop.f32.mrb[0].mxu0
      %v2789 = vpop.f32.mrb[0].mxu0
      %v2790 = vadd.f32 %v2693, %v2789
      %v2791 = vpop.f32.mrb[0].mxu0
      %2792 = vmatprep.mubr.bf16.mxu0 %v2022
      %2793 = vmatmul.mubr.bf16.gmra.mrb[0].mxu0 %v2021
      %v2794 = vpop.f32.mrb[0].mxu0
      %v2795 = vadd.f32 %v2698, %v2794
      %v2796 = vpop.f32.mrb[0].mxu0
      %v2797 = vpop.f32.mrb[0].mxu0
      %v2798 = vadd.f32 %v2701, %v2797
      %v2799 = vpop.f32.mrb[0].mxu0
      %2800 = vmatprep.mubr.bf16.mxu0 %v2031
      %2801 = vmatmul.mubr.bf16.gmra.mrb[0].mxu0 %v2030
      %v2802 = vpop.f32.mrb[0].mxu0
      %v2803 = vadd.f32 %v2706, %v2802
      %v2804 = vpop.f32.mrb[0].mxu0
      %v2805 = vpop.f32.mrb[0].mxu0
      %v2806 = vadd.f32 %v2709, %v2805
      %v2807 = vpop.f32.mrb[0].mxu0
      %2808 = vmatprep.mubr.bf16.mxu0 %v2040
      %2809 = vmatmul.mubr.bf16.gmra.mrb[0].mxu0 %v2039
      %v2810 = vpop.f32.mrb[0].mxu0
      %v2811 = vadd.f32 %v2714, %v2810
      %v2812 = vpop.f32.mrb[0].mxu0
      %v2813 = vpop.f32.mrb[0].mxu0
      %v2814 = vadd.f32 %v2717, %v2813
      %v2815 = vpop.f32.mrb[0].mxu0
      %2816 = vmatprep.mubr.bf16.mxu0 %v2049
      %2817 = vmatmul.mubr.bf16.gmra.mrb[0].mxu0 %v2048
      %v2818 = vpop.f32.mrb[0].mxu0
      %v2819 = vadd.f32 %v2722, %v2818
      %v2820 = vpop.f32.mrb[0].mxu0
      %v2821 = vpop.f32.mrb[0].mxu0
      %v2822 = vadd.f32 %v2725, %v2821
      %v2823 = vpop.f32.mrb[0].mxu0
      %2824 = vdwg.mxu0
      %2825 = vmatprep.subr.bf16.mxu0 0
      %2826 = vmatpush1.bf16.msra.mxu0 %v2519
      %2827 = vmatprep.subr.bf16.mxu0 0
      %2828 = vmatpush1.bf16.msra.mxu0 %v2520
      %2829 = vmatprep.subr.bf16.mxu0 0
      %2830 = vmatpush1.bf16.msra.mxu0 %v2521
      %2831 = vmatprep.subr.bf16.mxu0 0
      %2832 = vmatpush1.bf16.msra.mxu0 %v2522
      %2833 = vmatprep.subr.bf16.mxu0 0
      %2834 = vmatpush1.bf16.msra.mxu0 %v2523
      %2835 = vmatprep.subr.bf16.mxu0 0
      %2836 = vmatpush1.bf16.msra.mxu0 %v2524
      %2837 = vmatprep.subr.bf16.mxu0 0
      %2838 = vmatpush1.bf16.msra.mxu0 %v2525
      %2839 = vmatprep.subr.bf16.mxu0 0
      %2840 = vmatpush1.bf16.msra.mxu0 %v2526
      %2841 = vmatprep.subr.bf16.mxu0 0
      %2842 = vmatpush1.bf16.msra.mxu0 %v2527
      %2843 = vmatprep.subr.bf16.mxu0 0
      %2844 = vmatpush1.bf16.msra.mxu0 %v2528
      %2845 = vmatprep.subr.bf16.mxu0 0
      %2846 = vmatpush1.bf16.msra.mxu0 %v2529
      %2847 = vmatprep.subr.bf16.mxu0 0
      %2848 = vmatpush1.bf16.msra.mxu0 %v2530
      %2849 = vmatprep.subr.bf16.mxu0 0
      %2850 = vmatpush1.bf16.msra.mxu0 %v2531
      %2851 = vmatprep.subr.bf16.mxu0 0
      %2852 = vmatpush1.bf16.msra.mxu0 %v2532
      %2853 = vmatprep.subr.bf16.mxu0 0
      %2854 = vmatpush1.bf16.msra.mxu0 %v2533
      %2855 = vmatprep.subr.bf16.mxu0 0
      %2856 = vmatpush1.bf16.msra.mxu0 %v2534
      %2857 = vmatprep.mubr.bf16.mxu0 %v1988
      %2858 = vmatmul.mubr.bf16.gmra.mrb[0].mxu0 %v1987
      %v2859 = vpop.f32.mrb[0].mxu0
      %v2860 = vadd.f32 %v2763, %v2859
      %v2861 = vpop.f32.mrb[0].mxu0
      %v2862 = vpop.f32.mrb[0].mxu0
      %v2863 = vadd.f32 %v2766, %v2862
      %v2864 = vpop.f32.mrb[0].mxu0
      %2865 = vmatprep.mubr.bf16.mxu0 %v1997
      %2866 = vmatmul.mubr.bf16.gmra.mrb[0].mxu0 %v1996
      %v2867 = vpop.f32.mrb[0].mxu0
      %v2868 = vadd.f32 %v2771, %v2867
      %v2869 = vpop.f32.mrb[0].mxu0
      %v2870 = vpop.f32.mrb[0].mxu0
      %v2871 = vadd.f32 %v2774, %v2870
      %v2872 = vpop.f32.mrb[0].mxu0
      %2873 = vmatprep.mubr.bf16.mxu0 %v2006
      %2874 = vmatmul.mubr.bf16.gmra.mrb[0].mxu0 %v2005
      %v2875 = vpop.f32.mrb[0].mxu0
      %v2876 = vadd.f32 %v2779, %v2875
      %v2877 = vpop.f32.mrb[0].mxu0
      %v2878 = vpop.f32.mrb[0].mxu0
      %v2879 = vadd.f32 %v2782, %v2878
      %v2880 = vpop.f32.mrb[0].mxu0
      %2881 = vmatprep.mubr.bf16.mxu0 %v2015
      %2882 = vmatmul.mubr.bf16.gmra.mrb[0].mxu0 %v2014
      %v2883 = vpop.f32.mrb[0].mxu0
      %v2884 = vadd.f32 %v2787, %v2883
      %v2885 = vpop.f32.mrb[0].mxu0
      %v2886 = vpop.f32.mrb[0].mxu0
      %v2887 = vadd.f32 %v2790, %v2886
      %v2888 = vpop.f32.mrb[0].mxu0
      %2889 = vmatprep.mubr.bf16.mxu0 %v2024
      %2890 = vmatmul.mubr.bf16.gmra.mrb[0].mxu0 %v2023
      %v2891 = vpop.f32.mrb[0].mxu0
      %v2892 = vadd.f32 %v2795, %v2891
      %v2893 = vpop.f32.mrb[0].mxu0
      %v2894 = vpop.f32.mrb[0].mxu0
      %v2895 = vadd.f32 %v2798, %v2894
      %v2896 = vpop.f32.mrb[0].mxu0
      %2897 = vmatprep.mubr.bf16.mxu0 %v2033
      %2898 = vmatmul.mubr.bf16.gmra.mrb[0].mxu0 %v2032
      %v2899 = vpop.f32.mrb[0].mxu0
      %v2900 = vadd.f32 %v2803, %v2899
      %v2901 = vpop.f32.mrb[0].mxu0
      %v2902 = vpop.f32.mrb[0].mxu0
      %v2903 = vadd.f32 %v2806, %v2902
      %v2904 = vpop.f32.mrb[0].mxu0
      %2905 = vmatprep.mubr.bf16.mxu0 %v2042
      %2906 = vmatmul.mubr.bf16.gmra.mrb[0].mxu0 %v2041
      %v2907 = vpop.f32.mrb[0].mxu0
      %v2908 = vadd.f32 %v2811, %v2907
      %v2909 = vpop.f32.mrb[0].mxu0
      %v2910 = vpop.f32.mrb[0].mxu0
      %v2911 = vadd.f32 %v2814, %v2910
      %v2912 = vpop.f32.mrb[0].mxu0
      %2913 = vmatprep.mubr.bf16.mxu0 %v2051
      %2914 = vmatmul.mubr.bf16.gmra.mrb[0].mxu0 %v2050
      %v2915 = vpop.f32.mrb[0].mxu0
      %v2916 = vadd.f32 %v2819, %v2915
      %v2917 = vpop.f32.mrb[0].mxu0
      %v2918 = vpop.f32.mrb[0].mxu0
      %v2919 = vadd.f32 %v2822, %v2918
      %v2920 = vpop.f32.mrb[0].mxu0
      %2921 = vdwg.mxu0
      %2922 = vmatprep.subr.bf16.mxu0 0
      %2923 = vmatpush1.bf16.msra.mxu0 %v2535
      %2924 = vmatprep.subr.bf16.mxu0 0
      %2925 = vmatpush1.bf16.msra.mxu0 %v2536
      %2926 = vmatprep.subr.bf16.mxu0 0
      %2927 = vmatpush1.bf16.msra.mxu0 %v2537
      %2928 = vmatprep.subr.bf16.mxu0 0
      %2929 = vmatpush1.bf16.msra.mxu0 %v2538
      %2930 = vmatprep.subr.bf16.mxu0 0
      %2931 = vmatpush1.bf16.msra.mxu0 %v2539
      %2932 = vmatprep.subr.bf16.mxu0 0
      %2933 = vmatpush1.bf16.msra.mxu0 %v2540
      %2934 = vmatprep.subr.bf16.mxu0 0
      %2935 = vmatpush1.bf16.msra.mxu0 %v2541
      %2936 = vmatprep.subr.bf16.mxu0 0
      %2937 = vmatpush1.bf16.msra.mxu0 %v2542
      %2938 = vmatprep.subr.bf16.mxu0 0
      %2939 = vmatpush1.bf16.msra.mxu0 %v2543
      %2940 = vmatprep.subr.bf16.mxu0 0
      %2941 = vmatpush1.bf16.msra.mxu0 %v2544
      %2942 = vmatprep.subr.bf16.mxu0 0
      %2943 = vmatpush1.bf16.msra.mxu0 %v2545
      %2944 = vmatprep.subr.bf16.mxu0 0
      %2945 = vmatpush1.bf16.msra.mxu0 %v2546
      %2946 = vmatprep.subr.bf16.mxu0 0
      %2947 = vmatpush1.bf16.msra.mxu0 %v2547
      %2948 = vmatprep.subr.bf16.mxu0 0
      %2949 = vmatpush1.bf16.msra.mxu0 %v2548
      %2950 = vmatprep.subr.bf16.mxu0 0
      %2951 = vmatpush1.bf16.msra.mxu0 %v2549
      %2952 = vmatprep.subr.bf16.mxu0 0
      %2953 = vmatpush1.bf16.msra.mxu0 %v2550
      %2954 = vmatprep.mubr.bf16.mxu0 %v1990
      %2955 = vmatmul.mubr.bf16.gmra.mrb[0].mxu0 %v1989
      %v2956 = vpop.f32.mrb[0].mxu0
      %v2957 = vadd.f32 %v2860, %v2956
      %v2958 = vpop.f32.mrb[0].mxu0
      %v2959 = vpop.f32.mrb[0].mxu0
      %v2960 = vadd.f32 %v2863, %v2959
      %v2961 = vpop.f32.mrb[0].mxu0
      %2962 = vmatprep.mubr.bf16.mxu0 %v1999
      %2963 = vmatmul.mubr.bf16.gmra.mrb[0].mxu0 %v1998
      %v2964 = vpop.f32.mrb[0].mxu0
      %v2965 = vadd.f32 %v2868, %v2964
      %v2966 = vpop.f32.mrb[0].mxu0
      %v2967 = vpop.f32.mrb[0].mxu0
      %v2968 = vadd.f32 %v2871, %v2967
      %v2969 = vpop.f32.mrb[0].mxu0
      %2970 = vmatprep.mubr.bf16.mxu0 %v2008
      %2971 = vmatmul.mubr.bf16.gmra.mrb[0].mxu0 %v2007
      %v2972 = vpop.f32.mrb[0].mxu0
      %v2973 = vadd.f32 %v2876, %v2972
      %v2974 = vpop.f32.mrb[0].mxu0
      %v2975 = vpop.f32.mrb[0].mxu0
      %v2976 = vadd.f32 %v2879, %v2975
      %v2977 = vpop.f32.mrb[0].mxu0
      %2978 = vmatprep.mubr.bf16.mxu0 %v2017
      %2979 = vmatmul.mubr.bf16.gmra.mrb[0].mxu0 %v2016
      %v2980 = vpop.f32.mrb[0].mxu0
      %v2981 = vadd.f32 %v2884, %v2980
      %v2982 = vpop.f32.mrb[0].mxu0
      %v2983 = vpop.f32.mrb[0].mxu0
      %v2984 = vadd.f32 %v2887, %v2983
      %v2985 = vpop.f32.mrb[0].mxu0
      %2986 = vmatprep.mubr.bf16.mxu0 %v2026
      %2987 = vmatmul.mubr.bf16.gmra.mrb[0].mxu0 %v2025
      %v2988 = vpop.f32.mrb[0].mxu0
      %v2989 = vadd.f32 %v2892, %v2988
      %v2990 = vpop.f32.mrb[0].mxu0
      %v2991 = vpop.f32.mrb[0].mxu0
      %v2992 = vadd.f32 %v2895, %v2991
      %v2993 = vpop.f32.mrb[0].mxu0
      %2994 = vmatprep.mubr.bf16.mxu0 %v2035
      %2995 = vmatmul.mubr.bf16.gmra.mrb[0].mxu0 %v2034
      %v2996 = vpop.f32.mrb[0].mxu0
      %v2997 = vadd.f32 %v2900, %v2996
      %v2998 = vpop.f32.mrb[0].mxu0
      %v2999 = vpop.f32.mrb[0].mxu0
      %v3000 = vadd.f32 %v2903, %v2999
      %v3001 = vpop.f32.mrb[0].mxu0
      %3002 = vmatprep.mubr.bf16.mxu0 %v2044
      %3003 = vmatmul.mubr.bf16.gmra.mrb[0].mxu0 %v2043
      %v3004 = vpop.f32.mrb[0].mxu0
      %v3005 = vadd.f32 %v2908, %v3004
      %v3006 = vpop.f32.mrb[0].mxu0
      %v3007 = vpop.f32.mrb[0].mxu0
      %v3008 = vadd.f32 %v2911, %v3007
      %v3009 = vpop.f32.mrb[0].mxu0
      %3010 = vmatprep.mubr.bf16.mxu0 %v2053
      %3011 = vmatmul.mubr.bf16.gmra.mrb[0].mxu0 %v2052
      %v3012 = vpop.f32.mrb[0].mxu0
      %v3013 = vadd.f32 %v2916, %v3012
      %v3014 = vpop.f32.mrb[0].mxu0
      %v3015 = vpop.f32.mrb[0].mxu0
      %v3016 = vadd.f32 %v2919, %v3015
      %v3017 = vpop.f32.mrb[0].mxu0
      %3018 = vdwg.mxu0
      %3019 = vmatprep.subr.bf16.mxu0 0
      %3020 = vmatpush1.bf16.msra.mxu0 %v2551
      %3021 = vmatprep.subr.bf16.mxu0 0
      %3022 = vmatpush1.bf16.msra.mxu0 %v2552
      %3023 = vmatprep.subr.bf16.mxu0 0
      %3024 = vmatpush1.bf16.msra.mxu0 %v2553
      %3025 = vmatprep.subr.bf16.mxu0 0
      %3026 = vmatpush1.bf16.msra.mxu0 %v2554
      %3027 = vmatprep.subr.bf16.mxu0 0
      %3028 = vmatpush1.bf16.msra.mxu0 %v2555
      %3029 = vmatprep.subr.bf16.mxu0 0
      %3030 = vmatpush1.bf16.msra.mxu0 %v2556
      %3031 = vmatprep.subr.bf16.mxu0 0
      %3032 = vmatpush1.bf16.msra.mxu0 %v2557
      %3033 = vmatprep.subr.bf16.mxu0 0
      %3034 = vmatpush1.bf16.msra.mxu0 %v2558
      %3035 = vmatprep.subr.bf16.mxu0 0
      %3036 = vmatpush1.bf16.msra.mxu0 0
      %3037 = vmatprep.subr.bf16.mxu0 0
      %3038 = vmatpush1.bf16.msra.mxu0 0
      %3039 = vmatprep.subr.bf16.mxu0 0
      %3040 = vmatpush1.bf16.msra.mxu0 0
      %3041 = vmatprep.subr.bf16.mxu0 0
      %3042 = vmatpush1.bf16.msra.mxu0 0
      %3043 = vmatprep.subr.bf16.mxu0 0
      %3044 = vmatpush1.bf16.msra.mxu0 0
      %3045 = vmatprep.subr.bf16.mxu0 0
      %3046 = vmatpush1.bf16.msra.mxu0 0
      %3047 = vmatprep.subr.bf16.mxu0 0
      %3048 = vmatpush1.bf16.msra.mxu0 0
      %3049 = vmatprep.subr.bf16.mxu0 0
      %3050 = vmatpush1.bf16.msra.mxu0 0
      %3051 = vmatprep.mubr.bf16.mxu0 0
      %3052 = vmatmul.mubr.bf16.gmra.mrb[0].mxu0 %v1991
      %v3053 = vpop.f32.mrb[0].mxu0
      %v3054 = vadd.f32 %v2957, %v3053
      %v3055 = vpop.f32.mrb[0].mxu0
      %v3056 = vpop.f32.mrb[0].mxu0
      %v3057 = vadd.f32 %v2960, %v3056
      %v3058 = vpop.f32.mrb[0].mxu0
      %3059 = vmatprep.mubr.bf16.mxu0 0
      %3060 = vmatmul.mubr.bf16.gmra.mrb[0].mxu0 %v2000
      %v3061 = vpop.f32.mrb[0].mxu0
      %v3062 = vadd.f32 %v2965, %v3061
      %v3063 = vpop.f32.mrb[0].mxu0
      %v3064 = vpop.f32.mrb[0].mxu0
      %v3065 = vadd.f32 %v2968, %v3064
      %v3066 = vpop.f32.mrb[0].mxu0
      %3067 = vmatprep.mubr.bf16.mxu0 0
      %3068 = vmatmul.mubr.bf16.gmra.mrb[0].mxu0 %v2009
      %v3069 = vpop.f32.mrb[0].mxu0
      %v3070 = vadd.f32 %v2973, %v3069
      %v3071 = vpop.f32.mrb[0].mxu0
      %v3072 = vpop.f32.mrb[0].mxu0
      %v3073 = vadd.f32 %v2976, %v3072
      %v3074 = vpop.f32.mrb[0].mxu0
      %3075 = vmatprep.mubr.bf16.mxu0 0
      %3076 = vmatmul.mubr.bf16.gmra.mrb[0].mxu0 %v2018
      %v3077 = vpop.f32.mrb[0].mxu0
      %v3078 = vadd.f32 %v2981, %v3077
      %v3079 = vpop.f32.mrb[0].mxu0
      %v3080 = vpop.f32.mrb[0].mxu0
      %v3081 = vadd.f32 %v2984, %v3080
      %v3082 = vpop.f32.mrb[0].mxu0
      %3083 = vmatprep.mubr.bf16.mxu0 0
      %3084 = vmatmul.mubr.bf16.gmra.mrb[0].mxu0 %v2027
      %v3085 = vpop.f32.mrb[0].mxu0
      %v3086 = vadd.f32 %v2989, %v3085
      %v3087 = vpop.f32.mrb[0].mxu0
      %v3088 = vpop.f32.mrb[0].mxu0
      %v3089 = vadd.f32 %v2992, %v3088
      %v3090 = vpop.f32.mrb[0].mxu0
      %3091 = vmatprep.mubr.bf16.mxu0 0
      %3092 = vmatmul.mubr.bf16.gmra.mrb[0].mxu0 %v2036
      %v3093 = vpop.f32.mrb[0].mxu0
      %v3094 = vadd.f32 %v2997, %v3093
      %v3095 = vpop.f32.mrb[0].mxu0
      %v3096 = vpop.f32.mrb[0].mxu0
      %v3097 = vadd.f32 %v3000, %v3096
      %v3098 = vpop.f32.mrb[0].mxu0
      %3099 = vmatprep.mubr.bf16.mxu0 0
      %3100 = vmatmul.mubr.bf16.gmra.mrb[0].mxu0 %v2045
      %v3101 = vpop.f32.mrb[0].mxu0
      %v3102 = vadd.f32 %v3005, %v3101
      %v3103 = vpop.f32.mrb[0].mxu0
      %v3104 = vpop.f32.mrb[0].mxu0
      %v3105 = vadd.f32 %v3008, %v3104
      %v3106 = vpop.f32.mrb[0].mxu0
      %3107 = vmatprep.mubr.bf16.mxu0 0
      %3108 = vmatmul.mubr.bf16.gmra.mrb[0].mxu0 %v2054
      %v3109 = vpop.f32.mrb[0].mxu0
      %v3110 = vadd.f32 %v3013, %v3109
      %v3111 = vpop.f32.mrb[0].mxu0
      %v3112 = vpop.f32.mrb[0].mxu0
      %v3113 = vadd.f32 %v3016, %v3112
      %v3114 = vpop.f32.mrb[0].mxu0
      %3115 = vdwg.mxu0
      %v3116 = vadd.f32 %v288, %v3054
      %v3117 = vadd.f32 %v289, %v3057
      %v3118 = vadd.f32 %v290, %v3062
      %v3119 = vadd.f32 %v291, %v3065
      %v3120 = vadd.f32 %v292, %v3070
      %v3121 = vadd.f32 %v293, %v3073
      %v3122 = vadd.f32 %v294, %v3078
      %v3123 = vadd.f32 %v295, %v3081
      %v3124 = vadd.f32 %v296, %v3086
      %v3125 = vadd.f32 %v297, %v3089
      %v3126 = vadd.f32 %v298, %v3094
      %v3127 = vadd.f32 %v299, %v3097
      %v3128 = vadd.f32 %v300, %v3102
      %v3129 = vadd.f32 %v301, %v3105
      %v3130 = vadd.f32 %v302, %v3110
      %v3131 = vadd.f32 %v303, %v3113
      %3132 = vst [vmem:[%s285] sm:$0xff] %v3116
      %3133 = vst [vmem:[%s285 + $0x8] sm:$0xff] %v3117
      %3134 = vst [vmem:[%s285 + $0x10] sm:$0xff] %v3118
      %3135 = vst [vmem:[%s285 + $0x18] sm:$0xff] %v3119
      %3136 = vst [vmem:[%s285 + $0x20] sm:$0xff] %v3120
      %3137 = vst [vmem:[%s285 + $0x28] sm:$0xff] %v3121
      %3138 = vst [vmem:[%s285 + $0x30] sm:$0xff] %v3122
      %3139 = vst [vmem:[%s285 + $0x38] sm:$0xff] %v3123
      %3140 = vst [vmem:[%s285 + $0x40] sm:$0xff] %v3124
      %3141 = vst [vmem:[%s285 + $0x48] sm:$0xff] %v3125
      %3142 = vst [vmem:[%s285 + $0x50] sm:$0xff] %v3126
      %3143 = vst [vmem:[%s285 + $0x58] sm:$0xff] %v3127
      %3144 = vst [vmem:[%s285 + $0x60] sm:$0xff] %v3128
      %3145 = vst [vmem:[%s285 + $0x68] sm:$0xff] %v3129
      %3146 = vst [vmem:[%s285 + $0x70] sm:$0xff] %v3130
      %3147 = vst [vmem:[%s285 + $0x78] sm:$0xff] %v3131
      %s3148 = smul.u32 2, %s18
      %p3149 = scmp.lt.s32.totalorder %s3148, 7
      %s3150 = scalar_select %p3149, %s3148, 7
      %s3151 = smul.addr %s3150, 8
      %s3152 = smul.addr %s3151, 8
      %s3153 = scalar_lea.vmem %s7, %s3152
      // Predicated region
      $region49: #{_lambda_.3} parent=47 // pred_check
        %p3154 = pneg %p188
      $region50: #{_lambda_.3} parent=47 // pred_check_branch
        %3156 = sbr.rel (%p3154) target = $region52
      $region51: #{_lambda_.3} parent=47 // pred_region
        %s3157 = smul.u32 2, %s18
      $region52: #{_lambda_.3} parent=47 // pred_fallthru
        _
    $region48: #{_lambda_.3} parent=5 // pred_fallthru
      _
    %p3158 = scmp.le.s32.totalorder 2, %s13
    // Predicated region
    $region53: #{_lambda_.3} parent=5 // pred_check
      %p3159 = pneg %p3158
    $region54: #{_lambda_.3} parent=5 // pred_check_branch
      %3161 = sbr.rel (%p3159) target = $region56
    $region55: #{_lambda_.3} parent=5 // pred_region
      %s3162 = ssub.s32 %s13, 2
      // Predicated region
      $region57: #{_lambda_.3} parent=55 // pred_check
        %p3163 = pneg %p194
      $region58: #{_lambda_.3} parent=55 // pred_check_branch
        %3165 = sbr.rel (%p3163) target = $region60
      $region59: #{_lambda_.3} parent=55 // pred_region
        %s3166 = smul.u32 2, %s19
        %p3167 = scmp.lt.s32.totalorder %s3166, 7
        %s3168 = scalar_select %p3167, %s3166, 7
        %s3169 = smul.addr %s3168, 8
        %s3170 = smul.addr %s3169, 8
        %s3171 = scalar_lea.vmem %s7, %s3170
      $region60: #{_lambda_.3} parent=55 // pred_fallthru
        _
    $region56: #{_lambda_.3} parent=5 // pred_fallthru
      _
  $region6: #{_lambda_.3} parent=0 // loop_footer
    %s17 = sadd.s32 1, %s13
  $region7: #{_lambda_.3} parent=0 // loop_footer_branch
    %12 = sbr.rel target = $region3
  $region8: #{_lambda_.3} parent=0 // loop_exit
    _

// kernel: _lambda_.2
$region0: #{_lambda_.2}
  #allocation0 [shape = 'u32[]', space=smem, size = 0x4, offset = 0x4, fixed_abs, tag = 'smem constant byte address 0x4 - core index']
  #allocation1 [shape = 'u32[144,128]{1,0:T(1,128)}', space=vmem, size = 0x12000, scoped, tag = 'internal scratch']
  #allocation2 [shape = 'f32[2,18,18,128]{3,2,1,0:T(8,128)}', space=vmem, size = 0x6c000, scoped, tag = 'scratch operand']
  #allocation3 [shape = 'f32[2,10,10,128]{3,2,1,0:T(8,128)}', space=vmem, size = 0x28000, scoped, tag = 'scratch operand']
  %s0 = inlined_call_operand.vmem [shape: f32[8,16,16,128], index: 0, kind: input, shape index: {}]
  %s1 = inlined_call_operand.vmem [shape: f32[1,128], index: 1, kind: input, shape index: {}]
  %s2 = inlined_call_operand.vmem [shape: f32[1,128], index: 2, kind: input, shape index: {}]
  %s3 = inlined_call_operand.vmem [shape: bf16[1152,128], index: 3, kind: input, shape index: {}]
  %s4 = inlined_call_operand.vmem [shape: f32[1,128], index: 4, kind: input, shape index: {}]
  %s5 = inlined_call_operand.vmem [shape: f32[1,128], index: 5, kind: input, shape index: {}]
  %s6 = inlined_call_operand.vmem [shape: bf16[1152,128], index: 6, kind: input, shape index: {}]
  %s7 = inlined_call_operand.vmem [shape: bf16[128,128], index: 7, kind: input, shape index: {}]
  %s8 = inlined_call_operand.vmem [shape: f32[8,8,8,128], index: 8, kind: output, shape index: {}]
  %s9 = sld [smem:[#allocation0]]
  $region65: #{_lambda_.2} parent=0
    _
  %s11 = ssub.s32 1, %s9
  %s12 = scalar_select 0, %s11, %s9
  loop: start=0, step=1, limit=6
  $region2: #{_lambda_.2} parent=0 // loop_pre_header
    _
  $region3: #{_lambda_.2} parent=0 // loop_header
    %s14 = sphi 0, %s18
    %p15 = scmp.ge.s32.totalorder %s14, 6
    %s24 = sphi 0, %s26
    %s27 = sphi 0, %s24
    %s28 = sphi 0, %s27
    %s44 = sphi 0, %s28
    %s48 = sphi 0, %s48
    %s50 = sphi 0, %s48
    %s51 = sphi 0, %s50
    %s65 = sphi 0, %s51
    %s69 = sphi 0, %s69
    %s71 = sphi 0, %s69
    %s72 = sphi 0, %s71
    %s86 = sphi 0, %s72
    %s90 = sphi 0, %s90
    %s92 = sphi 0, %s90
    %s93 = sphi 0, %s92
    %s107 = sphi 0, %s93
    %s111 = sphi 0, %s111
    %s113 = sphi 0, %s111
    %s114 = sphi 0, %s113
    %s128 = sphi 0, %s114
    %s132 = sphi 0, %s132
    %s134 = sphi 0, %s132
    %s135 = sphi 0, %s134
    %s149 = sphi 0, %s135
    %s153 = sphi 0, %s153
    %s155 = sphi 0, %s153
    %s156 = sphi 0, %s155
    %s170 = sphi 0, %s156
    %s174 = sphi 0, %s174
    %s176 = sphi 0, %s174
    %s177 = sphi 0, %s176
    %s191 = sphi 0, %s177
    %s197 = sphi 0, %s199
    %s200 = sphi 0, %s197
    %s201 = sphi 0, %s200
    %s217 = sphi 0, %s201
  $region4: #{_lambda_.2} parent=0 // loop_header_branch
    %17 = sbr.rel (%p15) target = $region8
  $region5: #{_lambda_.2} parent=0 // loop_body
    %s19 = ssub.s32 %s14, 1
    %s20 = ssub.s32 %s14, 2
    %s21 = sadd.s32 %s14, 1
    %s22 = ssub.s32 %s14, %s21
    %p23 = scmp.eq.s32.totalorder %s22, 0
    %s25 = sadd.s32 %s24, 1
    %s26 = scalar_select %p23, %s24, %s25
    %p29 = pneg %p23
    %p30 = scmp.eq.s32.totalorder %s14, 3
    %p31 = por %p29, %p30
    %p32 = scmp.ne.s32.totalorder %s24, %s27
    %p33 = scmp.eq.s32.totalorder %s14, 0
    %p34 = por %p32, %p33
    %p35 = scmp.ne.s32.totalorder %s24, %s27
    %p36 = scmp.eq.s32.totalorder %s19, 3
    %p37 = por %p35, %p36
    %p38 = scmp.ne.s32.totalorder %s27, %s28
    %p39 = scmp.eq.s32.totalorder %s19, 0
    %p40 = por %p38, %p39
    %p41 = scmp.ne.s32.totalorder %s27, %s28
    %p42 = scmp.eq.s32.totalorder %s20, 3
    %p43 = por %p41, %p42
    %p45 = scmp.ne.s32.totalorder %s28, %s44
    %p46 = scmp.eq.s32.totalorder %s20, 0
    %p47 = por %p45, %p46
    %s49 = sadd.s32 %s48, 1
    %p52 = scmp.eq.s32.totalorder %s14, 3
    %p53 = scmp.ne.s32.totalorder %s48, %s50
    %p54 = scmp.eq.s32.totalorder %s14, 0
    %p55 = por %p53, %p54
    %p56 = scmp.ne.s32.totalorder %s48, %s50
    %p57 = scmp.eq.s32.totalorder %s19, 3
    %p58 = por %p56, %p57
    %p59 = scmp.ne.s32.totalorder %s50, %s51
    %p60 = scmp.eq.s32.totalorder %s19, 0
    %p61 = por %p59, %p60
    %p62 = scmp.ne.s32.totalorder %s50, %s51
    %p63 = scmp.eq.s32.totalorder %s20, 3
    %p64 = por %p62, %p63
    %p66 = scmp.ne.s32.totalorder %s51, %s65
    %p67 = scmp.eq.s32.totalorder %s20, 0
    %p68 = por %p66, %p67
    %s70 = sadd.s32 %s69, 1
    %p73 = scmp.eq.s32.totalorder %s14, 3
    %p74 = scmp.ne.s32.totalorder %s69, %s71
    %p75 = scmp.eq.s32.totalorder %s14, 0
    %p76 = por %p74, %p75
    %p77 = scmp.ne.s32.totalorder %s69, %s71
    %p78 = scmp.eq.s32.totalorder %s19, 3
    %p79 = por %p77, %p78
    %p80 = scmp.ne.s32.totalorder %s71, %s72
    %p81 = scmp.eq.s32.totalorder %s19, 0
    %p82 = por %p80, %p81
    %p83 = scmp.ne.s32.totalorder %s71, %s72
    %p84 = scmp.eq.s32.totalorder %s20, 3
    %p85 = por %p83, %p84
    %p87 = scmp.ne.s32.totalorder %s72, %s86
    %p88 = scmp.eq.s32.totalorder %s20, 0
    %p89 = por %p87, %p88
    %s91 = sadd.s32 %s90, 1
    %p94 = scmp.eq.s32.totalorder %s14, 3
    %p95 = scmp.ne.s32.totalorder %s90, %s92
    %p96 = scmp.eq.s32.totalorder %s14, 0
    %p97 = por %p95, %p96
    %p98 = scmp.ne.s32.totalorder %s90, %s92
    %p99 = scmp.eq.s32.totalorder %s19, 3
    %p100 = por %p98, %p99
    %p101 = scmp.ne.s32.totalorder %s92, %s93
    %p102 = scmp.eq.s32.totalorder %s19, 0
    %p103 = por %p101, %p102
    %p104 = scmp.ne.s32.totalorder %s92, %s93
    %p105 = scmp.eq.s32.totalorder %s20, 3
    %p106 = por %p104, %p105
    %p108 = scmp.ne.s32.totalorder %s93, %s107
    %p109 = scmp.eq.s32.totalorder %s20, 0
    %p110 = por %p108, %p109
    %s112 = sadd.s32 %s111, 1
    %p115 = scmp.eq.s32.totalorder %s14, 3
    %p116 = scmp.ne.s32.totalorder %s111, %s113
    %p117 = scmp.eq.s32.totalorder %s14, 0
    %p118 = por %p116, %p117
    %p119 = scmp.ne.s32.totalorder %s111, %s113
    %p120 = scmp.eq.s32.totalorder %s19, 3
    %p121 = por %p119, %p120
    %p122 = scmp.ne.s32.totalorder %s113, %s114
    %p123 = scmp.eq.s32.totalorder %s19, 0
    %p124 = por %p122, %p123
    %p125 = scmp.ne.s32.totalorder %s113, %s114
    %p126 = scmp.eq.s32.totalorder %s20, 3
    %p127 = por %p125, %p126
    %p129 = scmp.ne.s32.totalorder %s114, %s128
    %p130 = scmp.eq.s32.totalorder %s20, 0
    %p131 = por %p129, %p130
    %s133 = sadd.s32 %s132, 1
    %p136 = scmp.eq.s32.totalorder %s14, 3
    %p137 = scmp.ne.s32.totalorder %s132, %s134
    %p138 = scmp.eq.s32.totalorder %s14, 0
    %p139 = por %p137, %p138
    %p140 = scmp.ne.s32.totalorder %s132, %s134
    %p141 = scmp.eq.s32.totalorder %s19, 3
    %p142 = por %p140, %p141
    %p143 = scmp.ne.s32.totalorder %s134, %s135
    %p144 = scmp.eq.s32.totalorder %s19, 0
    %p145 = por %p143, %p144
    %p146 = scmp.ne.s32.totalorder %s134, %s135
    %p147 = scmp.eq.s32.totalorder %s20, 3
    %p148 = por %p146, %p147
    %p150 = scmp.ne.s32.totalorder %s135, %s149
    %p151 = scmp.eq.s32.totalorder %s20, 0
    %p152 = por %p150, %p151
    %s154 = sadd.s32 %s153, 1
    %p157 = scmp.eq.s32.totalorder %s14, 3
    %p158 = scmp.ne.s32.totalorder %s153, %s155
    %p159 = scmp.eq.s32.totalorder %s14, 0
    %p160 = por %p158, %p159
    %p161 = scmp.ne.s32.totalorder %s153, %s155
    %p162 = scmp.eq.s32.totalorder %s19, 3
    %p163 = por %p161, %p162
    %p164 = scmp.ne.s32.totalorder %s155, %s156
    %p165 = scmp.eq.s32.totalorder %s19, 0
    %p166 = por %p164, %p165
    %p167 = scmp.ne.s32.totalorder %s155, %s156
    %p168 = scmp.eq.s32.totalorder %s20, 3
    %p169 = por %p167, %p168
    %p171 = scmp.ne.s32.totalorder %s156, %s170
    %p172 = scmp.eq.s32.totalorder %s20, 0
    %p173 = por %p171, %p172
    %s175 = sadd.s32 %s174, 1
    %p178 = scmp.eq.s32.totalorder %s14, 3
    %p179 = scmp.ne.s32.totalorder %s174, %s176
    %p180 = scmp.eq.s32.totalorder %s14, 0
    %p181 = por %p179, %p180
    %p182 = scmp.ne.s32.totalorder %s174, %s176
    %p183 = scmp.eq.s32.totalorder %s19, 3
    %p184 = por %p182, %p183
    %p185 = scmp.ne.s32.totalorder %s176, %s177
    %p186 = scmp.eq.s32.totalorder %s19, 0
    %p187 = por %p185, %p186
    %p188 = scmp.ne.s32.totalorder %s176, %s177
    %p189 = scmp.eq.s32.totalorder %s20, 3
    %p190 = por %p188, %p189
    %p192 = scmp.ne.s32.totalorder %s177, %s191
    %p193 = scmp.eq.s32.totalorder %s20, 0
    %p194 = por %p192, %p193
    %s195 = ssub.s32 %s14, %s21
    %p196 = scmp.eq.s32.totalorder %s195, 0
    %s198 = sadd.s32 %s197, 1
    %s199 = scalar_select %p196, %s197, %s198
    %p202 = pneg %p196
    %p203 = scmp.eq.s32.totalorder %s14, 3
    %p204 = por %p202, %p203
    %p205 = scmp.ne.s32.totalorder %s197, %s200
    %p206 = scmp.eq.s32.totalorder %s14, 0
    %p207 = por %p205, %p206
    %p208 = scmp.ne.s32.totalorder %s197, %s200
    %p209 = scmp.eq.s32.totalorder %s19, 3
    %p210 = por %p208, %p209
    %p211 = scmp.ne.s32.totalorder %s200, %s201
    %p212 = scmp.eq.s32.totalorder %s19, 0
    %p213 = por %p211, %p212
    %p214 = scmp.ne.s32.totalorder %s200, %s201
    %p215 = scmp.eq.s32.totalorder %s20, 3
    %p216 = por %p214, %p215
    %p218 = scmp.ne.s32.totalorder %s201, %s217
    %p219 = scmp.eq.s32.totalorder %s20, 0
    %p220 = por %p218, %p219
    %p221 = scmp.le.s32.totalorder 1, %s14
    %p222 = scmp.lt.s32.totalorder %s14, 5
    %p223 = pnand %p221, %p222
    %p224 = pneg %p223
    // Predicated region
    $region9: #{_lambda_.2} parent=5 // pred_check
      _
    $region10: #{_lambda_.2} parent=5 // pred_check_branch
      %226 = sbr.rel (%p223) target = $region12
    $region11: #{_lambda_.2} parent=5 // pred_region
      %s227 = ssub.s32 %s14, 1
      // Predicated region
      $region13: #{_lambda_.2} parent=11 // pred_check
        %p228 = pneg %p61
      $region14: #{_lambda_.2} parent=11 // pred_check_branch
        %230 = sbr.rel (%p228) target = $region16
      $region15: #{_lambda_.2} parent=11 // pred_region
        _
      $region16: #{_lambda_.2} parent=11 // pred_fallthru
        _
      // Predicated region
      $region17: #{_lambda_.2} parent=11 // pred_check
        %p231 = pneg %p82
      $region18: #{_lambda_.2} parent=11 // pred_check_branch
        %233 = sbr.rel (%p231) target = $region20
      $region19: #{_lambda_.2} parent=11 // pred_region
        _
      $region20: #{_lambda_.2} parent=11 // pred_fallthru
        _
      // Predicated region
      $region21: #{_lambda_.2} parent=11 // pred_check
        %p234 = pneg %p103
      $region22: #{_lambda_.2} parent=11 // pred_check_branch
        %236 = sbr.rel (%p234) target = $region24
      $region23: #{_lambda_.2} parent=11 // pred_region
        _
      $region24: #{_lambda_.2} parent=11 // pred_fallthru
        _
      // Predicated region
      $region25: #{_lambda_.2} parent=11 // pred_check
        %p237 = pneg %p124
      $region26: #{_lambda_.2} parent=11 // pred_check_branch
        %239 = sbr.rel (%p237) target = $region28
      $region27: #{_lambda_.2} parent=11 // pred_region
        _
      $region28: #{_lambda_.2} parent=11 // pred_fallthru
        _
      // Predicated region
      $region29: #{_lambda_.2} parent=11 // pred_check
        %p240 = pneg %p145
      $region30: #{_lambda_.2} parent=11 // pred_check_branch
        %242 = sbr.rel (%p240) target = $region32
      $region31: #{_lambda_.2} parent=11 // pred_region
        _
      $region32: #{_lambda_.2} parent=11 // pred_fallthru
        _
      // Predicated region
      $region33: #{_lambda_.2} parent=11 // pred_check
        %p243 = pneg %p166
      $region34: #{_lambda_.2} parent=11 // pred_check_branch
        %245 = sbr.rel (%p243) target = $region36
      $region35: #{_lambda_.2} parent=11 // pred_region
        _
      $region36: #{_lambda_.2} parent=11 // pred_fallthru
        _
      // Predicated region
      $region37: #{_lambda_.2} parent=11 // pred_check
        %p246 = pneg %p187
      $region38: #{_lambda_.2} parent=11 // pred_check_branch
        %248 = sbr.rel (%p246) target = $region40
      $region39: #{_lambda_.2} parent=11 // pred_region
        _
      $region40: #{_lambda_.2} parent=11 // pred_fallthru
        _
    $region12: #{_lambda_.2} parent=5 // pred_fallthru
      _
    %p249 = scmp.lt.s32.totalorder %s14, 4
    // Predicated region
    $region41: #{_lambda_.2} parent=5 // pred_check
      %p250 = pneg %p249
    $region42: #{_lambda_.2} parent=5 // pred_check_branch
      %252 = sbr.rel (%p250) target = $region44
    $region43: #{_lambda_.2} parent=5 // pred_region
      // Predicated region
      $region45: #{_lambda_.2} parent=43 // pred_check
        %p253 = pneg %p34
      $region46: #{_lambda_.2} parent=43 // pred_check_branch
        %255 = sbr.rel (%p253) target = $region48
      $region47: #{_lambda_.2} parent=43 // pred_region
        %s256 = smul.u32 2, %s14
        %p257 = scmp.lt.s32.totalorder %s256, 7
        %s258 = scalar_select %p257, %s256, 7
        %s259 = smul.addr %s258, 32
        %s260 = smul.addr %s259, 8
        %s261 = scalar_lea.vmem %s0, %s260
        %s262 = smul.u32 2, %s14
      $region48: #{_lambda_.2} parent=43 // pred_fallthru
        _
    $region44: #{_lambda_.2} parent=5 // pred_fallthru
      _
    %p263 = scmp.le.s32.totalorder 1, %s14
    %p264 = scmp.lt.s32.totalorder %s14, 5
    %p265 = pnand %p263, %p264
    %p266 = pneg %p265
    // Predicated region
    $region49: #{_lambda_.2} parent=5 // pred_check
      _
    $region50: #{_lambda_.2} parent=5 // pred_check_branch
      %268 = sbr.rel (%p265) target = $region52
    $region51: #{_lambda_.2} parent=5 // pred_region
      %s269 = ssub.s32 %s14, 1
      %s270 = smul.u32 2, %s19
      %p271 = scmp.lt.s32.totalorder %s270, 7
      %s272 = scalar_select %p271, %s270, 7
      %s273 = smul.addr %s272, 32
      %s274 = smul.addr %s273, 8
      %s275 = scalar_lea.vmem %s0, %s274
      %p276 = pneg %p40
      %p277 = pneg %p37
      %p278 = pneg %p61
      %p279 = pneg %p58
      %p280 = pneg %p82
      %p281 = pneg %p79
      %p282 = pneg %p103
      %p283 = pneg %p100
      %p284 = pneg %p124
      %p285 = pneg %p121
      %p286 = pneg %p145
      %p287 = pneg %p142
      %p288 = pneg %p166
      %p289 = pneg %p163
      %p290 = pneg %p187
      %p291 = pneg %p184
      %p292 = pneg %p213
      %p293 = pneg %p210
      %s294 = smul.u32 2, %s19
      %p295 = scmp.lt.s32.totalorder %s294, 7
      %s296 = scalar_select %p295, %s294, 7
      %s297 = smul.addr %s296, 8
      %s298 = smul.addr %s297, 8
      %s299 = scalar_lea.vmem %s8, %s298
      %s300 = smul.u32 2, %s19
      %p301 = scmp.lt.s32.totalorder %s300, 7
      %s302 = scalar_select %p301, %s300, 7
      %s303 = smul.addr %s302, 32
      %s304 = smul.addr %s303, 8
      %s305 = scalar_lea.vmem %s0, %s304
      %s306 = smul.u32 2, %s19
      %s307 = smul.u32 2, %s19
      %p308 = scmp.lt.s32.totalorder %s307, 7
      %s309 = scalar_select %p308, %s307, 7
      %s310 = smul.addr %s309, 8
      %s311 = smul.addr %s310, 8
      %s312 = scalar_lea.vmem %s8, %s311
      %s313 = smul.u32 2, %s19
      %v315 = vld [vmem:[%s305] sm:$0xff]
      %v316 = vld [vmem:[%s305 + $0x8] sm:$0xff]
      %v317 = vld [vmem:[%s305 + $0x10] sm:$0xff]
      %v318 = vld [vmem:[%s305 + $0x18] sm:$0xff]
      %v319 = vld [vmem:[%s305 + $0x20] sm:$0xff]
      %v320 = vld [vmem:[%s305 + $0x28] sm:$0xff]
      %v321 = vld [vmem:[%s305 + $0x30] sm:$0xff]
      %v322 = vld [vmem:[%s305 + $0x38] sm:$0xff]
      %v323 = vld [vmem:[%s305 + $0x40] sm:$0xff]
      %v324 = vld [vmem:[%s305 + $0x48] sm:$0xff]
      %v325 = vld [vmem:[%s305 + $0x50] sm:$0xff]
      %v326 = vld [vmem:[%s305 + $0x58] sm:$0xff]
      %v327 = vld [vmem:[%s305 + $0x60] sm:$0xff]
      %v328 = vld [vmem:[%s305 + $0x68] sm:$0xff]
      %v329 = vld [vmem:[%s305 + $0x70] sm:$0xff]
      %v330 = vld [vmem:[%s305 + $0x78] sm:$0xff]
      %v331 = vld [vmem:[%s305 + $0x80] sm:$0xff]
      %v332 = vld [vmem:[%s305 + $0x88] sm:$0xff]
      %v333 = vld [vmem:[%s305 + $0x90] sm:$0xff]
      %v334 = vld [vmem:[%s305 + $0x98] sm:$0xff]
      %v335 = vld [vmem:[%s305 + $0xa0] sm:$0xff]
      %v336 = vld [vmem:[%s305 + $0xa8] sm:$0xff]
      %v337 = vld [vmem:[%s305 + $0xb0] sm:$0xff]
      %v338 = vld [vmem:[%s305 + $0xb8] sm:$0xff]
      %v339 = vld [vmem:[%s305 + $0xc0] sm:$0xff]
      %v340 = vld [vmem:[%s305 + $0xc8] sm:$0xff]
      %v341 = vld [vmem:[%s305 + $0xd0] sm:$0xff]
      %v342 = vld [vmem:[%s305 + $0xd8] sm:$0xff]
      %v343 = vld [vmem:[%s305 + $0xe0] sm:$0xff]
      %v344 = vld [vmem:[%s305 + $0xe8] sm:$0xff]
      %v345 = vld [vmem:[%s305 + $0xf0] sm:$0xff]
      %v346 = vld [vmem:[%s305 + $0xf8] sm:$0xff]
      %v347 = vld [vmem:[%s305 + $0x100] sm:$0xff]
      %v348 = vld [vmem:[%s305 + $0x108] sm:$0xff]
      %v349 = vld [vmem:[%s305 + $0x110] sm:$0xff]
      %v350 = vld [vmem:[%s305 + $0x118] sm:$0xff]
      %v351 = vld [vmem:[%s305 + $0x120] sm:$0xff]
      %v352 = vld [vmem:[%s305 + $0x128] sm:$0xff]
      %v353 = vld [vmem:[%s305 + $0x130] sm:$0xff]
      %v354 = vld [vmem:[%s305 + $0x138] sm:$0xff]
      %v355 = vld [vmem:[%s305 + $0x140] sm:$0xff]
      %v356 = vld [vmem:[%s305 + $0x148] sm:$0xff]
      %v357 = vld [vmem:[%s305 + $0x150] sm:$0xff]
      %v358 = vld [vmem:[%s305 + $0x158] sm:$0xff]
      %v359 = vld [vmem:[%s305 + $0x160] sm:$0xff]
      %v360 = vld [vmem:[%s305 + $0x168] sm:$0xff]
      %v361 = vld [vmem:[%s305 + $0x170] sm:$0xff]
      %v362 = vld [vmem:[%s305 + $0x178] sm:$0xff]
      %v363 = vld [vmem:[%s305 + $0x180] sm:$0xff]
      %v364 = vld [vmem:[%s305 + $0x188] sm:$0xff]
      %v365 = vld [vmem:[%s305 + $0x190] sm:$0xff]
      %v366 = vld [vmem:[%s305 + $0x198] sm:$0xff]
      %v367 = vld [vmem:[%s305 + $0x1a0] sm:$0xff]
      %v368 = vld [vmem:[%s305 + $0x1a8] sm:$0xff]
      %v369 = vld [vmem:[%s305 + $0x1b0] sm:$0xff]
      %v370 = vld [vmem:[%s305 + $0x1b8] sm:$0xff]
      %v371 = vld [vmem:[%s305 + $0x1c0] sm:$0xff]
      %v372 = vld [vmem:[%s305 + $0x1c8] sm:$0xff]
      %v373 = vld [vmem:[%s305 + $0x1d0] sm:$0xff]
      %v374 = vld [vmem:[%s305 + $0x1d8] sm:$0xff]
      %v375 = vld [vmem:[%s305 + $0x1e0] sm:$0xff]
      %v376 = vld [vmem:[%s305 + $0x1e8] sm:$0xff]
      %v377 = vld [vmem:[%s305 + $0x1f0] sm:$0xff]
      %v378 = vld [vmem:[%s305 + $0x1f8] sm:$0xff]
      %v379 = vld [vmem:[%s1] sm:$0x1]
      %v381 = vlaneseq
      %v382 = vshrl.u32 %v381, 7
      %v383 = vsub.s32 0, %v382
      %v384 = vrot.slane %v379, %v383
      %v386 = vmul.f32 %v315, %v384
      %v387 = vmul.f32 %v316, %v384
      %v388 = vmul.f32 %v317, %v384
      %v389 = vmul.f32 %v318, %v384
      %v390 = vmul.f32 %v319, %v384
      %v391 = vmul.f32 %v320, %v384
      %v392 = vmul.f32 %v321, %v384
      %v393 = vmul.f32 %v322, %v384
      %v394 = vmul.f32 %v323, %v384
      %v395 = vmul.f32 %v324, %v384
      %v396 = vmul.f32 %v325, %v384
      %v397 = vmul.f32 %v326, %v384
      %v398 = vmul.f32 %v327, %v384
      %v399 = vmul.f32 %v328, %v384
      %v400 = vmul.f32 %v329, %v384
      %v401 = vmul.f32 %v330, %v384
      %v402 = vmul.f32 %v331, %v384
      %v403 = vmul.f32 %v332, %v384
      %v404 = vmul.f32 %v333, %v384
      %v405 = vmul.f32 %v334, %v384
      %v406 = vmul.f32 %v335, %v384
      %v407 = vmul.f32 %v336, %v384
      %v408 = vmul.f32 %v337, %v384
      %v409 = vmul.f32 %v338, %v384
      %v410 = vmul.f32 %v339, %v384
      %v411 = vmul.f32 %v340, %v384
      %v412 = vmul.f32 %v341, %v384
      %v413 = vmul.f32 %v342, %v384
      %v414 = vmul.f32 %v343, %v384
      %v415 = vmul.f32 %v344, %v384
      %v416 = vmul.f32 %v345, %v384
      %v417 = vmul.f32 %v346, %v384
      %v418 = vmul.f32 %v347, %v384
      %v419 = vmul.f32 %v348, %v384
      %v420 = vmul.f32 %v349, %v384
      %v421 = vmul.f32 %v350, %v384
      %v422 = vmul.f32 %v351, %v384
      %v423 = vmul.f32 %v352, %v384
      %v424 = vmul.f32 %v353, %v384
      %v425 = vmul.f32 %v354, %v384
      %v426 = vmul.f32 %v355, %v384
      %v427 = vmul.f32 %v356, %v384
      %v428 = vmul.f32 %v357, %v384
      %v429 = vmul.f32 %v358, %v384
      %v430 = vmul.f32 %v359, %v384
      %v431 = vmul.f32 %v360, %v384
      %v432 = vmul.f32 %v361, %v384
      %v433 = vmul.f32 %v362, %v384
      %v434 = vmul.f32 %v363, %v384
      %v435 = vmul.f32 %v364, %v384
      %v436 = vmul.f32 %v365, %v384
      %v437 = vmul.f32 %v366, %v384
      %v438 = vmul.f32 %v367, %v384
      %v439 = vmul.f32 %v368, %v384
      %v440 = vmul.f32 %v369, %v384
      %v441 = vmul.f32 %v370, %v384
      %v442 = vmul.f32 %v371, %v384
      %v443 = vmul.f32 %v372, %v384
      %v444 = vmul.f32 %v373, %v384
      %v445 = vmul.f32 %v374, %v384
      %v446 = vmul.f32 %v375, %v384
      %v447 = vmul.f32 %v376, %v384
      %v448 = vmul.f32 %v377, %v384
      %v449 = vmul.f32 %v378, %v384
      %v450 = vld [vmem:[%s2] sm:$0x1]
      %v452 = vlaneseq
      %v453 = vshrl.u32 %v452, 7
      %v454 = vsub.s32 0, %v453
      %v455 = vrot.slane %v450, %v454
      %v457 = vadd.f32 %v386, %v455
      %v458 = vadd.f32 %v387, %v455
      %v459 = vadd.f32 %v388, %v455
      %v460 = vadd.f32 %v389, %v455
      %v461 = vadd.f32 %v390, %v455
      %v462 = vadd.f32 %v391, %v455
      %v463 = vadd.f32 %v392, %v455
      %v464 = vadd.f32 %v393, %v455
      %v465 = vadd.f32 %v394, %v455
      %v466 = vadd.f32 %v395, %v455
      %v467 = vadd.f32 %v396, %v455
      %v468 = vadd.f32 %v397, %v455
      %v469 = vadd.f32 %v398, %v455
      %v470 = vadd.f32 %v399, %v455
      %v471 = vadd.f32 %v400, %v455
      %v472 = vadd.f32 %v401, %v455
      %v473 = vadd.f32 %v402, %v455
      %v474 = vadd.f32 %v403, %v455
      %v475 = vadd.f32 %v404, %v455
      %v476 = vadd.f32 %v405, %v455
      %v477 = vadd.f32 %v406, %v455
      %v478 = vadd.f32 %v407, %v455
      %v479 = vadd.f32 %v408, %v455
      %v480 = vadd.f32 %v409, %v455
      %v481 = vadd.f32 %v410, %v455
      %v482 = vadd.f32 %v411, %v455
      %v483 = vadd.f32 %v412, %v455
      %v484 = vadd.f32 %v413, %v455
      %v485 = vadd.f32 %v414, %v455
      %v486 = vadd.f32 %v415, %v455
      %v487 = vadd.f32 %v416, %v455
      %v488 = vadd.f32 %v417, %v455
      %v489 = vadd.f32 %v418, %v455
      %v490 = vadd.f32 %v419, %v455
      %v491 = vadd.f32 %v420, %v455
      %v492 = vadd.f32 %v421, %v455
      %v493 = vadd.f32 %v422, %v455
      %v494 = vadd.f32 %v423, %v455
      %v495 = vadd.f32 %v424, %v455
      %v496 = vadd.f32 %v425, %v455
      %v497 = vadd.f32 %v426, %v455
      %v498 = vadd.f32 %v427, %v455
      %v499 = vadd.f32 %v428, %v455
      %v500 = vadd.f32 %v429, %v455
      %v501 = vadd.f32 %v430, %v455
      %v502 = vadd.f32 %v431, %v455
      %v503 = vadd.f32 %v432, %v455
      %v504 = vadd.f32 %v433, %v455
      %v505 = vadd.f32 %v434, %v455
      %v506 = vadd.f32 %v435, %v455
      %v507 = vadd.f32 %v436, %v455
      %v508 = vadd.f32 %v437, %v455
      %v509 = vadd.f32 %v438, %v455
      %v510 = vadd.f32 %v439, %v455
      %v511 = vadd.f32 %v440, %v455
      %v512 = vadd.f32 %v441, %v455
      %v513 = vadd.f32 %v442, %v455
      %v514 = vadd.f32 %v443, %v455
      %v515 = vadd.f32 %v444, %v455
      %v516 = vadd.f32 %v445, %v455
      %v517 = vadd.f32 %v446, %v455
      %v518 = vadd.f32 %v447, %v455
      %v519 = vadd.f32 %v448, %v455
      %v520 = vadd.f32 %v449, %v455
      %v521 = vmax.f32 %v457, 0.0
      %v522 = vmax.f32 %v458, 0.0
      %v523 = vmax.f32 %v459, 0.0
      %v524 = vmax.f32 %v460, 0.0
      %v525 = vmax.f32 %v461, 0.0
      %v526 = vmax.f32 %v462, 0.0
      %v527 = vmax.f32 %v463, 0.0
      %v528 = vmax.f32 %v464, 0.0
      %v529 = vmax.f32 %v465, 0.0
      %v530 = vmax.f32 %v466, 0.0
      %v531 = vmax.f32 %v467, 0.0
      %v532 = vmax.f32 %v468, 0.0
      %v533 = vmax.f32 %v469, 0.0
      %v534 = vmax.f32 %v470, 0.0
      %v535 = vmax.f32 %v471, 0.0
      %v536 = vmax.f32 %v472, 0.0
      %v537 = vmax.f32 %v473, 0.0
      %v538 = vmax.f32 %v474, 0.0
      %v539 = vmax.f32 %v475, 0.0
      %v540 = vmax.f32 %v476, 0.0
      %v541 = vmax.f32 %v477, 0.0
      %v542 = vmax.f32 %v478, 0.0
      %v543 = vmax.f32 %v479, 0.0
      %v544 = vmax.f32 %v480, 0.0
      %v545 = vmax.f32 %v481, 0.0
      %v546 = vmax.f32 %v482, 0.0
      %v547 = vmax.f32 %v483, 0.0
      %v548 = vmax.f32 %v484, 0.0
      %v549 = vmax.f32 %v485, 0.0
      %v550 = vmax.f32 %v486, 0.0
      %v551 = vmax.f32 %v487, 0.0
      %v552 = vmax.f32 %v488, 0.0
      %v553 = vmax.f32 %v489, 0.0
      %v554 = vmax.f32 %v490, 0.0
      %v555 = vmax.f32 %v491, 0.0
      %v556 = vmax.f32 %v492, 0.0
      %v557 = vmax.f32 %v493, 0.0
      %v558 = vmax.f32 %v494, 0.0
      %v559 = vmax.f32 %v495, 0.0
      %v560 = vmax.f32 %v496, 0.0
      %v561 = vmax.f32 %v497, 0.0
      %v562 = vmax.f32 %v498, 0.0
      %v563 = vmax.f32 %v499, 0.0
      %v564 = vmax.f32 %v500, 0.0
      %v565 = vmax.f32 %v501, 0.0
      %v566 = vmax.f32 %v502, 0.0
      %v567 = vmax.f32 %v503, 0.0
      %v568 = vmax.f32 %v504, 0.0
      %v569 = vmax.f32 %v505, 0.0
      %v570 = vmax.f32 %v506, 0.0
      %v571 = vmax.f32 %v507, 0.0
      %v572 = vmax.f32 %v508, 0.0
      %v573 = vmax.f32 %v509, 0.0
      %v574 = vmax.f32 %v510, 0.0
      %v575 = vmax.f32 %v511, 0.0
      %v576 = vmax.f32 %v512, 0.0
      %v577 = vmax.f32 %v513, 0.0
      %v578 = vmax.f32 %v514, 0.0
      %v579 = vmax.f32 %v515, 0.0
      %v580 = vmax.f32 %v516, 0.0
      %v581 = vmax.f32 %v517, 0.0
      %v582 = vmax.f32 %v518, 0.0
      %v583 = vmax.f32 %v519, 0.0
      %v584 = vmax.f32 %v520, 0.0
      %585 = vst [vmem:[#allocation2] sm:$0xff] 0.0
      %586 = vst [vmem:[#allocation2 + $0x8] sm:$0xff] 0.0
      %587 = vst [vmem:[#allocation2 + $0x10] sm:$0x3] 0.0
      %588 = vst [vmem:[#allocation2 + $0x1b0] sm:$0xff] 0.0
      %589 = vst [vmem:[#allocation2 + $0x1b8] sm:$0xff] 0.0
      %590 = vst [vmem:[#allocation2 + $0x1c0] sm:$0x3] 0.0
      %s591 = scalar_lea.vmem [#allocation2], 408
      %592 = vst [vmem:[%s591] sm:$0xff] 0.0
      %593 = vst [vmem:[%s591 + $0x8] sm:$0xff] 0.0
      %594 = vst [vmem:[%s591 + $0x10] sm:$0x3] 0.0
      %595 = vst [vmem:[%s591 + $0x1b0] sm:$0xff] 0.0
      %596 = vst [vmem:[%s591 + $0x1b8] sm:$0xff] 0.0
      %597 = vst [vmem:[%s591 + $0x1c0] sm:$0x3] 0.0
      %598 = vst [vmem:[#allocation2] sm:$0x1] 0.0
      %599 = vst [vmem:[#allocation2 + $0x18] sm:$0x1] 0.0
      %600 = vst [vmem:[#allocation2 + $0x30] sm:$0x1] 0.0
      %601 = vst [vmem:[#allocation2 + $0x48] sm:$0x1] 0.0
      %602 = vst [vmem:[#allocation2 + $0x60] sm:$0x1] 0.0
      %603 = vst [vmem:[#allocation2 + $0x78] sm:$0x1] 0.0
      %604 = vst [vmem:[#allocation2 + $0x90] sm:$0x1] 0.0
      %605 = vst [vmem:[#allocation2 + $0xa8] sm:$0x1] 0.0
      %606 = vst [vmem:[#allocation2 + $0xc0] sm:$0x1] 0.0
      %607 = vst [vmem:[#allocation2 + $0xd8] sm:$0x1] 0.0
      %608 = vst [vmem:[#allocation2 + $0xf0] sm:$0x1] 0.0
      %609 = vst [vmem:[#allocation2 + $0x108] sm:$0x1] 0.0
      %610 = vst [vmem:[#allocation2 + $0x120] sm:$0x1] 0.0
      %611 = vst [vmem:[#allocation2 + $0x138] sm:$0x1] 0.0
      %612 = vst [vmem:[#allocation2 + $0x150] sm:$0x1] 0.0
      %613 = vst [vmem:[#allocation2 + $0x168] sm:$0x1] 0.0
      %614 = vst [vmem:[#allocation2 + $0x180] sm:$0x1] 0.0
      %615 = vst [vmem:[#allocation2 + $0x198] sm:$0x1] 0.0
      %616 = vst [vmem:[#allocation2 + $0x1b0] sm:$0x1] 0.0
      %617 = vst [vmem:[#allocation2 + $0x1c8] sm:$0x1] 0.0
      %618 = vst [vmem:[#allocation2 + $0x1e0] sm:$0x1] 0.0
      %619 = vst [vmem:[#allocation2 + $0x1f8] sm:$0x1] 0.0
      %620 = vst [vmem:[#allocation2 + $0x210] sm:$0x1] 0.0
      %621 = vst [vmem:[#allocation2 + $0x228] sm:$0x1] 0.0
      %622 = vst [vmem:[#allocation2 + $0x240] sm:$0x1] 0.0
      %623 = vst [vmem:[#allocation2 + $0x258] sm:$0x1] 0.0
      %624 = vst [vmem:[#allocation2 + $0x270] sm:$0x1] 0.0
      %625 = vst [vmem:[#allocation2 + $0x288] sm:$0x1] 0.0
      %626 = vst [vmem:[#allocation2 + $0x2a0] sm:$0x1] 0.0
      %627 = vst [vmem:[#allocation2 + $0x2b8] sm:$0x1] 0.0
      %628 = vst [vmem:[#allocation2 + $0x2d0] sm:$0x1] 0.0
      %629 = vst [vmem:[#allocation2 + $0x2e8] sm:$0x1] 0.0
      %630 = vst [vmem:[#allocation2 + $0x300] sm:$0x1] 0.0
      %631 = vst [vmem:[#allocation2 + $0x318] sm:$0x1] 0.0
      %632 = vst [vmem:[#allocation2 + $0x330] sm:$0x1] 0.0
      %633 = vst [vmem:[#allocation2 + $0x348] sm:$0x1] 0.0
      %634 = vst [vmem:[#allocation2 + $0x11] sm:$0x1] 0.0
      %635 = vst [vmem:[#allocation2 + $0x29] sm:$0x1] 0.0
      %636 = vst [vmem:[#allocation2 + $0x41] sm:$0x1] 0.0
      %637 = vst [vmem:[#allocation2 + $0x59] sm:$0x1] 0.0
      %638 = vst [vmem:[#allocation2 + $0x71] sm:$0x1] 0.0
      %639 = vst [vmem:[#allocation2 + $0x89] sm:$0x1] 0.0
      %640 = vst [vmem:[#allocation2 + $0xa1] sm:$0x1] 0.0
      %641 = vst [vmem:[#allocation2 + $0xb9] sm:$0x1] 0.0
      %642 = vst [vmem:[#allocation2 + $0xd1] sm:$0x1] 0.0
      %643 = vst [vmem:[#allocation2 + $0xe9] sm:$0x1] 0.0
      %644 = vst [vmem:[#allocation2 + $0x101] sm:$0x1] 0.0
      %645 = vst [vmem:[#allocation2 + $0x119] sm:$0x1] 0.0
      %646 = vst [vmem:[#allocation2 + $0x131] sm:$0x1] 0.0
      %647 = vst [vmem:[#allocation2 + $0x149] sm:$0x1] 0.0
      %648 = vst [vmem:[#allocation2 + $0x161] sm:$0x1] 0.0
      %649 = vst [vmem:[#allocation2 + $0x179] sm:$0x1] 0.0
      %650 = vst [vmem:[#allocation2 + $0x191] sm:$0x1] 0.0
      %651 = vst [vmem:[#allocation2 + $0x1a9] sm:$0x1] 0.0
      %652 = vst [vmem:[#allocation2 + $0x1c1] sm:$0x1] 0.0
      %653 = vst [vmem:[#allocation2 + $0x1d9] sm:$0x1] 0.0
      %654 = vst [vmem:[#allocation2 + $0x1f1] sm:$0x1] 0.0
      %655 = vst [vmem:[#allocation2 + $0x209] sm:$0x1] 0.0
      %656 = vst [vmem:[#allocation2 + $0x221] sm:$0x1] 0.0
      %657 = vst [vmem:[#allocation2 + $0x239] sm:$0x1] 0.0
      %658 = vst [vmem:[#allocation2 + $0x251] sm:$0x1] 0.0
      %659 = vst [vmem:[#allocation2 + $0x269] sm:$0x1] 0.0
      %660 = vst [vmem:[#allocation2 + $0x281] sm:$0x1] 0.0
      %661 = vst [vmem:[#allocation2 + $0x299] sm:$0x1] 0.0
      %662 = vst [vmem:[#allocation2 + $0x2b1] sm:$0x1] 0.0
      %663 = vst [vmem:[#allocation2 + $0x2c9] sm:$0x1] 0.0
      %664 = vst [vmem:[#allocation2 + $0x2e1] sm:$0x1] 0.0
      %665 = vst [vmem:[#allocation2 + $0x2f9] sm:$0x1] 0.0
      %666 = vst [vmem:[#allocation2 + $0x311] sm:$0x1] 0.0
      %667 = vst [vmem:[#allocation2 + $0x329] sm:$0x1] 0.0
      %668 = vst [vmem:[#allocation2 + $0x341] sm:$0x1] 0.0
      %669 = vst [vmem:[#allocation2 + $0x359] sm:$0x1] 0.0
      %s670 = scalar_lea.vmem [#allocation2], 24
      %671 = vst [vmem:[%s670 + $0x1] sm:$0xff] %v521
      %672 = vst [vmem:[%s670 + $0x9] sm:$0xff] %v522
      %673 = vst [vmem:[%s670 + $0x19] sm:$0xff] %v523
      %674 = vst [vmem:[%s670 + $0x21] sm:$0xff] %v524
      %675 = vst [vmem:[%s670 + $0x31] sm:$0xff] %v525
      %676 = vst [vmem:[%s670 + $0x39] sm:$0xff] %v526
      %677 = vst [vmem:[%s670 + $0x49] sm:$0xff] %v527
      %678 = vst [vmem:[%s670 + $0x51] sm:$0xff] %v528
      %679 = vst [vmem:[%s670 + $0x61] sm:$0xff] %v529
      %680 = vst [vmem:[%s670 + $0x69] sm:$0xff] %v530
      %681 = vst [vmem:[%s670 + $0x79] sm:$0xff] %v531
      %682 = vst [vmem:[%s670 + $0x81] sm:$0xff] %v532
      %683 = vst [vmem:[%s670 + $0x91] sm:$0xff] %v533
      %684 = vst [vmem:[%s670 + $0x99] sm:$0xff] %v534
      %685 = vst [vmem:[%s670 + $0xa9] sm:$0xff] %v535
      %686 = vst [vmem:[%s670 + $0xb1] sm:$0xff] %v536
      %687 = vst [vmem:[%s670 + $0xc1] sm:$0xff] %v537
      %688 = vst [vmem:[%s670 + $0xc9] sm:$0xff] %v538
      %689 = vst [vmem:[%s670 + $0xd9] sm:$0xff] %v539
      %690 = vst [vmem:[%s670 + $0xe1] sm:$0xff] %v540
      %691 = vst [vmem:[%s670 + $0xf1] sm:$0xff] %v541
      %692 = vst [vmem:[%s670 + $0xf9] sm:$0xff] %v542
      %693 = vst [vmem:[%s670 + $0x109] sm:$0xff] %v543
      %694 = vst [vmem:[%s670 + $0x111] sm:$0xff] %v544
      %695 = vst [vmem:[%s670 + $0x121] sm:$0xff] %v545
      %696 = vst [vmem:[%s670 + $0x129] sm:$0xff] %v546
      %697 = vst [vmem:[%s670 + $0x139] sm:$0xff] %v547
      %698 = vst [vmem:[%s670 + $0x141] sm:$0xff] %v548
      %699 = vst [vmem:[%s670 + $0x151] sm:$0xff] %v549
      %700 = vst [vmem:[%s670 + $0x159] sm:$0xff] %v550
      %701 = vst [vmem:[%s670 + $0x169] sm:$0xff] %v551
      %702 = vst [vmem:[%s670 + $0x171] sm:$0xff] %v552
      %703 = vst [vmem:[%s670 + $0x1b1] sm:$0xff] %v553
      %704 = vst [vmem:[%s670 + $0x1b9] sm:$0xff] %v554
      %705 = vst [vmem:[%s670 + $0x1c9] sm:$0xff] %v555
      %706 = vst [vmem:[%s670 + $0x1d1] sm:$0xff] %v556
      %707 = vst [vmem:[%s670 + $0x1e1] sm:$0xff] %v557
      %708 = vst [vmem:[%s670 + $0x1e9] sm:$0xff] %v558
      %709 = vst [vmem:[%s670 + $0x1f9] sm:$0xff] %v559
      %710 = vst [vmem:[%s670 + $0x201] sm:$0xff] %v560
      %711 = vst [vmem:[%s670 + $0x211] sm:$0xff] %v561
      %712 = vst [vmem:[%s670 + $0x219] sm:$0xff] %v562
      %713 = vst [vmem:[%s670 + $0x229] sm:$0xff] %v563
      %714 = vst [vmem:[%s670 + $0x231] sm:$0xff] %v564
      %715 = vst [vmem:[%s670 + $0x241] sm:$0xff] %v565
      %716 = vst [vmem:[%s670 + $0x249] sm:$0xff] %v566
      %717 = vst [vmem:[%s670 + $0x259] sm:$0xff] %v567
      %718 = vst [vmem:[%s670 + $0x261] sm:$0xff] %v568
      %719 = vst [vmem:[%s670 + $0x271] sm:$0xff] %v569
      %720 = vst [vmem:[%s670 + $0x279] sm:$0xff] %v570
      %721 = vst [vmem:[%s670 + $0x289] sm:$0xff] %v571
      %722 = vst [vmem:[%s670 + $0x291] sm:$0xff] %v572
      %723 = vst [vmem:[%s670 + $0x2a1] sm:$0xff] %v573
      %724 = vst [vmem:[%s670 + $0x2a9] sm:$0xff] %v574
      %725 = vst [vmem:[%s670 + $0x2b9] sm:$0xff] %v575
      %726 = vst [vmem:[%s670 + $0x2c1] sm:$0xff] %v576
      %727 = vst [vmem:[%s670 + $0x2d1] sm:$0xff] %v577
      %728 = vst [vmem:[%s670 + $0x2d9] sm:$0xff] %v578
      %729 = vst [vmem:[%s670 + $0x2e9] sm:$0xff] %v579
      %730 = vst [vmem:[%s670 + $0x2f1] sm:$0xff] %v580
      %731 = vst [vmem:[%s670 + $0x301] sm:$0xff] %v581
      %732 = vst [vmem:[%s670 + $0x309] sm:$0xff] %v582
      %733 = vst [vmem:[%s670 + $0x319] sm:$0xff] %v583
      %734 = vst [vmem:[%s670 + $0x321] sm:$0xff] %v584
      %v735 = vld [vmem:[#allocation2] ss:$2 sm:$0xff]
      %s736 = scalar_lea.vmem [#allocation2], 16
      %v737 = vld [vmem:[%s736] ss:$2 sm:$0x1]
      %s738 = scalar_lea.vmem [#allocation2], 48
      %v739 = vld [vmem:[%s738] ss:$2 sm:$0xff]
      %s740 = scalar_lea.vmem [#allocation2], 64
      %v741 = vld [vmem:[%s740] ss:$2 sm:$0x1]
      %s742 = scalar_lea.vmem [#allocation2], 96
      %v743 = vld [vmem:[%s742] ss:$2 sm:$0xff]
      %s744 = scalar_lea.vmem [#allocation2], 112
      %v745 = vld [vmem:[%s744] ss:$2 sm:$0x1]
      %s746 = scalar_lea.vmem [#allocation2], 144
      %v747 = vld [vmem:[%s746] ss:$2 sm:$0xff]
      %s748 = scalar_lea.vmem [#allocation2], 160
      %v749 = vld [vmem:[%s748] ss:$2 sm:$0x1]
      %s750 = scalar_lea.vmem [#allocation2], 192
      %v751 = vld [vmem:[%s750] ss:$2 sm:$0xff]
      %s752 = scalar_lea.vmem [#allocation2], 208
      %v753 = vld [vmem:[%s752] ss:$2 sm:$0x1]
      %s754 = scalar_lea.vmem [#allocation2], 240
      %v755 = vld [vmem:[%s754] ss:$2 sm:$0xff]
      %s756 = scalar_lea.vmem [#allocation2], 256
      %v757 = vld [vmem:[%s756] ss:$2 sm:$0x1]
      %s758 = scalar_lea.vmem [#allocation2], 288
      %v759 = vld [vmem:[%s758] ss:$2 sm:$0xff]
      %s760 = scalar_lea.vmem [#allocation2], 304
      %v761 = vld [vmem:[%s760] ss:$2 sm:$0x1]
      %s762 = scalar_lea.vmem [#allocation2], 336
      %v763 = vld [vmem:[%s762] ss:$2 sm:$0xff]
      %s764 = scalar_lea.vmem [#allocation2], 352
      %v765 = vld [vmem:[%s764] ss:$2 sm:$0x1]
      %s766 = scalar_lea.vmem [#allocation2], 384
      %v767 = vld [vmem:[%s766] ss:$2 sm:$0xff]
      %s768 = scalar_lea.vmem [#allocation2], 400
      %v769 = vld [vmem:[%s768] ss:$2 sm:$0x1]
      %s770 = scalar_lea.vmem [#allocation2], 432
      %v771 = vld [vmem:[%s770] ss:$2 sm:$0xff]
      %s772 = scalar_lea.vmem [#allocation2], 448
      %v773 = vld [vmem:[%s772] ss:$2 sm:$0x1]
      %s774 = scalar_lea.vmem [#allocation2], 480
      %v775 = vld [vmem:[%s774] ss:$2 sm:$0xff]
      %s776 = scalar_lea.vmem [#allocation2], 496
      %v777 = vld [vmem:[%s776] ss:$2 sm:$0x1]
      %s778 = scalar_lea.vmem [#allocation2], 528
      %v779 = vld [vmem:[%s778] ss:$2 sm:$0xff]
      %s780 = scalar_lea.vmem [#allocation2], 544
      %v781 = vld [vmem:[%s780] ss:$2 sm:$0x1]
      %s782 = scalar_lea.vmem [#allocation2], 576
      %v783 = vld [vmem:[%s782] ss:$2 sm:$0xff]
      %s784 = scalar_lea.vmem [#allocation2], 592
      %v785 = vld [vmem:[%s784] ss:$2 sm:$0x1]
      %s786 = scalar_lea.vmem [#allocation2], 624
      %v787 = vld [vmem:[%s786] ss:$2 sm:$0xff]
      %s788 = scalar_lea.vmem [#allocation2], 640
      %v789 = vld [vmem:[%s788] ss:$2 sm:$0x1]
      %s790 = scalar_lea.vmem [#allocation2], 672
      %v791 = vld [vmem:[%s790] ss:$2 sm:$0xff]
      %s792 = scalar_lea.vmem [#allocation2], 688
      %v793 = vld [vmem:[%s792] ss:$2 sm:$0x1]
      %s794 = scalar_lea.vmem [#allocation2], 720
      %v795 = vld [vmem:[%s794] ss:$2 sm:$0xff]
      %s796 = scalar_lea.vmem [#allocation2], 736
      %v797 = vld [vmem:[%s796] ss:$2 sm:$0x1]
      %s798 = scalar_lea.vmem [#allocation2], 768
      %v799 = vld [vmem:[%s798] ss:$2 sm:$0xff]
      %s800 = scalar_lea.vmem [#allocation2], 784
      %v801 = vld [vmem:[%s800] ss:$2 sm:$0x1]
      %s802 = scalar_lea.vmem [#allocation2], 816
      %v803 = vld [vmem:[%s802] ss:$2 sm:$0xff]
      %s804 = scalar_lea.vmem [#allocation2], 832
      %v805 = vld [vmem:[%s804] ss:$2 sm:$0x1]
      %s806 = scalar_lea.vmem [#allocation2], 1
      %v807 = vld [vmem:[%s806] ss:$2 sm:$0xff]
      %s808 = scalar_lea.vmem [#allocation2], 49
      %v809 = vld [vmem:[%s808] ss:$2 sm:$0xff]
      %s810 = scalar_lea.vmem [#allocation2], 97
      %v811 = vld [vmem:[%s810] ss:$2 sm:$0xff]
      %s812 = scalar_lea.vmem [#allocation2], 145
      %v813 = vld [vmem:[%s812] ss:$2 sm:$0xff]
      %s814 = scalar_lea.vmem [#allocation2], 193
      %v815 = vld [vmem:[%s814] ss:$2 sm:$0xff]
      %s816 = scalar_lea.vmem [#allocation2], 241
      %v817 = vld [vmem:[%s816] ss:$2 sm:$0xff]
      %s818 = scalar_lea.vmem [#allocation2], 289
      %v819 = vld [vmem:[%s818] ss:$2 sm:$0xff]
      %s820 = scalar_lea.vmem [#allocation2], 337
      %v821 = vld [vmem:[%s820] ss:$2 sm:$0xff]
      %s822 = scalar_lea.vmem [#allocation2], 385
      %v823 = vld [vmem:[%s822] ss:$2 sm:$0xff]
      %s824 = scalar_lea.vmem [#allocation2], 433
      %v825 = vld [vmem:[%s824] ss:$2 sm:$0xff]
      %s826 = scalar_lea.vmem [#allocation2], 481
      %v827 = vld [vmem:[%s826] ss:$2 sm:$0xff]
      %s828 = scalar_lea.vmem [#allocation2], 529
      %v829 = vld [vmem:[%s828] ss:$2 sm:$0xff]
      %s830 = scalar_lea.vmem [#allocation2], 577
      %v831 = vld [vmem:[%s830] ss:$2 sm:$0xff]
      %s832 = scalar_lea.vmem [#allocation2], 625
      %v833 = vld [vmem:[%s832] ss:$2 sm:$0xff]
      %s834 = scalar_lea.vmem [#allocation2], 673
      %v835 = vld [vmem:[%s834] ss:$2 sm:$0xff]
      %s836 = scalar_lea.vmem [#allocation2], 721
      %v837 = vld [vmem:[%s836] ss:$2 sm:$0xff]
      %s838 = scalar_lea.vmem [#allocation2], 769
      %v839 = vld [vmem:[%s838] ss:$2 sm:$0xff]
      %s840 = scalar_lea.vmem [#allocation2], 817
      %v841 = vld [vmem:[%s840] ss:$2 sm:$0xff]
      %v842 = vld [vmem:[%s670] ss:$2 sm:$0xff]
      %s843 = scalar_lea.vmem %s670, 16 [#allocation2]
      %v844 = vld [vmem:[%s843] ss:$2 sm:$0x1]
      %s845 = scalar_lea.vmem %s670, 48 [#allocation2]
      %v846 = vld [vmem:[%s845] ss:$2 sm:$0xff]
      %s847 = scalar_lea.vmem %s670, 64 [#allocation2]
      %v848 = vld [vmem:[%s847] ss:$2 sm:$0x1]
      %s849 = scalar_lea.vmem %s670, 96 [#allocation2]
      %v850 = vld [vmem:[%s849] ss:$2 sm:$0xff]
      %s851 = scalar_lea.vmem %s670, 112 [#allocation2]
      %v852 = vld [vmem:[%s851] ss:$2 sm:$0x1]
      %s853 = scalar_lea.vmem %s670, 144 [#allocation2]
      %v854 = vld [vmem:[%s853] ss:$2 sm:$0xff]
      %s855 = scalar_lea.vmem %s670, 160 [#allocation2]
      %v856 = vld [vmem:[%s855] ss:$2 sm:$0x1]
      %s857 = scalar_lea.vmem %s670, 192 [#allocation2]
      %v858 = vld [vmem:[%s857] ss:$2 sm:$0xff]
      %s859 = scalar_lea.vmem %s670, 208 [#allocation2]
      %v860 = vld [vmem:[%s859] ss:$2 sm:$0x1]
      %s861 = scalar_lea.vmem %s670, 240 [#allocation2]
      %v862 = vld [vmem:[%s861] ss:$2 sm:$0xff]
      %s863 = scalar_lea.vmem %s670, 256 [#allocation2]
      %v864 = vld [vmem:[%s863] ss:$2 sm:$0x1]
      %s865 = scalar_lea.vmem %s670, 288 [#allocation2]
      %v866 = vld [vmem:[%s865] ss:$2 sm:$0xff]
      %s867 = scalar_lea.vmem %s670, 304 [#allocation2]
      %v868 = vld [vmem:[%s867] ss:$2 sm:$0x1]
      %s869 = scalar_lea.vmem %s670, 336 [#allocation2]
      %v870 = vld [vmem:[%s869] ss:$2 sm:$0xff]
      %s871 = scalar_lea.vmem %s670, 352 [#allocation2]
      %v872 = vld [vmem:[%s871] ss:$2 sm:$0x1]
      %s873 = scalar_lea.vmem %s670, 432 [#allocation2]
      %v874 = vld [vmem:[%s873] ss:$2 sm:$0xff]
      %s875 = scalar_lea.vmem %s670, 448 [#allocation2]
      %v876 = vld [vmem:[%s875] ss:$2 sm:$0x1]
      %s877 = scalar_lea.vmem %s670, 480 [#allocation2]
      %v878 = vld [vmem:[%s877] ss:$2 sm:$0xff]
      %s879 = scalar_lea.vmem %s670, 496 [#allocation2]
      %v880 = vld [vmem:[%s879] ss:$2 sm:$0x1]
      %s881 = scalar_lea.vmem %s670, 528 [#allocation2]
      %v882 = vld [vmem:[%s881] ss:$2 sm:$0xff]
      %s883 = scalar_lea.vmem %s670, 544 [#allocation2]
      %v884 = vld [vmem:[%s883] ss:$2 sm:$0x1]
      %s885 = scalar_lea.vmem %s670, 576 [#allocation2]
      %v886 = vld [vmem:[%s885] ss:$2 sm:$0xff]
      %s887 = scalar_lea.vmem %s670, 592 [#allocation2]
      %v888 = vld [vmem:[%s887] ss:$2 sm:$0x1]
      %s889 = scalar_lea.vmem %s670, 624 [#allocation2]
      %v890 = vld [vmem:[%s889] ss:$2 sm:$0xff]
      %s891 = scalar_lea.vmem %s670, 640 [#allocation2]
      %v892 = vld [vmem:[%s891] ss:$2 sm:$0x1]
      %s893 = scalar_lea.vmem %s670, 672 [#allocation2]
      %v894 = vld [vmem:[%s893] ss:$2 sm:$0xff]
      %s895 = scalar_lea.vmem %s670, 688 [#allocation2]
      %v896 = vld [vmem:[%s895] ss:$2 sm:$0x1]
      %s897 = scalar_lea.vmem %s670, 720 [#allocation2]
      %v898 = vld [vmem:[%s897] ss:$2 sm:$0xff]
      %s899 = scalar_lea.vmem %s670, 736 [#allocation2]
      %v900 = vld [vmem:[%s899] ss:$2 sm:$0x1]
      %s901 = scalar_lea.vmem %s670, 768 [#allocation2]
      %v902 = vld [vmem:[%s901] ss:$2 sm:$0xff]
      %s903 = scalar_lea.vmem %s670, 784 [#allocation2]
      %v904 = vld [vmem:[%s903] ss:$2 sm:$0x1]
      %s905 = scalar_lea.vmem %s670, 1 [#allocation2]
      %v906 = vld [vmem:[%s905] ss:$2 sm:$0xff]
      %s907 = scalar_lea.vmem %s670, 49 [#allocation2]
      %v908 = vld [vmem:[%s907] ss:$2 sm:$0xff]
      %s909 = scalar_lea.vmem %s670, 97 [#allocation2]
      %v910 = vld [vmem:[%s909] ss:$2 sm:$0xff]
      %s911 = scalar_lea.vmem %s670, 145 [#allocation2]
      %v912 = vld [vmem:[%s911] ss:$2 sm:$0xff]
      %s913 = scalar_lea.vmem %s670, 193 [#allocation2]
      %v914 = vld [vmem:[%s913] ss:$2 sm:$0xff]
      %s915 = scalar_lea.vmem %s670, 241 [#allocation2]
      %v916 = vld [vmem:[%s915] ss:$2 sm:$0xff]
      %s917 = scalar_lea.vmem %s670, 289 [#allocation2]
      %v918 = vld [vmem:[%s917] ss:$2 sm:$0xff]
      %s919 = scalar_lea.vmem %s670, 337 [#allocation2]
      %v920 = vld [vmem:[%s919] ss:$2 sm:$0xff]
      %s921 = scalar_lea.vmem %s670, 433 [#allocation2]
      %v922 = vld [vmem:[%s921] ss:$2 sm:$0xff]
      %s923 = scalar_lea.vmem %s670, 481 [#allocation2]
      %v924 = vld [vmem:[%s923] ss:$2 sm:$0xff]
      %s925 = scalar_lea.vmem %s670, 529 [#allocation2]
      %v926 = vld [vmem:[%s925] ss:$2 sm:$0xff]
      %s927 = scalar_lea.vmem %s670, 577 [#allocation2]
      %v928 = vld [vmem:[%s927] ss:$2 sm:$0xff]
      %s929 = scalar_lea.vmem %s670, 625 [#allocation2]
      %v930 = vld [vmem:[%s929] ss:$2 sm:$0xff]
      %s931 = scalar_lea.vmem %s670, 673 [#allocation2]
      %v932 = vld [vmem:[%s931] ss:$2 sm:$0xff]
      %s933 = scalar_lea.vmem %s670, 721 [#allocation2]
      %v934 = vld [vmem:[%s933] ss:$2 sm:$0xff]
      %s935 = scalar_lea.vmem %s670, 769 [#allocation2]
      %v936 = vld [vmem:[%s935] ss:$2 sm:$0xff]
      %vm969 = vcmask 1046528
      %v970 = vrot.slane %v735, 1
      %v971 = vrot.slane %v737, 1
      %v972 = vsel %vm969, %v970, %v971
      %v973 = vrot.slane %v739, 1
      %v974 = vrot.slane %v741, 1
      %v975 = vsel %vm969, %v973, %v974
      %v976 = vrot.slane %v743, 1
      %v977 = vrot.slane %v745, 1
      %v978 = vsel %vm969, %v976, %v977
      %v979 = vrot.slane %v747, 1
      %v980 = vrot.slane %v749, 1
      %v981 = vsel %vm969, %v979, %v980
      %v982 = vrot.slane %v751, 1
      %v983 = vrot.slane %v753, 1
      %v984 = vsel %vm969, %v982, %v983
      %v985 = vrot.slane %v755, 1
      %v986 = vrot.slane %v757, 1
      %v987 = vsel %vm969, %v985, %v986
      %v988 = vrot.slane %v759, 1
      %v989 = vrot.slane %v761, 1
      %v990 = vsel %vm969, %v988, %v989
      %v991 = vrot.slane %v763, 1
      %v992 = vrot.slane %v765, 1
      %v993 = vsel %vm969, %v991, %v992
      %v994 = vrot.slane %v771, 1
      %v995 = vrot.slane %v773, 1
      %v996 = vsel %vm969, %v994, %v995
      %v997 = vrot.slane %v775, 1
      %v998 = vrot.slane %v777, 1
      %v999 = vsel %vm969, %v997, %v998
      %v1000 = vrot.slane %v779, 1
      %v1001 = vrot.slane %v781, 1
      %v1002 = vsel %vm969, %v1000, %v1001
      %v1003 = vrot.slane %v783, 1
      %v1004 = vrot.slane %v785, 1
      %v1005 = vsel %vm969, %v1003, %v1004
      %v1006 = vrot.slane %v787, 1
      %v1007 = vrot.slane %v789, 1
      %v1008 = vsel %vm969, %v1006, %v1007
      %v1009 = vrot.slane %v791, 1
      %v1010 = vrot.slane %v793, 1
      %v1011 = vsel %vm969, %v1009, %v1010
      %v1012 = vrot.slane %v795, 1
      %v1013 = vrot.slane %v797, 1
      %v1014 = vsel %vm969, %v1012, %v1013
      %v1015 = vrot.slane %v799, 1
      %v1016 = vrot.slane %v801, 1
      %v1017 = vsel %vm969, %v1015, %v1016
      %v1066 = vrot.slane %v842, 1
      %v1067 = vrot.slane %v844, 1
      %v1068 = vsel %vm969, %v1066, %v1067
      %v1069 = vrot.slane %v846, 1
      %v1070 = vrot.slane %v848, 1
      %v1071 = vsel %vm969, %v1069, %v1070
      %v1072 = vrot.slane %v850, 1
      %v1073 = vrot.slane %v852, 1
      %v1074 = vsel %vm969, %v1072, %v1073
      %v1075 = vrot.slane %v854, 1
      %v1076 = vrot.slane %v856, 1
      %v1077 = vsel %vm969, %v1075, %v1076
      %v1078 = vrot.slane %v858, 1
      %v1079 = vrot.slane %v860, 1
      %v1080 = vsel %vm969, %v1078, %v1079
      %v1081 = vrot.slane %v862, 1
      %v1082 = vrot.slane %v864, 1
      %v1083 = vsel %vm969, %v1081, %v1082
      %v1084 = vrot.slane %v866, 1
      %v1085 = vrot.slane %v868, 1
      %v1086 = vsel %vm969, %v1084, %v1085
      %v1087 = vrot.slane %v870, 1
      %v1088 = vrot.slane %v872, 1
      %v1089 = vsel %vm969, %v1087, %v1088
      %v1090 = vrot.slane %v874, 1
      %v1091 = vrot.slane %v876, 1
      %v1092 = vsel %vm969, %v1090, %v1091
      %v1093 = vrot.slane %v878, 1
      %v1094 = vrot.slane %v880, 1
      %v1095 = vsel %vm969, %v1093, %v1094
      %v1096 = vrot.slane %v882, 1
      %v1097 = vrot.slane %v884, 1
      %v1098 = vsel %vm969, %v1096, %v1097
      %v1099 = vrot.slane %v886, 1
      %v1100 = vrot.slane %v888, 1
      %v1101 = vsel %vm969, %v1099, %v1100
      %v1102 = vrot.slane %v890, 1
      %v1103 = vrot.slane %v892, 1
      %v1104 = vsel %vm969, %v1102, %v1103
      %v1105 = vrot.slane %v894, 1
      %v1106 = vrot.slane %v896, 1
      %v1107 = vsel %vm969, %v1105, %v1106
      %v1108 = vrot.slane %v898, 1
      %v1109 = vrot.slane %v900, 1
      %v1110 = vsel %vm969, %v1108, %v1109
      %v1111 = vrot.slane %v902, 1
      %v1112 = vrot.slane %v904, 1
      %v1113 = vsel %vm969, %v1111, %v1112
      %v1134 = vrot.slane %v767, 1
      %v1135 = vrot.slane %v769, 1
      %v1136 = vsel %vm969, %v1134, %v1135
      %v1137 = vrot.slane %v803, 1
      %v1138 = vrot.slane %v805, 1
      %v1139 = vsel %vm969, %v1137, %v1138
      %v1142 = vpack.c.bf16 %v908, %v906
      %v1143 = vpack.c.bf16 %v912, %v910
      %v1144 = vpack.c.bf16 %v916, %v914
      %v1145 = vpack.c.bf16 %v920, %v918
      %v1146 = vpack.c.bf16 %v924, %v922
      %v1147 = vpack.c.bf16 %v928, %v926
      %v1148 = vpack.c.bf16 %v932, %v930
      %v1149 = vpack.c.bf16 %v936, %v934
      %v1150 = vpack.c.bf16 %v739, %v735
      %v1151 = vpack.c.bf16 %v809, %v807
      %v1152 = vpack.c.bf16 %v975, %v972
      %v1153 = vpack.c.bf16 %v846, %v842
      %v1154 = vpack.c.bf16 %v1071, %v1068
      %v1155 = vpack.c.bf16 %v743, %v739
      %v1156 = vpack.c.bf16 %v811, %v809
      %v1157 = vpack.c.bf16 %v978, %v975
      %v1158 = vpack.c.bf16 %v747, %v743
      %v1159 = vpack.c.bf16 %v813, %v811
      %v1160 = vpack.c.bf16 %v981, %v978
      %v1161 = vpack.c.bf16 %v854, %v850
      %v1162 = vpack.c.bf16 %v1077, %v1074
      %v1163 = vpack.c.bf16 %v751, %v747
      %v1164 = vpack.c.bf16 %v815, %v813
      %v1165 = vpack.c.bf16 %v984, %v981
      %v1166 = vpack.c.bf16 %v755, %v751
      %v1167 = vpack.c.bf16 %v817, %v815
      %v1168 = vpack.c.bf16 %v987, %v984
      %v1169 = vpack.c.bf16 %v862, %v858
      %v1170 = vpack.c.bf16 %v1083, %v1080
      %v1171 = vpack.c.bf16 %v759, %v755
      %v1172 = vpack.c.bf16 %v819, %v817
      %v1173 = vpack.c.bf16 %v990, %v987
      %v1174 = vpack.c.bf16 %v763, %v759
      %v1175 = vpack.c.bf16 %v821, %v819
      %v1176 = vpack.c.bf16 %v993, %v990
      %v1177 = vpack.c.bf16 %v870, %v866
      %v1178 = vpack.c.bf16 %v1089, %v1086
      %v1179 = vpack.c.bf16 %v767, %v763
      %v1180 = vpack.c.bf16 %v823, %v821
      %v1181 = vpack.c.bf16 %v1136, %v993
      %v1182 = vpack.c.bf16 %v775, %v771
      %v1183 = vpack.c.bf16 %v827, %v825
      %v1184 = vpack.c.bf16 %v999, %v996
      %v1185 = vpack.c.bf16 %v878, %v874
      %v1186 = vpack.c.bf16 %v1095, %v1092
      %v1187 = vpack.c.bf16 %v779, %v775
      %v1188 = vpack.c.bf16 %v829, %v827
      %v1189 = vpack.c.bf16 %v1002, %v999
      %v1190 = vpack.c.bf16 %v783, %v779
      %v1191 = vpack.c.bf16 %v831, %v829
      %v1192 = vpack.c.bf16 %v1005, %v1002
      %v1193 = vpack.c.bf16 %v886, %v882
      %v1194 = vpack.c.bf16 %v1101, %v1098
      %v1195 = vpack.c.bf16 %v787, %v783
      %v1196 = vpack.c.bf16 %v833, %v831
      %v1197 = vpack.c.bf16 %v1008, %v1005
      %v1198 = vpack.c.bf16 %v791, %v787
      %v1199 = vpack.c.bf16 %v835, %v833
      %v1200 = vpack.c.bf16 %v1011, %v1008
      %v1201 = vpack.c.bf16 %v894, %v890
      %v1202 = vpack.c.bf16 %v1107, %v1104
      %v1203 = vpack.c.bf16 %v795, %v791
      %v1204 = vpack.c.bf16 %v837, %v835
      %v1205 = vpack.c.bf16 %v1014, %v1011
      %v1206 = vpack.c.bf16 %v799, %v795
      %v1207 = vpack.c.bf16 %v839, %v837
      %v1208 = vpack.c.bf16 %v1017, %v1014
      %v1209 = vpack.c.bf16 %v902, %v898
      %v1210 = vpack.c.bf16 %v1113, %v1110
      %v1211 = vpack.c.bf16 %v803, %v799
      %v1212 = vpack.c.bf16 %v841, %v839
      %v1213 = vpack.c.bf16 %v1139, %v1017
      %v1214 = vld [vmem:[%s3] sm:$0xf]
      %v1215 = vld [vmem:[%s3 + $0x4] sm:$0xf]
      %v1216 = vld [vmem:[%s3 + $0x8] sm:$0xf]
      %v1217 = vld [vmem:[%s3 + $0xc] sm:$0xf]
      %v1218 = vld [vmem:[%s3 + $0x10] sm:$0xf]
      %v1219 = vld [vmem:[%s3 + $0x14] sm:$0xf]
      %v1220 = vld [vmem:[%s3 + $0x18] sm:$0xf]
      %v1221 = vld [vmem:[%s3 + $0x1c] sm:$0xf]
      %v1222 = vld [vmem:[%s3 + $0x20] sm:$0xf]
      %v1223 = vld [vmem:[%s3 + $0x24] sm:$0xf]
      %v1224 = vld [vmem:[%s3 + $0x28] sm:$0xf]
      %v1225 = vld [vmem:[%s3 + $0x2c] sm:$0xf]
      %v1226 = vld [vmem:[%s3 + $0x30] sm:$0xf]
      %v1227 = vld [vmem:[%s3 + $0x34] sm:$0xf]
      %v1228 = vld [vmem:[%s3 + $0x38] sm:$0xf]
      %v1229 = vld [vmem:[%s3 + $0x3c] sm:$0xf]
      %v1230 = vld [vmem:[%s3 + $0x40] sm:$0xf]
      %v1231 = vld [vmem:[%s3 + $0x44] sm:$0xf]
      %v1232 = vld [vmem:[%s3 + $0x48] sm:$0xf]
      %v1233 = vld [vmem:[%s3 + $0x4c] sm:$0xf]
      %v1234 = vld [vmem:[%s3 + $0x50] sm:$0xf]
      %v1235 = vld [vmem:[%s3 + $0x54] sm:$0xf]
      %v1236 = vld [vmem:[%s3 + $0x58] sm:$0xf]
      %v1237 = vld [vmem:[%s3 + $0x5c] sm:$0xf]
      %v1238 = vld [vmem:[%s3 + $0x60] sm:$0xf]
      %v1239 = vld [vmem:[%s3 + $0x64] sm:$0xf]
      %v1240 = vld [vmem:[%s3 + $0x68] sm:$0xf]
      %v1241 = vld [vmem:[%s3 + $0x6c] sm:$0xf]
      %v1242 = vld [vmem:[%s3 + $0x70] sm:$0xf]
      %v1243 = vld [vmem:[%s3 + $0x74] sm:$0xf]
      %v1244 = vld [vmem:[%s3 + $0x78] sm:$0xf]
      %v1245 = vld [vmem:[%s3 + $0x7c] sm:$0xf]
      %v1246 = vld [vmem:[%s3 + $0x80] sm:$0xf]
      %v1247 = vld [vmem:[%s3 + $0x84] sm:$0xf]
      %v1248 = vld [vmem:[%s3 + $0x88] sm:$0xf]
      %v1249 = vld [vmem:[%s3 + $0x8c] sm:$0xf]
      %v1250 = vld [vmem:[%s3 + $0x90] sm:$0xf]
      %v1251 = vld [vmem:[%s3 + $0x94] sm:$0xf]
      %v1252 = vld [vmem:[%s3 + $0x98] sm:$0xf]
      %v1253 = vld [vmem:[%s3 + $0x9c] sm:$0xf]
      %v1254 = vld [vmem:[%s3 + $0xa0] sm:$0xf]
      %v1255 = vld [vmem:[%s3 + $0xa4] sm:$0xf]
      %v1256 = vld [vmem:[%s3 + $0xa8] sm:$0xf]
      %v1257 = vld [vmem:[%s3 + $0xac] sm:$0xf]
      %v1258 = vld [vmem:[%s3 + $0xb0] sm:$0xf]
      %v1259 = vld [vmem:[%s3 + $0xb4] sm:$0xf]
      %v1260 = vld [vmem:[%s3 + $0xb8] sm:$0xf]
      %v1261 = vld [vmem:[%s3 + $0xbc] sm:$0xf]
      %v1262 = vld [vmem:[%s3 + $0xc0] sm:$0xf]
      %v1263 = vld [vmem:[%s3 + $0xc4] sm:$0xf]
      %v1264 = vld [vmem:[%s3 + $0xc8] sm:$0xf]
      %v1265 = vld [vmem:[%s3 + $0xcc] sm:$0xf]
      %v1266 = vld [vmem:[%s3 + $0xd0] sm:$0xf]
      %v1267 = vld [vmem:[%s3 + $0xd4] sm:$0xf]
      %v1268 = vld [vmem:[%s3 + $0xd8] sm:$0xf]
      %v1269 = vld [vmem:[%s3 + $0xdc] sm:$0xf]
      %v1270 = vld [vmem:[%s3 + $0xe0] sm:$0xf]
      %v1271 = vld [vmem:[%s3 + $0xe4] sm:$0xf]
      %v1272 = vld [vmem:[%s3 + $0xe8] sm:$0xf]
      %v1273 = vld [vmem:[%s3 + $0xec] sm:$0xf]
      %v1274 = vld [vmem:[%s3 + $0xf0] sm:$0xf]
      %v1275 = vld [vmem:[%s3 + $0xf4] sm:$0xf]
      %v1276 = vld [vmem:[%s3 + $0xf8] sm:$0xf]
      %v1277 = vld [vmem:[%s3 + $0xfc] sm:$0xf]
      %v1278 = vld [vmem:[%s3 + $0x100] sm:$0xf]
      %v1279 = vld [vmem:[%s3 + $0x104] sm:$0xf]
      %v1280 = vld [vmem:[%s3 + $0x108] sm:$0xf]
      %v1281 = vld [vmem:[%s3 + $0x10c] sm:$0xf]
      %v1282 = vld [vmem:[%s3 + $0x110] sm:$0xf]
      %v1283 = vld [vmem:[%s3 + $0x114] sm:$0xf]
      %v1284 = vld [vmem:[%s3 + $0x118] sm:$0xf]
      %v1285 = vld [vmem:[%s3 + $0x11c] sm:$0xf]
      %v1286 = vld [vmem:[%s3 + $0x120] sm:$0xf]
      %v1287 = vld [vmem:[%s3 + $0x124] sm:$0xf]
      %v1288 = vld [vmem:[%s3 + $0x128] sm:$0xf]
      %v1289 = vld [vmem:[%s3 + $0x12c] sm:$0xf]
      %v1290 = vld [vmem:[%s3 + $0x130] sm:$0xf]
      %v1291 = vld [vmem:[%s3 + $0x134] sm:$0xf]
      %v1292 = vld [vmem:[%s3 + $0x138] sm:$0xf]
      %v1293 = vld [vmem:[%s3 + $0x13c] sm:$0xf]
      %v1294 = vld [vmem:[%s3 + $0x140] sm:$0xf]
      %v1295 = vld [vmem:[%s3 + $0x144] sm:$0xf]
      %v1296 = vld [vmem:[%s3 + $0x148] sm:$0xf]
      %v1297 = vld [vmem:[%s3 + $0x14c] sm:$0xf]
      %v1298 = vld [vmem:[%s3 + $0x150] sm:$0xf]
      %v1299 = vld [vmem:[%s3 + $0x154] sm:$0xf]
      %v1300 = vld [vmem:[%s3 + $0x158] sm:$0xf]
      %v1301 = vld [vmem:[%s3 + $0x15c] sm:$0xf]
      %v1302 = vld [vmem:[%s3 + $0x160] sm:$0xf]
      %v1303 = vld [vmem:[%s3 + $0x164] sm:$0xf]
      %v1304 = vld [vmem:[%s3 + $0x168] sm:$0xf]
      %v1305 = vld [vmem:[%s3 + $0x16c] sm:$0xf]
      %v1306 = vld [vmem:[%s3 + $0x170] sm:$0xf]
      %v1307 = vld [vmem:[%s3 + $0x174] sm:$0xf]
      %v1308 = vld [vmem:[%s3 + $0x178] sm:$0xf]
      %v1309 = vld [vmem:[%s3 + $0x17c] sm:$0xf]
      %v1310 = vld [vmem:[%s3 + $0x180] sm:$0xf]
      %v1311 = vld [vmem:[%s3 + $0x184] sm:$0xf]
      %v1312 = vld [vmem:[%s3 + $0x188] sm:$0xf]
      %v1313 = vld [vmem:[%s3 + $0x18c] sm:$0xf]
      %v1314 = vld [vmem:[%s3 + $0x190] sm:$0xf]
      %v1315 = vld [vmem:[%s3 + $0x194] sm:$0xf]
      %v1316 = vld [vmem:[%s3 + $0x198] sm:$0xf]
      %v1317 = vld [vmem:[%s3 + $0x19c] sm:$0xf]
      %v1318 = vld [vmem:[%s3 + $0x1a0] sm:$0xf]
      %v1319 = vld [vmem:[%s3 + $0x1a4] sm:$0xf]
      %v1320 = vld [vmem:[%s3 + $0x1a8] sm:$0xf]
      %v1321 = vld [vmem:[%s3 + $0x1ac] sm:$0xf]
      %v1322 = vld [vmem:[%s3 + $0x1b0] sm:$0xf]
      %v1323 = vld [vmem:[%s3 + $0x1b4] sm:$0xf]
      %v1324 = vld [vmem:[%s3 + $0x1b8] sm:$0xf]
      %v1325 = vld [vmem:[%s3 + $0x1bc] sm:$0xf]
      %v1326 = vld [vmem:[%s3 + $0x1c0] sm:$0xf]
      %v1327 = vld [vmem:[%s3 + $0x1c4] sm:$0xf]
      %v1328 = vld [vmem:[%s3 + $0x1c8] sm:$0xf]
      %v1329 = vld [vmem:[%s3 + $0x1cc] sm:$0xf]
      %v1330 = vld [vmem:[%s3 + $0x1d0] sm:$0xf]
      %v1331 = vld [vmem:[%s3 + $0x1d4] sm:$0xf]
      %v1332 = vld [vmem:[%s3 + $0x1d8] sm:$0xf]
      %v1333 = vld [vmem:[%s3 + $0x1dc] sm:$0xf]
      %v1334 = vld [vmem:[%s3 + $0x1e0] sm:$0xf]
      %v1335 = vld [vmem:[%s3 + $0x1e4] sm:$0xf]
      %v1336 = vld [vmem:[%s3 + $0x1e8] sm:$0xf]
      %v1337 = vld [vmem:[%s3 + $0x1ec] sm:$0xf]
      %v1338 = vld [vmem:[%s3 + $0x1f0] sm:$0xf]
      %v1339 = vld [vmem:[%s3 + $0x1f4] sm:$0xf]
      %v1340 = vld [vmem:[%s3 + $0x1f8] sm:$0xf]
      %v1341 = vld [vmem:[%s3 + $0x1fc] sm:$0xf]
      %v1342 = vld [vmem:[%s3 + $0x200] sm:$0xf]
      %v1343 = vld [vmem:[%s3 + $0x204] sm:$0xf]
      %v1344 = vld [vmem:[%s3 + $0x208] sm:$0xf]
      %v1345 = vld [vmem:[%s3 + $0x20c] sm:$0xf]
      %v1346 = vld [vmem:[%s3 + $0x210] sm:$0xf]
      %v1347 = vld [vmem:[%s3 + $0x214] sm:$0xf]
      %v1348 = vld [vmem:[%s3 + $0x218] sm:$0xf]
      %v1349 = vld [vmem:[%s3 + $0x21c] sm:$0xf]
      %v1350 = vld [vmem:[%s3 + $0x220] sm:$0xf]
      %v1351 = vld [vmem:[%s3 + $0x224] sm:$0xf]
      %v1352 = vld [vmem:[%s3 + $0x228] sm:$0xf]
      %v1353 = vld [vmem:[%s3 + $0x22c] sm:$0xf]
      %v1354 = vld [vmem:[%s3 + $0x230] sm:$0xf]
      %v1355 = vld [vmem:[%s3 + $0x234] sm:$0xf]
      %v1356 = vld [vmem:[%s3 + $0x238] sm:$0xf]
      %v1357 = vld [vmem:[%s3 + $0x23c] sm:$0xf]
      %v1502 = vunpack.c.l.b16 %v1214
      %v1503 = vunpack.c.l.b16 %v1215
      %v1504 = vunpack.c.l.b16 %v1216
      %v1505 = vunpack.c.l.b16 %v1217
      %v1506 = vunpack.c.l.b16 %v1218
      %v1507 = vunpack.c.l.b16 %v1219
      %v1508 = vunpack.c.l.b16 %v1220
      %v1509 = vunpack.c.l.b16 %v1221
      %v1510 = vunpack.c.l.b16 %v1222
      %v1511 = vunpack.c.l.b16 %v1223
      %v1512 = vunpack.c.l.b16 %v1224
      %v1513 = vunpack.c.l.b16 %v1225
      %v1514 = vunpack.c.l.b16 %v1226
      %v1515 = vunpack.c.l.b16 %v1227
      %v1516 = vunpack.c.l.b16 %v1228
      %v1517 = vunpack.c.l.b16 %v1229
      %v1518 = vunpack.c.l.b16 %v1230
      %v1519 = vunpack.c.l.b16 %v1231
      %v1520 = vunpack.c.l.b16 %v1232
      %v1521 = vunpack.c.l.b16 %v1233
      %v1522 = vunpack.c.l.b16 %v1234
      %v1523 = vunpack.c.l.b16 %v1235
      %v1524 = vunpack.c.l.b16 %v1236
      %v1525 = vunpack.c.l.b16 %v1237
      %v1526 = vunpack.c.l.b16 %v1238
      %v1527 = vunpack.c.l.b16 %v1239
      %v1528 = vunpack.c.l.b16 %v1240
      %v1529 = vunpack.c.l.b16 %v1241
      %v1530 = vunpack.c.l.b16 %v1242
      %v1531 = vunpack.c.l.b16 %v1243
      %v1532 = vunpack.c.l.b16 %v1244
      %v1533 = vunpack.c.l.b16 %v1245
      %v1534 = vunpack.c.l.b16 %v1246
      %v1535 = vunpack.c.l.b16 %v1247
      %v1536 = vunpack.c.l.b16 %v1248
      %v1537 = vunpack.c.l.b16 %v1249
      %v1538 = vunpack.c.l.b16 %v1250
      %v1539 = vunpack.c.l.b16 %v1251
      %v1540 = vunpack.c.l.b16 %v1252
      %v1541 = vunpack.c.l.b16 %v1253
      %v1542 = vunpack.c.l.b16 %v1254
      %v1543 = vunpack.c.l.b16 %v1255
      %v1544 = vunpack.c.l.b16 %v1256
      %v1545 = vunpack.c.l.b16 %v1257
      %v1546 = vunpack.c.l.b16 %v1258
      %v1547 = vunpack.c.l.b16 %v1259
      %v1548 = vunpack.c.l.b16 %v1260
      %v1549 = vunpack.c.l.b16 %v1261
      %v1550 = vunpack.c.l.b16 %v1262
      %v1551 = vunpack.c.l.b16 %v1263
      %v1552 = vunpack.c.l.b16 %v1264
      %v1553 = vunpack.c.l.b16 %v1265
      %v1554 = vunpack.c.l.b16 %v1266
      %v1555 = vunpack.c.l.b16 %v1267
      %v1556 = vunpack.c.l.b16 %v1268
      %v1557 = vunpack.c.l.b16 %v1269
      %v1558 = vunpack.c.l.b16 %v1270
      %v1559 = vunpack.c.l.b16 %v1271
      %v1560 = vunpack.c.l.b16 %v1272
      %v1561 = vunpack.c.l.b16 %v1273
      %v1562 = vunpack.c.l.b16 %v1274
      %v1563 = vunpack.c.l.b16 %v1275
      %v1564 = vunpack.c.l.b16 %v1276
      %v1565 = vunpack.c.l.b16 %v1277
      %v1566 = vunpack.c.l.b16 %v1278
      %v1567 = vunpack.c.l.b16 %v1279
      %v1568 = vunpack.c.l.b16 %v1280
      %v1569 = vunpack.c.l.b16 %v1281
      %v1570 = vunpack.c.l.b16 %v1282
      %v1571 = vunpack.c.l.b16 %v1283
      %v1572 = vunpack.c.l.b16 %v1284
      %v1573 = vunpack.c.l.b16 %v1285
      %v1574 = vunpack.c.l.b16 %v1286
      %v1575 = vunpack.c.l.b16 %v1287
      %v1576 = vunpack.c.l.b16 %v1288
      %v1577 = vunpack.c.l.b16 %v1289
      %v1578 = vunpack.c.l.b16 %v1290
      %v1579 = vunpack.c.l.b16 %v1291
      %v1580 = vunpack.c.l.b16 %v1292
      %v1581 = vunpack.c.l.b16 %v1293
      %v1582 = vunpack.c.l.b16 %v1294
      %v1583 = vunpack.c.l.b16 %v1295
      %v1584 = vunpack.c.l.b16 %v1296
      %v1585 = vunpack.c.l.b16 %v1297
      %v1586 = vunpack.c.l.b16 %v1298
      %v1587 = vunpack.c.l.b16 %v1299
      %v1588 = vunpack.c.l.b16 %v1300
      %v1589 = vunpack.c.l.b16 %v1301
      %v1590 = vunpack.c.l.b16 %v1302
      %v1591 = vunpack.c.l.b16 %v1303
      %v1592 = vunpack.c.l.b16 %v1304
      %v1593 = vunpack.c.l.b16 %v1305
      %v1594 = vunpack.c.l.b16 %v1306
      %v1595 = vunpack.c.l.b16 %v1307
      %v1596 = vunpack.c.l.b16 %v1308
      %v1597 = vunpack.c.l.b16 %v1309
      %v1598 = vunpack.c.l.b16 %v1310
      %v1599 = vunpack.c.l.b16 %v1311
      %v1600 = vunpack.c.l.b16 %v1312
      %v1601 = vunpack.c.l.b16 %v1313
      %v1602 = vunpack.c.l.b16 %v1314
      %v1603 = vunpack.c.l.b16 %v1315
      %v1604 = vunpack.c.l.b16 %v1316
      %v1605 = vunpack.c.l.b16 %v1317
      %v1606 = vunpack.c.l.b16 %v1318
      %v1607 = vunpack.c.l.b16 %v1319
      %v1608 = vunpack.c.l.b16 %v1320
      %v1609 = vunpack.c.l.b16 %v1321
      %v1610 = vunpack.c.l.b16 %v1322
      %v1611 = vunpack.c.l.b16 %v1323
      %v1612 = vunpack.c.l.b16 %v1324
      %v1613 = vunpack.c.l.b16 %v1325
      %v1614 = vunpack.c.l.b16 %v1326
      %v1615 = vunpack.c.l.b16 %v1327
      %v1616 = vunpack.c.l.b16 %v1328
      %v1617 = vunpack.c.l.b16 %v1329
      %v1618 = vunpack.c.l.b16 %v1330
      %v1619 = vunpack.c.l.b16 %v1331
      %v1620 = vunpack.c.l.b16 %v1332
      %v1621 = vunpack.c.l.b16 %v1333
      %v1622 = vunpack.c.l.b16 %v1334
      %v1623 = vunpack.c.l.b16 %v1335
      %v1624 = vunpack.c.l.b16 %v1336
      %v1625 = vunpack.c.l.b16 %v1337
      %v1626 = vunpack.c.l.b16 %v1338
      %v1627 = vunpack.c.l.b16 %v1339
      %v1628 = vunpack.c.l.b16 %v1340
      %v1629 = vunpack.c.l.b16 %v1341
      %v1630 = vunpack.c.l.b16 %v1342
      %v1631 = vunpack.c.l.b16 %v1343
      %v1632 = vunpack.c.l.b16 %v1344
      %v1633 = vunpack.c.l.b16 %v1345
      %v1634 = vunpack.c.l.b16 %v1346
      %v1635 = vunpack.c.l.b16 %v1347
      %v1636 = vunpack.c.l.b16 %v1348
      %v1637 = vunpack.c.l.b16 %v1349
      %v1638 = vunpack.c.l.b16 %v1350
      %v1639 = vunpack.c.l.b16 %v1351
      %v1640 = vunpack.c.l.b16 %v1352
      %v1641 = vunpack.c.l.b16 %v1353
      %v1642 = vunpack.c.l.b16 %v1354
      %v1643 = vunpack.c.l.b16 %v1355
      %v1644 = vunpack.c.l.b16 %v1356
      %v1645 = vunpack.c.l.b16 %v1357
      %v1646 = vpack.c.b16 %v1503, %v1502
      %v1647 = vpack.c.b16 %v1505, %v1504
      %v1648 = vpack.c.b16 %v1507, %v1506
      %v1649 = vpack.c.b16 %v1509, %v1508
      %v1650 = vpack.c.b16 %v1511, %v1510
      %v1651 = vpack.c.b16 %v1513, %v1512
      %v1652 = vpack.c.b16 %v1515, %v1514
      %v1653 = vpack.c.b16 %v1517, %v1516
      %v1654 = vpack.c.b16 %v1519, %v1518
      %v1655 = vpack.c.b16 %v1521, %v1520
      %v1656 = vpack.c.b16 %v1523, %v1522
      %v1657 = vpack.c.b16 %v1525, %v1524
      %v1658 = vpack.c.b16 %v1527, %v1526
      %v1659 = vpack.c.b16 %v1529, %v1528
      %v1660 = vpack.c.b16 %v1531, %v1530
      %v1661 = vpack.c.b16 %v1533, %v1532
      %v1662 = vpack.c.b16 %v1535, %v1534
      %v1663 = vpack.c.b16 %v1537, %v1536
      %v1664 = vpack.c.b16 %v1539, %v1538
      %v1665 = vpack.c.b16 %v1541, %v1540
      %v1666 = vpack.c.b16 %v1543, %v1542
      %v1667 = vpack.c.b16 %v1545, %v1544
      %v1668 = vpack.c.b16 %v1547, %v1546
      %v1669 = vpack.c.b16 %v1549, %v1548
      %v1670 = vpack.c.b16 %v1551, %v1550
      %v1671 = vpack.c.b16 %v1553, %v1552
      %v1672 = vpack.c.b16 %v1555, %v1554
      %v1673 = vpack.c.b16 %v1557, %v1556
      %v1674 = vpack.c.b16 %v1559, %v1558
      %v1675 = vpack.c.b16 %v1561, %v1560
      %v1676 = vpack.c.b16 %v1563, %v1562
      %v1677 = vpack.c.b16 %v1565, %v1564
      %v1678 = vpack.c.b16 %v1567, %v1566
      %v1679 = vpack.c.b16 %v1569, %v1568
      %v1680 = vpack.c.b16 %v1571, %v1570
      %v1681 = vpack.c.b16 %v1573, %v1572
      %v1682 = vpack.c.b16 %v1575, %v1574
      %v1683 = vpack.c.b16 %v1577, %v1576
      %v1684 = vpack.c.b16 %v1579, %v1578
      %v1685 = vpack.c.b16 %v1581, %v1580
      %v1686 = vpack.c.b16 %v1583, %v1582
      %v1687 = vpack.c.b16 %v1585, %v1584
      %v1688 = vpack.c.b16 %v1587, %v1586
      %v1689 = vpack.c.b16 %v1589, %v1588
      %v1690 = vpack.c.b16 %v1591, %v1590
      %v1691 = vpack.c.b16 %v1593, %v1592
      %v1692 = vpack.c.b16 %v1595, %v1594
      %v1693 = vpack.c.b16 %v1597, %v1596
      %v1694 = vpack.c.b16 %v1599, %v1598
      %v1695 = vpack.c.b16 %v1601, %v1600
      %v1696 = vpack.c.b16 %v1603, %v1602
      %v1697 = vpack.c.b16 %v1605, %v1604
      %v1698 = vpack.c.b16 %v1607, %v1606
      %v1699 = vpack.c.b16 %v1609, %v1608
      %v1700 = vpack.c.b16 %v1611, %v1610
      %v1701 = vpack.c.b16 %v1613, %v1612
      %v1702 = vpack.c.b16 %v1615, %v1614
      %v1703 = vpack.c.b16 %v1617, %v1616
      %v1704 = vpack.c.b16 %v1619, %v1618
      %v1705 = vpack.c.b16 %v1621, %v1620
      %v1706 = vpack.c.b16 %v1623, %v1622
      %v1707 = vpack.c.b16 %v1625, %v1624
      %v1708 = vpack.c.b16 %v1627, %v1626
      %v1709 = vpack.c.b16 %v1629, %v1628
      %v1710 = vpack.c.b16 %v1631, %v1630
      %v1711 = vpack.c.b16 %v1633, %v1632
      %v1712 = vpack.c.b16 %v1635, %v1634
      %v1713 = vpack.c.b16 %v1637, %v1636
      %v1714 = vpack.c.b16 %v1639, %v1638
      %v1715 = vpack.c.b16 %v1641, %v1640
      %v1716 = vpack.c.b16 %v1643, %v1642
      %v1717 = vpack.c.b16 %v1645, %v1644
      %1790 = vmatprep.subr.bf16.mxu0 0
      %1791 = vmatpush1.bf16.msra.mxu0 %v1646
      %1792 = vmatprep.subr.bf16.mxu0 0
      %1793 = vmatpush1.bf16.msra.mxu0 %v1647
      %1794 = vmatprep.subr.bf16.mxu0 0
      %1795 = vmatpush1.bf16.msra.mxu0 %v1648
      %1796 = vmatprep.subr.bf16.mxu0 0
      %1797 = vmatpush1.bf16.msra.mxu0 %v1649
      %1798 = vmatprep.subr.bf16.mxu0 0
      %1799 = vmatpush1.bf16.msra.mxu0 %v1650
      %1800 = vmatprep.subr.bf16.mxu0 0
      %1801 = vmatpush1.bf16.msra.mxu0 %v1651
      %1802 = vmatprep.subr.bf16.mxu0 0
      %1803 = vmatpush1.bf16.msra.mxu0 %v1652
      %1804 = vmatprep.subr.bf16.mxu0 0
      %1805 = vmatpush1.bf16.msra.mxu0 %v1653
      %1806 = vmatprep.subr.bf16.mxu0 0
      %1807 = vmatpush1.bf16.msra.mxu0 %v1654
      %1808 = vmatprep.subr.bf16.mxu0 0
      %1809 = vmatpush1.bf16.msra.mxu0 %v1655
      %1810 = vmatprep.subr.bf16.mxu0 0
      %1811 = vmatpush1.bf16.msra.mxu0 %v1656
      %1812 = vmatprep.subr.bf16.mxu0 0
      %1813 = vmatpush1.bf16.msra.mxu0 %v1657
      %1814 = vmatprep.subr.bf16.mxu0 0
      %1815 = vmatpush1.bf16.msra.mxu0 %v1658
      %1816 = vmatprep.subr.bf16.mxu0 0
      %1817 = vmatpush1.bf16.msra.mxu0 %v1659
      %1818 = vmatprep.subr.bf16.mxu0 0
      %1819 = vmatpush1.bf16.msra.mxu0 %v1660
      %1820 = vmatprep.subr.bf16.mxu0 0
      %1821 = vmatpush1.bf16.msra.mxu0 %v1661
      %1822 = vmatprep.mubr.bf16.mxu0 %v1151
      %1823 = vmatmul.mubr.bf16.gmra.mrb[0].mxu0 %v1150
      %v1824 = vpop.f32.mrb[0].mxu0
      %v1825 = vadd.f32 0.0, %v1824
      %v1826 = vpop.f32.mrb[0].mxu0
      %v1827 = vpop.f32.mrb[0].mxu0
      %v1828 = vadd.f32 0.0, %v1827
      %v1829 = vpop.f32.mrb[0].mxu0
      %1830 = vmatprep.mubr.bf16.mxu0 %v1159
      %1831 = vmatmul.mubr.bf16.gmra.mrb[0].mxu0 %v1158
      %v1832 = vpop.f32.mrb[0].mxu0
      %v1833 = vadd.f32 0.0, %v1832
      %v1834 = vpop.f32.mrb[0].mxu0
      %v1835 = vpop.f32.mrb[0].mxu0
      %v1836 = vadd.f32 0.0, %v1835
      %v1837 = vpop.f32.mrb[0].mxu0
      %1838 = vmatprep.mubr.bf16.mxu0 %v1167
      %1839 = vmatmul.mubr.bf16.gmra.mrb[0].mxu0 %v1166
      %v1840 = vpop.f32.mrb[0].mxu0
      %v1841 = vadd.f32 0.0, %v1840
      %v1842 = vpop.f32.mrb[0].mxu0
      %v1843 = vpop.f32.mrb[0].mxu0
      %v1844 = vadd.f32 0.0, %v1843
      %v1845 = vpop.f32.mrb[0].mxu0
      %1846 = vmatprep.mubr.bf16.mxu0 %v1175
      %1847 = vmatmul.mubr.bf16.gmra.mrb[0].mxu0 %v1174
      %v1848 = vpop.f32.mrb[0].mxu0
      %v1849 = vadd.f32 0.0, %v1848
      %v1850 = vpop.f32.mrb[0].mxu0
      %v1851 = vpop.f32.mrb[0].mxu0
      %v1852 = vadd.f32 0.0, %v1851
      %v1853 = vpop.f32.mrb[0].mxu0
      %1854 = vmatprep.mubr.bf16.mxu0 %v1183
      %1855 = vmatmul.mubr.bf16.gmra.mrb[0].mxu0 %v1182
      %v1856 = vpop.f32.mrb[0].mxu0
      %v1857 = vadd.f32 0.0, %v1856
      %v1858 = vpop.f32.mrb[0].mxu0
      %v1859 = vpop.f32.mrb[0].mxu0
      %v1860 = vadd.f32 0.0, %v1859
      %v1861 = vpop.f32.mrb[0].mxu0
      %1862 = vmatprep.mubr.bf16.mxu0 %v1191
      %1863 = vmatmul.mubr.bf16.gmra.mrb[0].mxu0 %v1190
      %v1864 = vpop.f32.mrb[0].mxu0
      %v1865 = vadd.f32 0.0, %v1864
      %v1866 = vpop.f32.mrb[0].mxu0
      %v1867 = vpop.f32.mrb[0].mxu0
      %v1868 = vadd.f32 0.0, %v1867
      %v1869 = vpop.f32.mrb[0].mxu0
      %1870 = vmatprep.mubr.bf16.mxu0 %v1199
      %1871 = vmatmul.mubr.bf16.gmra.mrb[0].mxu0 %v1198
      %v1872 = vpop.f32.mrb[0].mxu0
      %v1873 = vadd.f32 0.0, %v1872
      %v1874 = vpop.f32.mrb[0].mxu0
      %v1875 = vpop.f32.mrb[0].mxu0
      %v1876 = vadd.f32 0.0, %v1875
      %v1877 = vpop.f32.mrb[0].mxu0
      %1878 = vmatprep.mubr.bf16.mxu0 %v1207
      %1879 = vmatmul.mubr.bf16.gmra.mrb[0].mxu0 %v1206
      %v1880 = vpop.f32.mrb[0].mxu0
      %v1881 = vadd.f32 0.0, %v1880
      %v1882 = vpop.f32.mrb[0].mxu0
      %v1883 = vpop.f32.mrb[0].mxu0
      %v1884 = vadd.f32 0.0, %v1883
      %v1885 = vpop.f32.mrb[0].mxu0
      %1886 = vdwg.mxu0
      %1887 = vmatprep.subr.bf16.mxu0 0
      %1888 = vmatpush1.bf16.msra.mxu0 %v1662
      %1889 = vmatprep.subr.bf16.mxu0 0
      %1890 = vmatpush1.bf16.msra.mxu0 %v1663
      %1891 = vmatprep.subr.bf16.mxu0 0
      %1892 = vmatpush1.bf16.msra.mxu0 %v1664
      %1893 = vmatprep.subr.bf16.mxu0 0
      %1894 = vmatpush1.bf16.msra.mxu0 %v1665
      %1895 = vmatprep.subr.bf16.mxu0 0
      %1896 = vmatpush1.bf16.msra.mxu0 %v1666
      %1897 = vmatprep.subr.bf16.mxu0 0
      %1898 = vmatpush1.bf16.msra.mxu0 %v1667
      %1899 = vmatprep.subr.bf16.mxu0 0
      %1900 = vmatpush1.bf16.msra.mxu0 %v1668
      %1901 = vmatprep.subr.bf16.mxu0 0
      %1902 = vmatpush1.bf16.msra.mxu0 %v1669
      %1903 = vmatprep.subr.bf16.mxu0 0
      %1904 = vmatpush1.bf16.msra.mxu0 %v1670
      %1905 = vmatprep.subr.bf16.mxu0 0
      %1906 = vmatpush1.bf16.msra.mxu0 %v1671
      %1907 = vmatprep.subr.bf16.mxu0 0
      %1908 = vmatpush1.bf16.msra.mxu0 %v1672
      %1909 = vmatprep.subr.bf16.mxu0 0
      %1910 = vmatpush1.bf16.msra.mxu0 %v1673
      %1911 = vmatprep.subr.bf16.mxu0 0
      %1912 = vmatpush1.bf16.msra.mxu0 %v1674
      %1913 = vmatprep.subr.bf16.mxu0 0
      %1914 = vmatpush1.bf16.msra.mxu0 %v1675
      %1915 = vmatprep.subr.bf16.mxu0 0
      %1916 = vmatpush1.bf16.msra.mxu0 %v1676
      %1917 = vmatprep.subr.bf16.mxu0 0
      %1918 = vmatpush1.bf16.msra.mxu0 %v1677
      %1919 = vmatprep.mubr.bf16.mxu0 %v1153
      %1920 = vmatmul.mubr.bf16.gmra.mrb[0].mxu0 %v1152
      %v1921 = vpop.f32.mrb[0].mxu0
      %v1922 = vadd.f32 %v1825, %v1921
      %v1923 = vpop.f32.mrb[0].mxu0
      %v1924 = vpop.f32.mrb[0].mxu0
      %v1925 = vadd.f32 %v1828, %v1924
      %v1926 = vpop.f32.mrb[0].mxu0
      %1927 = vmatprep.mubr.bf16.mxu0 %v1161
      %1928 = vmatmul.mubr.bf16.gmra.mrb[0].mxu0 %v1160
      %v1929 = vpop.f32.mrb[0].mxu0
      %v1930 = vadd.f32 %v1833, %v1929
      %v1931 = vpop.f32.mrb[0].mxu0
      %v1932 = vpop.f32.mrb[0].mxu0
      %v1933 = vadd.f32 %v1836, %v1932
      %v1934 = vpop.f32.mrb[0].mxu0
      %1935 = vmatprep.mubr.bf16.mxu0 %v1169
      %1936 = vmatmul.mubr.bf16.gmra.mrb[0].mxu0 %v1168
      %v1937 = vpop.f32.mrb[0].mxu0
      %v1938 = vadd.f32 %v1841, %v1937
      %v1939 = vpop.f32.mrb[0].mxu0
      %v1940 = vpop.f32.mrb[0].mxu0
      %v1941 = vadd.f32 %v1844, %v1940
      %v1942 = vpop.f32.mrb[0].mxu0
      %1943 = vmatprep.mubr.bf16.mxu0 %v1177
      %1944 = vmatmul.mubr.bf16.gmra.mrb[0].mxu0 %v1176
      %v1945 = vpop.f32.mrb[0].mxu0
      %v1946 = vadd.f32 %v1849, %v1945
      %v1947 = vpop.f32.mrb[0].mxu0
      %v1948 = vpop.f32.mrb[0].mxu0
      %v1949 = vadd.f32 %v1852, %v1948
      %v1950 = vpop.f32.mrb[0].mxu0
      %1951 = vmatprep.mubr.bf16.mxu0 %v1185
      %1952 = vmatmul.mubr.bf16.gmra.mrb[0].mxu0 %v1184
      %v1953 = vpop.f32.mrb[0].mxu0
      %v1954 = vadd.f32 %v1857, %v1953
      %v1955 = vpop.f32.mrb[0].mxu0
      %v1956 = vpop.f32.mrb[0].mxu0
      %v1957 = vadd.f32 %v1860, %v1956
      %v1958 = vpop.f32.mrb[0].mxu0
      %1959 = vmatprep.mubr.bf16.mxu0 %v1193
      %1960 = vmatmul.mubr.bf16.gmra.mrb[0].mxu0 %v1192
      %v1961 = vpop.f32.mrb[0].mxu0
      %v1962 = vadd.f32 %v1865, %v1961
      %v1963 = vpop.f32.mrb[0].mxu0
      %v1964 = vpop.f32.mrb[0].mxu0
      %v1965 = vadd.f32 %v1868, %v1964
      %v1966 = vpop.f32.mrb[0].mxu0
      %1967 = vmatprep.mubr.bf16.mxu0 %v1201
      %1968 = vmatmul.mubr.bf16.gmra.mrb[0].mxu0 %v1200
      %v1969 = vpop.f32.mrb[0].mxu0
      %v1970 = vadd.f32 %v1873, %v1969
      %v1971 = vpop.f32.mrb[0].mxu0
      %v1972 = vpop.f32.mrb[0].mxu0
      %v1973 = vadd.f32 %v1876, %v1972
      %v1974 = vpop.f32.mrb[0].mxu0
      %1975 = vmatprep.mubr.bf16.mxu0 %v1209
      %1976 = vmatmul.mubr.bf16.gmra.mrb[0].mxu0 %v1208
      %v1977 = vpop.f32.mrb[0].mxu0
      %v1978 = vadd.f32 %v1881, %v1977
      %v1979 = vpop.f32.mrb[0].mxu0
      %v1980 = vpop.f32.mrb[0].mxu0
      %v1981 = vadd.f32 %v1884, %v1980
      %v1982 = vpop.f32.mrb[0].mxu0
      %1983 = vdwg.mxu0
      %1984 = vmatprep.subr.bf16.mxu0 0
      %1985 = vmatpush1.bf16.msra.mxu0 %v1678
      %1986 = vmatprep.subr.bf16.mxu0 0
      %1987 = vmatpush1.bf16.msra.mxu0 %v1679
      %1988 = vmatprep.subr.bf16.mxu0 0
      %1989 = vmatpush1.bf16.msra.mxu0 %v1680
      %1990 = vmatprep.subr.bf16.mxu0 0
      %1991 = vmatpush1.bf16.msra.mxu0 %v1681
      %1992 = vmatprep.subr.bf16.mxu0 0
      %1993 = vmatpush1.bf16.msra.mxu0 %v1682
      %1994 = vmatprep.subr.bf16.mxu0 0
      %1995 = vmatpush1.bf16.msra.mxu0 %v1683
      %1996 = vmatprep.subr.bf16.mxu0 0
      %1997 = vmatpush1.bf16.msra.mxu0 %v1684
      %1998 = vmatprep.subr.bf16.mxu0 0
      %1999 = vmatpush1.bf16.msra.mxu0 %v1685
      %2000 = vmatprep.subr.bf16.mxu0 0
      %2001 = vmatpush1.bf16.msra.mxu0 %v1686
      %2002 = vmatprep.subr.bf16.mxu0 0
      %2003 = vmatpush1.bf16.msra.mxu0 %v1687
      %2004 = vmatprep.subr.bf16.mxu0 0
      %2005 = vmatpush1.bf16.msra.mxu0 %v1688
      %2006 = vmatprep.subr.bf16.mxu0 0
      %2007 = vmatpush1.bf16.msra.mxu0 %v1689
      %2008 = vmatprep.subr.bf16.mxu0 0
      %2009 = vmatpush1.bf16.msra.mxu0 %v1690
      %2010 = vmatprep.subr.bf16.mxu0 0
      %2011 = vmatpush1.bf16.msra.mxu0 %v1691
      %2012 = vmatprep.subr.bf16.mxu0 0
      %2013 = vmatpush1.bf16.msra.mxu0 %v1692
      %2014 = vmatprep.subr.bf16.mxu0 0
      %2015 = vmatpush1.bf16.msra.mxu0 %v1693
      %2016 = vmatprep.mubr.bf16.mxu0 %v1154
      %2017 = vmatmul.mubr.bf16.gmra.mrb[0].mxu0 %v1142
      %v2018 = vpop.f32.mrb[0].mxu0
      %v2019 = vadd.f32 %v1922, %v2018
      %v2020 = vpop.f32.mrb[0].mxu0
      %v2021 = vpop.f32.mrb[0].mxu0
      %v2022 = vadd.f32 %v1925, %v2021
      %v2023 = vpop.f32.mrb[0].mxu0
      %2024 = vmatprep.mubr.bf16.mxu0 %v1162
      %2025 = vmatmul.mubr.bf16.gmra.mrb[0].mxu0 %v1143
      %v2026 = vpop.f32.mrb[0].mxu0
      %v2027 = vadd.f32 %v1930, %v2026
      %v2028 = vpop.f32.mrb[0].mxu0
      %v2029 = vpop.f32.mrb[0].mxu0
      %v2030 = vadd.f32 %v1933, %v2029
      %v2031 = vpop.f32.mrb[0].mxu0
      %2032 = vmatprep.mubr.bf16.mxu0 %v1170
      %2033 = vmatmul.mubr.bf16.gmra.mrb[0].mxu0 %v1144
      %v2034 = vpop.f32.mrb[0].mxu0
      %v2035 = vadd.f32 %v1938, %v2034
      %v2036 = vpop.f32.mrb[0].mxu0
      %v2037 = vpop.f32.mrb[0].mxu0
      %v2038 = vadd.f32 %v1941, %v2037
      %v2039 = vpop.f32.mrb[0].mxu0
      %2040 = vmatprep.mubr.bf16.mxu0 %v1178
      %2041 = vmatmul.mubr.bf16.gmra.mrb[0].mxu0 %v1145
      %v2042 = vpop.f32.mrb[0].mxu0
      %v2043 = vadd.f32 %v1946, %v2042
      %v2044 = vpop.f32.mrb[0].mxu0
      %v2045 = vpop.f32.mrb[0].mxu0
      %v2046 = vadd.f32 %v1949, %v2045
      %v2047 = vpop.f32.mrb[0].mxu0
      %2048 = vmatprep.mubr.bf16.mxu0 %v1186
      %2049 = vmatmul.mubr.bf16.gmra.mrb[0].mxu0 %v1146
      %v2050 = vpop.f32.mrb[0].mxu0
      %v2051 = vadd.f32 %v1954, %v2050
      %v2052 = vpop.f32.mrb[0].mxu0
      %v2053 = vpop.f32.mrb[0].mxu0
      %v2054 = vadd.f32 %v1957, %v2053
      %v2055 = vpop.f32.mrb[0].mxu0
      %2056 = vmatprep.mubr.bf16.mxu0 %v1194
      %2057 = vmatmul.mubr.bf16.gmra.mrb[0].mxu0 %v1147
      %v2058 = vpop.f32.mrb[0].mxu0
      %v2059 = vadd.f32 %v1962, %v2058
      %v2060 = vpop.f32.mrb[0].mxu0
      %v2061 = vpop.f32.mrb[0].mxu0
      %v2062 = vadd.f32 %v1965, %v2061
      %v2063 = vpop.f32.mrb[0].mxu0
      %2064 = vmatprep.mubr.bf16.mxu0 %v1202
      %2065 = vmatmul.mubr.bf16.gmra.mrb[0].mxu0 %v1148
      %v2066 = vpop.f32.mrb[0].mxu0
      %v2067 = vadd.f32 %v1970, %v2066
      %v2068 = vpop.f32.mrb[0].mxu0
      %v2069 = vpop.f32.mrb[0].mxu0
      %v2070 = vadd.f32 %v1973, %v2069
      %v2071 = vpop.f32.mrb[0].mxu0
      %2072 = vmatprep.mubr.bf16.mxu0 %v1210
      %2073 = vmatmul.mubr.bf16.gmra.mrb[0].mxu0 %v1149
      %v2074 = vpop.f32.mrb[0].mxu0
      %v2075 = vadd.f32 %v1978, %v2074
      %v2076 = vpop.f32.mrb[0].mxu0
      %v2077 = vpop.f32.mrb[0].mxu0
      %v2078 = vadd.f32 %v1981, %v2077
      %v2079 = vpop.f32.mrb[0].mxu0
      %2080 = vdwg.mxu0
      %2081 = vmatprep.subr.bf16.mxu0 0
      %2082 = vmatpush1.bf16.msra.mxu0 %v1694
      %2083 = vmatprep.subr.bf16.mxu0 0
      %2084 = vmatpush1.bf16.msra.mxu0 %v1695
      %2085 = vmatprep.subr.bf16.mxu0 0
      %2086 = vmatpush1.bf16.msra.mxu0 %v1696
      %2087 = vmatprep.subr.bf16.mxu0 0
      %2088 = vmatpush1.bf16.msra.mxu0 %v1697
      %2089 = vmatprep.subr.bf16.mxu0 0
      %2090 = vmatpush1.bf16.msra.mxu0 %v1698
      %2091 = vmatprep.subr.bf16.mxu0 0
      %2092 = vmatpush1.bf16.msra.mxu0 %v1699
      %2093 = vmatprep.subr.bf16.mxu0 0
      %2094 = vmatpush1.bf16.msra.mxu0 %v1700
      %2095 = vmatprep.subr.bf16.mxu0 0
      %2096 = vmatpush1.bf16.msra.mxu0 %v1701
      %2097 = vmatprep.subr.bf16.mxu0 0
      %2098 = vmatpush1.bf16.msra.mxu0 %v1702
      %2099 = vmatprep.subr.bf16.mxu0 0
      %2100 = vmatpush1.bf16.msra.mxu0 %v1703
      %2101 = vmatprep.subr.bf16.mxu0 0
      %2102 = vmatpush1.bf16.msra.mxu0 %v1704
      %2103 = vmatprep.subr.bf16.mxu0 0
      %2104 = vmatpush1.bf16.msra.mxu0 %v1705
      %2105 = vmatprep.subr.bf16.mxu0 0
      %2106 = vmatpush1.bf16.msra.mxu0 %v1706
      %2107 = vmatprep.subr.bf16.mxu0 0
      %2108 = vmatpush1.bf16.msra.mxu0 %v1707
      %2109 = vmatprep.subr.bf16.mxu0 0
      %2110 = vmatpush1.bf16.msra.mxu0 %v1708
      %2111 = vmatprep.subr.bf16.mxu0 0
      %2112 = vmatpush1.bf16.msra.mxu0 %v1709
      %2113 = vmatprep.mubr.bf16.mxu0 %v1156
      %2114 = vmatmul.mubr.bf16.gmra.mrb[0].mxu0 %v1155
      %v2115 = vpop.f32.mrb[0].mxu0
      %v2116 = vadd.f32 %v2019, %v2115
      %v2117 = vpop.f32.mrb[0].mxu0
      %v2118 = vpop.f32.mrb[0].mxu0
      %v2119 = vadd.f32 %v2022, %v2118
      %v2120 = vpop.f32.mrb[0].mxu0
      %2121 = vmatprep.mubr.bf16.mxu0 %v1164
      %2122 = vmatmul.mubr.bf16.gmra.mrb[0].mxu0 %v1163
      %v2123 = vpop.f32.mrb[0].mxu0
      %v2124 = vadd.f32 %v2027, %v2123
      %v2125 = vpop.f32.mrb[0].mxu0
      %v2126 = vpop.f32.mrb[0].mxu0
      %v2127 = vadd.f32 %v2030, %v2126
      %v2128 = vpop.f32.mrb[0].mxu0
      %2129 = vmatprep.mubr.bf16.mxu0 %v1172
      %2130 = vmatmul.mubr.bf16.gmra.mrb[0].mxu0 %v1171
      %v2131 = vpop.f32.mrb[0].mxu0
      %v2132 = vadd.f32 %v2035, %v2131
      %v2133 = vpop.f32.mrb[0].mxu0
      %v2134 = vpop.f32.mrb[0].mxu0
      %v2135 = vadd.f32 %v2038, %v2134
      %v2136 = vpop.f32.mrb[0].mxu0
      %2137 = vmatprep.mubr.bf16.mxu0 %v1180
      %2138 = vmatmul.mubr.bf16.gmra.mrb[0].mxu0 %v1179
      %v2139 = vpop.f32.mrb[0].mxu0
      %v2140 = vadd.f32 %v2043, %v2139
      %v2141 = vpop.f32.mrb[0].mxu0
      %v2142 = vpop.f32.mrb[0].mxu0
      %v2143 = vadd.f32 %v2046, %v2142
      %v2144 = vpop.f32.mrb[0].mxu0
      %2145 = vmatprep.mubr.bf16.mxu0 %v1188
      %2146 = vmatmul.mubr.bf16.gmra.mrb[0].mxu0 %v1187
      %v2147 = vpop.f32.mrb[0].mxu0
      %v2148 = vadd.f32 %v2051, %v2147
      %v2149 = vpop.f32.mrb[0].mxu0
      %v2150 = vpop.f32.mrb[0].mxu0
      %v2151 = vadd.f32 %v2054, %v2150
      %v2152 = vpop.f32.mrb[0].mxu0
      %2153 = vmatprep.mubr.bf16.mxu0 %v1196
      %2154 = vmatmul.mubr.bf16.gmra.mrb[0].mxu0 %v1195
      %v2155 = vpop.f32.mrb[0].mxu0
      %v2156 = vadd.f32 %v2059, %v2155
      %v2157 = vpop.f32.mrb[0].mxu0
      %v2158 = vpop.f32.mrb[0].mxu0
      %v2159 = vadd.f32 %v2062, %v2158
      %v2160 = vpop.f32.mrb[0].mxu0
      %2161 = vmatprep.mubr.bf16.mxu0 %v1204
      %2162 = vmatmul.mubr.bf16.gmra.mrb[0].mxu0 %v1203
      %v2163 = vpop.f32.mrb[0].mxu0
      %v2164 = vadd.f32 %v2067, %v2163
      %v2165 = vpop.f32.mrb[0].mxu0
      %v2166 = vpop.f32.mrb[0].mxu0
      %v2167 = vadd.f32 %v2070, %v2166
      %v2168 = vpop.f32.mrb[0].mxu0
      %2169 = vmatprep.mubr.bf16.mxu0 %v1212
      %2170 = vmatmul.mubr.bf16.gmra.mrb[0].mxu0 %v1211
      %v2171 = vpop.f32.mrb[0].mxu0
      %v2172 = vadd.f32 %v2075, %v2171
      %v2173 = vpop.f32.mrb[0].mxu0
      %v2174 = vpop.f32.mrb[0].mxu0
      %v2175 = vadd.f32 %v2078, %v2174
      %v2176 = vpop.f32.mrb[0].mxu0
      %2177 = vdwg.mxu0
      %2178 = vmatprep.subr.bf16.mxu0 0
      %2179 = vmatpush1.bf16.msra.mxu0 %v1710
      %2180 = vmatprep.subr.bf16.mxu0 0
      %2181 = vmatpush1.bf16.msra.mxu0 %v1711
      %2182 = vmatprep.subr.bf16.mxu0 0
      %2183 = vmatpush1.bf16.msra.mxu0 %v1712
      %2184 = vmatprep.subr.bf16.mxu0 0
      %2185 = vmatpush1.bf16.msra.mxu0 %v1713
      %2186 = vmatprep.subr.bf16.mxu0 0
      %2187 = vmatpush1.bf16.msra.mxu0 %v1714
      %2188 = vmatprep.subr.bf16.mxu0 0
      %2189 = vmatpush1.bf16.msra.mxu0 %v1715
      %2190 = vmatprep.subr.bf16.mxu0 0
      %2191 = vmatpush1.bf16.msra.mxu0 %v1716
      %2192 = vmatprep.subr.bf16.mxu0 0
      %2193 = vmatpush1.bf16.msra.mxu0 %v1717
      %2194 = vmatprep.subr.bf16.mxu0 0
      %2195 = vmatpush1.bf16.msra.mxu0 0
      %2196 = vmatprep.subr.bf16.mxu0 0
      %2197 = vmatpush1.bf16.msra.mxu0 0
      %2198 = vmatprep.subr.bf16.mxu0 0
      %2199 = vmatpush1.bf16.msra.mxu0 0
      %2200 = vmatprep.subr.bf16.mxu0 0
      %2201 = vmatpush1.bf16.msra.mxu0 0
      %2202 = vmatprep.subr.bf16.mxu0 0
      %2203 = vmatpush1.bf16.msra.mxu0 0
      %2204 = vmatprep.subr.bf16.mxu0 0
      %2205 = vmatpush1.bf16.msra.mxu0 0
      %2206 = vmatprep.subr.bf16.mxu0 0
      %2207 = vmatpush1.bf16.msra.mxu0 0
      %2208 = vmatprep.subr.bf16.mxu0 0
      %2209 = vmatpush1.bf16.msra.mxu0 0
      %2210 = vmatprep.mubr.bf16.mxu0 0
      %2211 = vmatmul.mubr.bf16.gmra.mrb[0].mxu0 %v1157
      %v2212 = vpop.f32.mrb[0].mxu0
      %v2213 = vadd.f32 %v2116, %v2212
      %v2214 = vpop.f32.mrb[0].mxu0
      %v2215 = vpop.f32.mrb[0].mxu0
      %v2216 = vadd.f32 %v2119, %v2215
      %v2217 = vpop.f32.mrb[0].mxu0
      %2218 = vmatprep.mubr.bf16.mxu0 0
      %2219 = vmatmul.mubr.bf16.gmra.mrb[0].mxu0 %v1165
      %v2220 = vpop.f32.mrb[0].mxu0
      %v2221 = vadd.f32 %v2124, %v2220
      %v2222 = vpop.f32.mrb[0].mxu0
      %v2223 = vpop.f32.mrb[0].mxu0
      %v2224 = vadd.f32 %v2127, %v2223
      %v2225 = vpop.f32.mrb[0].mxu0
      %2226 = vmatprep.mubr.bf16.mxu0 0
      %2227 = vmatmul.mubr.bf16.gmra.mrb[0].mxu0 %v1173
      %v2228 = vpop.f32.mrb[0].mxu0
      %v2229 = vadd.f32 %v2132, %v2228
      %v2230 = vpop.f32.mrb[0].mxu0
      %v2231 = vpop.f32.mrb[0].mxu0
      %v2232 = vadd.f32 %v2135, %v2231
      %v2233 = vpop.f32.mrb[0].mxu0
      %2234 = vmatprep.mubr.bf16.mxu0 0
      %2235 = vmatmul.mubr.bf16.gmra.mrb[0].mxu0 %v1181
      %v2236 = vpop.f32.mrb[0].mxu0
      %v2237 = vadd.f32 %v2140, %v2236
      %v2238 = vpop.f32.mrb[0].mxu0
      %v2239 = vpop.f32.mrb[0].mxu0
      %v2240 = vadd.f32 %v2143, %v2239
      %v2241 = vpop.f32.mrb[0].mxu0
      %2242 = vmatprep.mubr.bf16.mxu0 0
      %2243 = vmatmul.mubr.bf16.gmra.mrb[0].mxu0 %v1189
      %v2244 = vpop.f32.mrb[0].mxu0
      %v2245 = vadd.f32 %v2148, %v2244
      %v2246 = vpop.f32.mrb[0].mxu0
      %v2247 = vpop.f32.mrb[0].mxu0
      %v2248 = vadd.f32 %v2151, %v2247
      %v2249 = vpop.f32.mrb[0].mxu0
      %2250 = vmatprep.mubr.bf16.mxu0 0
      %2251 = vmatmul.mubr.bf16.gmra.mrb[0].mxu0 %v1197
      %v2252 = vpop.f32.mrb[0].mxu0
      %v2253 = vadd.f32 %v2156, %v2252
      %v2254 = vpop.f32.mrb[0].mxu0
      %v2255 = vpop.f32.mrb[0].mxu0
      %v2256 = vadd.f32 %v2159, %v2255
      %v2257 = vpop.f32.mrb[0].mxu0
      %2258 = vmatprep.mubr.bf16.mxu0 0
      %2259 = vmatmul.mubr.bf16.gmra.mrb[0].mxu0 %v1205
      %v2260 = vpop.f32.mrb[0].mxu0
      %v2261 = vadd.f32 %v2164, %v2260
      %v2262 = vpop.f32.mrb[0].mxu0
      %v2263 = vpop.f32.mrb[0].mxu0
      %v2264 = vadd.f32 %v2167, %v2263
      %v2265 = vpop.f32.mrb[0].mxu0
      %2266 = vmatprep.mubr.bf16.mxu0 0
      %2267 = vmatmul.mubr.bf16.gmra.mrb[0].mxu0 %v1213
      %v2268 = vpop.f32.mrb[0].mxu0
      %v2269 = vadd.f32 %v2172, %v2268
      %v2270 = vpop.f32.mrb[0].mxu0
      %v2271 = vpop.f32.mrb[0].mxu0
      %v2272 = vadd.f32 %v2175, %v2271
      %v2273 = vpop.f32.mrb[0].mxu0
      %2274 = vdwg.mxu0
      %v2275 = vld [vmem:[%s4] sm:$0x1]
      %v2277 = vlaneseq
      %v2278 = vshrl.u32 %v2277, 7
      %v2279 = vsub.s32 0, %v2278
      %v2280 = vrot.slane %v2275, %v2279
      %v2282 = vmul.f32 %v2213, %v2280
      %v2283 = vmul.f32 %v2216, %v2280
      %v2284 = vmul.f32 %v2221, %v2280
      %v2285 = vmul.f32 %v2224, %v2280
      %v2286 = vmul.f32 %v2229, %v2280
      %v2287 = vmul.f32 %v2232, %v2280
      %v2288 = vmul.f32 %v2237, %v2280
      %v2289 = vmul.f32 %v2240, %v2280
      %v2290 = vmul.f32 %v2245, %v2280
      %v2291 = vmul.f32 %v2248, %v2280
      %v2292 = vmul.f32 %v2253, %v2280
      %v2293 = vmul.f32 %v2256, %v2280
      %v2294 = vmul.f32 %v2261, %v2280
      %v2295 = vmul.f32 %v2264, %v2280
      %v2296 = vmul.f32 %v2269, %v2280
      %v2297 = vmul.f32 %v2272, %v2280
      %v2298 = vld [vmem:[%s5] sm:$0x1]
      %v2300 = vlaneseq
      %v2301 = vshrl.u32 %v2300, 7
      %v2302 = vsub.s32 0, %v2301
      %v2303 = vrot.slane %v2298, %v2302
      %v2305 = vadd.f32 %v2282, %v2303
      %v2306 = vadd.f32 %v2283, %v2303
      %v2307 = vadd.f32 %v2284, %v2303
      %v2308 = vadd.f32 %v2285, %v2303
      %v2309 = vadd.f32 %v2286, %v2303
      %v2310 = vadd.f32 %v2287, %v2303
      %v2311 = vadd.f32 %v2288, %v2303
      %v2312 = vadd.f32 %v2289, %v2303
      %v2313 = vadd.f32 %v2290, %v2303
      %v2314 = vadd.f32 %v2291, %v2303
      %v2315 = vadd.f32 %v2292, %v2303
      %v2316 = vadd.f32 %v2293, %v2303
      %v2317 = vadd.f32 %v2294, %v2303
      %v2318 = vadd.f32 %v2295, %v2303
      %v2319 = vadd.f32 %v2296, %v2303
      %v2320 = vadd.f32 %v2297, %v2303
      %v2321 = vmax.f32 %v2305, 0.0
      %v2322 = vmax.f32 %v2306, 0.0
      %v2323 = vmax.f32 %v2307, 0.0
      %v2324 = vmax.f32 %v2308, 0.0
      %v2325 = vmax.f32 %v2309, 0.0
      %v2326 = vmax.f32 %v2310, 0.0
      %v2327 = vmax.f32 %v2311, 0.0
      %v2328 = vmax.f32 %v2312, 0.0
      %v2329 = vmax.f32 %v2313, 0.0
      %v2330 = vmax.f32 %v2314, 0.0
      %v2331 = vmax.f32 %v2315, 0.0
      %v2332 = vmax.f32 %v2316, 0.0
      %v2333 = vmax.f32 %v2317, 0.0
      %v2334 = vmax.f32 %v2318, 0.0
      %v2335 = vmax.f32 %v2319, 0.0
      %v2336 = vmax.f32 %v2320, 0.0
      %2337 = vst [vmem:[#allocation3] sm:$0xff] 0.0
      %2338 = vst [vmem:[#allocation3 + $0x8] sm:$0x3] 0.0
      %2339 = vst [vmem:[#allocation3 + $0xa0] sm:$0xff] 0.0
      %2340 = vst [vmem:[#allocation3 + $0xa8] sm:$0x3] 0.0
      %s2341 = scalar_lea.vmem [#allocation3], 144
      %2342 = vst [vmem:[%s2341] sm:$0xff] 0.0
      %2343 = vst [vmem:[%s2341 + $0x8] sm:$0x3] 0.0
      %2344 = vst [vmem:[%s2341 + $0xa0] sm:$0xff] 0.0
      %2345 = vst [vmem:[%s2341 + $0xa8] sm:$0x3] 0.0
      %2346 = vst [vmem:[#allocation3] sm:$0x1] 0.0
      %2347 = vst [vmem:[#allocation3 + $0x10] sm:$0x1] 0.0
      %2348 = vst [vmem:[#allocation3 + $0x20] sm:$0x1] 0.0
      %2349 = vst [vmem:[#allocation3 + $0x30] sm:$0x1] 0.0
      %2350 = vst [vmem:[#allocation3 + $0x40] sm:$0x1] 0.0
      %2351 = vst [vmem:[#allocation3 + $0x50] sm:$0x1] 0.0
      %2352 = vst [vmem:[#allocation3 + $0x60] sm:$0x1] 0.0
      %2353 = vst [vmem:[#allocation3 + $0x70] sm:$0x1] 0.0
      %2354 = vst [vmem:[#allocation3 + $0x80] sm:$0x1] 0.0
      %2355 = vst [vmem:[#allocation3 + $0x90] sm:$0x1] 0.0
      %2356 = vst [vmem:[#allocation3 + $0xa0] sm:$0x1] 0.0
      %2357 = vst [vmem:[#allocation3 + $0xb0] sm:$0x1] 0.0
      %2358 = vst [vmem:[#allocation3 + $0xc0] sm:$0x1] 0.0
      %2359 = vst [vmem:[#allocation3 + $0xd0] sm:$0x1] 0.0
      %2360 = vst [vmem:[#allocation3 + $0xe0] sm:$0x1] 0.0
      %2361 = vst [vmem:[#allocation3 + $0xf0] sm:$0x1] 0.0
      %2362 = vst [vmem:[#allocation3 + $0x100] sm:$0x1] 0.0
      %2363 = vst [vmem:[#allocation3 + $0x110] sm:$0x1] 0.0
      %2364 = vst [vmem:[#allocation3 + $0x120] sm:$0x1] 0.0
      %2365 = vst [vmem:[#allocation3 + $0x130] sm:$0x1] 0.0
      %2366 = vst [vmem:[#allocation3 + $0x9] sm:$0x1] 0.0
      %2367 = vst [vmem:[#allocation3 + $0x19] sm:$0x1] 0.0
      %2368 = vst [vmem:[#allocation3 + $0x29] sm:$0x1] 0.0
      %2369 = vst [vmem:[#allocation3 + $0x39] sm:$0x1] 0.0
      %2370 = vst [vmem:[#allocation3 + $0x49] sm:$0x1] 0.0
      %2371 = vst [vmem:[#allocation3 + $0x59] sm:$0x1] 0.0
      %2372 = vst [vmem:[#allocation3 + $0x69] sm:$0x1] 0.0
      %2373 = vst [vmem:[#allocation3 + $0x79] sm:$0x1] 0.0
      %2374 = vst [vmem:[#allocation3 + $0x89] sm:$0x1] 0.0
      %2375 = vst [vmem:[#allocation3 + $0x99] sm:$0x1] 0.0
      %2376 = vst [vmem:[#allocation3 + $0xa9] sm:$0x1] 0.0
      %2377 = vst [vmem:[#allocation3 + $0xb9] sm:$0x1] 0.0
      %2378 = vst [vmem:[#allocation3 + $0xc9] sm:$0x1] 0.0
      %2379 = vst [vmem:[#allocation3 + $0xd9] sm:$0x1] 0.0
      %2380 = vst [vmem:[#allocation3 + $0xe9] sm:$0x1] 0.0
      %2381 = vst [vmem:[#allocation3 + $0xf9] sm:$0x1] 0.0
      %2382 = vst [vmem:[#allocation3 + $0x109] sm:$0x1] 0.0
      %2383 = vst [vmem:[#allocation3 + $0x119] sm:$0x1] 0.0
      %2384 = vst [vmem:[#allocation3 + $0x129] sm:$0x1] 0.0
      %2385 = vst [vmem:[#allocation3 + $0x139] sm:$0x1] 0.0
      %s2386 = scalar_lea.vmem [#allocation3], 16
      %2387 = vst [vmem:[%s2386 + $0x1] sm:$0xff] %v2321
      %2388 = vst [vmem:[%s2386 + $0x11] sm:$0xff] %v2322
      %2389 = vst [vmem:[%s2386 + $0x21] sm:$0xff] %v2323
      %2390 = vst [vmem:[%s2386 + $0x31] sm:$0xff] %v2324
      %2391 = vst [vmem:[%s2386 + $0x41] sm:$0xff] %v2325
      %2392 = vst [vmem:[%s2386 + $0x51] sm:$0xff] %v2326
      %2393 = vst [vmem:[%s2386 + $0x61] sm:$0xff] %v2327
      %2394 = vst [vmem:[%s2386 + $0x71] sm:$0xff] %v2328
      %2395 = vst [vmem:[%s2386 + $0xa1] sm:$0xff] %v2329
      %2396 = vst [vmem:[%s2386 + $0xb1] sm:$0xff] %v2330
      %2397 = vst [vmem:[%s2386 + $0xc1] sm:$0xff] %v2331
      %2398 = vst [vmem:[%s2386 + $0xd1] sm:$0xff] %v2332
      %2399 = vst [vmem:[%s2386 + $0xe1] sm:$0xff] %v2333
      %2400 = vst [vmem:[%s2386 + $0xf1] sm:$0xff] %v2334
      %2401 = vst [vmem:[%s2386 + $0x101] sm:$0xff] %v2335
      %2402 = vst [vmem:[%s2386 + $0x111] sm:$0xff] %v2336
      %v2403 = vld [vmem:[%s7] sm:$0xf]
      %v2404 = vld [vmem:[%s7 + $0x4] sm:$0xf]
      %v2405 = vld [vmem:[%s7 + $0x8] sm:$0xf]
      %v2406 = vld [vmem:[%s7 + $0xc] sm:$0xf]
      %v2407 = vld [vmem:[%s7 + $0x10] sm:$0xf]
      %v2408 = vld [vmem:[%s7 + $0x14] sm:$0xf]
      %v2409 = vld [vmem:[%s7 + $0x18] sm:$0xf]
      %v2410 = vld [vmem:[%s7 + $0x1c] sm:$0xf]
      %v2411 = vld [vmem:[%s7 + $0x20] sm:$0xf]
      %v2412 = vld [vmem:[%s7 + $0x24] sm:$0xf]
      %v2413 = vld [vmem:[%s7 + $0x28] sm:$0xf]
      %v2414 = vld [vmem:[%s7 + $0x2c] sm:$0xf]
      %v2415 = vld [vmem:[%s7 + $0x30] sm:$0xf]
      %v2416 = vld [vmem:[%s7 + $0x34] sm:$0xf]
      %v2417 = vld [vmem:[%s7 + $0x38] sm:$0xf]
      %v2418 = vld [vmem:[%s7 + $0x3c] sm:$0xf]
      %v2419 = vld [vmem:[#allocation3] sm:$0xff]
      %v2420 = vld [vmem:[#allocation3 + $0x10] sm:$0xff]
      %v2421 = vld [vmem:[#allocation3 + $0x20] sm:$0xff]
      %v2422 = vld [vmem:[#allocation3 + $0x30] sm:$0xff]
      %v2423 = vld [vmem:[#allocation3 + $0x40] sm:$0xff]
      %v2424 = vld [vmem:[#allocation3 + $0x50] sm:$0xff]
      %v2425 = vld [vmem:[#allocation3 + $0x60] sm:$0xff]
      %v2426 = vld [vmem:[#allocation3 + $0x70] sm:$0xff]
      %v2427 = vld [vmem:[#allocation3 + $0xa0] sm:$0xff]
      %v2428 = vld [vmem:[#allocation3 + $0xb0] sm:$0xff]
      %v2429 = vld [vmem:[#allocation3 + $0xc0] sm:$0xff]
      %v2430 = vld [vmem:[#allocation3 + $0xd0] sm:$0xff]
      %v2431 = vld [vmem:[#allocation3 + $0xe0] sm:$0xff]
      %v2432 = vld [vmem:[#allocation3 + $0xf0] sm:$0xff]
      %v2433 = vld [vmem:[#allocation3 + $0x100] sm:$0xff]
      %v2434 = vld [vmem:[#allocation3 + $0x110] sm:$0xff]
      %v2435 = vld [vmem:[#allocation3 + $0x1] sm:$0xff]
      %v2436 = vld [vmem:[#allocation3 + $0x11] sm:$0xff]
      %v2437 = vld [vmem:[#allocation3 + $0x21] sm:$0xff]
      %v2438 = vld [vmem:[#allocation3 + $0x31] sm:$0xff]
      %v2439 = vld [vmem:[#allocation3 + $0x41] sm:$0xff]
      %v2440 = vld [vmem:[#allocation3 + $0x51] sm:$0xff]
      %v2441 = vld [vmem:[#allocation3 + $0x61] sm:$0xff]
      %v2442 = vld [vmem:[#allocation3 + $0x71] sm:$0xff]
      %v2443 = vld [vmem:[#allocation3 + $0xa1] sm:$0xff]
      %v2444 = vld [vmem:[#allocation3 + $0xb1] sm:$0xff]
      %v2445 = vld [vmem:[#allocation3 + $0xc1] sm:$0xff]
      %v2446 = vld [vmem:[#allocation3 + $0xd1] sm:$0xff]
      %v2447 = vld [vmem:[#allocation3 + $0xe1] sm:$0xff]
      %v2448 = vld [vmem:[#allocation3 + $0xf1] sm:$0xff]
      %v2449 = vld [vmem:[#allocation3 + $0x101] sm:$0xff]
      %v2450 = vld [vmem:[#allocation3 + $0x111] sm:$0xff]
      %v2451 = vld [vmem:[#allocation3 + $0x2] sm:$0xff]
      %v2452 = vld [vmem:[#allocation3 + $0x12] sm:$0xff]
      %v2453 = vld [vmem:[#allocation3 + $0x22] sm:$0xff]
      %v2454 = vld [vmem:[#allocation3 + $0x32] sm:$0xff]
      %v2455 = vld [vmem:[#allocation3 + $0x42] sm:$0xff]
      %v2456 = vld [vmem:[#allocation3 + $0x52] sm:$0xff]
      %v2457 = vld [vmem:[#allocation3 + $0x62] sm:$0xff]
      %v2458 = vld [vmem:[#allocation3 + $0x72] sm:$0xff]
      %v2459 = vld [vmem:[#allocation3 + $0xa2] sm:$0xff]
      %v2460 = vld [vmem:[#allocation3 + $0xb2] sm:$0xff]
      %v2461 = vld [vmem:[#allocation3 + $0xc2] sm:$0xff]
      %v2462 = vld [vmem:[#allocation3 + $0xd2] sm:$0xff]
      %v2463 = vld [vmem:[#allocation3 + $0xe2] sm:$0xff]
      %v2464 = vld [vmem:[#allocation3 + $0xf2] sm:$0xff]
      %v2465 = vld [vmem:[#allocation3 + $0x102] sm:$0xff]
      %v2466 = vld [vmem:[#allocation3 + $0x112] sm:$0xff]
      %v2467 = vld [vmem:[%s2386] sm:$0xff]
      %v2468 = vld [vmem:[%s2386 + $0x10] sm:$0xff]
      %v2469 = vld [vmem:[%s2386 + $0x20] sm:$0xff]
      %v2470 = vld [vmem:[%s2386 + $0x30] sm:$0xff]
      %v2471 = vld [vmem:[%s2386 + $0x40] sm:$0xff]
      %v2472 = vld [vmem:[%s2386 + $0x50] sm:$0xff]
      %v2473 = vld [vmem:[%s2386 + $0x60] sm:$0xff]
      %v2474 = vld [vmem:[%s2386 + $0x70] sm:$0xff]
      %v2475 = vld [vmem:[%s2386 + $0xa0] sm:$0xff]
      %v2476 = vld [vmem:[%s2386 + $0xb0] sm:$0xff]
      %v2477 = vld [vmem:[%s2386 + $0xc0] sm:$0xff]
      %v2478 = vld [vmem:[%s2386 + $0xd0] sm:$0xff]
      %v2479 = vld [vmem:[%s2386 + $0xe0] sm:$0xff]
      %v2480 = vld [vmem:[%s2386 + $0xf0] sm:$0xff]
      %v2481 = vld [vmem:[%s2386 + $0x100] sm:$0xff]
      %v2482 = vld [vmem:[%s2386 + $0x110] sm:$0xff]
      %v2483 = vld [vmem:[%s2386 + $0x1] sm:$0xff]
      %v2484 = vld [vmem:[%s2386 + $0x11] sm:$0xff]
      %v2485 = vld [vmem:[%s2386 + $0x21] sm:$0xff]
      %v2486 = vld [vmem:[%s2386 + $0x31] sm:$0xff]
      %v2487 = vld [vmem:[%s2386 + $0x41] sm:$0xff]
      %v2488 = vld [vmem:[%s2386 + $0x51] sm:$0xff]
      %v2489 = vld [vmem:[%s2386 + $0x61] sm:$0xff]
      %v2490 = vld [vmem:[%s2386 + $0x71] sm:$0xff]
      %v2491 = vld [vmem:[%s2386 + $0xa1] sm:$0xff]
      %v2492 = vld [vmem:[%s2386 + $0xb1] sm:$0xff]
      %v2493 = vld [vmem:[%s2386 + $0xc1] sm:$0xff]
      %v2494 = vld [vmem:[%s2386 + $0xd1] sm:$0xff]
      %v2495 = vld [vmem:[%s2386 + $0xe1] sm:$0xff]
      %v2496 = vld [vmem:[%s2386 + $0xf1] sm:$0xff]
      %v2497 = vld [vmem:[%s2386 + $0x101] sm:$0xff]
      %v2498 = vld [vmem:[%s2386 + $0x111] sm:$0xff]
      %v2499 = vld [vmem:[%s2386 + $0x2] sm:$0xff]
      %v2500 = vld [vmem:[%s2386 + $0x12] sm:$0xff]
      %v2501 = vld [vmem:[%s2386 + $0x22] sm:$0xff]
      %v2502 = vld [vmem:[%s2386 + $0x32] sm:$0xff]
      %v2503 = vld [vmem:[%s2386 + $0x42] sm:$0xff]
      %v2504 = vld [vmem:[%s2386 + $0x52] sm:$0xff]
      %v2505 = vld [vmem:[%s2386 + $0x62] sm:$0xff]
      %v2506 = vld [vmem:[%s2386 + $0x72] sm:$0xff]
      %v2507 = vld [vmem:[%s2386 + $0xa2] sm:$0xff]
      %v2508 = vld [vmem:[%s2386 + $0xb2] sm:$0xff]
      %v2509 = vld [vmem:[%s2386 + $0xc2] sm:$0xff]
      %v2510 = vld [vmem:[%s2386 + $0xd2] sm:$0xff]
      %v2511 = vld [vmem:[%s2386 + $0xe2] sm:$0xff]
      %v2512 = vld [vmem:[%s2386 + $0xf2] sm:$0xff]
      %v2513 = vld [vmem:[%s2386 + $0x102] sm:$0xff]
      %v2514 = vld [vmem:[%s2386 + $0x112] sm:$0xff]
      %s2515 = scalar_lea.vmem [#allocation3], 32
      %v2516 = vld [vmem:[%s2515] sm:$0xff]
      %v2517 = vld [vmem:[%s2515 + $0x10] sm:$0xff]
      %v2518 = vld [vmem:[%s2515 + $0x20] sm:$0xff]
      %v2519 = vld [vmem:[%s2515 + $0x30] sm:$0xff]
      %v2520 = vld [vmem:[%s2515 + $0x40] sm:$0xff]
      %v2521 = vld [vmem:[%s2515 + $0x50] sm:$0xff]
      %v2522 = vld [vmem:[%s2515 + $0x60] sm:$0xff]
      %v2523 = vld [vmem:[%s2515 + $0x70] sm:$0xff]
      %v2524 = vld [vmem:[%s2515 + $0xa0] sm:$0xff]
      %v2525 = vld [vmem:[%s2515 + $0xb0] sm:$0xff]
      %v2526 = vld [vmem:[%s2515 + $0xc0] sm:$0xff]
      %v2527 = vld [vmem:[%s2515 + $0xd0] sm:$0xff]
      %v2528 = vld [vmem:[%s2515 + $0xe0] sm:$0xff]
      %v2529 = vld [vmem:[%s2515 + $0xf0] sm:$0xff]
      %v2530 = vld [vmem:[%s2515 + $0x100] sm:$0xff]
      %v2531 = vld [vmem:[%s2515 + $0x110] sm:$0xff]
      %v2532 = vld [vmem:[%s2515 + $0x1] sm:$0xff]
      %v2533 = vld [vmem:[%s2515 + $0x11] sm:$0xff]
      %v2534 = vld [vmem:[%s2515 + $0x21] sm:$0xff]
      %v2535 = vld [vmem:[%s2515 + $0x31] sm:$0xff]
      %v2536 = vld [vmem:[%s2515 + $0x41] sm:$0xff]
      %v2537 = vld [vmem:[%s2515 + $0x51] sm:$0xff]
      %v2538 = vld [vmem:[%s2515 + $0x61] sm:$0xff]
      %v2539 = vld [vmem:[%s2515 + $0x71] sm:$0xff]
      %v2540 = vld [vmem:[%s2515 + $0xa1] sm:$0xff]
      %v2541 = vld [vmem:[%s2515 + $0xb1] sm:$0xff]
      %v2542 = vld [vmem:[%s2515 + $0xc1] sm:$0xff]
      %v2543 = vld [vmem:[%s2515 + $0xd1] sm:$0xff]
      %v2544 = vld [vmem:[%s2515 + $0xe1] sm:$0xff]
      %v2545 = vld [vmem:[%s2515 + $0xf1] sm:$0xff]
      %v2546 = vld [vmem:[%s2515 + $0x101] sm:$0xff]
      %v2547 = vld [vmem:[%s2515 + $0x111] sm:$0xff]
      %v2548 = vld [vmem:[%s2515 + $0x2] sm:$0xff]
      %v2549 = vld [vmem:[%s2515 + $0x12] sm:$0xff]
      %v2550 = vld [vmem:[%s2515 + $0x22] sm:$0xff]
      %v2551 = vld [vmem:[%s2515 + $0x32] sm:$0xff]
      %v2552 = vld [vmem:[%s2515 + $0x42] sm:$0xff]
      %v2553 = vld [vmem:[%s2515 + $0x52] sm:$0xff]
      %v2554 = vld [vmem:[%s2515 + $0x62] sm:$0xff]
      %v2555 = vld [vmem:[%s2515 + $0x72] sm:$0xff]
      %v2556 = vld [vmem:[%s2515 + $0xa2] sm:$0xff]
      %v2557 = vld [vmem:[%s2515 + $0xb2] sm:$0xff]
      %v2558 = vld [vmem:[%s2515 + $0xc2] sm:$0xff]
      %v2559 = vld [vmem:[%s2515 + $0xd2] sm:$0xff]
      %v2560 = vld [vmem:[%s2515 + $0xe2] sm:$0xff]
      %v2561 = vld [vmem:[%s2515 + $0xf2] sm:$0xff]
      %v2562 = vld [vmem:[%s2515 + $0x102] sm:$0xff]
      %v2563 = vld [vmem:[%s2515 + $0x112] sm:$0xff]
      %v2564 = vpack.c.bf16 %v2420, %v2419
      %v2565 = vpack.c.bf16 %v2436, %v2435
      %v2566 = vpack.c.bf16 %v2452, %v2451
      %v2567 = vpack.c.bf16 %v2468, %v2467
      %v2568 = vpack.c.bf16 %v2484, %v2483
      %v2569 = vpack.c.bf16 %v2500, %v2499
      %v2570 = vpack.c.bf16 %v2517, %v2516
      %v2571 = vpack.c.bf16 %v2533, %v2532
      %v2572 = vpack.c.bf16 %v2549, %v2548
      %v2573 = vpack.c.bf16 %v2422, %v2421
      %v2574 = vpack.c.bf16 %v2438, %v2437
      %v2575 = vpack.c.bf16 %v2454, %v2453
      %v2576 = vpack.c.bf16 %v2470, %v2469
      %v2577 = vpack.c.bf16 %v2486, %v2485
      %v2578 = vpack.c.bf16 %v2502, %v2501
      %v2579 = vpack.c.bf16 %v2519, %v2518
      %v2580 = vpack.c.bf16 %v2535, %v2534
      %v2581 = vpack.c.bf16 %v2551, %v2550
      %v2582 = vpack.c.bf16 %v2424, %v2423
      %v2583 = vpack.c.bf16 %v2440, %v2439
      %v2584 = vpack.c.bf16 %v2456, %v2455
      %v2585 = vpack.c.bf16 %v2472, %v2471
      %v2586 = vpack.c.bf16 %v2488, %v2487
      %v2587 = vpack.c.bf16 %v2504, %v2503
      %v2588 = vpack.c.bf16 %v2521, %v2520
      %v2589 = vpack.c.bf16 %v2537, %v2536
      %v2590 = vpack.c.bf16 %v2553, %v2552
      %v2591 = vpack.c.bf16 %v2426, %v2425
      %v2592 = vpack.c.bf16 %v2442, %v2441
      %v2593 = vpack.c.bf16 %v2458, %v2457
      %v2594 = vpack.c.bf16 %v2474, %v2473
      %v2595 = vpack.c.bf16 %v2490, %v2489
      %v2596 = vpack.c.bf16 %v2506, %v2505
      %v2597 = vpack.c.bf16 %v2523, %v2522
      %v2598 = vpack.c.bf16 %v2539, %v2538
      %v2599 = vpack.c.bf16 %v2555, %v2554
      %v2600 = vpack.c.bf16 %v2428, %v2427
      %v2601 = vpack.c.bf16 %v2444, %v2443
      %v2602 = vpack.c.bf16 %v2460, %v2459
      %v2603 = vpack.c.bf16 %v2476, %v2475
      %v2604 = vpack.c.bf16 %v2492, %v2491
      %v2605 = vpack.c.bf16 %v2508, %v2507
      %v2606 = vpack.c.bf16 %v2525, %v2524
      %v2607 = vpack.c.bf16 %v2541, %v2540
      %v2608 = vpack.c.bf16 %v2557, %v2556
      %v2609 = vpack.c.bf16 %v2430, %v2429
      %v2610 = vpack.c.bf16 %v2446, %v2445
      %v2611 = vpack.c.bf16 %v2462, %v2461
      %v2612 = vpack.c.bf16 %v2478, %v2477
      %v2613 = vpack.c.bf16 %v2494, %v2493
      %v2614 = vpack.c.bf16 %v2510, %v2509
      %v2615 = vpack.c.bf16 %v2527, %v2526
      %v2616 = vpack.c.bf16 %v2543, %v2542
      %v2617 = vpack.c.bf16 %v2559, %v2558
      %v2618 = vpack.c.bf16 %v2432, %v2431
      %v2619 = vpack.c.bf16 %v2448, %v2447
      %v2620 = vpack.c.bf16 %v2464, %v2463
      %v2621 = vpack.c.bf16 %v2480, %v2479
      %v2622 = vpack.c.bf16 %v2496, %v2495
      %v2623 = vpack.c.bf16 %v2512, %v2511
      %v2624 = vpack.c.bf16 %v2529, %v2528
      %v2625 = vpack.c.bf16 %v2545, %v2544
      %v2626 = vpack.c.bf16 %v2561, %v2560
      %v2627 = vpack.c.bf16 %v2434, %v2433
      %v2628 = vpack.c.bf16 %v2450, %v2449
      %v2629 = vpack.c.bf16 %v2466, %v2465
      %v2630 = vpack.c.bf16 %v2482, %v2481
      %v2631 = vpack.c.bf16 %v2498, %v2497
      %v2632 = vpack.c.bf16 %v2514, %v2513
      %v2633 = vpack.c.bf16 %v2531, %v2530
      %v2634 = vpack.c.bf16 %v2547, %v2546
      %v2635 = vpack.c.bf16 %v2563, %v2562
      %v2636 = vld [vmem:[%s6] sm:$0xf]
      %v2637 = vld [vmem:[%s6 + $0x4] sm:$0xf]
      %v2638 = vld [vmem:[%s6 + $0x8] sm:$0xf]
      %v2639 = vld [vmem:[%s6 + $0xc] sm:$0xf]
      %v2640 = vld [vmem:[%s6 + $0x10] sm:$0xf]
      %v2641 = vld [vmem:[%s6 + $0x14] sm:$0xf]
      %v2642 = vld [vmem:[%s6 + $0x18] sm:$0xf]
      %v2643 = vld [vmem:[%s6 + $0x1c] sm:$0xf]
      %v2644 = vld [vmem:[%s6 + $0x20] sm:$0xf]
      %v2645 = vld [vmem:[%s6 + $0x24] sm:$0xf]
      %v2646 = vld [vmem:[%s6 + $0x28] sm:$0xf]
      %v2647 = vld [vmem:[%s6 + $0x2c] sm:$0xf]
      %v2648 = vld [vmem:[%s6 + $0x30] sm:$0xf]
      %v2649 = vld [vmem:[%s6 + $0x34] sm:$0xf]
      %v2650 = vld [vmem:[%s6 + $0x38] sm:$0xf]
      %v2651 = vld [vmem:[%s6 + $0x3c] sm:$0xf]
      %v2652 = vld [vmem:[%s6 + $0x40] sm:$0xf]
      %v2653 = vld [vmem:[%s6 + $0x44] sm:$0xf]
      %v2654 = vld [vmem:[%s6 + $0x48] sm:$0xf]
      %v2655 = vld [vmem:[%s6 + $0x4c] sm:$0xf]
      %v2656 = vld [vmem:[%s6 + $0x50] sm:$0xf]
      %v2657 = vld [vmem:[%s6 + $0x54] sm:$0xf]
      %v2658 = vld [vmem:[%s6 + $0x58] sm:$0xf]
      %v2659 = vld [vmem:[%s6 + $0x5c] sm:$0xf]
      %v2660 = vld [vmem:[%s6 + $0x60] sm:$0xf]
      %v2661 = vld [vmem:[%s6 + $0x64] sm:$0xf]
      %v2662 = vld [vmem:[%s6 + $0x68] sm:$0xf]
      %v2663 = vld [vmem:[%s6 + $0x6c] sm:$0xf]
      %v2664 = vld [vmem:[%s6 + $0x70] sm:$0xf]
      %v2665 = vld [vmem:[%s6 + $0x74] sm:$0xf]
      %v2666 = vld [vmem:[%s6 + $0x78] sm:$0xf]
      %v2667 = vld [vmem:[%s6 + $0x7c] sm:$0xf]
      %v2668 = vld [vmem:[%s6 + $0x80] sm:$0xf]
      %v2669 = vld [vmem:[%s6 + $0x84] sm:$0xf]
      %v2670 = vld [vmem:[%s6 + $0x88] sm:$0xf]
      %v2671 = vld [vmem:[%s6 + $0x8c] sm:$0xf]
      %v2672 = vld [vmem:[%s6 + $0x90] sm:$0xf]
      %v2673 = vld [vmem:[%s6 + $0x94] sm:$0xf]
      %v2674 = vld [vmem:[%s6 + $0x98] sm:$0xf]
      %v2675 = vld [vmem:[%s6 + $0x9c] sm:$0xf]
      %v2676 = vld [vmem:[%s6 + $0xa0] sm:$0xf]
      %v2677 = vld [vmem:[%s6 + $0xa4] sm:$0xf]
      %v2678 = vld [vmem:[%s6 + $0xa8] sm:$0xf]
      %v2679 = vld [vmem:[%s6 + $0xac] sm:$0xf]
      %v2680 = vld [vmem:[%s6 + $0xb0] sm:$0xf]
      %v2681 = vld [vmem:[%s6 + $0xb4] sm:$0xf]
      %v2682 = vld [vmem:[%s6 + $0xb8] sm:$0xf]
      %v2683 = vld [vmem:[%s6 + $0xbc] sm:$0xf]
      %v2684 = vld [vmem:[%s6 + $0xc0] sm:$0xf]
      %v2685 = vld [vmem:[%s6 + $0xc4] sm:$0xf]
      %v2686 = vld [vmem:[%s6 + $0xc8] sm:$0xf]
      %v2687 = vld [vmem:[%s6 + $0xcc] sm:$0xf]
      %v2688 = vld [vmem:[%s6 + $0xd0] sm:$0xf]
      %v2689 = vld [vmem:[%s6 + $0xd4] sm:$0xf]
      %v2690 = vld [vmem:[%s6 + $0xd8] sm:$0xf]
      %v2691 = vld [vmem:[%s6 + $0xdc] sm:$0xf]
      %v2692 = vld [vmem:[%s6 + $0xe0] sm:$0xf]
      %v2693 = vld [vmem:[%s6 + $0xe4] sm:$0xf]
      %v2694 = vld [vmem:[%s6 + $0xe8] sm:$0xf]
      %v2695 = vld [vmem:[%s6 + $0xec] sm:$0xf]
      %v2696 = vld [vmem:[%s6 + $0xf0] sm:$0xf]
      %v2697 = vld [vmem:[%s6 + $0xf4] sm:$0xf]
      %v2698 = vld [vmem:[%s6 + $0xf8] sm:$0xf]
      %v2699 = vld [vmem:[%s6 + $0xfc] sm:$0xf]
      %v2700 = vld [vmem:[%s6 + $0x100] sm:$0xf]
      %v2701 = vld [vmem:[%s6 + $0x104] sm:$0xf]
      %v2702 = vld [vmem:[%s6 + $0x108] sm:$0xf]
      %v2703 = vld [vmem:[%s6 + $0x10c] sm:$0xf]
      %v2704 = vld [vmem:[%s6 + $0x110] sm:$0xf]
      %v2705 = vld [vmem:[%s6 + $0x114] sm:$0xf]
      %v2706 = vld [vmem:[%s6 + $0x118] sm:$0xf]
      %v2707 = vld [vmem:[%s6 + $0x11c] sm:$0xf]
      %v2708 = vld [vmem:[%s6 + $0x120] sm:$0xf]
      %v2709 = vld [vmem:[%s6 + $0x124] sm:$0xf]
      %v2710 = vld [vmem:[%s6 + $0x128] sm:$0xf]
      %v2711 = vld [vmem:[%s6 + $0x12c] sm:$0xf]
      %v2712 = vld [vmem:[%s6 + $0x130] sm:$0xf]
      %v2713 = vld [vmem:[%s6 + $0x134] sm:$0xf]
      %v2714 = vld [vmem:[%s6 + $0x138] sm:$0xf]
      %v2715 = vld [vmem:[%s6 + $0x13c] sm:$0xf]
      %v2716 = vld [vmem:[%s6 + $0x140] sm:$0xf]
      %v2717 = vld [vmem:[%s6 + $0x144] sm:$0xf]
      %v2718 = vld [vmem:[%s6 + $0x148] sm:$0xf]
      %v2719 = vld [vmem:[%s6 + $0x14c] sm:$0xf]
      %v2720 = vld [vmem:[%s6 + $0x150] sm:$0xf]
      %v2721 = vld [vmem:[%s6 + $0x154] sm:$0xf]
      %v2722 = vld [vmem:[%s6 + $0x158] sm:$0xf]
      %v2723 = vld [vmem:[%s6 + $0x15c] sm:$0xf]
      %v2724 = vld [vmem:[%s6 + $0x160] sm:$0xf]
      %v2725 = vld [vmem:[%s6 + $0x164] sm:$0xf]
      %v2726 = vld [vmem:[%s6 + $0x168] sm:$0xf]
      %v2727 = vld [vmem:[%s6 + $0x16c] sm:$0xf]
      %v2728 = vld [vmem:[%s6 + $0x170] sm:$0xf]
      %v2729 = vld [vmem:[%s6 + $0x174] sm:$0xf]
      %v2730 = vld [vmem:[%s6 + $0x178] sm:$0xf]
      %v2731 = vld [vmem:[%s6 + $0x17c] sm:$0xf]
      %v2732 = vld [vmem:[%s6 + $0x180] sm:$0xf]
      %v2733 = vld [vmem:[%s6 + $0x184] sm:$0xf]
      %v2734 = vld [vmem:[%s6 + $0x188] sm:$0xf]
      %v2735 = vld [vmem:[%s6 + $0x18c] sm:$0xf]
      %v2736 = vld [vmem:[%s6 + $0x190] sm:$0xf]
      %v2737 = vld [vmem:[%s6 + $0x194] sm:$0xf]
      %v2738 = vld [vmem:[%s6 + $0x198] sm:$0xf]
      %v2739 = vld [vmem:[%s6 + $0x19c] sm:$0xf]
      %v2740 = vld [vmem:[%s6 + $0x1a0] sm:$0xf]
      %v2741 = vld [vmem:[%s6 + $0x1a4] sm:$0xf]
      %v2742 = vld [vmem:[%s6 + $0x1a8] sm:$0xf]
      %v2743 = vld [vmem:[%s6 + $0x1ac] sm:$0xf]
      %v2744 = vld [vmem:[%s6 + $0x1b0] sm:$0xf]
      %v2745 = vld [vmem:[%s6 + $0x1b4] sm:$0xf]
      %v2746 = vld [vmem:[%s6 + $0x1b8] sm:$0xf]
      %v2747 = vld [vmem:[%s6 + $0x1bc] sm:$0xf]
      %v2748 = vld [vmem:[%s6 + $0x1c0] sm:$0xf]
      %v2749 = vld [vmem:[%s6 + $0x1c4] sm:$0xf]
      %v2750 = vld [vmem:[%s6 + $0x1c8] sm:$0xf]
      %v2751 = vld [vmem:[%s6 + $0x1cc] sm:$0xf]
      %v2752 = vld [vmem:[%s6 + $0x1d0] sm:$0xf]
      %v2753 = vld [vmem:[%s6 + $0x1d4] sm:$0xf]
      %v2754 = vld [vmem:[%s6 + $0x1d8] sm:$0xf]
      %v2755 = vld [vmem:[%s6 + $0x1dc] sm:$0xf]
      %v2756 = vld [vmem:[%s6 + $0x1e0] sm:$0xf]
      %v2757 = vld [vmem:[%s6 + $0x1e4] sm:$0xf]
      %v2758 = vld [vmem:[%s6 + $0x1e8] sm:$0xf]
      %v2759 = vld [vmem:[%s6 + $0x1ec] sm:$0xf]
      %v2760 = vld [vmem:[%s6 + $0x1f0] sm:$0xf]
      %v2761 = vld [vmem:[%s6 + $0x1f4] sm:$0xf]
      %v2762 = vld [vmem:[%s6 + $0x1f8] sm:$0xf]
      %v2763 = vld [vmem:[%s6 + $0x1fc] sm:$0xf]
      %v2764 = vld [vmem:[%s6 + $0x200] sm:$0xf]
      %v2765 = vld [vmem:[%s6 + $0x204] sm:$0xf]
      %v2766 = vld [vmem:[%s6 + $0x208] sm:$0xf]
      %v2767 = vld [vmem:[%s6 + $0x20c] sm:$0xf]
      %v2768 = vld [vmem:[%s6 + $0x210] sm:$0xf]
      %v2769 = vld [vmem:[%s6 + $0x214] sm:$0xf]
      %v2770 = vld [vmem:[%s6 + $0x218] sm:$0xf]
      %v2771 = vld [vmem:[%s6 + $0x21c] sm:$0xf]
      %v2772 = vld [vmem:[%s6 + $0x220] sm:$0xf]
      %v2773 = vld [vmem:[%s6 + $0x224] sm:$0xf]
      %v2774 = vld [vmem:[%s6 + $0x228] sm:$0xf]
      %v2775 = vld [vmem:[%s6 + $0x22c] sm:$0xf]
      %v2776 = vld [vmem:[%s6 + $0x230] sm:$0xf]
      %v2777 = vld [vmem:[%s6 + $0x234] sm:$0xf]
      %v2778 = vld [vmem:[%s6 + $0x238] sm:$0xf]
      %v2779 = vld [vmem:[%s6 + $0x23c] sm:$0xf]
      %v2924 = vunpack.c.l.b16 %v2636
      %v2925 = vunpack.c.l.b16 %v2637
      %v2926 = vunpack.c.l.b16 %v2638
      %v2927 = vunpack.c.l.b16 %v2639
      %v2928 = vunpack.c.l.b16 %v2640
      %v2929 = vunpack.c.l.b16 %v2641
      %v2930 = vunpack.c.l.b16 %v2642
      %v2931 = vunpack.c.l.b16 %v2643
      %v2932 = vunpack.c.l.b16 %v2644
      %v2933 = vunpack.c.l.b16 %v2645
      %v2934 = vunpack.c.l.b16 %v2646
      %v2935 = vunpack.c.l.b16 %v2647
      %v2936 = vunpack.c.l.b16 %v2648
      %v2937 = vunpack.c.l.b16 %v2649
      %v2938 = vunpack.c.l.b16 %v2650
      %v2939 = vunpack.c.l.b16 %v2651
      %v2940 = vunpack.c.l.b16 %v2652
      %v2941 = vunpack.c.l.b16 %v2653
      %v2942 = vunpack.c.l.b16 %v2654
      %v2943 = vunpack.c.l.b16 %v2655
      %v2944 = vunpack.c.l.b16 %v2656
      %v2945 = vunpack.c.l.b16 %v2657
      %v2946 = vunpack.c.l.b16 %v2658
      %v2947 = vunpack.c.l.b16 %v2659
      %v2948 = vunpack.c.l.b16 %v2660
      %v2949 = vunpack.c.l.b16 %v2661
      %v2950 = vunpack.c.l.b16 %v2662
      %v2951 = vunpack.c.l.b16 %v2663
      %v2952 = vunpack.c.l.b16 %v2664
      %v2953 = vunpack.c.l.b16 %v2665
      %v2954 = vunpack.c.l.b16 %v2666
      %v2955 = vunpack.c.l.b16 %v2667
      %v2956 = vunpack.c.l.b16 %v2668
      %v2957 = vunpack.c.l.b16 %v2669
      %v2958 = vunpack.c.l.b16 %v2670
      %v2959 = vunpack.c.l.b16 %v2671
      %v2960 = vunpack.c.l.b16 %v2672
      %v2961 = vunpack.c.l.b16 %v2673
      %v2962 = vunpack.c.l.b16 %v2674
      %v2963 = vunpack.c.l.b16 %v2675
      %v2964 = vunpack.c.l.b16 %v2676
      %v2965 = vunpack.c.l.b16 %v2677
      %v2966 = vunpack.c.l.b16 %v2678
      %v2967 = vunpack.c.l.b16 %v2679
      %v2968 = vunpack.c.l.b16 %v2680
      %v2969 = vunpack.c.l.b16 %v2681
      %v2970 = vunpack.c.l.b16 %v2682
      %v2971 = vunpack.c.l.b16 %v2683
      %v2972 = vunpack.c.l.b16 %v2684
      %v2973 = vunpack.c.l.b16 %v2685
      %v2974 = vunpack.c.l.b16 %v2686
      %v2975 = vunpack.c.l.b16 %v2687
      %v2976 = vunpack.c.l.b16 %v2688
      %v2977 = vunpack.c.l.b16 %v2689
      %v2978 = vunpack.c.l.b16 %v2690
      %v2979 = vunpack.c.l.b16 %v2691
      %v2980 = vunpack.c.l.b16 %v2692
      %v2981 = vunpack.c.l.b16 %v2693
      %v2982 = vunpack.c.l.b16 %v2694
      %v2983 = vunpack.c.l.b16 %v2695
      %v2984 = vunpack.c.l.b16 %v2696
      %v2985 = vunpack.c.l.b16 %v2697
      %v2986 = vunpack.c.l.b16 %v2698
      %v2987 = vunpack.c.l.b16 %v2699
      %v2988 = vunpack.c.l.b16 %v2700
      %v2989 = vunpack.c.l.b16 %v2701
      %v2990 = vunpack.c.l.b16 %v2702
      %v2991 = vunpack.c.l.b16 %v2703
      %v2992 = vunpack.c.l.b16 %v2704
      %v2993 = vunpack.c.l.b16 %v2705
      %v2994 = vunpack.c.l.b16 %v2706
      %v2995 = vunpack.c.l.b16 %v2707
      %v2996 = vunpack.c.l.b16 %v2708
      %v2997 = vunpack.c.l.b16 %v2709
      %v2998 = vunpack.c.l.b16 %v2710
      %v2999 = vunpack.c.l.b16 %v2711
      %v3000 = vunpack.c.l.b16 %v2712
      %v3001 = vunpack.c.l.b16 %v2713
      %v3002 = vunpack.c.l.b16 %v2714
      %v3003 = vunpack.c.l.b16 %v2715
      %v3004 = vunpack.c.l.b16 %v2716
      %v3005 = vunpack.c.l.b16 %v2717
      %v3006 = vunpack.c.l.b16 %v2718
      %v3007 = vunpack.c.l.b16 %v2719
      %v3008 = vunpack.c.l.b16 %v2720
      %v3009 = vunpack.c.l.b16 %v2721
      %v3010 = vunpack.c.l.b16 %v2722
      %v3011 = vunpack.c.l.b16 %v2723
      %v3012 = vunpack.c.l.b16 %v2724
      %v3013 = vunpack.c.l.b16 %v2725
      %v3014 = vunpack.c.l.b16 %v2726
      %v3015 = vunpack.c.l.b16 %v2727
      %v3016 = vunpack.c.l.b16 %v2728
      %v3017 = vunpack.c.l.b16 %v2729
      %v3018 = vunpack.c.l.b16 %v2730
      %v3019 = vunpack.c.l.b16 %v2731
      %v3020 = vunpack.c.l.b16 %v2732
      %v3021 = vunpack.c.l.b16 %v2733
      %v3022 = vunpack.c.l.b16 %v2734
      %v3023 = vunpack.c.l.b16 %v2735
      %v3024 = vunpack.c.l.b16 %v2736
      %v3025 = vunpack.c.l.b16 %v2737
      %v3026 = vunpack.c.l.b16 %v2738
      %v3027 = vunpack.c.l.b16 %v2739
      %v3028 = vunpack.c.l.b16 %v2740
      %v3029 = vunpack.c.l.b16 %v2741
      %v3030 = vunpack.c.l.b16 %v2742
      %v3031 = vunpack.c.l.b16 %v2743
      %v3032 = vunpack.c.l.b16 %v2744
      %v3033 = vunpack.c.l.b16 %v2745
      %v3034 = vunpack.c.l.b16 %v2746
      %v3035 = vunpack.c.l.b16 %v2747
      %v3036 = vunpack.c.l.b16 %v2748
      %v3037 = vunpack.c.l.b16 %v2749
      %v3038 = vunpack.c.l.b16 %v2750
      %v3039 = vunpack.c.l.b16 %v2751
      %v3040 = vunpack.c.l.b16 %v2752
      %v3041 = vunpack.c.l.b16 %v2753
      %v3042 = vunpack.c.l.b16 %v2754
      %v3043 = vunpack.c.l.b16 %v2755
      %v3044 = vunpack.c.l.b16 %v2756
      %v3045 = vunpack.c.l.b16 %v2757
      %v3046 = vunpack.c.l.b16 %v2758
      %v3047 = vunpack.c.l.b16 %v2759
      %v3048 = vunpack.c.l.b16 %v2760
      %v3049 = vunpack.c.l.b16 %v2761
      %v3050 = vunpack.c.l.b16 %v2762
      %v3051 = vunpack.c.l.b16 %v2763
      %v3052 = vunpack.c.l.b16 %v2764
      %v3053 = vunpack.c.l.b16 %v2765
      %v3054 = vunpack.c.l.b16 %v2766
      %v3055 = vunpack.c.l.b16 %v2767
      %v3056 = vunpack.c.l.b16 %v2768
      %v3057 = vunpack.c.l.b16 %v2769
      %v3058 = vunpack.c.l.b16 %v2770
      %v3059 = vunpack.c.l.b16 %v2771
      %v3060 = vunpack.c.l.b16 %v2772
      %v3061 = vunpack.c.l.b16 %v2773
      %v3062 = vunpack.c.l.b16 %v2774
      %v3063 = vunpack.c.l.b16 %v2775
      %v3064 = vunpack.c.l.b16 %v2776
      %v3065 = vunpack.c.l.b16 %v2777
      %v3066 = vunpack.c.l.b16 %v2778
      %v3067 = vunpack.c.l.b16 %v2779
      %v3068 = vpack.c.b16 %v2925, %v2924
      %v3069 = vpack.c.b16 %v2927, %v2926
      %v3070 = vpack.c.b16 %v2929, %v2928
      %v3071 = vpack.c.b16 %v2931, %v2930
      %v3072 = vpack.c.b16 %v2933, %v2932
      %v3073 = vpack.c.b16 %v2935, %v2934
      %v3074 = vpack.c.b16 %v2937, %v2936
      %v3075 = vpack.c.b16 %v2939, %v2938
      %v3076 = vpack.c.b16 %v2941, %v2940
      %v3077 = vpack.c.b16 %v2943, %v2942
      %v3078 = vpack.c.b16 %v2945, %v2944
      %v3079 = vpack.c.b16 %v2947, %v2946
      %v3080 = vpack.c.b16 %v2949, %v2948
      %v3081 = vpack.c.b16 %v2951, %v2950
      %v3082 = vpack.c.b16 %v2953, %v2952
      %v3083 = vpack.c.b16 %v2955, %v2954
      %v3084 = vpack.c.b16 %v2957, %v2956
      %v3085 = vpack.c.b16 %v2959, %v2958
      %v3086 = vpack.c.b16 %v2961, %v2960
      %v3087 = vpack.c.b16 %v2963, %v2962
      %v3088 = vpack.c.b16 %v2965, %v2964
      %v3089 = vpack.c.b16 %v2967, %v2966
      %v3090 = vpack.c.b16 %v2969, %v2968
      %v3091 = vpack.c.b16 %v2971, %v2970
      %v3092 = vpack.c.b16 %v2973, %v2972
      %v3093 = vpack.c.b16 %v2975, %v2974
      %v3094 = vpack.c.b16 %v2977, %v2976
      %v3095 = vpack.c.b16 %v2979, %v2978
      %v3096 = vpack.c.b16 %v2981, %v2980
      %v3097 = vpack.c.b16 %v2983, %v2982
      %v3098 = vpack.c.b16 %v2985, %v2984
      %v3099 = vpack.c.b16 %v2987, %v2986
      %v3100 = vpack.c.b16 %v2989, %v2988
      %v3101 = vpack.c.b16 %v2991, %v2990
      %v3102 = vpack.c.b16 %v2993, %v2992
      %v3103 = vpack.c.b16 %v2995, %v2994
      %v3104 = vpack.c.b16 %v2997, %v2996
      %v3105 = vpack.c.b16 %v2999, %v2998
      %v3106 = vpack.c.b16 %v3001, %v3000
      %v3107 = vpack.c.b16 %v3003, %v3002
      %v3108 = vpack.c.b16 %v3005, %v3004
      %v3109 = vpack.c.b16 %v3007, %v3006
      %v3110 = vpack.c.b16 %v3009, %v3008
      %v3111 = vpack.c.b16 %v3011, %v3010
      %v3112 = vpack.c.b16 %v3013, %v3012
      %v3113 = vpack.c.b16 %v3015, %v3014
      %v3114 = vpack.c.b16 %v3017, %v3016
      %v3115 = vpack.c.b16 %v3019, %v3018
      %v3116 = vpack.c.b16 %v3021, %v3020
      %v3117 = vpack.c.b16 %v3023, %v3022
      %v3118 = vpack.c.b16 %v3025, %v3024
      %v3119 = vpack.c.b16 %v3027, %v3026
      %v3120 = vpack.c.b16 %v3029, %v3028
      %v3121 = vpack.c.b16 %v3031, %v3030
      %v3122 = vpack.c.b16 %v3033, %v3032
      %v3123 = vpack.c.b16 %v3035, %v3034
      %v3124 = vpack.c.b16 %v3037, %v3036
      %v3125 = vpack.c.b16 %v3039, %v3038
      %v3126 = vpack.c.b16 %v3041, %v3040
      %v3127 = vpack.c.b16 %v3043, %v3042
      %v3128 = vpack.c.b16 %v3045, %v3044
      %v3129 = vpack.c.b16 %v3047, %v3046
      %v3130 = vpack.c.b16 %v3049, %v3048
      %v3131 = vpack.c.b16 %v3051, %v3050
      %v3132 = vpack.c.b16 %v3053, %v3052
      %v3133 = vpack.c.b16 %v3055, %v3054
      %v3134 = vpack.c.b16 %v3057, %v3056
      %v3135 = vpack.c.b16 %v3059, %v3058
      %v3136 = vpack.c.b16 %v3061, %v3060
      %v3137 = vpack.c.b16 %v3063, %v3062
      %v3138 = vpack.c.b16 %v3065, %v3064
      %v3139 = vpack.c.b16 %v3067, %v3066
      %3212 = vmatprep.subr.bf16.mxu0 0
      %3213 = vmatpush1.bf16.msra.mxu0 %v3068
      %3214 = vmatprep.subr.bf16.mxu0 0
      %3215 = vmatpush1.bf16.msra.mxu0 %v3069
      %3216 = vmatprep.subr.bf16.mxu0 0
      %3217 = vmatpush1.bf16.msra.mxu0 %v3070
      %3218 = vmatprep.subr.bf16.mxu0 0
      %3219 = vmatpush1.bf16.msra.mxu0 %v3071
      %3220 = vmatprep.subr.bf16.mxu0 0
      %3221 = vmatpush1.bf16.msra.mxu0 %v3072
      %3222 = vmatprep.subr.bf16.mxu0 0
      %3223 = vmatpush1.bf16.msra.mxu0 %v3073
      %3224 = vmatprep.subr.bf16.mxu0 0
      %3225 = vmatpush1.bf16.msra.mxu0 %v3074
      %3226 = vmatprep.subr.bf16.mxu0 0
      %3227 = vmatpush1.bf16.msra.mxu0 %v3075
      %3228 = vmatprep.subr.bf16.mxu0 0
      %3229 = vmatpush1.bf16.msra.mxu0 %v3076
      %3230 = vmatprep.subr.bf16.mxu0 0
      %3231 = vmatpush1.bf16.msra.mxu0 %v3077
      %3232 = vmatprep.subr.bf16.mxu0 0
      %3233 = vmatpush1.bf16.msra.mxu0 %v3078
      %3234 = vmatprep.subr.bf16.mxu0 0
      %3235 = vmatpush1.bf16.msra.mxu0 %v3079
      %3236 = vmatprep.subr.bf16.mxu0 0
      %3237 = vmatpush1.bf16.msra.mxu0 %v3080
      %3238 = vmatprep.subr.bf16.mxu0 0
      %3239 = vmatpush1.bf16.msra.mxu0 %v3081
      %3240 = vmatprep.subr.bf16.mxu0 0
      %3241 = vmatpush1.bf16.msra.mxu0 %v3082
      %3242 = vmatprep.subr.bf16.mxu0 0
      %3243 = vmatpush1.bf16.msra.mxu0 %v3083
      %3244 = vmatprep.mubr.bf16.mxu0 %v2565
      %3245 = vmatmul.mubr.bf16.gmra.mrb[0].mxu0 %v2564
      %v3246 = vpop.f32.mrb[0].mxu0
      %v3247 = vadd.f32 0.0, %v3246
      %v3248 = vpop.f32.mrb[0].mxu0
      %v3249 = vpop.f32.mrb[0].mxu0
      %v3250 = vadd.f32 0.0, %v3249
      %v3251 = vpop.f32.mrb[0].mxu0
      %3252 = vmatprep.mubr.bf16.mxu0 %v2574
      %3253 = vmatmul.mubr.bf16.gmra.mrb[0].mxu0 %v2573
      %v3254 = vpop.f32.mrb[0].mxu0
      %v3255 = vadd.f32 0.0, %v3254
      %v3256 = vpop.f32.mrb[0].mxu0
      %v3257 = vpop.f32.mrb[0].mxu0
      %v3258 = vadd.f32 0.0, %v3257
      %v3259 = vpop.f32.mrb[0].mxu0
      %3260 = vmatprep.mubr.bf16.mxu0 %v2583
      %3261 = vmatmul.mubr.bf16.gmra.mrb[0].mxu0 %v2582
      %v3262 = vpop.f32.mrb[0].mxu0
      %v3263 = vadd.f32 0.0, %v3262
      %v3264 = vpop.f32.mrb[0].mxu0
      %v3265 = vpop.f32.mrb[0].mxu0
      %v3266 = vadd.f32 0.0, %v3265
      %v3267 = vpop.f32.mrb[0].mxu0
      %3268 = vmatprep.mubr.bf16.mxu0 %v2592
      %3269 = vmatmul.mubr.bf16.gmra.mrb[0].mxu0 %v2591
      %v3270 = vpop.f32.mrb[0].mxu0
      %v3271 = vadd.f32 0.0, %v3270
      %v3272 = vpop.f32.mrb[0].mxu0
      %v3273 = vpop.f32.mrb[0].mxu0
      %v3274 = vadd.f32 0.0, %v3273
      %v3275 = vpop.f32.mrb[0].mxu0
      %3276 = vmatprep.mubr.bf16.mxu0 %v2601
      %3277 = vmatmul.mubr.bf16.gmra.mrb[0].mxu0 %v2600
      %v3278 = vpop.f32.mrb[0].mxu0
      %v3279 = vadd.f32 0.0, %v3278
      %v3280 = vpop.f32.mrb[0].mxu0
      %v3281 = vpop.f32.mrb[0].mxu0
      %v3282 = vadd.f32 0.0, %v3281
      %v3283 = vpop.f32.mrb[0].mxu0
      %3284 = vmatprep.mubr.bf16.mxu0 %v2610
      %3285 = vmatmul.mubr.bf16.gmra.mrb[0].mxu0 %v2609
      %v3286 = vpop.f32.mrb[0].mxu0
      %v3287 = vadd.f32 0.0, %v3286
      %v3288 = vpop.f32.mrb[0].mxu0
      %v3289 = vpop.f32.mrb[0].mxu0
      %v3290 = vadd.f32 0.0, %v3289
      %v3291 = vpop.f32.mrb[0].mxu0
      %3292 = vmatprep.mubr.bf16.mxu0 %v2619
      %3293 = vmatmul.mubr.bf16.gmra.mrb[0].mxu0 %v2618
      %v3294 = vpop.f32.mrb[0].mxu0
      %v3295 = vadd.f32 0.0, %v3294
      %v3296 = vpop.f32.mrb[0].mxu0
      %v3297 = vpop.f32.mrb[0].mxu0
      %v3298 = vadd.f32 0.0, %v3297
      %v3299 = vpop.f32.mrb[0].mxu0
      %3300 = vmatprep.mubr.bf16.mxu0 %v2628
      %3301 = vmatmul.mubr.bf16.gmra.mrb[0].mxu0 %v2627
      %v3302 = vpop.f32.mrb[0].mxu0
      %v3303 = vadd.f32 0.0, %v3302
      %v3304 = vpop.f32.mrb[0].mxu0
      %v3305 = vpop.f32.mrb[0].mxu0
      %v3306 = vadd.f32 0.0, %v3305
      %v3307 = vpop.f32.mrb[0].mxu0
      %3308 = vdwg.mxu0
      %3309 = vmatprep.subr.bf16.mxu0 0
      %3310 = vmatpush1.bf16.msra.mxu0 %v3084
      %3311 = vmatprep.subr.bf16.mxu0 0
      %3312 = vmatpush1.bf16.msra.mxu0 %v3085
      %3313 = vmatprep.subr.bf16.mxu0 0
      %3314 = vmatpush1.bf16.msra.mxu0 %v3086
      %3315 = vmatprep.subr.bf16.mxu0 0
      %3316 = vmatpush1.bf16.msra.mxu0 %v3087
      %3317 = vmatprep.subr.bf16.mxu0 0
      %3318 = vmatpush1.bf16.msra.mxu0 %v3088
      %3319 = vmatprep.subr.bf16.mxu0 0
      %3320 = vmatpush1.bf16.msra.mxu0 %v3089
      %3321 = vmatprep.subr.bf16.mxu0 0
      %3322 = vmatpush1.bf16.msra.mxu0 %v3090
      %3323 = vmatprep.subr.bf16.mxu0 0
      %3324 = vmatpush1.bf16.msra.mxu0 %v3091
      %3325 = vmatprep.subr.bf16.mxu0 0
      %3326 = vmatpush1.bf16.msra.mxu0 %v3092
      %3327 = vmatprep.subr.bf16.mxu0 0
      %3328 = vmatpush1.bf16.msra.mxu0 %v3093
      %3329 = vmatprep.subr.bf16.mxu0 0
      %3330 = vmatpush1.bf16.msra.mxu0 %v3094
      %3331 = vmatprep.subr.bf16.mxu0 0
      %3332 = vmatpush1.bf16.msra.mxu0 %v3095
      %3333 = vmatprep.subr.bf16.mxu0 0
      %3334 = vmatpush1.bf16.msra.mxu0 %v3096
      %3335 = vmatprep.subr.bf16.mxu0 0
      %3336 = vmatpush1.bf16.msra.mxu0 %v3097
      %3337 = vmatprep.subr.bf16.mxu0 0
      %3338 = vmatpush1.bf16.msra.mxu0 %v3098
      %3339 = vmatprep.subr.bf16.mxu0 0
      %3340 = vmatpush1.bf16.msra.mxu0 %v3099
      %3341 = vmatprep.mubr.bf16.mxu0 %v2567
      %3342 = vmatmul.mubr.bf16.gmra.mrb[0].mxu0 %v2566
      %v3343 = vpop.f32.mrb[0].mxu0
      %v3344 = vadd.f32 %v3247, %v3343
      %v3345 = vpop.f32.mrb[0].mxu0
      %v3346 = vpop.f32.mrb[0].mxu0
      %v3347 = vadd.f32 %v3250, %v3346
      %v3348 = vpop.f32.mrb[0].mxu0
      %3349 = vmatprep.mubr.bf16.mxu0 %v2576
      %3350 = vmatmul.mubr.bf16.gmra.mrb[0].mxu0 %v2575
      %v3351 = vpop.f32.mrb[0].mxu0
      %v3352 = vadd.f32 %v3255, %v3351
      %v3353 = vpop.f32.mrb[0].mxu0
      %v3354 = vpop.f32.mrb[0].mxu0
      %v3355 = vadd.f32 %v3258, %v3354
      %v3356 = vpop.f32.mrb[0].mxu0
      %3357 = vmatprep.mubr.bf16.mxu0 %v2585
      %3358 = vmatmul.mubr.bf16.gmra.mrb[0].mxu0 %v2584
      %v3359 = vpop.f32.mrb[0].mxu0
      %v3360 = vadd.f32 %v3263, %v3359
      %v3361 = vpop.f32.mrb[0].mxu0
      %v3362 = vpop.f32.mrb[0].mxu0
      %v3363 = vadd.f32 %v3266, %v3362
      %v3364 = vpop.f32.mrb[0].mxu0
      %3365 = vmatprep.mubr.bf16.mxu0 %v2594
      %3366 = vmatmul.mubr.bf16.gmra.mrb[0].mxu0 %v2593
      %v3367 = vpop.f32.mrb[0].mxu0
      %v3368 = vadd.f32 %v3271, %v3367
      %v3369 = vpop.f32.mrb[0].mxu0
      %v3370 = vpop.f32.mrb[0].mxu0
      %v3371 = vadd.f32 %v3274, %v3370
      %v3372 = vpop.f32.mrb[0].mxu0
      %3373 = vmatprep.mubr.bf16.mxu0 %v2603
      %3374 = vmatmul.mubr.bf16.gmra.mrb[0].mxu0 %v2602
      %v3375 = vpop.f32.mrb[0].mxu0
      %v3376 = vadd.f32 %v3279, %v3375
      %v3377 = vpop.f32.mrb[0].mxu0
      %v3378 = vpop.f32.mrb[0].mxu0
      %v3379 = vadd.f32 %v3282, %v3378
      %v3380 = vpop.f32.mrb[0].mxu0
      %3381 = vmatprep.mubr.bf16.mxu0 %v2612
      %3382 = vmatmul.mubr.bf16.gmra.mrb[0].mxu0 %v2611
      %v3383 = vpop.f32.mrb[0].mxu0
      %v3384 = vadd.f32 %v3287, %v3383
      %v3385 = vpop.f32.mrb[0].mxu0
      %v3386 = vpop.f32.mrb[0].mxu0
      %v3387 = vadd.f32 %v3290, %v3386
      %v3388 = vpop.f32.mrb[0].mxu0
      %3389 = vmatprep.mubr.bf16.mxu0 %v2621
      %3390 = vmatmul.mubr.bf16.gmra.mrb[0].mxu0 %v2620
      %v3391 = vpop.f32.mrb[0].mxu0
      %v3392 = vadd.f32 %v3295, %v3391
      %v3393 = vpop.f32.mrb[0].mxu0
      %v3394 = vpop.f32.mrb[0].mxu0
      %v3395 = vadd.f32 %v3298, %v3394
      %v3396 = vpop.f32.mrb[0].mxu0
      %3397 = vmatprep.mubr.bf16.mxu0 %v2630
      %3398 = vmatmul.mubr.bf16.gmra.mrb[0].mxu0 %v2629
      %v3399 = vpop.f32.mrb[0].mxu0
      %v3400 = vadd.f32 %v3303, %v3399
      %v3401 = vpop.f32.mrb[0].mxu0
      %v3402 = vpop.f32.mrb[0].mxu0
      %v3403 = vadd.f32 %v3306, %v3402
      %v3404 = vpop.f32.mrb[0].mxu0
      %3405 = vdwg.mxu0
      %3406 = vmatprep.subr.bf16.mxu0 0
      %3407 = vmatpush1.bf16.msra.mxu0 %v3100
      %3408 = vmatprep.subr.bf16.mxu0 0
      %3409 = vmatpush1.bf16.msra.mxu0 %v3101
      %3410 = vmatprep.subr.bf16.mxu0 0
      %3411 = vmatpush1.bf16.msra.mxu0 %v3102
      %3412 = vmatprep.subr.bf16.mxu0 0
      %3413 = vmatpush1.bf16.msra.mxu0 %v3103
      %3414 = vmatprep.subr.bf16.mxu0 0
      %3415 = vmatpush1.bf16.msra.mxu0 %v3104
      %3416 = vmatprep.subr.bf16.mxu0 0
      %3417 = vmatpush1.bf16.msra.mxu0 %v3105
      %3418 = vmatprep.subr.bf16.mxu0 0
      %3419 = vmatpush1.bf16.msra.mxu0 %v3106
      %3420 = vmatprep.subr.bf16.mxu0 0
      %3421 = vmatpush1.bf16.msra.mxu0 %v3107
      %3422 = vmatprep.subr.bf16.mxu0 0
      %3423 = vmatpush1.bf16.msra.mxu0 %v3108
      %3424 = vmatprep.subr.bf16.mxu0 0
      %3425 = vmatpush1.bf16.msra.mxu0 %v3109
      %3426 = vmatprep.subr.bf16.mxu0 0
      %3427 = vmatpush1.bf16.msra.mxu0 %v3110
      %3428 = vmatprep.subr.bf16.mxu0 0
      %3429 = vmatpush1.bf16.msra.mxu0 %v3111
      %3430 = vmatprep.subr.bf16.mxu0 0
      %3431 = vmatpush1.bf16.msra.mxu0 %v3112
      %3432 = vmatprep.subr.bf16.mxu0 0
      %3433 = vmatpush1.bf16.msra.mxu0 %v3113
      %3434 = vmatprep.subr.bf16.mxu0 0
      %3435 = vmatpush1.bf16.msra.mxu0 %v3114
      %3436 = vmatprep.subr.bf16.mxu0 0
      %3437 = vmatpush1.bf16.msra.mxu0 %v3115
      %3438 = vmatprep.mubr.bf16.mxu0 %v2569
      %3439 = vmatmul.mubr.bf16.gmra.mrb[0].mxu0 %v2568
      %v3440 = vpop.f32.mrb[0].mxu0
      %v3441 = vadd.f32 %v3344, %v3440
      %v3442 = vpop.f32.mrb[0].mxu0
      %v3443 = vpop.f32.mrb[0].mxu0
      %v3444 = vadd.f32 %v3347, %v3443
      %v3445 = vpop.f32.mrb[0].mxu0
      %3446 = vmatprep.mubr.bf16.mxu0 %v2578
      %3447 = vmatmul.mubr.bf16.gmra.mrb[0].mxu0 %v2577
      %v3448 = vpop.f32.mrb[0].mxu0
      %v3449 = vadd.f32 %v3352, %v3448
      %v3450 = vpop.f32.mrb[0].mxu0
      %v3451 = vpop.f32.mrb[0].mxu0
      %v3452 = vadd.f32 %v3355, %v3451
      %v3453 = vpop.f32.mrb[0].mxu0
      %3454 = vmatprep.mubr.bf16.mxu0 %v2587
      %3455 = vmatmul.mubr.bf16.gmra.mrb[0].mxu0 %v2586
      %v3456 = vpop.f32.mrb[0].mxu0
      %v3457 = vadd.f32 %v3360, %v3456
      %v3458 = vpop.f32.mrb[0].mxu0
      %v3459 = vpop.f32.mrb[0].mxu0
      %v3460 = vadd.f32 %v3363, %v3459
      %v3461 = vpop.f32.mrb[0].mxu0
      %3462 = vmatprep.mubr.bf16.mxu0 %v2596
      %3463 = vmatmul.mubr.bf16.gmra.mrb[0].mxu0 %v2595
      %v3464 = vpop.f32.mrb[0].mxu0
      %v3465 = vadd.f32 %v3368, %v3464
      %v3466 = vpop.f32.mrb[0].mxu0
      %v3467 = vpop.f32.mrb[0].mxu0
      %v3468 = vadd.f32 %v3371, %v3467
      %v3469 = vpop.f32.mrb[0].mxu0
      %3470 = vmatprep.mubr.bf16.mxu0 %v2605
      %3471 = vmatmul.mubr.bf16.gmra.mrb[0].mxu0 %v2604
      %v3472 = vpop.f32.mrb[0].mxu0
      %v3473 = vadd.f32 %v3376, %v3472
      %v3474 = vpop.f32.mrb[0].mxu0
      %v3475 = vpop.f32.mrb[0].mxu0
      %v3476 = vadd.f32 %v3379, %v3475
      %v3477 = vpop.f32.mrb[0].mxu0
      %3478 = vmatprep.mubr.bf16.mxu0 %v2614
      %3479 = vmatmul.mubr.bf16.gmra.mrb[0].mxu0 %v2613
      %v3480 = vpop.f32.mrb[0].mxu0
      %v3481 = vadd.f32 %v3384, %v3480
      %v3482 = vpop.f32.mrb[0].mxu0
      %v3483 = vpop.f32.mrb[0].mxu0
      %v3484 = vadd.f32 %v3387, %v3483
      %v3485 = vpop.f32.mrb[0].mxu0
      %3486 = vmatprep.mubr.bf16.mxu0 %v2623
      %3487 = vmatmul.mubr.bf16.gmra.mrb[0].mxu0 %v2622
      %v3488 = vpop.f32.mrb[0].mxu0
      %v3489 = vadd.f32 %v3392, %v3488
      %v3490 = vpop.f32.mrb[0].mxu0
      %v3491 = vpop.f32.mrb[0].mxu0
      %v3492 = vadd.f32 %v3395, %v3491
      %v3493 = vpop.f32.mrb[0].mxu0
      %3494 = vmatprep.mubr.bf16.mxu0 %v2632
      %3495 = vmatmul.mubr.bf16.gmra.mrb[0].mxu0 %v2631
      %v3496 = vpop.f32.mrb[0].mxu0
      %v3497 = vadd.f32 %v3400, %v3496
      %v3498 = vpop.f32.mrb[0].mxu0
      %v3499 = vpop.f32.mrb[0].mxu0
      %v3500 = vadd.f32 %v3403, %v3499
      %v3501 = vpop.f32.mrb[0].mxu0
      %3502 = vdwg.mxu0
      %3503 = vmatprep.subr.bf16.mxu0 0
      %3504 = vmatpush1.bf16.msra.mxu0 %v3116
      %3505 = vmatprep.subr.bf16.mxu0 0
      %3506 = vmatpush1.bf16.msra.mxu0 %v3117
      %3507 = vmatprep.subr.bf16.mxu0 0
      %3508 = vmatpush1.bf16.msra.mxu0 %v3118
      %3509 = vmatprep.subr.bf16.mxu0 0
      %3510 = vmatpush1.bf16.msra.mxu0 %v3119
      %3511 = vmatprep.subr.bf16.mxu0 0
      %3512 = vmatpush1.bf16.msra.mxu0 %v3120
      %3513 = vmatprep.subr.bf16.mxu0 0
      %3514 = vmatpush1.bf16.msra.mxu0 %v3121
      %3515 = vmatprep.subr.bf16.mxu0 0
      %3516 = vmatpush1.bf16.msra.mxu0 %v3122
      %3517 = vmatprep.subr.bf16.mxu0 0
      %3518 = vmatpush1.bf16.msra.mxu0 %v3123
      %3519 = vmatprep.subr.bf16.mxu0 0
      %3520 = vmatpush1.bf16.msra.mxu0 %v3124
      %3521 = vmatprep.subr.bf16.mxu0 0
      %3522 = vmatpush1.bf16.msra.mxu0 %v3125
      %3523 = vmatprep.subr.bf16.mxu0 0
      %3524 = vmatpush1.bf16.msra.mxu0 %v3126
      %3525 = vmatprep.subr.bf16.mxu0 0
      %3526 = vmatpush1.bf16.msra.mxu0 %v3127
      %3527 = vmatprep.subr.bf16.mxu0 0
      %3528 = vmatpush1.bf16.msra.mxu0 %v3128
      %3529 = vmatprep.subr.bf16.mxu0 0
      %3530 = vmatpush1.bf16.msra.mxu0 %v3129
      %3531 = vmatprep.subr.bf16.mxu0 0
      %3532 = vmatpush1.bf16.msra.mxu0 %v3130
      %3533 = vmatprep.subr.bf16.mxu0 0
      %3534 = vmatpush1.bf16.msra.mxu0 %v3131
      %3535 = vmatprep.mubr.bf16.mxu0 %v2571
      %3536 = vmatmul.mubr.bf16.gmra.mrb[0].mxu0 %v2570
      %v3537 = vpop.f32.mrb[0].mxu0
      %v3538 = vadd.f32 %v3441, %v3537
      %v3539 = vpop.f32.mrb[0].mxu0
      %v3540 = vpop.f32.mrb[0].mxu0
      %v3541 = vadd.f32 %v3444, %v3540
      %v3542 = vpop.f32.mrb[0].mxu0
      %3543 = vmatprep.mubr.bf16.mxu0 %v2580
      %3544 = vmatmul.mubr.bf16.gmra.mrb[0].mxu0 %v2579
      %v3545 = vpop.f32.mrb[0].mxu0
      %v3546 = vadd.f32 %v3449, %v3545
      %v3547 = vpop.f32.mrb[0].mxu0
      %v3548 = vpop.f32.mrb[0].mxu0
      %v3549 = vadd.f32 %v3452, %v3548
      %v3550 = vpop.f32.mrb[0].mxu0
      %3551 = vmatprep.mubr.bf16.mxu0 %v2589
      %3552 = vmatmul.mubr.bf16.gmra.mrb[0].mxu0 %v2588
      %v3553 = vpop.f32.mrb[0].mxu0
      %v3554 = vadd.f32 %v3457, %v3553
      %v3555 = vpop.f32.mrb[0].mxu0
      %v3556 = vpop.f32.mrb[0].mxu0
      %v3557 = vadd.f32 %v3460, %v3556
      %v3558 = vpop.f32.mrb[0].mxu0
      %3559 = vmatprep.mubr.bf16.mxu0 %v2598
      %3560 = vmatmul.mubr.bf16.gmra.mrb[0].mxu0 %v2597
      %v3561 = vpop.f32.mrb[0].mxu0
      %v3562 = vadd.f32 %v3465, %v3561
      %v3563 = vpop.f32.mrb[0].mxu0
      %v3564 = vpop.f32.mrb[0].mxu0
      %v3565 = vadd.f32 %v3468, %v3564
      %v3566 = vpop.f32.mrb[0].mxu0
      %3567 = vmatprep.mubr.bf16.mxu0 %v2607
      %3568 = vmatmul.mubr.bf16.gmra.mrb[0].mxu0 %v2606
      %v3569 = vpop.f32.mrb[0].mxu0
      %v3570 = vadd.f32 %v3473, %v3569
      %v3571 = vpop.f32.mrb[0].mxu0
      %v3572 = vpop.f32.mrb[0].mxu0
      %v3573 = vadd.f32 %v3476, %v3572
      %v3574 = vpop.f32.mrb[0].mxu0
      %3575 = vmatprep.mubr.bf16.mxu0 %v2616
      %3576 = vmatmul.mubr.bf16.gmra.mrb[0].mxu0 %v2615
      %v3577 = vpop.f32.mrb[0].mxu0
      %v3578 = vadd.f32 %v3481, %v3577
      %v3579 = vpop.f32.mrb[0].mxu0
      %v3580 = vpop.f32.mrb[0].mxu0
      %v3581 = vadd.f32 %v3484, %v3580
      %v3582 = vpop.f32.mrb[0].mxu0
      %3583 = vmatprep.mubr.bf16.mxu0 %v2625
      %3584 = vmatmul.mubr.bf16.gmra.mrb[0].mxu0 %v2624
      %v3585 = vpop.f32.mrb[0].mxu0
      %v3586 = vadd.f32 %v3489, %v3585
      %v3587 = vpop.f32.mrb[0].mxu0
      %v3588 = vpop.f32.mrb[0].mxu0
      %v3589 = vadd.f32 %v3492, %v3588
      %v3590 = vpop.f32.mrb[0].mxu0
      %3591 = vmatprep.mubr.bf16.mxu0 %v2634
      %3592 = vmatmul.mubr.bf16.gmra.mrb[0].mxu0 %v2633
      %v3593 = vpop.f32.mrb[0].mxu0
      %v3594 = vadd.f32 %v3497, %v3593
      %v3595 = vpop.f32.mrb[0].mxu0
      %v3596 = vpop.f32.mrb[0].mxu0
      %v3597 = vadd.f32 %v3500, %v3596
      %v3598 = vpop.f32.mrb[0].mxu0
      %3599 = vdwg.mxu0
      %3600 = vmatprep.subr.bf16.mxu0 0
      %3601 = vmatpush1.bf16.msra.mxu0 %v3132
      %3602 = vmatprep.subr.bf16.mxu0 0
      %3603 = vmatpush1.bf16.msra.mxu0 %v3133
      %3604 = vmatprep.subr.bf16.mxu0 0
      %3605 = vmatpush1.bf16.msra.mxu0 %v3134
      %3606 = vmatprep.subr.bf16.mxu0 0
      %3607 = vmatpush1.bf16.msra.mxu0 %v3135
      %3608 = vmatprep.subr.bf16.mxu0 0
      %3609 = vmatpush1.bf16.msra.mxu0 %v3136
      %3610 = vmatprep.subr.bf16.mxu0 0
      %3611 = vmatpush1.bf16.msra.mxu0 %v3137
      %3612 = vmatprep.subr.bf16.mxu0 0
      %3613 = vmatpush1.bf16.msra.mxu0 %v3138
      %3614 = vmatprep.subr.bf16.mxu0 0
      %3615 = vmatpush1.bf16.msra.mxu0 %v3139
      %3616 = vmatprep.subr.bf16.mxu0 0
      %3617 = vmatpush1.bf16.msra.mxu0 0
      %3618 = vmatprep.subr.bf16.mxu0 0
      %3619 = vmatpush1.bf16.msra.mxu0 0
      %3620 = vmatprep.subr.bf16.mxu0 0
      %3621 = vmatpush1.bf16.msra.mxu0 0
      %3622 = vmatprep.subr.bf16.mxu0 0
      %3623 = vmatpush1.bf16.msra.mxu0 0
      %3624 = vmatprep.subr.bf16.mxu0 0
      %3625 = vmatpush1.bf16.msra.mxu0 0
      %3626 = vmatprep.subr.bf16.mxu0 0
      %3627 = vmatpush1.bf16.msra.mxu0 0
      %3628 = vmatprep.subr.bf16.mxu0 0
      %3629 = vmatpush1.bf16.msra.mxu0 0
      %3630 = vmatprep.subr.bf16.mxu0 0
      %3631 = vmatpush1.bf16.msra.mxu0 0
      %3632 = vmatprep.mubr.bf16.mxu0 0
      %3633 = vmatmul.mubr.bf16.gmra.mrb[0].mxu0 %v2572
      %v3634 = vpop.f32.mrb[0].mxu0
      %v3635 = vadd.f32 %v3538, %v3634
      %v3636 = vpop.f32.mrb[0].mxu0
      %v3637 = vpop.f32.mrb[0].mxu0
      %v3638 = vadd.f32 %v3541, %v3637
      %v3639 = vpop.f32.mrb[0].mxu0
      %3640 = vmatprep.mubr.bf16.mxu0 0
      %3641 = vmatmul.mubr.bf16.gmra.mrb[0].mxu0 %v2581
      %v3642 = vpop.f32.mrb[0].mxu0
      %v3643 = vadd.f32 %v3546, %v3642
      %v3644 = vpop.f32.mrb[0].mxu0
      %v3645 = vpop.f32.mrb[0].mxu0
      %v3646 = vadd.f32 %v3549, %v3645
      %v3647 = vpop.f32.mrb[0].mxu0
      %3648 = vmatprep.mubr.bf16.mxu0 0
      %3649 = vmatmul.mubr.bf16.gmra.mrb[0].mxu0 %v2590
      %v3650 = vpop.f32.mrb[0].mxu0
      %v3651 = vadd.f32 %v3554, %v3650
      %v3652 = vpop.f32.mrb[0].mxu0
      %v3653 = vpop.f32.mrb[0].mxu0
      %v3654 = vadd.f32 %v3557, %v3653
      %v3655 = vpop.f32.mrb[0].mxu0
      %3656 = vmatprep.mubr.bf16.mxu0 0
      %3657 = vmatmul.mubr.bf16.gmra.mrb[0].mxu0 %v2599
      %v3658 = vpop.f32.mrb[0].mxu0
      %v3659 = vadd.f32 %v3562, %v3658
      %v3660 = vpop.f32.mrb[0].mxu0
      %v3661 = vpop.f32.mrb[0].mxu0
      %v3662 = vadd.f32 %v3565, %v3661
      %v3663 = vpop.f32.mrb[0].mxu0
      %3664 = vmatprep.mubr.bf16.mxu0 0
      %3665 = vmatmul.mubr.bf16.gmra.mrb[0].mxu0 %v2608
      %v3666 = vpop.f32.mrb[0].mxu0
      %v3667 = vadd.f32 %v3570, %v3666
      %v3668 = vpop.f32.mrb[0].mxu0
      %v3669 = vpop.f32.mrb[0].mxu0
      %v3670 = vadd.f32 %v3573, %v3669
      %v3671 = vpop.f32.mrb[0].mxu0
      %3672 = vmatprep.mubr.bf16.mxu0 0
      %3673 = vmatmul.mubr.bf16.gmra.mrb[0].mxu0 %v2617
      %v3674 = vpop.f32.mrb[0].mxu0
      %v3675 = vadd.f32 %v3578, %v3674
      %v3676 = vpop.f32.mrb[0].mxu0
      %v3677 = vpop.f32.mrb[0].mxu0
      %v3678 = vadd.f32 %v3581, %v3677
      %v3679 = vpop.f32.mrb[0].mxu0
      %3680 = vmatprep.mubr.bf16.mxu0 0
      %3681 = vmatmul.mubr.bf16.gmra.mrb[0].mxu0 %v2626
      %v3682 = vpop.f32.mrb[0].mxu0
      %v3683 = vadd.f32 %v3586, %v3682
      %v3684 = vpop.f32.mrb[0].mxu0
      %v3685 = vpop.f32.mrb[0].mxu0
      %v3686 = vadd.f32 %v3589, %v3685
      %v3687 = vpop.f32.mrb[0].mxu0
      %3688 = vmatprep.mubr.bf16.mxu0 0
      %3689 = vmatmul.mubr.bf16.gmra.mrb[0].mxu0 %v2635
      %v3690 = vpop.f32.mrb[0].mxu0
      %v3691 = vadd.f32 %v3594, %v3690
      %v3692 = vpop.f32.mrb[0].mxu0
      %v3693 = vpop.f32.mrb[0].mxu0
      %v3694 = vadd.f32 %v3597, %v3693
      %v3695 = vpop.f32.mrb[0].mxu0
      %3696 = vdwg.mxu0
      %v3713 = vunpack.c.l.b16 %v2403
      %v3714 = vunpack.c.l.b16 %v2404
      %v3715 = vunpack.c.l.b16 %v2405
      %v3716 = vunpack.c.l.b16 %v2406
      %v3717 = vunpack.c.l.b16 %v2407
      %v3718 = vunpack.c.l.b16 %v2408
      %v3719 = vunpack.c.l.b16 %v2409
      %v3720 = vunpack.c.l.b16 %v2410
      %v3721 = vunpack.c.l.b16 %v2411
      %v3722 = vunpack.c.l.b16 %v2412
      %v3723 = vunpack.c.l.b16 %v2413
      %v3724 = vunpack.c.l.b16 %v2414
      %v3725 = vunpack.c.l.b16 %v2415
      %v3726 = vunpack.c.l.b16 %v2416
      %v3727 = vunpack.c.l.b16 %v2417
      %v3728 = vunpack.c.l.b16 %v2418
      %v3729 = vpack.c.b16 %v3714, %v3713
      %v3730 = vpack.c.b16 %v3716, %v3715
      %v3731 = vpack.c.b16 %v3718, %v3717
      %v3732 = vpack.c.b16 %v3720, %v3719
      %v3733 = vpack.c.b16 %v3722, %v3721
      %v3734 = vpack.c.b16 %v3724, %v3723
      %v3735 = vpack.c.b16 %v3726, %v3725
      %v3736 = vpack.c.b16 %v3728, %v3727
      %3745 = vmatprep.subr.bf16.mxu0 0
      %3746 = vmatpush1.bf16.msra.mxu0 %v3729
      %3747 = vmatprep.subr.bf16.mxu0 0
      %3748 = vmatpush1.bf16.msra.mxu0 %v3730
      %3749 = vmatprep.subr.bf16.mxu0 0
      %3750 = vmatpush1.bf16.msra.mxu0 %v3731
      %3751 = vmatprep.subr.bf16.mxu0 0
      %3752 = vmatpush1.bf16.msra.mxu0 %v3732
      %3753 = vmatprep.subr.bf16.mxu0 0
      %3754 = vmatpush1.bf16.msra.mxu0 %v3733
      %3755 = vmatprep.subr.bf16.mxu0 0
      %3756 = vmatpush1.bf16.msra.mxu0 %v3734
      %3757 = vmatprep.subr.bf16.mxu0 0
      %3758 = vmatpush1.bf16.msra.mxu0 %v3735
      %3759 = vmatprep.subr.bf16.mxu0 0
      %3760 = vmatpush1.bf16.msra.mxu0 %v3736
      %3761 = vmatprep.subr.bf16.mxu0 0
      %3762 = vmatpush1.bf16.msra.mxu0 0
      %3763 = vmatprep.subr.bf16.mxu0 0
      %3764 = vmatpush1.bf16.msra.mxu0 0
      %3765 = vmatprep.subr.bf16.mxu0 0
      %3766 = vmatpush1.bf16.msra.mxu0 0
      %3767 = vmatprep.subr.bf16.mxu0 0
      %3768 = vmatpush1.bf16.msra.mxu0 0
      %3769 = vmatprep.subr.bf16.mxu0 0
      %3770 = vmatpush1.bf16.msra.mxu0 0
      %3771 = vmatprep.subr.bf16.mxu0 0
      %3772 = vmatpush1.bf16.msra.mxu0 0
      %3773 = vmatprep.subr.bf16.mxu0 0
      %3774 = vmatpush1.bf16.msra.mxu0 0
      %3775 = vmatprep.subr.bf16.mxu0 0
      %3776 = vmatpush1.bf16.msra.mxu0 0
      %3777 = vmatprep.mubr.bf16.mxu0 0
      %3778 = vmatmul.mubr.bf16.gmra.mrb[0].mxu0 %v1142
      %v3779 = vpop.f32.mrb[0].mxu0
      %v3780 = vadd.f32 %v3635, %v3779
      %v3781 = vpop.f32.mrb[0].mxu0
      %v3782 = vpop.f32.mrb[0].mxu0
      %v3783 = vadd.f32 %v3638, %v3782
      %v3784 = vpop.f32.mrb[0].mxu0
      %3785 = vmatprep.mubr.bf16.mxu0 0
      %3786 = vmatmul.mubr.bf16.gmra.mrb[0].mxu0 %v1143
      %v3787 = vpop.f32.mrb[0].mxu0
      %v3788 = vadd.f32 %v3643, %v3787
      %v3789 = vpop.f32.mrb[0].mxu0
      %v3790 = vpop.f32.mrb[0].mxu0
      %v3791 = vadd.f32 %v3646, %v3790
      %v3792 = vpop.f32.mrb[0].mxu0
      %3793 = vmatprep.mubr.bf16.mxu0 0
      %3794 = vmatmul.mubr.bf16.gmra.mrb[0].mxu0 %v1144
      %v3795 = vpop.f32.mrb[0].mxu0
      %v3796 = vadd.f32 %v3651, %v3795
      %v3797 = vpop.f32.mrb[0].mxu0
      %v3798 = vpop.f32.mrb[0].mxu0
      %v3799 = vadd.f32 %v3654, %v3798
      %v3800 = vpop.f32.mrb[0].mxu0
      %3801 = vmatprep.mubr.bf16.mxu0 0
      %3802 = vmatmul.mubr.bf16.gmra.mrb[0].mxu0 %v1145
      %v3803 = vpop.f32.mrb[0].mxu0
      %v3804 = vadd.f32 %v3659, %v3803
      %v3805 = vpop.f32.mrb[0].mxu0
      %v3806 = vpop.f32.mrb[0].mxu0
      %v3807 = vadd.f32 %v3662, %v3806
      %v3808 = vpop.f32.mrb[0].mxu0
      %3809 = vmatprep.mubr.bf16.mxu0 0
      %3810 = vmatmul.mubr.bf16.gmra.mrb[0].mxu0 %v1146
      %v3811 = vpop.f32.mrb[0].mxu0
      %v3812 = vadd.f32 %v3667, %v3811
      %v3813 = vpop.f32.mrb[0].mxu0
      %v3814 = vpop.f32.mrb[0].mxu0
      %v3815 = vadd.f32 %v3670, %v3814
      %v3816 = vpop.f32.mrb[0].mxu0
      %3817 = vmatprep.mubr.bf16.mxu0 0
      %3818 = vmatmul.mubr.bf16.gmra.mrb[0].mxu0 %v1147
      %v3819 = vpop.f32.mrb[0].mxu0
      %v3820 = vadd.f32 %v3675, %v3819
      %v3821 = vpop.f32.mrb[0].mxu0
      %v3822 = vpop.f32.mrb[0].mxu0
      %v3823 = vadd.f32 %v3678, %v3822
      %v3824 = vpop.f32.mrb[0].mxu0
      %3825 = vmatprep.mubr.bf16.mxu0 0
      %3826 = vmatmul.mubr.bf16.gmra.mrb[0].mxu0 %v1148
      %v3827 = vpop.f32.mrb[0].mxu0
      %v3828 = vadd.f32 %v3683, %v3827
      %v3829 = vpop.f32.mrb[0].mxu0
      %v3830 = vpop.f32.mrb[0].mxu0
      %v3831 = vadd.f32 %v3686, %v3830
      %v3832 = vpop.f32.mrb[0].mxu0
      %3833 = vmatprep.mubr.bf16.mxu0 0
      %3834 = vmatmul.mubr.bf16.gmra.mrb[0].mxu0 %v1149
      %v3835 = vpop.f32.mrb[0].mxu0
      %v3836 = vadd.f32 %v3691, %v3835
      %v3837 = vpop.f32.mrb[0].mxu0
      %v3838 = vpop.f32.mrb[0].mxu0
      %v3839 = vadd.f32 %v3694, %v3838
      %v3840 = vpop.f32.mrb[0].mxu0
      %3841 = vdwg.mxu0
      %3842 = vst [vmem:[%s312] sm:$0xff] %v3780
      %3843 = vst [vmem:[%s312 + $0x8] sm:$0xff] %v3783
      %3844 = vst [vmem:[%s312 + $0x10] sm:$0xff] %v3788
      %3845 = vst [vmem:[%s312 + $0x18] sm:$0xff] %v3791
      %3846 = vst [vmem:[%s312 + $0x20] sm:$0xff] %v3796
      %3847 = vst [vmem:[%s312 + $0x28] sm:$0xff] %v3799
      %3848 = vst [vmem:[%s312 + $0x30] sm:$0xff] %v3804
      %3849 = vst [vmem:[%s312 + $0x38] sm:$0xff] %v3807
      %3850 = vst [vmem:[%s312 + $0x40] sm:$0xff] %v3812
      %3851 = vst [vmem:[%s312 + $0x48] sm:$0xff] %v3815
      %3852 = vst [vmem:[%s312 + $0x50] sm:$0xff] %v3820
      %3853 = vst [vmem:[%s312 + $0x58] sm:$0xff] %v3823
      %3854 = vst [vmem:[%s312 + $0x60] sm:$0xff] %v3828
      %3855 = vst [vmem:[%s312 + $0x68] sm:$0xff] %v3831
      %3856 = vst [vmem:[%s312 + $0x70] sm:$0xff] %v3836
      %3857 = vst [vmem:[%s312 + $0x78] sm:$0xff] %v3839
      %s3858 = smul.u32 2, %s19
      %p3859 = scmp.lt.s32.totalorder %s3858, 7
      %s3860 = scalar_select %p3859, %s3858, 7
      %s3861 = smul.addr %s3860, 8
      %s3862 = smul.addr %s3861, 8
      %s3863 = scalar_lea.vmem %s8, %s3862
      // Predicated region
      $region53: #{_lambda_.2} parent=51 // pred_check
        %p3864 = pneg %p210
      $region54: #{_lambda_.2} parent=51 // pred_check_branch
        %3866 = sbr.rel (%p3864) target = $region56
      $region55: #{_lambda_.2} parent=51 // pred_region
        %s3867 = smul.u32 2, %s19
      $region56: #{_lambda_.2} parent=51 // pred_fallthru
        _
    $region52: #{_lambda_.2} parent=5 // pred_fallthru
      _
    %p3868 = scmp.le.s32.totalorder 2, %s14
    // Predicated region
    $region57: #{_lambda_.2} parent=5 // pred_check
      %p3869 = pneg %p3868
    $region58: #{_lambda_.2} parent=5 // pred_check_branch
      %3871 = sbr.rel (%p3869) target = $region60
    $region59: #{_lambda_.2} parent=5 // pred_region
      %s3872 = ssub.s32 %s14, 2
      // Predicated region
      $region61: #{_lambda_.2} parent=59 // pred_check
        %p3873 = pneg %p216
      $region62: #{_lambda_.2} parent=59 // pred_check_branch
        %3875 = sbr.rel (%p3873) target = $region64
      $region63: #{_lambda_.2} parent=59 // pred_region
        %s3876 = smul.u32 2, %s20
        %p3877 = scmp.lt.s32.totalorder %s3876, 7
        %s3878 = scalar_select %p3877, %s3876, 7
        %s3879 = smul.addr %s3878, 8
        %s3880 = smul.addr %s3879, 8
        %s3881 = scalar_lea.vmem %s8, %s3880
      $region64: #{_lambda_.2} parent=59 // pred_fallthru
        _
    $region60: #{_lambda_.2} parent=5 // pred_fallthru
      _
  $region6: #{_lambda_.2} parent=0 // loop_footer
    %s18 = sadd.s32 1, %s14
  $region7: #{_lambda_.2} parent=0 // loop_footer_branch
    %13 = sbr.rel target = $region3
  $region8: #{_lambda_.2} parent=0 // loop_exit
    _

</llo_original>
